<compile_context>
chip_gen: v7x
topology: tpu7x:2x2x1
jax: 0.10.0
libtpu: 0.0.40
codegen_flags: <defaults>
</compile_context>

<pallas_src>
import functools

import jax
import jax.numpy as jnp
from jax import lax
from jax.experimental import pallas as pl
from jax.experimental.pallas import tpu as pltpu

EPS = 1e-5
LANE = 128


def _round_up(x, m):
    return (x + m - 1) // m * m


@functools.lru_cache(maxsize=None)
def _vmem_limit_bytes():
    """Scoped-VMEM budget: ~half of physical (32 MiB on v7x, 64 MiB on v5e/v6e)."""
    try:
        phys = pltpu.get_tpu_info().vmem_capacity_bytes
    except Exception:
        phys = 64 * 1024 * 1024        # conservative fallback (v7x-sized)
    return int(max(32 * 1024 * 1024, min(64 * 1024 * 1024, phys // 2)))


def _pick_row_block(nhw, max_tm):
    """Largest row tile (multiple of 8) dividing N*H*W, preferring >=2 grid
    steps (both v7x TensorCores get work), capped by the per-step VMEM budget."""
    ladder = [t for t in (2048, 1024, 512, 256, 128, 64, 32, 16, 8) if t <= max_tm]
    for tm in ladder:
        if nhw % tm == 0 and nhw // tm >= 2:
            return tm
    for tm in ladder:
        if nhw % tm == 0:
            return tm
    # TODO(synk): odd N*H*W needs a masked tail tile.
    raise ValueError(f"N*H*W={nhw} must be a multiple of 8")


def _store_stats(stats_ref, y):
    """BN partial stats: row0 = sum(y), row1 = sum(y*y) (rows 2-7 unused).

    Two direct row stores instead of an iota/where-built (8,C) tile (VPU filler,
    most visible on v5e's 4-VALU / no-bf16 VPU)."""
    stats_ref[0:1, 0:1, :] = jnp.sum(y, axis=0, keepdims=True)[None]
    stats_ref[0:1, 1:2, :] = jnp.sum(y * y, axis=0, keepdims=True)[None]


def _bn_affine(stats, gamma, beta, count):
    """Fold training-mode BN (biased var) into per-channel scale/shift (f32)."""
    s = jnp.sum(stats[:, 0, :], axis=0)
    ss = jnp.sum(stats[:, 1, :], axis=0)
    mean = s / count
    # Clamp: E[x^2] - E[x]^2 from partial sums can cancel to a tiny negative.
    var = jnp.maximum(ss / count - mean * mean, 0.0)
    scale = gamma * lax.rsqrt(var + EPS)
    shift = beta - mean * scale
    return scale.reshape(1, -1), shift.reshape(1, -1)


# ---------------------------------------------------------------------------
# Kernel 1: pointwise (1x1) conv with optional fused per-channel pre-affine
#           (+ relu) and fused BN partial-stats emission
# ---------------------------------------------------------------------------
def _pw_conv_kernel(*refs, pre_relu, has_affine, compute_dtype):
    if has_affine:
        x_ref, w_ref, scale_ref, shift_ref, y_ref, stats_ref = refs
        a = x_ref[...].astype(jnp.float32) * scale_ref[...] + shift_ref[...]
        if pre_relu:
            a = jnp.maximum(a, 0.0)
        a = a.astype(compute_dtype)
    else:
        # Stage 1: the pre-affine is identity -> skip the FMA entirely.
        x_ref, w_ref, y_ref, stats_ref = refs
        a = x_ref[...].astype(compute_dtype)
    y = jnp.dot(a, w_ref[...], preferred_element_type=jnp.float32)  # MXU, f32 acc
    y_ref[...] = y.astype(y_ref.dtype)
    _store_stats(stats_ref, y)


def _pw_conv(x2d, w, scale=None, shift=None, *, pre_relu, compute_dtype,
             out_dtype, tm, vmem_limit):
    nhw, cin = x2d.shape
    cout = w.shape[1]
    g = nhw // tm
    has_affine = scale is not None
    kernel = functools.partial(_pw_conv_kernel, pre_relu=pre_relu,
                               has_affine=has_affine, compute_dtype=compute_dtype)

    in_specs = [pl.BlockSpec((tm, cin), lambda i: (i, 0)),
                pl.BlockSpec((cin, cout), lambda i: (0, 0))]
    operands = [x2d, w]
    if has_affine:
        in_specs += [pl.BlockSpec((1, cin), lambda i: (0, 0)),
                     pl.BlockSpec((1, cin), lambda i: (0, 0))]
        operands += [scale, shift]

    out_bytes = jnp.dtype(out_dtype).itemsize
    cost = pl.CostEstimate(
        flops=2 * nhw * cin * cout + (4 * nhw * cin if has_affine else 0),
        transcendentals=0,
        bytes_accessed=(nhw * cin * x2d.dtype.itemsize
                        + cin * cout * w.dtype.itemsize
                        + nhw * cout * out_bytes + g * 8 * cout * 4))

    return pl.pallas_call(
        kernel,
        out_shape=(jax.ShapeDtypeStruct((nhw, cout), out_dtype),
                   jax.ShapeDtypeStruct((g, 8, cout), jnp.float32)),
        grid=(g,),
        in_specs=in_specs,
        out_specs=(pl.BlockSpec((tm, cout), lambda i: (i, 0)),
                   pl.BlockSpec((1, 8, cout), lambda i: (i, 0, 0))),
        compiler_params=pltpu.CompilerParams(
            dimension_semantics=("parallel",),
            vmem_limit_bytes=vmem_limit),
        cost_estimate=cost,
    )(*operands)


# ---------------------------------------------------------------------------
# Kernel 2: 3x3 conv (pad=1) with fused bn1+relu on the input, per-tap MXU
#           accumulation (no im2col buffer), fused BN partial-stats emission
# ---------------------------------------------------------------------------
def _conv3x3_kernel(t1_ref, w_ref, scale_ref, shift_ref, y_ref, stats_ref,
                    pad_ref, acc_ref, *, H, W, compute_dtype):
    P = t1_ref.shape[-1]
    a = t1_ref[...].astype(jnp.float32).reshape(H, W, P)
    a = a * scale_ref[...] + shift_ref[...]            # fused bn1 (f32)
    a = jnp.maximum(a, 0.0).astype(compute_dtype)      # relu, narrow for MXU

    # Zero only the 1-pixel border the taps actually read, then write interior.
    # (Re-zeroed every step: under megacore "parallel" sharding each TensorCore
    #  owns a private scratch and may start at program_id != 0, so gating this
    #  on program_id == 0 would leave one core's border stale.)
    WP = pad_ref.shape[1]                              # sublane-aligned width
    zrow = jnp.zeros((1, WP, P), compute_dtype)
    zcol = jnp.zeros((H, 1, P), compute_dtype)
    pad_ref[0:1, :, :] = zrow
    pad_ref[H + 1:H + 2, :, :] = zrow
    pad_ref[1:H + 1, 0:1, :] = zcol
    pad_ref[1:H + 1, W + 1:W + 2, :] = zcol
    pad_ref[1:H + 1, 1:W + 1, :] = a

    # Per-tap accumulation: 9 accumulating K=P MXU matmuls reading shifted
    # windows of the padded scratch.  No (H*W, 9P) im2col buffer -> peak VMEM
    # stays ~one tap of activation (key for v7x's 64 MiB VMEM).
    t = 0
    for kh in range(3):
        for kw in range(3):
            tap = pad_ref[kh:kh + H, kw:kw + W, :].reshape(H * W, P)
            contrib = jnp.dot(tap, w_ref[t], preferred_element_type=jnp.float32)
            if t == 0:
                acc_ref[...] = contrib
            else:
                acc_ref[...] += contrib
            t += 1

    y = acc_ref[...]
    y_ref[...] = y.astype(y_ref.dtype)
    _store_stats(stats_ref, y)


def _conv3x3(t1_2d, w2r, scale, shift, *, n, h, w, compute_dtype, out_dtype,
             vmem_limit):
    # TODO(synk): for large feature maps / batch < 2, add an H-tile-with-halo
    # grid axis so per-step VMEM stays bounded and both v7x cores get work.
    p = t1_2d.shape[-1]
    hw = h * w
    wp = _round_up(w + 2, 8)                           # sublane-aligned scratch
    kernel = functools.partial(_conv3x3_kernel, H=h, W=w,
                               compute_dtype=compute_dtype)
    out_bytes = jnp.dtype(out_dtype).itemsize
    cost = pl.CostEstimate(
        flops=2 * n * hw * 9 * p * p,
        transcendentals=0,
        bytes_accessed=(n * hw * p * (t1_2d.dtype.itemsize + out_bytes)
                        + 9 * p * p * w2r.dtype.itemsize + n * 8 * p * 4))

    return pl.pallas_call(
        kernel,
        out_shape=(jax.ShapeDtypeStruct((n * hw, p), out_dtype),
                   jax.ShapeDtypeStruct((n, 8, p), jnp.float32)),
        grid=(n,),
        in_specs=[pl.BlockSpec((hw, p), lambda i: (i, 0)),
                  pl.BlockSpec((9, p, p), lambda i: (0, 0, 0)),
                  pl.BlockSpec((1, p), lambda i: (0, 0)),
                  pl.BlockSpec((1, p), lambda i: (0, 0))],
        out_specs=(pl.BlockSpec((hw, p), lambda i: (i, 0)),
                   pl.BlockSpec((1, 8, p), lambda i: (i, 0, 0))),
        scratch_shapes=[pltpu.VMEM((h + 2, wp, p), compute_dtype),
                        pltpu.VMEM((hw, p), jnp.float32)],
        compiler_params=pltpu.CompilerParams(
            dimension_semantics=("parallel",),
            vmem_limit_bytes=vmem_limit),
        cost_estimate=cost,
    )(t1_2d, w2r, scale, shift)


# ---------------------------------------------------------------------------
# Kernel 3: fused bn3 + residual add + relu epilogue (pure VPU, f32),
#           output aliased over the residual input's HBM buffer
# ---------------------------------------------------------------------------
def _residual_kernel(t3_ref, x_ref, scale_ref, shift_ref, o_ref):
    y = (t3_ref[...].astype(jnp.float32) * scale_ref[...] + shift_ref[...]
         + x_ref[...])
    o_ref[...] = jnp.maximum(y, 0.0)


def _residual(t3, x2d, scale, shift, *, tm, vmem_limit):
    nhw, c = t3.shape
    g = nhw // tm
    cost = pl.CostEstimate(
        flops=4 * nhw * c, transcendentals=0,
        bytes_accessed=nhw * c * (t3.dtype.itemsize + 4 + 4) + 2 * c * 4)
    return pl.pallas_call(
        _residual_kernel,
        out_shape=jax.ShapeDtypeStruct((nhw, c), jnp.float32),
        grid=(g,),
        in_specs=[pl.BlockSpec((tm, c), lambda i: (i, 0)),
                  pl.BlockSpec((tm, c), lambda i: (i, 0)),
                  pl.BlockSpec((1, c), lambda i: (0, 0)),
                  pl.BlockSpec((1, c), lambda i: (0, 0))],
        out_specs=pl.BlockSpec((tm, c), lambda i: (i, 0)),
        # Same tile index map on input 1 (x2d) and output 0 -> safe to write
        # the result in place over x2d's HBM buffer.
        input_output_aliases={1: 0},
        compiler_params=pltpu.CompilerParams(
            dimension_semantics=("parallel",),
            vmem_limit_bytes=vmem_limit),
        cost_estimate=cost,
    )(t3, x2d, scale, shift)


# ---------------------------------------------------------------------------
# Forward wrappers
# ---------------------------------------------------------------------------
def bottleneck_forward_nhwc(x_nhwc, params, *, compute_dtype=jnp.bfloat16):
    """x_nhwc: [N, H, W, Cin] f32.  params: (w1[Cin,P], w2_hwio[3,3,P,P],
    w3[P,Cout], g1, b1, g2, b2, g3, b3).  Returns [N, H, W, Cout] f32."""
    w1, w2, w3, g1, b1, g2, b2, g3, b3 = params
    n, h, w_sp, cin = x_nhwc.shape
    p = w1.shape[1]
    cout = w3.shape[1]
    assert cin == cout, "downsample is None => inplanes must equal planes*4"

    cin_p = _round_up(cin, LANE)
    p_p = _round_up(p, LANE)
    cout_p = _round_up(cout, LANE)
    nhw = n * h * w_sp
    count = float(nhw)
    vmem_limit = _vmem_limit_bytes()

    # bf16 intermediates halve t1/t2/t3 HBM traffic (f32 in the parity config).
    store_dtype = compute_dtype
    row_bytes = cin_p * 4 + cout_p * jnp.dtype(store_dtype).itemsize
    tm = _pick_row_block(nhw, max_tm=max(8, vmem_limit // (8 * row_bytes)))

    # Lane-dense (128-padded), narrow-dtype weight prep (done once per model in
    # practice; zero-padded channels stay exactly zero end-to-end).
    w1p = jnp.pad(w1, ((0, cin_p - cin), (0, p_p - p))).astype(compute_dtype)
    w2p = jnp.pad(w2, ((0, 0), (0, 0), (0, p_p - p), (0, p_p - p)))
    w2p = w2p.astype(compute_dtype).reshape(9, p_p, p_p)   # per-tap layout
    w3p = jnp.pad(w3, ((0, p_p - p), (0, cout_p - cout))).astype(compute_dtype)

    def padv(v, c):
        return jnp.pad(v.astype(jnp.float32).reshape(-1), (0, c - v.size))

    g1p, b1p = padv(g1, p_p), padv(b1, p_p)
    g2p, b2p = padv(g2, p_p), padv(b2, p_p)
    g3p, b3p = padv(g3, cout_p), padv(b3, cout_p)

    x2d = jnp.pad(x_nhwc, ((0, 0), (0, 0), (0, 0), (0, cin_p - cin)))
    x2d = x2d.reshape(nhw, cin_p).astype(jnp.float32)

    # Stage 1: t1 = x @ w1  (identity pre-affine skipped)   (+ BN1 partial stats)
    t1, st1 = _pw_conv(x2d, w1p, pre_relu=False, compute_dtype=compute_dtype,
                       out_dtype=store_dtype, tm=tm, vmem_limit=vmem_limit)
    sc1, sh1 = _bn_affine(st1, g1p, b1p, count)

    # Stage 2: t2 = conv3x3(relu(bn1(t1)))                  (+ BN2 partial stats)
    t2, st2 = _conv3x3(t1, w2p, sc1, sh1, n=n, h=h, w=w_sp,
                       compute_dtype=compute_dtype, out_dtype=store_dtype,
                       vmem_limit=vmem_limit)
    sc2, sh2 = _bn_affine(st2, g2p, b2p, count)

    # Stage 3: t3 = relu(bn2(t2)) @ w3                      (+ BN3 partial stats)
    t3, st3 = _pw_conv(t2, w3p, sc2, sh2, pre_relu=True,
                       compute_dtype=compute_dtype, out_dtype=store_dtype,
                       tm=tm, vmem_limit=vmem_limit)
    sc3, sh3 = _bn_affine(st3, g3p, b3p, count)

    # Stage 4: out = relu(bn3(t3) + x)   (fused epilogue, aliased over x2d)
    out2d = _residual(t3, x2d, sc3, sh3, tm=tm, vmem_limit=vmem_limit)
    return out2d.reshape(n, h, w_sp, cout_p)[..., :cout]


def bottleneck_forward(x_nchw, params, *, compute_dtype=jnp.bfloat16):
    """NCHW wrapper for parity with the PyTorch module.  Prefer the NHWC entry
    point (with 128-multiple channels) end-to-end in real models to avoid the
    two layout transposes and the channel slice, each an extra HBM pass."""
    x_nhwc = jnp.transpose(x_nchw, (0, 2, 3, 1))
    out = bottleneck_forward_nhwc(x_nhwc, params, compute_dtype=compute_dtype)
    return jnp.transpose(out, (0, 3, 1, 2))


# ---------------------------------------------------------------------------
# Pure-JAX f32 reference (NCHW, gamma=1, beta=0, training-mode BN)
# ---------------------------------------------------------------------------
def ref_forward(x, w1_pt, w2_pt, w3_pt):
    def bn(y, relu=True):
        mean = y.mean(axis=(0, 2, 3), keepdims=True)
        var = ((y - mean) ** 2).mean(axis=(0, 2, 3), keepdims=True)
        y = (y - mean) / jnp.sqrt(var + EPS)
        return jnp.maximum(y, 0.0) if relu else y

    dn = ('NCHW', 'OIHW', 'NCHW')
    y = lax.conv_general_dilated(x, w1_pt, (1, 1), 'VALID', dimension_numbers=dn)
    y = bn(y)
    y = lax.conv_general_dilated(y, w2_pt, (1, 1), ((1, 1), (1, 1)),
                                 dimension_numbers=dn)
    y = bn(y)
    y = lax.conv_general_dilated(y, w3_pt, (1, 1), 'VALID', dimension_numbers=dn)
    y = bn(y, relu=False)
    return jnp.maximum(y + x, 0.0)


if __name__ == "__main__":
    # Small shapes consistent with the module: inplanes = planes * expansion.
    N, H, W = 2, 16, 16
    planes = 4
    inplanes = planes * 4          # 16 -> residual add works (downsample=None)
    cout = planes * 4

    key = jax.random.PRNGKey(0)
    kx, k1, k2, k3 = jax.random.split(key, 4)

    x = jax.random.normal(kx, (N, inplanes, H, W), dtype=jnp.float32)

    # Deterministic synthetic weights in PyTorch layout [out, in, kh, kw].
    w1_pt = 0.1 * jax.random.normal(k1, (planes, inplanes, 1, 1), jnp.float32)
    w2_pt = 0.1 * jax.random.normal(k2, (planes, planes, 3, 3), jnp.float32)
    w3_pt = 0.1 * jax.random.normal(k3, (cout, planes, 1, 1), jnp.float32)

    # Kernel-layout weights: 1x1 -> [Cin, Cout]; 3x3 -> HWIO [3, 3, in, out].
    w1 = jnp.transpose(w1_pt[:, :, 0, 0], (1, 0))
    w2 = jnp.transpose(w2_pt, (2, 3, 1, 0))
    w3 = jnp.transpose(w3_pt[:, :, 0, 0], (1, 0))

    # BatchNorm affine params (PyTorch defaults: gamma=1, beta=0).
    g1, b1 = jnp.ones((planes,), jnp.float32), jnp.zeros((planes,), jnp.float32)
    g2, b2 = jnp.ones((planes,), jnp.float32), jnp.zeros((planes,), jnp.float32)
    g3, b3 = jnp.ones((cout,), jnp.float32), jnp.zeros((cout,), jnp.float32)

    params = (w1, w2, w3, g1, b1, g2, b2, g3, b3)

    ref = ref_forward(x, w1_pt, w2_pt, w3_pt)

    # f32 MXU operands & f32 intermediates: strict parity with the reference.
    fwd_f32 = jax.jit(functools.partial(bottleneck_forward,
                                        compute_dtype=jnp.float32))
    out_f32 = jax.block_until_ready(fwd_f32(x, params))
    assert out_f32.shape == (N, inplanes, H, W)
    assert jnp.allclose(out_f32, ref, rtol=1e-4, atol=1e-4), "f32 mismatch"

    # bf16 MXU operands + bf16 intermediates (f32 BN math): performance config.
    fwd_bf16 = jax.jit(functools.partial(bottleneck_forward,
                                         compute_dtype=jnp.bfloat16))
    out_bf16 = jax.block_until_ready(fwd_bf16(x, params))
    assert out_bf16.shape == (N, inplanes, H, W)
    assert jnp.allclose(out_bf16, ref, rtol=3e-2, atol=3e-2), "bf16 mismatch"

    print("KERNEL_OK")
</pallas_src>

<mosaic_0001>
module attributes {stable_mosaic.version = 11 : i64} {
  func.func @_pw_conv_kernel(%arg0: i32, %arg1: memref<256x128xf32, #tpu.memory_space<vmem>>, %arg2: memref<128x128xf32, #tpu.memory_space<vmem>>, %arg3: memref<256x128xf32, #tpu.memory_space<vmem>>, %arg4: memref<1x8x128xf32, #tpu.memory_space<vmem>>) attributes {dimension_semantics = [#tpu.dimension_semantics<parallel>], iteration_bounds = array<i64: 2>, scalar_prefetch = 0 : i64, scratch_operands = 0 : i64, tpu.core_type = #tpu.core_type<tc>, window_params = [{transform_indices = @transform_0, window_bounds = array<i64: 256, 128>}, {pipeline_mode = #tpu.pipeline_mode<synchronous>, transform_indices = @transform_1, window_bounds = array<i64: 128, 128>}, {transform_indices = @transform_2, window_bounds = array<i64: 256, 128>}, {transform_indices = @transform_3, window_bounds = array<i64: 1, 8, 128>}]} {
    %c0 = arith.constant 0 : index
    %c0_0 = arith.constant 0 : index
    %0 = vector.load %arg1[%c0, %c0_0] : memref<256x128xf32, #tpu.memory_space<vmem>>, vector<256x128xf32>
    %c0_1 = arith.constant 0 : index
    %c0_2 = arith.constant 0 : index
    %1 = vector.load %arg2[%c0_1, %c0_2] : memref<128x128xf32, #tpu.memory_space<vmem>>, vector<128x128xf32>
    %cst = arith.constant dense<0.000000e+00> : vector<256x128xf32>
    %2 = tpu.matmul %0, %1, %cst {dimension_numbers = #tpu.dot_dimension_numbers<[1], [0], [0], [1], [0, 0, 1, 1], [], []>} : vector<256x128xf32>, vector<128x128xf32>, vector<256x128xf32> -> vector<256x128xf32>
    %c0_3 = arith.constant 0 : index
    %c0_4 = arith.constant 0 : index
    %3 = vector.load %arg3[%c0_3, %c0_4] : memref<256x128xf32, #tpu.memory_space<vmem>>, vector<256x128xf32>
    tpu.vector_store %arg3[%c0_3, %c0_4], %2 {strides = array<i32>} : memref<256x128xf32, #tpu.memory_space<vmem>>, vector<256x128xf32>,
    %cst_5 = arith.constant dense<0.000000e+00> : vector<128xf32>
    %4 = vector.multi_reduction <add>, %2, %cst_5 [0] : vector<256x128xf32> to vector<128xf32>
    %5 = vector.shape_cast %4 : vector<128xf32> to vector<1x128xf32>
    %6 = vector.shape_cast %5 : vector<1x128xf32> to vector<1x1x128xf32>
    %c0_6 = arith.constant 0 : index
    %c0_7 = arith.constant 0 : index
    %c0_8 = arith.constant 0 : index
    %7 = vector.load %arg4[%c0_6, %c0_7, %c0_8] : memref<1x8x128xf32, #tpu.memory_space<vmem>>, vector<1x1x128xf32>
    tpu.vector_store %arg4[%c0_6, %c0_7, %c0_8], %6 {strides = array<i32>} : memref<1x8x128xf32, #tpu.memory_space<vmem>>, vector<1x1x128xf32>,
    %8 = arith.mulf %2, %2 : vector<256x128xf32>
    %cst_9 = arith.constant dense<0.000000e+00> : vector<128xf32>
    %9 = vector.multi_reduction <add>, %8, %cst_9 [0] : vector<256x128xf32> to vector<128xf32>
    %10 = vector.shape_cast %9 : vector<128xf32> to vector<1x128xf32>
    %11 = vector.shape_cast %10 : vector<1x128xf32> to vector<1x1x128xf32>
    %c0_10 = arith.constant 0 : index
    %c1 = arith.constant 1 : index
    %c0_11 = arith.constant 0 : index
    %12 = vector.load %arg4[%c0_10, %c1, %c0_11] : memref<1x8x128xf32, #tpu.memory_space<vmem>>, vector<1x1x128xf32>
    tpu.vector_store %arg4[%c0_10, %c1, %c0_11], %11 {strides = array<i32>} : memref<1x8x128xf32, #tpu.memory_space<vmem>>, vector<1x1x128xf32>,
    return
  }
  func.func @transform_0(%arg0: i32) -> (i32, i32) {
    %c0_i32 = arith.constant 0 : i32
    %c0_i32_0 = arith.constant 0 : i32
    return %arg0, %c0_i32 : i32, i32
  }
  func.func @transform_1(%arg0: i32) -> (i32, i32) {
    %c0_i32 = arith.constant 0 : i32
    %c0_i32_0 = arith.constant 0 : i32
    %c0_i32_1 = arith.constant 0 : i32
    return %c0_i32, %c0_i32_0 : i32, i32
  }
  func.func @transform_2(%arg0: i32) -> (i32, i32) {
    %c0_i32 = arith.constant 0 : i32
    %c0_i32_0 = arith.constant 0 : i32
    return %arg0, %c0_i32 : i32, i32
  }
  func.func @transform_3(%arg0: i32) -> (i32, i32, i32) {
    %c0_i32 = arith.constant 0 : i32
    %c0_i32_0 = arith.constant 0 : i32
    %c0_i32_1 = arith.constant 0 : i32
    return %arg0, %c0_i32, %c0_i32_0 : i32, i32, i32
  }
}

module attributes {stable_mosaic.version = 11 : i64} {
  func.func @_residual_kernel(%arg0: i32, %arg1: memref<256x128xf32, #tpu.memory_space<vmem>>, %arg2: memref<256x128xf32, #tpu.memory_space<vmem>>, %arg3: memref<1x128xf32, #tpu.memory_space<vmem>>, %arg4: memref<1x128xf32, #tpu.memory_space<vmem>>, %arg5: memref<256x128xf32, #tpu.memory_space<vmem>>) attributes {dimension_semantics = [#tpu.dimension_semantics<parallel>], iteration_bounds = array<i64: 2>, scalar_prefetch = 0 : i64, scratch_operands = 0 : i64, tpu.core_type = #tpu.core_type<tc>, window_params = [{transform_indices = @transform_0, window_bounds = array<i64: 256, 128>}, {transform_indices = @transform_1, window_bounds = array<i64: 256, 128>}, {pipeline_mode = #tpu.pipeline_mode<synchronous>, transform_indices = @transform_2, window_bounds = array<i64: 1, 128>}, {pipeline_mode = #tpu.pipeline_mode<synchronous>, transform_indices = @transform_3, window_bounds = array<i64: 1, 128>}, {transform_indices = @transform_4, window_bounds = array<i64: 256, 128>}]} {
    %c0 = arith.constant 0 : index
    %c0_0 = arith.constant 0 : index
    %0 = vector.load %arg1[%c0, %c0_0] : memref<256x128xf32, #tpu.memory_space<vmem>>, vector<256x128xf32>
    %c0_1 = arith.constant 0 : index
    %c0_2 = arith.constant 0 : index
    %1 = vector.load %arg3[%c0_1, %c0_2] : memref<1x128xf32, #tpu.memory_space<vmem>>, vector<1x128xf32>
    %2 = vector.broadcast %1 : vector<1x128xf32> to vector<256x128xf32>
    %3 = arith.mulf %0, %2 : vector<256x128xf32>
    %c0_3 = arith.constant 0 : index
    %c0_4 = arith.constant 0 : index
    %4 = vector.load %arg4[%c0_3, %c0_4] : memref<1x128xf32, #tpu.memory_space<vmem>>, vector<1x128xf32>
    %5 = vector.broadcast %4 : vector<1x128xf32> to vector<256x128xf32>
    %6 = arith.addf %3, %5 : vector<256x128xf32>
    %c0_5 = arith.constant 0 : index
    %c0_6 = arith.constant 0 : index
    %7 = vector.load %arg2[%c0_5, %c0_6] : memref<256x128xf32, #tpu.memory_space<vmem>>, vector<256x128xf32>
    %8 = arith.addf %6, %7 : vector<256x128xf32>
    %cst = arith.constant 0.000000e+00 : f32
    %9 = vector.broadcast %cst : f32 to vector<256x128xf32>
    %10 = arith.maximumf %8, %9 : vector<256x128xf32>
    %c0_7 = arith.constant 0 : index
    %c0_8 = arith.constant 0 : index
    %11 = vector.load %arg5[%c0_7, %c0_8] : memref<256x128xf32, #tpu.memory_space<vmem>>, vector<256x128xf32>
    tpu.vector_store %arg5[%c0_7, %c0_8], %10 {strides = array<i32>} : memref<256x128xf32, #tpu.memory_space<vmem>>, vector<256x128xf32>,
    return
  }
  func.func @transform_0(%arg0: i32) -> (i32, i32) {
    %c0_i32 = arith.constant 0 : i32
    %c0_i32_0 = arith.constant 0 : i32
    return %arg0, %c0_i32 : i32, i32
  }
  func.func @transform_1(%arg0: i32) -> (i32, i32) {
    %c0_i32 = arith.constant 0 : i32
    %c0_i32_0 = arith.constant 0 : i32
    return %arg0, %c0_i32 : i32, i32
  }
  func.func @transform_2(%arg0: i32) -> (i32, i32) {
    %c0_i32 = arith.constant 0 : i32
    %c0_i32_0 = arith.constant 0 : i32
    %c0_i32_1 = arith.constant 0 : i32
    return %c0_i32, %c0_i32_0 : i32, i32
  }
  func.func @transform_3(%arg0: i32) -> (i32, i32) {
    %c0_i32 = arith.constant 0 : i32
    %c0_i32_0 = arith.constant 0 : i32
    %c0_i32_1 = arith.constant 0 : i32
    return %c0_i32, %c0_i32_0 : i32, i32
  }
  func.func @transform_4(%arg0: i32) -> (i32, i32) {
    %c0_i32 = arith.constant 0 : i32
    %c0_i32_0 = arith.constant 0 : i32
    return %arg0, %c0_i32 : i32, i32
  }
}

module attributes {stable_mosaic.version = 11 : i64} {
  func.func @_conv3x3_kernel(%arg0: i32, %arg1: memref<256x128xf32, #tpu.memory_space<vmem>>, %arg2: memref<9x128x128xf32, #tpu.memory_space<vmem>>, %arg3: memref<1x128xf32, #tpu.memory_space<vmem>>, %arg4: memref<1x128xf32, #tpu.memory_space<vmem>>, %arg5: memref<256x128xf32, #tpu.memory_space<vmem>>, %arg6: memref<1x8x128xf32, #tpu.memory_space<vmem>>, %arg7: memref<18x24x128xf32, #tpu.memory_space<vmem>>, %arg8: memref<256x128xf32, #tpu.memory_space<vmem>>) attributes {dimension_semantics = [#tpu.dimension_semantics<parallel>], iteration_bounds = array<i64: 2>, scalar_prefetch = 0 : i64, scratch_operands = 2 : i64, tpu.core_type = #tpu.core_type<tc>, window_params = [{transform_indices = @transform_0, window_bounds = array<i64: 256, 128>}, {pipeline_mode = #tpu.pipeline_mode<synchronous>, transform_indices = @transform_1, window_bounds = array<i64: 9, 128, 128>}, {pipeline_mode = #tpu.pipeline_mode<synchronous>, transform_indices = @transform_2, window_bounds = array<i64: 1, 128>}, {pipeline_mode = #tpu.pipeline_mode<synchronous>, transform_indices = @transform_3, window_bounds = array<i64: 1, 128>}, {transform_indices = @transform_4, window_bounds = array<i64: 256, 128>}, {transform_indices = @transform_5, window_bounds = array<i64: 1, 8, 128>}]} {
    %c0 = arith.constant 0 : index
    %c0_0 = arith.constant 0 : index
    %0 = vector.load %arg1[%c0, %c0_0] : memref<256x128xf32, #tpu.memory_space<vmem>>, vector<256x128xf32>
    %1 = vector.shape_cast %0 : vector<256x128xf32> to vector<16x16x128xf32>
    %c0_1 = arith.constant 0 : index
    %c0_2 = arith.constant 0 : index
    %2 = vector.load %arg3[%c0_1, %c0_2] : memref<1x128xf32, #tpu.memory_space<vmem>>, vector<1x128xf32>
    %3 = vector.shape_cast %2 : vector<1x128xf32> to vector<1x1x128xf32>
    %4 = vector.broadcast %3 : vector<1x1x128xf32> to vector<16x16x128xf32>
    %5 = arith.mulf %1, %4 : vector<16x16x128xf32>
    %c0_3 = arith.constant 0 : index
    %c0_4 = arith.constant 0 : index
    %6 = vector.load %arg4[%c0_3, %c0_4] : memref<1x128xf32, #tpu.memory_space<vmem>>, vector<1x128xf32>
    %7 = vector.shape_cast %6 : vector<1x128xf32> to vector<1x1x128xf32>
    %8 = vector.broadcast %7 : vector<1x1x128xf32> to vector<16x16x128xf32>
    %9 = arith.addf %5, %8 : vector<16x16x128xf32>
    %cst = arith.constant 0.000000e+00 : f32
    %10 = vector.broadcast %cst : f32 to vector<16x16x128xf32>
    %11 = arith.maximumf %9, %10 : vector<16x16x128xf32>
    %cst_5 = arith.constant 0.000000e+00 : f32
    %12 = vector.broadcast %cst_5 : f32 to vector<1x24x128xf32>
    %cst_6 = arith.constant 0.000000e+00 : f32
    %13 = vector.broadcast %cst_6 : f32 to vector<16x1x128xf32>
    %c0_7 = arith.constant 0 : index
    %c0_8 = arith.constant 0 : index
    %c0_9 = arith.constant 0 : index
    %14 = vector.load %arg7[%c0_7, %c0_8, %c0_9] : memref<18x24x128xf32, #tpu.memory_space<vmem>>, vector<1x24x128xf32>
    tpu.vector_store %arg7[%c0_7, %c0_8, %c0_9], %12 {strides = array<i32>} : memref<18x24x128xf32, #tpu.memory_space<vmem>>, vector<1x24x128xf32>,
    %c17 = arith.constant 17 : index
    %c0_10 = arith.constant 0 : index
    %c0_11 = arith.constant 0 : index
    %15 = vector.load %arg7[%c17, %c0_10, %c0_11] : memref<18x24x128xf32, #tpu.memory_space<vmem>>, vector<1x24x128xf32>
    tpu.vector_store %arg7[%c17, %c0_10, %c0_11], %12 {strides = array<i32>} : memref<18x24x128xf32, #tpu.memory_space<vmem>>, vector<1x24x128xf32>,
    %c1 = arith.constant 1 : index
    %c0_12 = arith.constant 0 : index
    %c0_13 = arith.constant 0 : index
    %16 = vector.load %arg7[%c1, %c0_12, %c0_13] : memref<18x24x128xf32, #tpu.memory_space<vmem>>, vector<16x1x128xf32>
    tpu.vector_store %arg7[%c1, %c0_12, %c0_13], %13 {strides = array<i32>} : memref<18x24x128xf32, #tpu.memory_space<vmem>>, vector<16x1x128xf32>,
    %c1_14 = arith.constant 1 : index
    %c17_15 = arith.constant 17 : index
    %c0_16 = arith.constant 0 : index
    %17 = vector.load %arg7[%c1_14, %c17_15, %c0_16] : memref<18x24x128xf32, #tpu.memory_space<vmem>>, vector<16x1x128xf32>
    tpu.vector_store %arg7[%c1_14, %c17_15, %c0_16], %13 {strides = array<i32>} : memref<18x24x128xf32, #tpu.memory_space<vmem>>, vector<16x1x128xf32>,
    %c1_17 = arith.constant 1 : index
    %c1_18 = arith.constant 1 : index
    %c0_19 = arith.constant 0 : index
    %18 = vector.load %arg7[%c1_17, %c1_18, %c0_19] : memref<18x24x128xf32, #tpu.memory_space<vmem>>, vector<16x16x128xf32>
    tpu.vector_store %arg7[%c1_17, %c1_18, %c0_19], %11 {strides = array<i32>} : memref<18x24x128xf32, #tpu.memory_space<vmem>>, vector<16x16x128xf32>,
    %c0_20 = arith.constant 0 : index
    %c0_21 = arith.constant 0 : index
    %c0_22 = arith.constant 0 : index
    %19 = vector.load %arg7[%c0_20, %c0_21, %c0_22] : memref<18x24x128xf32, #tpu.memory_space<vmem>>, vector<16x16x128xf32>
    %20 = vector.shape_cast %19 : vector<16x16x128xf32> to vector<256x128xf32>
    %c0_23 = arith.constant 0 : index
    %c0_24 = arith.constant 0 : index
    %c0_25 = arith.constant 0 : index
    %21 = vector.load %arg2[%c0_23, %c0_24, %c0_25] : memref<9x128x128xf32, #tpu.memory_space<vmem>>, vector<1x128x128xf32>
    %22 = vector.shape_cast %21 : vector<1x128x128xf32> to vector<128x128xf32>
    %cst_26 = arith.constant dense<0.000000e+00> : vector<256x128xf32>
    %23 = tpu.matmul %20, %22, %cst_26 {dimension_numbers = #tpu.dot_dimension_numbers<[1], [0], [0], [1], [0, 0, 1, 1], [], []>} : vector<256x128xf32>, vector<128x128xf32>, vector<256x128xf32> -> vector<256x128xf32>
    %c0_27 = arith.constant 0 : index
    %c0_28 = arith.constant 0 : index
    %24 = vector.load %arg8[%c0_27, %c0_28] : memref<256x128xf32, #tpu.memory_space<vmem>>, vector<256x128xf32>
    tpu.vector_store %arg8[%c0_27, %c0_28], %23 {strides = array<i32>} : memref<256x128xf32, #tpu.memory_space<vmem>>, vector<256x128xf32>,
    %c0_29 = arith.constant 0 : index
    %c1_30 = arith.constant 1 : index
    %c0_31 = arith.constant 0 : index
    %25 = vector.load %arg7[%c0_29, %c1_30, %c0_31] : memref<18x24x128xf32, #tpu.memory_space<vmem>>, vector<16x16x128xf32>
    %26 = vector.shape_cast %25 : vector<16x16x128xf32> to vector<256x128xf32>
    %c1_32 = arith.constant 1 : index
    %c0_33 = arith.constant 0 : index
    %c0_34 = arith.constant 0 : index
    %27 = vector.load %arg2[%c1_32, %c0_33, %c0_34] : memref<9x128x128xf32, #tpu.memory_space<vmem>>, vector<1x128x128xf32>
    %28 = vector.shape_cast %27 : vector<1x128x128xf32> to vector<128x128xf32>
    %cst_35 = arith.constant dense<0.000000e+00> : vector<256x128xf32>
    %29 = tpu.matmul %26, %28, %cst_35 {dimension_numbers = #tpu.dot_dimension_numbers<[1], [0], [0], [1], [0, 0, 1, 1], [], []>} : vector<256x128xf32>, vector<128x128xf32>, vector<256x128xf32> -> vector<256x128xf32>
    %c0_36 = arith.constant 0 : index
    %c0_37 = arith.constant 0 : index
    %30 = vector.load %arg8[%c0_36, %c0_37] : memref<256x128xf32, #tpu.memory_space<vmem>>, vector<256x128xf32>
    %31 = arith.addf %30, %29 : vector<256x128xf32>
    %c0_38 = arith.constant 0 : index
    %c0_39 = arith.constant 0 : index
    %32 = vector.load %arg8[%c0_38, %c0_39] : memref<256x128xf32, #tpu.memory_space<vmem>>, vector<256x128xf32>
    tpu.vector_store %arg8[%c0_38, %c0_39], %31 {strides = array<i32>} : memref<256x128xf32, #tpu.memory_space<vmem>>, vector<256x128xf32>,
    %c0_40 = arith.constant 0 : index
    %c2 = arith.constant 2 : index
    %c0_41 = arith.constant 0 : index
    %33 = vector.load %arg7[%c0_40, %c2, %c0_41] : memref<18x24x128xf32, #tpu.memory_space<vmem>>, vector<16x16x128xf32>
    %34 = vector.shape_cast %33 : vector<16x16x128xf32> to vector<256x128xf32>
    %c2_42 = arith.constant 2 : index
    %c0_43 = arith.constant 0 : index
    %c0_44 = arith.constant 0 : index
    %35 = vector.load %arg2[%c2_42, %c0_43, %c0_44] : memref<9x128x128xf32, #tpu.memory_space<vmem>>, vector<1x128x128xf32>
    %36 = vector.shape_cast %35 : vector<1x128x128xf32> to vector<128x128xf32>
    %cst_45 = arith.constant dense<0.000000e+00> : vector<256x128xf32>
    %37 = tpu.matmul %34, %36, %cst_45 {dimension_numbers = #tpu.dot_dimension_numbers<[1], [0], [0], [1], [0, 0, 1, 1], [], []>} : vector<256x128xf32>, vector<128x128xf32>, vector<256x128xf32> -> vector<256x128xf32>
    %c0_46 = arith.constant 0 : index
    %c0_47 = arith.constant 0 : index
    %38 = vector.load %arg8[%c0_46, %c0_47] : memref<256x128xf32, #tpu.memory_space<vmem>>, vector<256x128xf32>
    %39 = arith.addf %38, %37 : vector<256x128xf32>
    %c0_48 = arith.constant 0 : index
    %c0_49 = arith.constant 0 : index
    %40 = vector.load %arg8[%c0_48, %c0_49] : memref<256x128xf32, #tpu.memory_space<vmem>>, vector<256x128xf32>
    tpu.vector_store %arg8[%c0_48, %c0_49], %39 {strides = array<i32>} : memref<256x128xf32, #tpu.memory_space<vmem>>, vector<256x128xf32>,
    %c1_50 = arith.constant 1 : index
    %c0_51 = arith.constant 0 : index
    %c0_52 = arith.constant 0 : index
    %41 = vector.load %arg7[%c1_50, %c0_51, %c0_52] : memref<18x24x128xf32, #tpu.memory_space<vmem>>, vector<16x16x128xf32>
    %42 = vector.shape_cast %41 : vector<16x16x128xf32> to vector<256x128xf32>
    %c3 = arith.constant 3 : index
    %c0_53 = arith.constant 0 : index
    %c0_54 = arith.constant 0 : index
    %43 = vector.load %arg2[%c3, %c0_53, %c0_54] : memref<9x128x128xf32, #tpu.memory_space<vmem>>, vector<1x128x128xf32>
    %44 = vector.shape_cast %43 : vector<1x128x128xf32> to vector<128x128xf32>
    %cst_55 = arith.constant dense<0.000000e+00> : vector<256x128xf32>
    %45 = tpu.matmul %42, %44, %cst_55 {dimension_numbers = #tpu.dot_dimension_numbers<[1], [0], [0], [1], [0, 0, 1, 1], [], []>} : vector<256x128xf32>, vector<128x128xf32>, vector<256x128xf32> -> vector<256x128xf32>
    %c0_56 = arith.constant 0 : index
    %c0_57 = arith.constant 0 : index
    %46 = vector.load %arg8[%c0_56, %c0_57] : memref<256x128xf32, #tpu.memory_space<vmem>>, vector<256x128xf32>
    %47 = arith.addf %46, %45 : vector<256x128xf32>
    %c0_58 = arith.constant 0 : index
    %c0_59 = arith.constant 0 : index
    %48 = vector.load %arg8[%c0_58, %c0_59] : memref<256x128xf32, #tpu.memory_space<vmem>>, vector<256x128xf32>
    tpu.vector_store %arg8[%c0_58, %c0_59], %47 {strides = array<i32>} : memref<256x128xf32, #tpu.memory_space<vmem>>, vector<256x128xf32>,
    %c1_60 = arith.constant 1 : index
    %c1_61 = arith.constant 1 : index
    %c0_62 = arith.constant 0 : index
    %49 = vector.load %arg7[%c1_60, %c1_61, %c0_62] : memref<18x24x128xf32, #tpu.memory_space<vmem>>, vector<16x16x128xf32>
    %50 = vector.shape_cast %49 : vector<16x16x128xf32> to vector<256x128xf32>
    %c4 = arith.constant 4 : index
    %c0_63 = arith.constant 0 : index
    %c0_64 = arith.constant 0 : index
    %51 = vector.load %arg2[%c4, %c0_63, %c0_64] : memref<9x128x128xf32, #tpu.memory_space<vmem>>, vector<1x128x128xf32>
    %52 = vector.shape_cast %51 : vector<1x128x128xf32> to vector<128x128xf32>
    %cst_65 = arith.constant dense<0.000000e+00> : vector<256x128xf32>
    %53 = tpu.matmul %50, %52, %cst_65 {dimension_numbers = #tpu.dot_dimension_numbers<[1], [0], [0], [1], [0, 0, 1, 1], [], []>} : vector<256x128xf32>, vector<128x128xf32>, vector<256x128xf32> -> vector<256x128xf32>
    %c0_66 = arith.constant 0 : index
    %c0_67 = arith.constant 0 : index
    %54 = vector.load %arg8[%c0_66, %c0_67] : memref<256x128xf32, #tpu.memory_space<vmem>>, vector<256x128xf32>
    %55 = arith.addf %54, %53 : vector<256x128xf32>
    %c0_68 = arith.constant 0 : index
    %c0_69 = arith.constant 0 : index
    %56 = vector.load %arg8[%c0_68, %c0_69] : memref<256x128xf32, #tpu.memory_space<vmem>>, vector<256x128xf32>
    tpu.vector_store %arg8[%c0_68, %c0_69], %55 {strides = array<i32>} : memref<256x128xf32, #tpu.memory_space<vmem>>, vector<256x128xf32>,
    %c1_70 = arith.constant 1 : index
    %c2_71 = arith.constant 2 : index
    %c0_72 = arith.constant 0 : index
    %57 = vector.load %arg7[%c1_70, %c2_71, %c0_72] : memref<18x24x128xf32, #tpu.memory_space<vmem>>, vector<16x16x128xf32>
    %58 = vector.shape_cast %57 : vector<16x16x128xf32> to vector<256x128xf32>
    %c5 = arith.constant 5 : index
    %c0_73 = arith.constant 0 : index
    %c0_74 = arith.constant 0 : index
    %59 = vector.load %arg2[%c5, %c0_73, %c0_74] : memref<9x128x128xf32, #tpu.memory_space<vmem>>, vector<1x128x128xf32>
    %60 = vector.shape_cast %59 : vector<1x128x128xf32> to vector<128x128xf32>
    %cst_75 = arith.constant dense<0.000000e+00> : vector<256x128xf32>
    %61 = tpu.matmul %58, %60, %cst_75 {dimension_numbers = #tpu.dot_dimension_numbers<[1], [0], [0], [1], [0, 0, 1, 1], [], []>} : vector<256x128xf32>, vector<128x128xf32>, vector<256x128xf32> -> vector<256x128xf32>
    %c0_76 = arith.constant 0 : index
    %c0_77 = arith.constant 0 : index
    %62 = vector.load %arg8[%c0_76, %c0_77] : memref<256x128xf32, #tpu.memory_space<vmem>>, vector<256x128xf32>
    %63 = arith.addf %62, %61 : vector<256x128xf32>
    %c0_78 = arith.constant 0 : index
    %c0_79 = arith.constant 0 : index
    %64 = vector.load %arg8[%c0_78, %c0_79] : memref<256x128xf32, #tpu.memory_space<vmem>>, vector<256x128xf32>
    tpu.vector_store %arg8[%c0_78, %c0_79], %63 {strides = array<i32>} : memref<256x128xf32, #tpu.memory_space<vmem>>, vector<256x128xf32>,
    %c2_80 = arith.constant 2 : index
    %c0_81 = arith.constant 0 : index
    %c0_82 = arith.constant 0 : index
    %65 = vector.load %arg7[%c2_80, %c0_81, %c0_82] : memref<18x24x128xf32, #tpu.memory_space<vmem>>, vector<16x16x128xf32>
    %66 = vector.shape_cast %65 : vector<16x16x128xf32> to vector<256x128xf32>
    %c6 = arith.constant 6 : index
    %c0_83 = arith.constant 0 : index
    %c0_84 = arith.constant 0 : index
    %67 = vector.load %arg2[%c6, %c0_83, %c0_84] : memref<9x128x128xf32, #tpu.memory_space<vmem>>, vector<1x128x128xf32>
    %68 = vector.shape_cast %67 : vector<1x128x128xf32> to vector<128x128xf32>
    %cst_85 = arith.constant dense<0.000000e+00> : vector<256x128xf32>
    %69 = tpu.matmul %66, %68, %cst_85 {dimension_numbers = #tpu.dot_dimension_numbers<[1], [0], [0], [1], [0, 0, 1, 1], [], []>} : vector<256x128xf32>, vector<128x128xf32>, vector<256x128xf32> -> vector<256x128xf32>
    %c0_86 = arith.constant 0 : index
    %c0_87 = arith.constant 0 : index
    %70 = vector.load %arg8[%c0_86, %c0_87] : memref<256x128xf32, #tpu.memory_space<vmem>>, vector<256x128xf32>
    %71 = arith.addf %70, %69 : vector<256x128xf32>
    %c0_88 = arith.constant 0 : index
    %c0_89 = arith.constant 0 : index
    %72 = vector.load %arg8[%c0_88, %c0_89] : memref<256x128xf32, #tpu.memory_space<vmem>>, vector<256x128xf32>
    tpu.vector_store %arg8[%c0_88, %c0_89], %71 {strides = array<i32>} : memref<256x128xf32, #tpu.memory_space<vmem>>, vector<256x128xf32>,
    %c2_90 = arith.constant 2 : index
    %c1_91 = arith.constant 1 : index
    %c0_92 = arith.constant 0 : index
    %73 = vector.load %arg7[%c2_90, %c1_91, %c0_92] : memref<18x24x128xf32, #tpu.memory_space<vmem>>, vector<16x16x128xf32>
    %74 = vector.shape_cast %73 : vector<16x16x128xf32> to vector<256x128xf32>
    %c7 = arith.constant 7 : index
    %c0_93 = arith.constant 0 : index
    %c0_94 = arith.constant 0 : index
    %75 = vector.load %arg2[%c7, %c0_93, %c0_94] : memref<9x128x128xf32, #tpu.memory_space<vmem>>, vector<1x128x128xf32>
    %76 = vector.shape_cast %75 : vector<1x128x128xf32> to vector<128x128xf32>
    %cst_95 = arith.constant dense<0.000000e+00> : vector<256x128xf32>
    %77 = tpu.matmul %74, %76, %cst_95 {dimension_numbers = #tpu.dot_dimension_numbers<[1], [0], [0], [1], [0, 0, 1, 1], [], []>} : vector<256x128xf32>, vector<128x128xf32>, vector<256x128xf32> -> vector<256x128xf32>
    %c0_96 = arith.constant 0 : index
    %c0_97 = arith.constant 0 : index
    %78 = vector.load %arg8[%c0_96, %c0_97] : memref<256x128xf32, #tpu.memory_space<vmem>>, vector<256x128xf32>
    %79 = arith.addf %78, %77 : vector<256x128xf32>
    %c0_98 = arith.constant 0 : index
    %c0_99 = arith.constant 0 : index
    %80 = vector.load %arg8[%c0_98, %c0_99] : memref<256x128xf32, #tpu.memory_space<vmem>>, vector<256x128xf32>
    tpu.vector_store %arg8[%c0_98, %c0_99], %79 {strides = array<i32>} : memref<256x128xf32, #tpu.memory_space<vmem>>, vector<256x128xf32>,
    %c2_100 = arith.constant 2 : index
    %c2_101 = arith.constant 2 : index
    %c0_102 = arith.constant 0 : index
    %81 = vector.load %arg7[%c2_100, %c2_101, %c0_102] : memref<18x24x128xf32, #tpu.memory_space<vmem>>, vector<16x16x128xf32>
    %82 = vector.shape_cast %81 : vector<16x16x128xf32> to vector<256x128xf32>
    %c8 = arith.constant 8 : index
    %c0_103 = arith.constant 0 : index
    %c0_104 = arith.constant 0 : index
    %83 = vector.load %arg2[%c8, %c0_103, %c0_104] : memref<9x128x128xf32, #tpu.memory_space<vmem>>, vector<1x128x128xf32>
    %84 = vector.shape_cast %83 : vector<1x128x128xf32> to vector<128x128xf32>
    %cst_105 = arith.constant dense<0.000000e+00> : vector<256x128xf32>
    %85 = tpu.matmul %82, %84, %cst_105 {dimension_numbers = #tpu.dot_dimension_numbers<[1], [0], [0], [1], [0, 0, 1, 1], [], []>} : vector<256x128xf32>, vector<128x128xf32>, vector<256x128xf32> -> vector<256x128xf32>
    %c0_106 = arith.constant 0 : index
    %c0_107 = arith.constant 0 : index
    %86 = vector.load %arg8[%c0_106, %c0_107] : memref<256x128xf32, #tpu.memory_space<vmem>>, vector<256x128xf32>
    %87 = arith.addf %86, %85 : vector<256x128xf32>
    %c0_108 = arith.constant 0 : index
    %c0_109 = arith.constant 0 : index
    %88 = vector.load %arg8[%c0_108, %c0_109] : memref<256x128xf32, #tpu.memory_space<vmem>>, vector<256x128xf32>
    tpu.vector_store %arg8[%c0_108, %c0_109], %87 {strides = array<i32>} : memref<256x128xf32, #tpu.memory_space<vmem>>, vector<256x128xf32>,
    %c0_110 = arith.constant 0 : index
    %c0_111 = arith.constant 0 : index
    %89 = vector.load %arg8[%c0_110, %c0_111] : memref<256x128xf32, #tpu.memory_space<vmem>>, vector<256x128xf32>
    %c0_112 = arith.constant 0 : index
    %c0_113 = arith.constant 0 : index
    %90 = vector.load %arg5[%c0_112, %c0_113] : memref<256x128xf32, #tpu.memory_space<vmem>>, vector<256x128xf32>
    tpu.vector_store %arg5[%c0_112, %c0_113], %89 {strides = array<i32>} : memref<256x128xf32, #tpu.memory_space<vmem>>, vector<256x128xf32>,
    %cst_114 = arith.constant dense<0.000000e+00> : vector<128xf32>
    %91 = vector.multi_reduction <add>, %89, %cst_114 [0] : vector<256x128xf32> to vector<128xf32>
    %92 = vector.shape_cast %91 : vector<128xf32> to vector<1x128xf32>
    %93 = vector.shape_cast %92 : vector<1x128xf32> to vector<1x1x128xf32>
    %c0_115 = arith.constant 0 : index
    %c0_116 = arith.constant 0 : index
    %c0_117 = arith.constant 0 : index
    %94 = vector.load %arg6[%c0_115, %c0_116, %c0_117] : memref<1x8x128xf32, #tpu.memory_space<vmem>>, vector<1x1x128xf32>
    tpu.vector_store %arg6[%c0_115, %c0_116, %c0_117], %93 {strides = array<i32>} : memref<1x8x128xf32, #tpu.memory_space<vmem>>, vector<1x1x128xf32>,
    %95 = arith.mulf %89, %89 : vector<256x128xf32>
    %cst_118 = arith.constant dense<0.000000e+00> : vector<128xf32>
    %96 = vector.multi_reduction <add>, %95, %cst_118 [0] : vector<256x128xf32> to vector<128xf32>
    %97 = vector.shape_cast %96 : vector<128xf32> to vector<1x128xf32>
    %98 = vector.shape_cast %97 : vector<1x128xf32> to vector<1x1x128xf32>
    %c0_119 = arith.constant 0 : index
    %c1_120 = arith.constant 1 : index
    %c0_121 = arith.constant 0 : index
    %99 = vector.load %arg6[%c0_119, %c1_120, %c0_121] : memref<1x8x128xf32, #tpu.memory_space<vmem>>, vector<1x1x128xf32>
    tpu.vector_store %arg6[%c0_119, %c1_120, %c0_121], %98 {strides = array<i32>} : memref<1x8x128xf32, #tpu.memory_space<vmem>>, vector<1x1x128xf32>,
    return
  }
  func.func @transform_0(%arg0: i32) -> (i32, i32) {
    %c0_i32 = arith.constant 0 : i32
    %c0_i32_0 = arith.constant 0 : i32
    return %arg0, %c0_i32 : i32, i32
  }
  func.func @transform_1(%arg0: i32) -> (i32, i32, i32) {
    %c0_i32 = arith.constant 0 : i32
    %c0_i32_0 = arith.constant 0 : i32
    %c0_i32_1 = arith.constant 0 : i32
    %c0_i32_2 = arith.constant 0 : i32
    return %c0_i32, %c0_i32_0, %c0_i32_1 : i32, i32, i32
  }
  func.func @transform_2(%arg0: i32) -> (i32, i32) {
    %c0_i32 = arith.constant 0 : i32
    %c0_i32_0 = arith.constant 0 : i32
    %c0_i32_1 = arith.constant 0 : i32
    return %c0_i32, %c0_i32_0 : i32, i32
  }
  func.func @transform_3(%arg0: i32) -> (i32, i32) {
    %c0_i32 = arith.constant 0 : i32
    %c0_i32_0 = arith.constant 0 : i32
    %c0_i32_1 = arith.constant 0 : i32
    return %c0_i32, %c0_i32_0 : i32, i32
  }
  func.func @transform_4(%arg0: i32) -> (i32, i32) {
    %c0_i32 = arith.constant 0 : i32
    %c0_i32_0 = arith.constant 0 : i32
    return %arg0, %c0_i32 : i32, i32
  }
  func.func @transform_5(%arg0: i32) -> (i32, i32, i32) {
    %c0_i32 = arith.constant 0 : i32
    %c0_i32_0 = arith.constant 0 : i32
    %c0_i32_1 = arith.constant 0 : i32
    return %arg0, %c0_i32, %c0_i32_0 : i32, i32, i32
  }
}

module attributes {stable_mosaic.version = 11 : i64} {
  func.func @_pw_conv_kernel(%arg0: i32, %arg1: memref<256x128xf32, #tpu.memory_space<vmem>>, %arg2: memref<128x128xf32, #tpu.memory_space<vmem>>, %arg3: memref<1x128xf32, #tpu.memory_space<vmem>>, %arg4: memref<1x128xf32, #tpu.memory_space<vmem>>, %arg5: memref<256x128xf32, #tpu.memory_space<vmem>>, %arg6: memref<1x8x128xf32, #tpu.memory_space<vmem>>) attributes {dimension_semantics = [#tpu.dimension_semantics<parallel>], iteration_bounds = array<i64: 2>, scalar_prefetch = 0 : i64, scratch_operands = 0 : i64, tpu.core_type = #tpu.core_type<tc>, window_params = [{transform_indices = @transform_0, window_bounds = array<i64: 256, 128>}, {pipeline_mode = #tpu.pipeline_mode<synchronous>, transform_indices = @transform_1, window_bounds = array<i64: 128, 128>}, {pipeline_mode = #tpu.pipeline_mode<synchronous>, transform_indices = @transform_2, window_bounds = array<i64: 1, 128>}, {pipeline_mode = #tpu.pipeline_mode<synchronous>, transform_indices = @transform_3, window_bounds = array<i64: 1, 128>}, {transform_indices = @transform_4, window_bounds = array<i64: 256, 128>}, {transform_indices = @transform_5, window_bounds = array<i64: 1, 8, 128>}]} {
    %c0 = arith.constant 0 : index
    %c0_0 = arith.constant 0 : index
    %0 = vector.load %arg1[%c0, %c0_0] : memref<256x128xf32, #tpu.memory_space<vmem>>, vector<256x128xf32>
    %c0_1 = arith.constant 0 : index
    %c0_2 = arith.constant 0 : index
    %1 = vector.load %arg3[%c0_1, %c0_2] : memref<1x128xf32, #tpu.memory_space<vmem>>, vector<1x128xf32>
    %2 = vector.broadcast %1 : vector<1x128xf32> to vector<256x128xf32>
    %3 = arith.mulf %0, %2 : vector<256x128xf32>
    %c0_3 = arith.constant 0 : index
    %c0_4 = arith.constant 0 : index
    %4 = vector.load %arg4[%c0_3, %c0_4] : memref<1x128xf32, #tpu.memory_space<vmem>>, vector<1x128xf32>
    %5 = vector.broadcast %4 : vector<1x128xf32> to vector<256x128xf32>
    %6 = arith.addf %3, %5 : vector<256x128xf32>
    %cst = arith.constant 0.000000e+00 : f32
    %7 = vector.broadcast %cst : f32 to vector<256x128xf32>
    %8 = arith.maximumf %6, %7 : vector<256x128xf32>
    %c0_5 = arith.constant 0 : index
    %c0_6 = arith.constant 0 : index
    %9 = vector.load %arg2[%c0_5, %c0_6] : memref<128x128xf32, #tpu.memory_space<vmem>>, vector<128x128xf32>
    %cst_7 = arith.constant dense<0.000000e+00> : vector<256x128xf32>
    %10 = tpu.matmul %8, %9, %cst_7 {dimension_numbers = #tpu.dot_dimension_numbers<[1], [0], [0], [1], [0, 0, 1, 1], [], []>} : vector<256x128xf32>, vector<128x128xf32>, vector<256x128xf32> -> vector<256x128xf32>
    %c0_8 = arith.constant 0 : index
    %c0_9 = arith.constant 0 : index
    %11 = vector.load %arg5[%c0_8, %c0_9] : memref<256x128xf32, #tpu.memory_space<vmem>>, vector<256x128xf32>
    tpu.vector_store %arg5[%c0_8, %c0_9], %10 {strides = array<i32>} : memref<256x128xf32, #tpu.memory_space<vmem>>, vector<256x128xf32>,
    %cst_10 = arith.constant dense<0.000000e+00> : vector<128xf32>
    %12 = vector.multi_reduction <add>, %10, %cst_10 [0] : vector<256x128xf32> to vector<128xf32>
    %13 = vector.shape_cast %12 : vector<128xf32> to vector<1x128xf32>
    %14 = vector.shape_cast %13 : vector<1x128xf32> to vector<1x1x128xf32>
    %c0_11 = arith.constant 0 : index
    %c0_12 = arith.constant 0 : index
    %c0_13 = arith.constant 0 : index
    %15 = vector.load %arg6[%c0_11, %c0_12, %c0_13] : memref<1x8x128xf32, #tpu.memory_space<vmem>>, vector<1x1x128xf32>
    tpu.vector_store %arg6[%c0_11, %c0_12, %c0_13], %14 {strides = array<i32>} : memref<1x8x128xf32, #tpu.memory_space<vmem>>, vector<1x1x128xf32>,
    %16 = arith.mulf %10, %10 : vector<256x128xf32>
    %cst_14 = arith.constant dense<0.000000e+00> : vector<128xf32>
    %17 = vector.multi_reduction <add>, %16, %cst_14 [0] : vector<256x128xf32> to vector<128xf32>
    %18 = vector.shape_cast %17 : vector<128xf32> to vector<1x128xf32>
    %19 = vector.shape_cast %18 : vector<1x128xf32> to vector<1x1x128xf32>
    %c0_15 = arith.constant 0 : index
    %c1 = arith.constant 1 : index
    %c0_16 = arith.constant 0 : index
    %20 = vector.load %arg6[%c0_15, %c1, %c0_16] : memref<1x8x128xf32, #tpu.memory_space<vmem>>, vector<1x1x128xf32>
    tpu.vector_store %arg6[%c0_15, %c1, %c0_16], %19 {strides = array<i32>} : memref<1x8x128xf32, #tpu.memory_space<vmem>>, vector<1x1x128xf32>,
    return
  }
  func.func @transform_0(%arg0: i32) -> (i32, i32) {
    %c0_i32 = arith.constant 0 : i32
    %c0_i32_0 = arith.constant 0 : i32
    return %arg0, %c0_i32 : i32, i32
  }
  func.func @transform_1(%arg0: i32) -> (i32, i32) {
    %c0_i32 = arith.constant 0 : i32
    %c0_i32_0 = arith.constant 0 : i32
    %c0_i32_1 = arith.constant 0 : i32
    return %c0_i32, %c0_i32_0 : i32, i32
  }
  func.func @transform_2(%arg0: i32) -> (i32, i32) {
    %c0_i32 = arith.constant 0 : i32
    %c0_i32_0 = arith.constant 0 : i32
    %c0_i32_1 = arith.constant 0 : i32
    return %c0_i32, %c0_i32_0 : i32, i32
  }
  func.func @transform_3(%arg0: i32) -> (i32, i32) {
    %c0_i32 = arith.constant 0 : i32
    %c0_i32_0 = arith.constant 0 : i32
    %c0_i32_1 = arith.constant 0 : i32
    return %c0_i32, %c0_i32_0 : i32, i32
  }
  func.func @transform_4(%arg0: i32) -> (i32, i32) {
    %c0_i32 = arith.constant 0 : i32
    %c0_i32_0 = arith.constant 0 : i32
    return %arg0, %c0_i32 : i32, i32
  }
  func.func @transform_5(%arg0: i32) -> (i32, i32, i32) {
    %c0_i32 = arith.constant 0 : i32
    %c0_i32_0 = arith.constant 0 : i32
    %c0_i32_1 = arith.constant 0 : i32
    return %arg0, %c0_i32, %c0_i32_0 : i32, i32, i32
  }
}

</mosaic_0001>

<llo_original>
// kernel: bottleneck_forward.7
$region0: #{bottleneck_forward.7}
  #allocation0 [shape = 'u32[]', space=smem, size = 0x4, offset = 0x4, fixed_abs, tag = 'smem constant byte address 0x4 - core index']
  #allocation1 [shape = 'u32[144,128]{1,0:T(1,128)}', space=vmem, size = 0x12000, scoped, tag = 'internal scratch']
  %s0 = inlined_call_operand.vmem [shape: f32[512,128], index: 0, kind: input, shape index: {}]
  %s1 = inlined_call_operand.vmem [shape: f32[512,128], index: 1, kind: input, shape index: {}, may-alias: {1,4}]
  %s2 = inlined_call_operand.vmem [shape: f32[1,128], index: 2, kind: input, shape index: {}]
  %s3 = inlined_call_operand.vmem [shape: f32[1,128], index: 3, kind: input, shape index: {}]
  %s4 = inlined_call_operand.vmem [shape: f32[512,128], index: 4, kind: output, shape index: {}, may-alias: {1,4}]
  %s5 = sld [smem:[#allocation0]]
  $region49: #{bottleneck_forward.7} parent=0
    _
  %s7 = ssub.s32 1, %s5
  %s8 = scalar_select 0, %s7, %s5
  loop: start=0, step=1, limit=4
  $region2: #{bottleneck_forward.7} parent=0 // loop_pre_header
    _
  $region3: #{bottleneck_forward.7} parent=0 // loop_header
    %s10 = sphi 0, %s14
    %p11 = scmp.ge.s32.totalorder %s10, 4
    %s20 = sphi 0, %s22
    %s23 = sphi 0, %s20
    %s24 = sphi 0, %s23
    %s40 = sphi 0, %s24
    %s46 = sphi 0, %s48
    %s49 = sphi 0, %s46
    %s50 = sphi 0, %s49
    %s66 = sphi 0, %s50
    %s70 = sphi 0, %s70
    %s72 = sphi 0, %s70
    %s73 = sphi 0, %s72
    %s87 = sphi 0, %s73
    %s91 = sphi 0, %s91
    %s93 = sphi 0, %s91
    %s94 = sphi 0, %s93
    %s108 = sphi 0, %s94
    %s114 = sphi 0, %s116
    %s117 = sphi 0, %s114
    %s118 = sphi 0, %s117
    %s134 = sphi 0, %s118
  $region4: #{bottleneck_forward.7} parent=0 // loop_header_branch
    %13 = sbr.rel (%p11) target = $region8
  $region5: #{bottleneck_forward.7} parent=0 // loop_body
    %s15 = ssub.s32 %s10, 1
    %s16 = ssub.s32 %s10, 2
    %s17 = sadd.s32 %s10, 1
    %s18 = ssub.s32 %s10, %s17
    %p19 = scmp.eq.s32.totalorder %s18, 0
    %s21 = sadd.s32 %s20, 1
    %s22 = scalar_select %p19, %s20, %s21
    %p25 = pneg %p19
    %p26 = scmp.eq.s32.totalorder %s10, 1
    %p27 = por %p25, %p26
    %p28 = scmp.ne.s32.totalorder %s20, %s23
    %p29 = scmp.eq.s32.totalorder %s10, 0
    %p30 = por %p28, %p29
    %p31 = scmp.ne.s32.totalorder %s20, %s23
    %p32 = scmp.eq.s32.totalorder %s15, 1
    %p33 = por %p31, %p32
    %p34 = scmp.ne.s32.totalorder %s23, %s24
    %p35 = scmp.eq.s32.totalorder %s15, 0
    %p36 = por %p34, %p35
    %p37 = scmp.ne.s32.totalorder %s23, %s24
    %p38 = scmp.eq.s32.totalorder %s16, 1
    %p39 = por %p37, %p38
    %p41 = scmp.ne.s32.totalorder %s24, %s40
    %p42 = scmp.eq.s32.totalorder %s16, 0
    %p43 = por %p41, %p42
    %s44 = ssub.s32 %s10, %s17
    %p45 = scmp.eq.s32.totalorder %s44, 0
    %s47 = sadd.s32 %s46, 1
    %s48 = scalar_select %p45, %s46, %s47
    %p51 = pneg %p45
    %p52 = scmp.eq.s32.totalorder %s10, 1
    %p53 = por %p51, %p52
    %p54 = scmp.ne.s32.totalorder %s46, %s49
    %p55 = scmp.eq.s32.totalorder %s10, 0
    %p56 = por %p54, %p55
    %p57 = scmp.ne.s32.totalorder %s46, %s49
    %p58 = scmp.eq.s32.totalorder %s15, 1
    %p59 = por %p57, %p58
    %p60 = scmp.ne.s32.totalorder %s49, %s50
    %p61 = scmp.eq.s32.totalorder %s15, 0
    %p62 = por %p60, %p61
    %p63 = scmp.ne.s32.totalorder %s49, %s50
    %p64 = scmp.eq.s32.totalorder %s16, 1
    %p65 = por %p63, %p64
    %p67 = scmp.ne.s32.totalorder %s50, %s66
    %p68 = scmp.eq.s32.totalorder %s16, 0
    %p69 = por %p67, %p68
    %s71 = sadd.s32 %s70, 1
    %p74 = scmp.eq.s32.totalorder %s10, 1
    %p75 = scmp.ne.s32.totalorder %s70, %s72
    %p76 = scmp.eq.s32.totalorder %s10, 0
    %p77 = por %p75, %p76
    %p78 = scmp.ne.s32.totalorder %s70, %s72
    %p79 = scmp.eq.s32.totalorder %s15, 1
    %p80 = por %p78, %p79
    %p81 = scmp.ne.s32.totalorder %s72, %s73
    %p82 = scmp.eq.s32.totalorder %s15, 0
    %p83 = por %p81, %p82
    %p84 = scmp.ne.s32.totalorder %s72, %s73
    %p85 = scmp.eq.s32.totalorder %s16, 1
    %p86 = por %p84, %p85
    %p88 = scmp.ne.s32.totalorder %s73, %s87
    %p89 = scmp.eq.s32.totalorder %s16, 0
    %p90 = por %p88, %p89
    %s92 = sadd.s32 %s91, 1
    %p95 = scmp.eq.s32.totalorder %s10, 1
    %p96 = scmp.ne.s32.totalorder %s91, %s93
    %p97 = scmp.eq.s32.totalorder %s10, 0
    %p98 = por %p96, %p97
    %p99 = scmp.ne.s32.totalorder %s91, %s93
    %p100 = scmp.eq.s32.totalorder %s15, 1
    %p101 = por %p99, %p100
    %p102 = scmp.ne.s32.totalorder %s93, %s94
    %p103 = scmp.eq.s32.totalorder %s15, 0
    %p104 = por %p102, %p103
    %p105 = scmp.ne.s32.totalorder %s93, %s94
    %p106 = scmp.eq.s32.totalorder %s16, 1
    %p107 = por %p105, %p106
    %p109 = scmp.ne.s32.totalorder %s94, %s108
    %p110 = scmp.eq.s32.totalorder %s16, 0
    %p111 = por %p109, %p110
    %s112 = ssub.s32 %s10, %s17
    %p113 = scmp.eq.s32.totalorder %s112, 0
    %s115 = sadd.s32 %s114, 1
    %s116 = scalar_select %p113, %s114, %s115
    %p119 = pneg %p113
    %p120 = scmp.eq.s32.totalorder %s10, 1
    %p121 = por %p119, %p120
    %p122 = scmp.ne.s32.totalorder %s114, %s117
    %p123 = scmp.eq.s32.totalorder %s10, 0
    %p124 = por %p122, %p123
    %p125 = scmp.ne.s32.totalorder %s114, %s117
    %p126 = scmp.eq.s32.totalorder %s15, 1
    %p127 = por %p125, %p126
    %p128 = scmp.ne.s32.totalorder %s117, %s118
    %p129 = scmp.eq.s32.totalorder %s15, 0
    %p130 = por %p128, %p129
    %p131 = scmp.ne.s32.totalorder %s117, %s118
    %p132 = scmp.eq.s32.totalorder %s16, 1
    %p133 = por %p131, %p132
    %p135 = scmp.ne.s32.totalorder %s118, %s134
    %p136 = scmp.eq.s32.totalorder %s16, 0
    %p137 = por %p135, %p136
    %p138 = scmp.le.s32.totalorder 1, %s10
    %p139 = scmp.lt.s32.totalorder %s10, 3
    %p140 = pnand %p138, %p139
    %p141 = pneg %p140
    // Predicated region
    $region9: #{bottleneck_forward.7} parent=5 // pred_check
      _
    $region10: #{bottleneck_forward.7} parent=5 // pred_check_branch
      %143 = sbr.rel (%p140) target = $region12
    $region11: #{bottleneck_forward.7} parent=5 // pred_region
      %s144 = ssub.s32 %s10, 1
      // Predicated region
      $region13: #{bottleneck_forward.7} parent=11 // pred_check
        %p145 = pneg %p83
      $region14: #{bottleneck_forward.7} parent=11 // pred_check_branch
        %147 = sbr.rel (%p145) target = $region16
      $region15: #{bottleneck_forward.7} parent=11 // pred_region
        _
      $region16: #{bottleneck_forward.7} parent=11 // pred_fallthru
        _
      // Predicated region
      $region17: #{bottleneck_forward.7} parent=11 // pred_check
        %p148 = pneg %p104
      $region18: #{bottleneck_forward.7} parent=11 // pred_check_branch
        %150 = sbr.rel (%p148) target = $region20
      $region19: #{bottleneck_forward.7} parent=11 // pred_region
        _
      $region20: #{bottleneck_forward.7} parent=11 // pred_fallthru
        _
    $region12: #{bottleneck_forward.7} parent=5 // pred_fallthru
      _
    %p151 = scmp.lt.s32.totalorder %s10, 2
    // Predicated region
    $region21: #{bottleneck_forward.7} parent=5 // pred_check
      %p152 = pneg %p151
    $region22: #{bottleneck_forward.7} parent=5 // pred_check_branch
      %154 = sbr.rel (%p152) target = $region24
    $region23: #{bottleneck_forward.7} parent=5 // pred_region
      // Predicated region
      $region25: #{bottleneck_forward.7} parent=23 // pred_check
        %p155 = pneg %p30
      $region26: #{bottleneck_forward.7} parent=23 // pred_check_branch
        %157 = sbr.rel (%p155) target = $region28
      $region27: #{bottleneck_forward.7} parent=23 // pred_region
        %s158 = smul.u32 32, %s10
        %p159 = scmp.lt.s32.totalorder %s158, 63
        %s160 = scalar_select %p159, %s158, 63
        %s161 = smul.addr %s160, 8
        %s162 = scalar_lea.vmem %s0, %s161
        %s163 = smul.u32 32, %s10
      $region28: #{bottleneck_forward.7} parent=23 // pred_fallthru
        _
      // Predicated region
      $region29: #{bottleneck_forward.7} parent=23 // pred_check
        %p164 = pneg %p56
      $region30: #{bottleneck_forward.7} parent=23 // pred_check_branch
        %166 = sbr.rel (%p164) target = $region32
      $region31: #{bottleneck_forward.7} parent=23 // pred_region
        %s167 = smul.u32 32, %s10
        %p168 = scmp.lt.s32.totalorder %s167, 63
        %s169 = scalar_select %p168, %s167, 63
        %s170 = smul.addr %s169, 8
        %s171 = scalar_lea.vmem %s1, %s170
        %s172 = smul.u32 32, %s10
      $region32: #{bottleneck_forward.7} parent=23 // pred_fallthru
        _
    $region24: #{bottleneck_forward.7} parent=5 // pred_fallthru
      _
    %p173 = scmp.le.s32.totalorder 1, %s10
    %p174 = scmp.lt.s32.totalorder %s10, 3
    %p175 = pnand %p173, %p174
    %p176 = pneg %p175
    // Predicated region
    $region33: #{bottleneck_forward.7} parent=5 // pred_check
      _
    $region34: #{bottleneck_forward.7} parent=5 // pred_check_branch
      %178 = sbr.rel (%p175) target = $region36
    $region35: #{bottleneck_forward.7} parent=5 // pred_region
      %s179 = ssub.s32 %s10, 1
      %s180 = smul.u32 32, %s15
      %p181 = scmp.lt.s32.totalorder %s180, 63
      %s182 = scalar_select %p181, %s180, 63
      %s183 = smul.addr %s182, 8
      %s184 = scalar_lea.vmem %s0, %s183
      %p185 = pneg %p36
      %p186 = pneg %p33
      %s187 = smul.u32 32, %s15
      %p188 = scmp.lt.s32.totalorder %s187, 63
      %s189 = scalar_select %p188, %s187, 63
      %s190 = smul.addr %s189, 8
      %s191 = scalar_lea.vmem %s1, %s190
      %p192 = pneg %p62
      %p193 = pneg %p59
      %p194 = pneg %p83
      %p195 = pneg %p80
      %p196 = pneg %p104
      %p197 = pneg %p101
      %p198 = pneg %p130
      %p199 = pneg %p127
      %s200 = smul.u32 32, %s15
      %p201 = scmp.lt.s32.totalorder %s200, 63
      %s202 = scalar_select %p201, %s200, 63
      %s203 = smul.addr %s202, 8
      %s204 = scalar_lea.vmem %s4, %s203
      %s205 = smul.u32 32, %s15
      %p206 = scmp.lt.s32.totalorder %s205, 63
      %s207 = scalar_select %p206, %s205, 63
      %s208 = smul.addr %s207, 8
      %s209 = scalar_lea.vmem %s0, %s208
      %s210 = smul.u32 32, %s15
      %s211 = smul.u32 32, %s15
      %p212 = scmp.lt.s32.totalorder %s211, 63
      %s213 = scalar_select %p212, %s211, 63
      %s214 = smul.addr %s213, 8
      %s215 = scalar_lea.vmem %s1, %s214
      %s216 = smul.u32 32, %s15
      %s217 = smul.u32 32, %s15
      %p218 = scmp.lt.s32.totalorder %s217, 63
      %s219 = scalar_select %p218, %s217, 63
      %s220 = smul.addr %s219, 8
      %s221 = scalar_lea.vmem %s4, %s220
      %s222 = smul.u32 32, %s15
      %v223 = vld [vmem:[%s209] sm:$0xff]
      %v224 = vld [vmem:[%s209 + $0x8] sm:$0xff]
      %v225 = vld [vmem:[%s209 + $0x10] sm:$0xff]
      %v226 = vld [vmem:[%s209 + $0x18] sm:$0xff]
      %v227 = vld [vmem:[%s209 + $0x20] sm:$0xff]
      %v228 = vld [vmem:[%s209 + $0x28] sm:$0xff]
      %v229 = vld [vmem:[%s209 + $0x30] sm:$0xff]
      %v230 = vld [vmem:[%s209 + $0x38] sm:$0xff]
      %v231 = vld [vmem:[%s209 + $0x40] sm:$0xff]
      %v232 = vld [vmem:[%s209 + $0x48] sm:$0xff]
      %v233 = vld [vmem:[%s209 + $0x50] sm:$0xff]
      %v234 = vld [vmem:[%s209 + $0x58] sm:$0xff]
      %v235 = vld [vmem:[%s209 + $0x60] sm:$0xff]
      %v236 = vld [vmem:[%s209 + $0x68] sm:$0xff]
      %v237 = vld [vmem:[%s209 + $0x70] sm:$0xff]
      %v238 = vld [vmem:[%s209 + $0x78] sm:$0xff]
      %v239 = vld [vmem:[%s209 + $0x80] sm:$0xff]
      %v240 = vld [vmem:[%s209 + $0x88] sm:$0xff]
      %v241 = vld [vmem:[%s209 + $0x90] sm:$0xff]
      %v242 = vld [vmem:[%s209 + $0x98] sm:$0xff]
      %v243 = vld [vmem:[%s209 + $0xa0] sm:$0xff]
      %v244 = vld [vmem:[%s209 + $0xa8] sm:$0xff]
      %v245 = vld [vmem:[%s209 + $0xb0] sm:$0xff]
      %v246 = vld [vmem:[%s209 + $0xb8] sm:$0xff]
      %v247 = vld [vmem:[%s209 + $0xc0] sm:$0xff]
      %v248 = vld [vmem:[%s209 + $0xc8] sm:$0xff]
      %v249 = vld [vmem:[%s209 + $0xd0] sm:$0xff]
      %v250 = vld [vmem:[%s209 + $0xd8] sm:$0xff]
      %v251 = vld [vmem:[%s209 + $0xe0] sm:$0xff]
      %v252 = vld [vmem:[%s209 + $0xe8] sm:$0xff]
      %v253 = vld [vmem:[%s209 + $0xf0] sm:$0xff]
      %v254 = vld [vmem:[%s209 + $0xf8] sm:$0xff]
      %v255 = vld [vmem:[%s2] sm:$0x1]
      %v257 = vlaneseq
      %v258 = vshrl.u32 %v257, 7
      %v259 = vsub.s32 0, %v258
      %v260 = vrot.slane %v255, %v259
      %v262 = vmul.f32 %v223, %v260
      %v263 = vmul.f32 %v224, %v260
      %v264 = vmul.f32 %v225, %v260
      %v265 = vmul.f32 %v226, %v260
      %v266 = vmul.f32 %v227, %v260
      %v267 = vmul.f32 %v228, %v260
      %v268 = vmul.f32 %v229, %v260
      %v269 = vmul.f32 %v230, %v260
      %v270 = vmul.f32 %v231, %v260
      %v271 = vmul.f32 %v232, %v260
      %v272 = vmul.f32 %v233, %v260
      %v273 = vmul.f32 %v234, %v260
      %v274 = vmul.f32 %v235, %v260
      %v275 = vmul.f32 %v236, %v260
      %v276 = vmul.f32 %v237, %v260
      %v277 = vmul.f32 %v238, %v260
      %v278 = vmul.f32 %v239, %v260
      %v279 = vmul.f32 %v240, %v260
      %v280 = vmul.f32 %v241, %v260
      %v281 = vmul.f32 %v242, %v260
      %v282 = vmul.f32 %v243, %v260
      %v283 = vmul.f32 %v244, %v260
      %v284 = vmul.f32 %v245, %v260
      %v285 = vmul.f32 %v246, %v260
      %v286 = vmul.f32 %v247, %v260
      %v287 = vmul.f32 %v248, %v260
      %v288 = vmul.f32 %v249, %v260
      %v289 = vmul.f32 %v250, %v260
      %v290 = vmul.f32 %v251, %v260
      %v291 = vmul.f32 %v252, %v260
      %v292 = vmul.f32 %v253, %v260
      %v293 = vmul.f32 %v254, %v260
      %v294 = vld [vmem:[%s3] sm:$0x1]
      %v296 = vlaneseq
      %v297 = vshrl.u32 %v296, 7
      %v298 = vsub.s32 0, %v297
      %v299 = vrot.slane %v294, %v298
      %v301 = vadd.f32 %v262, %v299
      %v302 = vadd.f32 %v263, %v299
      %v303 = vadd.f32 %v264, %v299
      %v304 = vadd.f32 %v265, %v299
      %v305 = vadd.f32 %v266, %v299
      %v306 = vadd.f32 %v267, %v299
      %v307 = vadd.f32 %v268, %v299
      %v308 = vadd.f32 %v269, %v299
      %v309 = vadd.f32 %v270, %v299
      %v310 = vadd.f32 %v271, %v299
      %v311 = vadd.f32 %v272, %v299
      %v312 = vadd.f32 %v273, %v299
      %v313 = vadd.f32 %v274, %v299
      %v314 = vadd.f32 %v275, %v299
      %v315 = vadd.f32 %v276, %v299
      %v316 = vadd.f32 %v277, %v299
      %v317 = vadd.f32 %v278, %v299
      %v318 = vadd.f32 %v279, %v299
      %v319 = vadd.f32 %v280, %v299
      %v320 = vadd.f32 %v281, %v299
      %v321 = vadd.f32 %v282, %v299
      %v322 = vadd.f32 %v283, %v299
      %v323 = vadd.f32 %v284, %v299
      %v324 = vadd.f32 %v285, %v299
      %v325 = vadd.f32 %v286, %v299
      %v326 = vadd.f32 %v287, %v299
      %v327 = vadd.f32 %v288, %v299
      %v328 = vadd.f32 %v289, %v299
      %v329 = vadd.f32 %v290, %v299
      %v330 = vadd.f32 %v291, %v299
      %v331 = vadd.f32 %v292, %v299
      %v332 = vadd.f32 %v293, %v299
      %v333 = vld [vmem:[%s215] sm:$0xff]
      %v334 = vld [vmem:[%s215 + $0x8] sm:$0xff]
      %v335 = vld [vmem:[%s215 + $0x10] sm:$0xff]
      %v336 = vld [vmem:[%s215 + $0x18] sm:$0xff]
      %v337 = vld [vmem:[%s215 + $0x20] sm:$0xff]
      %v338 = vld [vmem:[%s215 + $0x28] sm:$0xff]
      %v339 = vld [vmem:[%s215 + $0x30] sm:$0xff]
      %v340 = vld [vmem:[%s215 + $0x38] sm:$0xff]
      %v341 = vld [vmem:[%s215 + $0x40] sm:$0xff]
      %v342 = vld [vmem:[%s215 + $0x48] sm:$0xff]
      %v343 = vld [vmem:[%s215 + $0x50] sm:$0xff]
      %v344 = vld [vmem:[%s215 + $0x58] sm:$0xff]
      %v345 = vld [vmem:[%s215 + $0x60] sm:$0xff]
      %v346 = vld [vmem:[%s215 + $0x68] sm:$0xff]
      %v347 = vld [vmem:[%s215 + $0x70] sm:$0xff]
      %v348 = vld [vmem:[%s215 + $0x78] sm:$0xff]
      %v349 = vld [vmem:[%s215 + $0x80] sm:$0xff]
      %v350 = vld [vmem:[%s215 + $0x88] sm:$0xff]
      %v351 = vld [vmem:[%s215 + $0x90] sm:$0xff]
      %v352 = vld [vmem:[%s215 + $0x98] sm:$0xff]
      %v353 = vld [vmem:[%s215 + $0xa0] sm:$0xff]
      %v354 = vld [vmem:[%s215 + $0xa8] sm:$0xff]
      %v355 = vld [vmem:[%s215 + $0xb0] sm:$0xff]
      %v356 = vld [vmem:[%s215 + $0xb8] sm:$0xff]
      %v357 = vld [vmem:[%s215 + $0xc0] sm:$0xff]
      %v358 = vld [vmem:[%s215 + $0xc8] sm:$0xff]
      %v359 = vld [vmem:[%s215 + $0xd0] sm:$0xff]
      %v360 = vld [vmem:[%s215 + $0xd8] sm:$0xff]
      %v361 = vld [vmem:[%s215 + $0xe0] sm:$0xff]
      %v362 = vld [vmem:[%s215 + $0xe8] sm:$0xff]
      %v363 = vld [vmem:[%s215 + $0xf0] sm:$0xff]
      %v364 = vld [vmem:[%s215 + $0xf8] sm:$0xff]
      %v365 = vadd.f32 %v301, %v333
      %v366 = vadd.f32 %v302, %v334
      %v367 = vadd.f32 %v303, %v335
      %v368 = vadd.f32 %v304, %v336
      %v369 = vadd.f32 %v305, %v337
      %v370 = vadd.f32 %v306, %v338
      %v371 = vadd.f32 %v307, %v339
      %v372 = vadd.f32 %v308, %v340
      %v373 = vadd.f32 %v309, %v341
      %v374 = vadd.f32 %v310, %v342
      %v375 = vadd.f32 %v311, %v343
      %v376 = vadd.f32 %v312, %v344
      %v377 = vadd.f32 %v313, %v345
      %v378 = vadd.f32 %v314, %v346
      %v379 = vadd.f32 %v315, %v347
      %v380 = vadd.f32 %v316, %v348
      %v381 = vadd.f32 %v317, %v349
      %v382 = vadd.f32 %v318, %v350
      %v383 = vadd.f32 %v319, %v351
      %v384 = vadd.f32 %v320, %v352
      %v385 = vadd.f32 %v321, %v353
      %v386 = vadd.f32 %v322, %v354
      %v387 = vadd.f32 %v323, %v355
      %v388 = vadd.f32 %v324, %v356
      %v389 = vadd.f32 %v325, %v357
      %v390 = vadd.f32 %v326, %v358
      %v391 = vadd.f32 %v327, %v359
      %v392 = vadd.f32 %v328, %v360
      %v393 = vadd.f32 %v329, %v361
      %v394 = vadd.f32 %v330, %v362
      %v395 = vadd.f32 %v331, %v363
      %v396 = vadd.f32 %v332, %v364
      %v397 = vmax.f32 %v365, 0.0
      %v398 = vmax.f32 %v366, 0.0
      %v399 = vmax.f32 %v367, 0.0
      %v400 = vmax.f32 %v368, 0.0
      %v401 = vmax.f32 %v369, 0.0
      %v402 = vmax.f32 %v370, 0.0
      %v403 = vmax.f32 %v371, 0.0
      %v404 = vmax.f32 %v372, 0.0
      %v405 = vmax.f32 %v373, 0.0
      %v406 = vmax.f32 %v374, 0.0
      %v407 = vmax.f32 %v375, 0.0
      %v408 = vmax.f32 %v376, 0.0
      %v409 = vmax.f32 %v377, 0.0
      %v410 = vmax.f32 %v378, 0.0
      %v411 = vmax.f32 %v379, 0.0
      %v412 = vmax.f32 %v380, 0.0
      %v413 = vmax.f32 %v381, 0.0
      %v414 = vmax.f32 %v382, 0.0
      %v415 = vmax.f32 %v383, 0.0
      %v416 = vmax.f32 %v384, 0.0
      %v417 = vmax.f32 %v385, 0.0
      %v418 = vmax.f32 %v386, 0.0
      %v419 = vmax.f32 %v387, 0.0
      %v420 = vmax.f32 %v388, 0.0
      %v421 = vmax.f32 %v389, 0.0
      %v422 = vmax.f32 %v390, 0.0
      %v423 = vmax.f32 %v391, 0.0
      %v424 = vmax.f32 %v392, 0.0
      %v425 = vmax.f32 %v393, 0.0
      %v426 = vmax.f32 %v394, 0.0
      %v427 = vmax.f32 %v395, 0.0
      %v428 = vmax.f32 %v396, 0.0
      %429 = vst [vmem:[%s221] sm:$0xff] %v397
      %430 = vst [vmem:[%s221 + $0x8] sm:$0xff] %v398
      %431 = vst [vmem:[%s221 + $0x10] sm:$0xff] %v399
      %432 = vst [vmem:[%s221 + $0x18] sm:$0xff] %v400
      %433 = vst [vmem:[%s221 + $0x20] sm:$0xff] %v401
      %434 = vst [vmem:[%s221 + $0x28] sm:$0xff] %v402
      %435 = vst [vmem:[%s221 + $0x30] sm:$0xff] %v403
      %436 = vst [vmem:[%s221 + $0x38] sm:$0xff] %v404
      %437 = vst [vmem:[%s221 + $0x40] sm:$0xff] %v405
      %438 = vst [vmem:[%s221 + $0x48] sm:$0xff] %v406
      %439 = vst [vmem:[%s221 + $0x50] sm:$0xff] %v407
      %440 = vst [vmem:[%s221 + $0x58] sm:$0xff] %v408
      %441 = vst [vmem:[%s221 + $0x60] sm:$0xff] %v409
      %442 = vst [vmem:[%s221 + $0x68] sm:$0xff] %v410
      %443 = vst [vmem:[%s221 + $0x70] sm:$0xff] %v411
      %444 = vst [vmem:[%s221 + $0x78] sm:$0xff] %v412
      %445 = vst [vmem:[%s221 + $0x80] sm:$0xff] %v413
      %446 = vst [vmem:[%s221 + $0x88] sm:$0xff] %v414
      %447 = vst [vmem:[%s221 + $0x90] sm:$0xff] %v415
      %448 = vst [vmem:[%s221 + $0x98] sm:$0xff] %v416
      %449 = vst [vmem:[%s221 + $0xa0] sm:$0xff] %v417
      %450 = vst [vmem:[%s221 + $0xa8] sm:$0xff] %v418
      %451 = vst [vmem:[%s221 + $0xb0] sm:$0xff] %v419
      %452 = vst [vmem:[%s221 + $0xb8] sm:$0xff] %v420
      %453 = vst [vmem:[%s221 + $0xc0] sm:$0xff] %v421
      %454 = vst [vmem:[%s221 + $0xc8] sm:$0xff] %v422
      %455 = vst [vmem:[%s221 + $0xd0] sm:$0xff] %v423
      %456 = vst [vmem:[%s221 + $0xd8] sm:$0xff] %v424
      %457 = vst [vmem:[%s221 + $0xe0] sm:$0xff] %v425
      %458 = vst [vmem:[%s221 + $0xe8] sm:$0xff] %v426
      %459 = vst [vmem:[%s221 + $0xf0] sm:$0xff] %v427
      %460 = vst [vmem:[%s221 + $0xf8] sm:$0xff] %v428
      %s461 = smul.u32 32, %s15
      %p462 = scmp.lt.s32.totalorder %s461, 63
      %s463 = scalar_select %p462, %s461, 63
      %s464 = smul.addr %s463, 8
      %s465 = scalar_lea.vmem %s4, %s464
      // Predicated region
      $region37: #{bottleneck_forward.7} parent=35 // pred_check
        %p466 = pneg %p127
      $region38: #{bottleneck_forward.7} parent=35 // pred_check_branch
        %468 = sbr.rel (%p466) target = $region40
      $region39: #{bottleneck_forward.7} parent=35 // pred_region
        %s469 = smul.u32 32, %s15
      $region40: #{bottleneck_forward.7} parent=35 // pred_fallthru
        _
    $region36: #{bottleneck_forward.7} parent=5 // pred_fallthru
      _
    %p470 = scmp.le.s32.totalorder 2, %s10
    // Predicated region
    $region41: #{bottleneck_forward.7} parent=5 // pred_check
      %p471 = pneg %p470
    $region42: #{bottleneck_forward.7} parent=5 // pred_check_branch
      %473 = sbr.rel (%p471) target = $region44
    $region43: #{bottleneck_forward.7} parent=5 // pred_region
      %s474 = ssub.s32 %s10, 2
      // Predicated region
      $region45: #{bottleneck_forward.7} parent=43 // pred_check
        %p475 = pneg %p133
      $region46: #{bottleneck_forward.7} parent=43 // pred_check_branch
        %477 = sbr.rel (%p475) target = $region48
      $region47: #{bottleneck_forward.7} parent=43 // pred_region
        %s478 = smul.u32 32, %s16
        %p479 = scmp.lt.s32.totalorder %s478, 63
        %s480 = scalar_select %p479, %s478, 63
        %s481 = smul.addr %s480, 8
        %s482 = scalar_lea.vmem %s4, %s481
      $region48: #{bottleneck_forward.7} parent=43 // pred_fallthru
        _
    $region44: #{bottleneck_forward.7} parent=5 // pred_fallthru
      _
  $region6: #{bottleneck_forward.7} parent=0 // loop_footer
    %s14 = sadd.s32 1, %s10
  $region7: #{bottleneck_forward.7} parent=0 // loop_footer_branch
    %9 = sbr.rel target = $region3
  $region8: #{bottleneck_forward.7} parent=0 // loop_exit
    _

// kernel: bottleneck_forward.6
$region0: #{bottleneck_forward.6}
  #allocation0 [shape = 'u32[]', space=smem, size = 0x4, offset = 0x4, fixed_abs, tag = 'smem constant byte address 0x4 - core index']
  #allocation1 [shape = 'u32[144,128]{1,0:T(1,128)}', space=vmem, size = 0x12000, scoped, tag = 'internal scratch']
  %s0 = inlined_call_operand.vmem [shape: f32[512,128], index: 0, kind: input, shape index: {}]
  %s1 = inlined_call_operand.vmem [shape: f32[128,128], index: 1, kind: input, shape index: {}]
  %s2 = inlined_call_operand.vmem [shape: f32[1,128], index: 2, kind: input, shape index: {}]
  %s3 = inlined_call_operand.vmem [shape: f32[1,128], index: 3, kind: input, shape index: {}]
  %s4 = inlined_call_operand.vmem [shape: f32[512,128], index: 4, kind: output, shape index: {0}]
  %s5 = inlined_call_operand.vmem [shape: f32[2,8,128], index: 5, kind: output, shape index: {1}]
  %6 = xla_tuple %s4, %s5
  %s7 = sld [smem:[#allocation0]]
  $region57: #{bottleneck_forward.6} parent=0
    _
  %s9 = ssub.s32 1, %s7
  %s10 = scalar_select 0, %s9, %s7
  loop: start=0, step=1, limit=4
  $region2: #{bottleneck_forward.6} parent=0 // loop_pre_header
    _
  $region3: #{bottleneck_forward.6} parent=0 // loop_header
    %s12 = sphi 0, %s16
    %p13 = scmp.ge.s32.totalorder %s12, 4
    %s22 = sphi 0, %s24
    %s25 = sphi 0, %s22
    %s26 = sphi 0, %s25
    %s42 = sphi 0, %s26
    %s46 = sphi 0, %s46
    %s48 = sphi 0, %s46
    %s49 = sphi 0, %s48
    %s63 = sphi 0, %s49
    %s67 = sphi 0, %s67
    %s69 = sphi 0, %s67
    %s70 = sphi 0, %s69
    %s84 = sphi 0, %s70
    %s88 = sphi 0, %s88
    %s90 = sphi 0, %s88
    %s91 = sphi 0, %s90
    %s105 = sphi 0, %s91
    %s111 = sphi 0, %s113
    %s114 = sphi 0, %s111
    %s115 = sphi 0, %s114
    %s131 = sphi 0, %s115
    %s137 = sphi 0, %s139
    %s140 = sphi 0, %s137
    %s141 = sphi 0, %s140
    %s157 = sphi 0, %s141
  $region4: #{bottleneck_forward.6} parent=0 // loop_header_branch
    %15 = sbr.rel (%p13) target = $region8
  $region5: #{bottleneck_forward.6} parent=0 // loop_body
    %s17 = ssub.s32 %s12, 1
    %s18 = ssub.s32 %s12, 2
    %s19 = sadd.s32 %s12, 1
    %s20 = ssub.s32 %s12, %s19
    %p21 = scmp.eq.s32.totalorder %s20, 0
    %s23 = sadd.s32 %s22, 1
    %s24 = scalar_select %p21, %s22, %s23
    %p27 = pneg %p21
    %p28 = scmp.eq.s32.totalorder %s12, 1
    %p29 = por %p27, %p28
    %p30 = scmp.ne.s32.totalorder %s22, %s25
    %p31 = scmp.eq.s32.totalorder %s12, 0
    %p32 = por %p30, %p31
    %p33 = scmp.ne.s32.totalorder %s22, %s25
    %p34 = scmp.eq.s32.totalorder %s17, 1
    %p35 = por %p33, %p34
    %p36 = scmp.ne.s32.totalorder %s25, %s26
    %p37 = scmp.eq.s32.totalorder %s17, 0
    %p38 = por %p36, %p37
    %p39 = scmp.ne.s32.totalorder %s25, %s26
    %p40 = scmp.eq.s32.totalorder %s18, 1
    %p41 = por %p39, %p40
    %p43 = scmp.ne.s32.totalorder %s26, %s42
    %p44 = scmp.eq.s32.totalorder %s18, 0
    %p45 = por %p43, %p44
    %s47 = sadd.s32 %s46, 1
    %p50 = scmp.eq.s32.totalorder %s12, 1
    %p51 = scmp.ne.s32.totalorder %s46, %s48
    %p52 = scmp.eq.s32.totalorder %s12, 0
    %p53 = por %p51, %p52
    %p54 = scmp.ne.s32.totalorder %s46, %s48
    %p55 = scmp.eq.s32.totalorder %s17, 1
    %p56 = por %p54, %p55
    %p57 = scmp.ne.s32.totalorder %s48, %s49
    %p58 = scmp.eq.s32.totalorder %s17, 0
    %p59 = por %p57, %p58
    %p60 = scmp.ne.s32.totalorder %s48, %s49
    %p61 = scmp.eq.s32.totalorder %s18, 1
    %p62 = por %p60, %p61
    %p64 = scmp.ne.s32.totalorder %s49, %s63
    %p65 = scmp.eq.s32.totalorder %s18, 0
    %p66 = por %p64, %p65
    %s68 = sadd.s32 %s67, 1
    %p71 = scmp.eq.s32.totalorder %s12, 1
    %p72 = scmp.ne.s32.totalorder %s67, %s69
    %p73 = scmp.eq.s32.totalorder %s12, 0
    %p74 = por %p72, %p73
    %p75 = scmp.ne.s32.totalorder %s67, %s69
    %p76 = scmp.eq.s32.totalorder %s17, 1
    %p77 = por %p75, %p76
    %p78 = scmp.ne.s32.totalorder %s69, %s70
    %p79 = scmp.eq.s32.totalorder %s17, 0
    %p80 = por %p78, %p79
    %p81 = scmp.ne.s32.totalorder %s69, %s70
    %p82 = scmp.eq.s32.totalorder %s18, 1
    %p83 = por %p81, %p82
    %p85 = scmp.ne.s32.totalorder %s70, %s84
    %p86 = scmp.eq.s32.totalorder %s18, 0
    %p87 = por %p85, %p86
    %s89 = sadd.s32 %s88, 1
    %p92 = scmp.eq.s32.totalorder %s12, 1
    %p93 = scmp.ne.s32.totalorder %s88, %s90
    %p94 = scmp.eq.s32.totalorder %s12, 0
    %p95 = por %p93, %p94
    %p96 = scmp.ne.s32.totalorder %s88, %s90
    %p97 = scmp.eq.s32.totalorder %s17, 1
    %p98 = por %p96, %p97
    %p99 = scmp.ne.s32.totalorder %s90, %s91
    %p100 = scmp.eq.s32.totalorder %s17, 0
    %p101 = por %p99, %p100
    %p102 = scmp.ne.s32.totalorder %s90, %s91
    %p103 = scmp.eq.s32.totalorder %s18, 1
    %p104 = por %p102, %p103
    %p106 = scmp.ne.s32.totalorder %s91, %s105
    %p107 = scmp.eq.s32.totalorder %s18, 0
    %p108 = por %p106, %p107
    %s109 = ssub.s32 %s12, %s19
    %p110 = scmp.eq.s32.totalorder %s109, 0
    %s112 = sadd.s32 %s111, 1
    %s113 = scalar_select %p110, %s111, %s112
    %p116 = pneg %p110
    %p117 = scmp.eq.s32.totalorder %s12, 1
    %p118 = por %p116, %p117
    %p119 = scmp.ne.s32.totalorder %s111, %s114
    %p120 = scmp.eq.s32.totalorder %s12, 0
    %p121 = por %p119, %p120
    %p122 = scmp.ne.s32.totalorder %s111, %s114
    %p123 = scmp.eq.s32.totalorder %s17, 1
    %p124 = por %p122, %p123
    %p125 = scmp.ne.s32.totalorder %s114, %s115
    %p126 = scmp.eq.s32.totalorder %s17, 0
    %p127 = por %p125, %p126
    %p128 = scmp.ne.s32.totalorder %s114, %s115
    %p129 = scmp.eq.s32.totalorder %s18, 1
    %p130 = por %p128, %p129
    %p132 = scmp.ne.s32.totalorder %s115, %s131
    %p133 = scmp.eq.s32.totalorder %s18, 0
    %p134 = por %p132, %p133
    %s135 = ssub.s32 %s12, %s19
    %p136 = scmp.eq.s32.totalorder %s135, 0
    %s138 = sadd.s32 %s137, 1
    %s139 = scalar_select %p136, %s137, %s138
    %p142 = pneg %p136
    %p143 = scmp.eq.s32.totalorder %s12, 1
    %p144 = por %p142, %p143
    %p145 = scmp.ne.s32.totalorder %s137, %s140
    %p146 = scmp.eq.s32.totalorder %s12, 0
    %p147 = por %p145, %p146
    %p148 = scmp.ne.s32.totalorder %s137, %s140
    %p149 = scmp.eq.s32.totalorder %s17, 1
    %p150 = por %p148, %p149
    %p151 = scmp.ne.s32.totalorder %s140, %s141
    %p152 = scmp.eq.s32.totalorder %s17, 0
    %p153 = por %p151, %p152
    %p154 = scmp.ne.s32.totalorder %s140, %s141
    %p155 = scmp.eq.s32.totalorder %s18, 1
    %p156 = por %p154, %p155
    %p158 = scmp.ne.s32.totalorder %s141, %s157
    %p159 = scmp.eq.s32.totalorder %s18, 0
    %p160 = por %p158, %p159
    %p161 = scmp.le.s32.totalorder 1, %s12
    %p162 = scmp.lt.s32.totalorder %s12, 3
    %p163 = pnand %p161, %p162
    %p164 = pneg %p163
    // Predicated region
    $region9: #{bottleneck_forward.6} parent=5 // pred_check
      _
    $region10: #{bottleneck_forward.6} parent=5 // pred_check_branch
      %166 = sbr.rel (%p163) target = $region12
    $region11: #{bottleneck_forward.6} parent=5 // pred_region
      %s167 = ssub.s32 %s12, 1
      // Predicated region
      $region13: #{bottleneck_forward.6} parent=11 // pred_check
        %p168 = pneg %p59
      $region14: #{bottleneck_forward.6} parent=11 // pred_check_branch
        %170 = sbr.rel (%p168) target = $region16
      $region15: #{bottleneck_forward.6} parent=11 // pred_region
        _
      $region16: #{bottleneck_forward.6} parent=11 // pred_fallthru
        _
      // Predicated region
      $region17: #{bottleneck_forward.6} parent=11 // pred_check
        %p171 = pneg %p80
      $region18: #{bottleneck_forward.6} parent=11 // pred_check_branch
        %173 = sbr.rel (%p171) target = $region20
      $region19: #{bottleneck_forward.6} parent=11 // pred_region
        _
      $region20: #{bottleneck_forward.6} parent=11 // pred_fallthru
        _
      // Predicated region
      $region21: #{bottleneck_forward.6} parent=11 // pred_check
        %p174 = pneg %p101
      $region22: #{bottleneck_forward.6} parent=11 // pred_check_branch
        %176 = sbr.rel (%p174) target = $region24
      $region23: #{bottleneck_forward.6} parent=11 // pred_region
        _
      $region24: #{bottleneck_forward.6} parent=11 // pred_fallthru
        _
    $region12: #{bottleneck_forward.6} parent=5 // pred_fallthru
      _
    %p177 = scmp.lt.s32.totalorder %s12, 2
    // Predicated region
    $region25: #{bottleneck_forward.6} parent=5 // pred_check
      %p178 = pneg %p177
    $region26: #{bottleneck_forward.6} parent=5 // pred_check_branch
      %180 = sbr.rel (%p178) target = $region28
    $region27: #{bottleneck_forward.6} parent=5 // pred_region
      // Predicated region
      $region29: #{bottleneck_forward.6} parent=27 // pred_check
        %p181 = pneg %p32
      $region30: #{bottleneck_forward.6} parent=27 // pred_check_branch
        %183 = sbr.rel (%p181) target = $region32
      $region31: #{bottleneck_forward.6} parent=27 // pred_region
        %s184 = smul.u32 32, %s12
        %p185 = scmp.lt.s32.totalorder %s184, 63
        %s186 = scalar_select %p185, %s184, 63
        %s187 = smul.addr %s186, 8
        %s188 = scalar_lea.vmem %s0, %s187
        %s189 = smul.u32 32, %s12
      $region32: #{bottleneck_forward.6} parent=27 // pred_fallthru
        _
    $region28: #{bottleneck_forward.6} parent=5 // pred_fallthru
      _
    %p190 = scmp.le.s32.totalorder 1, %s12
    %p191 = scmp.lt.s32.totalorder %s12, 3
    %p192 = pnand %p190, %p191
    %p193 = pneg %p192
    // Predicated region
    $region33: #{bottleneck_forward.6} parent=5 // pred_check
      _
    $region34: #{bottleneck_forward.6} parent=5 // pred_check_branch
      %195 = sbr.rel (%p192) target = $region36
    $region35: #{bottleneck_forward.6} parent=5 // pred_region
      %s196 = ssub.s32 %s12, 1
      %s197 = smul.u32 32, %s17
      %p198 = scmp.lt.s32.totalorder %s197, 63
      %s199 = scalar_select %p198, %s197, 63
      %s200 = smul.addr %s199, 8
      %s201 = scalar_lea.vmem %s0, %s200
      %p202 = pneg %p38
      %p203 = pneg %p35
      %p204 = pneg %p59
      %p205 = pneg %p56
      %p206 = pneg %p80
      %p207 = pneg %p77
      %p208 = pneg %p101
      %p209 = pneg %p98
      %p210 = pneg %p127
      %p211 = pneg %p124
      %s212 = smul.u32 32, %s17
      %p213 = scmp.lt.s32.totalorder %s212, 63
      %s214 = scalar_select %p213, %s212, 63
      %s215 = smul.addr %s214, 8
      %s216 = scalar_lea.vmem %s4, %s215
      %p217 = pneg %p153
      %p218 = pneg %p150
      %p219 = scmp.lt.s32.totalorder %s17, 1
      %s220 = scalar_select %p219, %s17, 1
      %s221 = smul.addr %s220, 8
      %s222 = scalar_lea.vmem %s5, %s221
      %s223 = smul.u32 32, %s17
      %p224 = scmp.lt.s32.totalorder %s223, 63
      %s225 = scalar_select %p224, %s223, 63
      %s226 = smul.addr %s225, 8
      %s227 = scalar_lea.vmem %s0, %s226
      %s228 = smul.u32 32, %s17
      %s229 = smul.u32 32, %s17
      %p230 = scmp.lt.s32.totalorder %s229, 63
      %s231 = scalar_select %p230, %s229, 63
      %s232 = smul.addr %s231, 8
      %s233 = scalar_lea.vmem %s4, %s232
      %s234 = smul.u32 32, %s17
      %p235 = scmp.lt.s32.totalorder %s17, 1
      %s236 = scalar_select %p235, %s17, 1
      %s237 = smul.addr %s236, 8
      %s238 = scalar_lea.vmem %s5, %s237
      %v239 = vld [vmem:[%s227] sm:$0xff]
      %v240 = vld [vmem:[%s227 + $0x8] sm:$0xff]
      %v241 = vld [vmem:[%s227 + $0x10] sm:$0xff]
      %v242 = vld [vmem:[%s227 + $0x18] sm:$0xff]
      %v243 = vld [vmem:[%s227 + $0x20] sm:$0xff]
      %v244 = vld [vmem:[%s227 + $0x28] sm:$0xff]
      %v245 = vld [vmem:[%s227 + $0x30] sm:$0xff]
      %v246 = vld [vmem:[%s227 + $0x38] sm:$0xff]
      %v247 = vld [vmem:[%s227 + $0x40] sm:$0xff]
      %v248 = vld [vmem:[%s227 + $0x48] sm:$0xff]
      %v249 = vld [vmem:[%s227 + $0x50] sm:$0xff]
      %v250 = vld [vmem:[%s227 + $0x58] sm:$0xff]
      %v251 = vld [vmem:[%s227 + $0x60] sm:$0xff]
      %v252 = vld [vmem:[%s227 + $0x68] sm:$0xff]
      %v253 = vld [vmem:[%s227 + $0x70] sm:$0xff]
      %v254 = vld [vmem:[%s227 + $0x78] sm:$0xff]
      %v255 = vld [vmem:[%s227 + $0x80] sm:$0xff]
      %v256 = vld [vmem:[%s227 + $0x88] sm:$0xff]
      %v257 = vld [vmem:[%s227 + $0x90] sm:$0xff]
      %v258 = vld [vmem:[%s227 + $0x98] sm:$0xff]
      %v259 = vld [vmem:[%s227 + $0xa0] sm:$0xff]
      %v260 = vld [vmem:[%s227 + $0xa8] sm:$0xff]
      %v261 = vld [vmem:[%s227 + $0xb0] sm:$0xff]
      %v262 = vld [vmem:[%s227 + $0xb8] sm:$0xff]
      %v263 = vld [vmem:[%s227 + $0xc0] sm:$0xff]
      %v264 = vld [vmem:[%s227 + $0xc8] sm:$0xff]
      %v265 = vld [vmem:[%s227 + $0xd0] sm:$0xff]
      %v266 = vld [vmem:[%s227 + $0xd8] sm:$0xff]
      %v267 = vld [vmem:[%s227 + $0xe0] sm:$0xff]
      %v268 = vld [vmem:[%s227 + $0xe8] sm:$0xff]
      %v269 = vld [vmem:[%s227 + $0xf0] sm:$0xff]
      %v270 = vld [vmem:[%s227 + $0xf8] sm:$0xff]
      %v271 = vld [vmem:[%s2] sm:$0x1]
      %v273 = vlaneseq
      %v274 = vshrl.u32 %v273, 7
      %v275 = vsub.s32 0, %v274
      %v276 = vrot.slane %v271, %v275
      %v278 = vmul.f32 %v239, %v276
      %v279 = vmul.f32 %v240, %v276
      %v280 = vmul.f32 %v241, %v276
      %v281 = vmul.f32 %v242, %v276
      %v282 = vmul.f32 %v243, %v276
      %v283 = vmul.f32 %v244, %v276
      %v284 = vmul.f32 %v245, %v276
      %v285 = vmul.f32 %v246, %v276
      %v286 = vmul.f32 %v247, %v276
      %v287 = vmul.f32 %v248, %v276
      %v288 = vmul.f32 %v249, %v276
      %v289 = vmul.f32 %v250, %v276
      %v290 = vmul.f32 %v251, %v276
      %v291 = vmul.f32 %v252, %v276
      %v292 = vmul.f32 %v253, %v276
      %v293 = vmul.f32 %v254, %v276
      %v294 = vmul.f32 %v255, %v276
      %v295 = vmul.f32 %v256, %v276
      %v296 = vmul.f32 %v257, %v276
      %v297 = vmul.f32 %v258, %v276
      %v298 = vmul.f32 %v259, %v276
      %v299 = vmul.f32 %v260, %v276
      %v300 = vmul.f32 %v261, %v276
      %v301 = vmul.f32 %v262, %v276
      %v302 = vmul.f32 %v263, %v276
      %v303 = vmul.f32 %v264, %v276
      %v304 = vmul.f32 %v265, %v276
      %v305 = vmul.f32 %v266, %v276
      %v306 = vmul.f32 %v267, %v276
      %v307 = vmul.f32 %v268, %v276
      %v308 = vmul.f32 %v269, %v276
      %v309 = vmul.f32 %v270, %v276
      %v310 = vld [vmem:[%s3] sm:$0x1]
      %v312 = vlaneseq
      %v313 = vshrl.u32 %v312, 7
      %v314 = vsub.s32 0, %v313
      %v315 = vrot.slane %v310, %v314
      %v317 = vadd.f32 %v278, %v315
      %v318 = vadd.f32 %v279, %v315
      %v319 = vadd.f32 %v280, %v315
      %v320 = vadd.f32 %v281, %v315
      %v321 = vadd.f32 %v282, %v315
      %v322 = vadd.f32 %v283, %v315
      %v323 = vadd.f32 %v284, %v315
      %v324 = vadd.f32 %v285, %v315
      %v325 = vadd.f32 %v286, %v315
      %v326 = vadd.f32 %v287, %v315
      %v327 = vadd.f32 %v288, %v315
      %v328 = vadd.f32 %v289, %v315
      %v329 = vadd.f32 %v290, %v315
      %v330 = vadd.f32 %v291, %v315
      %v331 = vadd.f32 %v292, %v315
      %v332 = vadd.f32 %v293, %v315
      %v333 = vadd.f32 %v294, %v315
      %v334 = vadd.f32 %v295, %v315
      %v335 = vadd.f32 %v296, %v315
      %v336 = vadd.f32 %v297, %v315
      %v337 = vadd.f32 %v298, %v315
      %v338 = vadd.f32 %v299, %v315
      %v339 = vadd.f32 %v300, %v315
      %v340 = vadd.f32 %v301, %v315
      %v341 = vadd.f32 %v302, %v315
      %v342 = vadd.f32 %v303, %v315
      %v343 = vadd.f32 %v304, %v315
      %v344 = vadd.f32 %v305, %v315
      %v345 = vadd.f32 %v306, %v315
      %v346 = vadd.f32 %v307, %v315
      %v347 = vadd.f32 %v308, %v315
      %v348 = vadd.f32 %v309, %v315
      %v349 = vmax.f32 %v317, 0.0
      %v350 = vmax.f32 %v318, 0.0
      %v351 = vmax.f32 %v319, 0.0
      %v352 = vmax.f32 %v320, 0.0
      %v353 = vmax.f32 %v321, 0.0
      %v354 = vmax.f32 %v322, 0.0
      %v355 = vmax.f32 %v323, 0.0
      %v356 = vmax.f32 %v324, 0.0
      %v357 = vmax.f32 %v325, 0.0
      %v358 = vmax.f32 %v326, 0.0
      %v359 = vmax.f32 %v327, 0.0
      %v360 = vmax.f32 %v328, 0.0
      %v361 = vmax.f32 %v329, 0.0
      %v362 = vmax.f32 %v330, 0.0
      %v363 = vmax.f32 %v331, 0.0
      %v364 = vmax.f32 %v332, 0.0
      %v365 = vmax.f32 %v333, 0.0
      %v366 = vmax.f32 %v334, 0.0
      %v367 = vmax.f32 %v335, 0.0
      %v368 = vmax.f32 %v336, 0.0
      %v369 = vmax.f32 %v337, 0.0
      %v370 = vmax.f32 %v338, 0.0
      %v371 = vmax.f32 %v339, 0.0
      %v372 = vmax.f32 %v340, 0.0
      %v373 = vmax.f32 %v341, 0.0
      %v374 = vmax.f32 %v342, 0.0
      %v375 = vmax.f32 %v343, 0.0
      %v376 = vmax.f32 %v344, 0.0
      %v377 = vmax.f32 %v345, 0.0
      %v378 = vmax.f32 %v346, 0.0
      %v379 = vmax.f32 %v347, 0.0
      %v380 = vmax.f32 %v348, 0.0
      %v381 = vld [vmem:[%s1] sm:$0xff]
      %v382 = vld [vmem:[%s1 + $0x8] sm:$0xff]
      %v383 = vld [vmem:[%s1 + $0x10] sm:$0xff]
      %v384 = vld [vmem:[%s1 + $0x18] sm:$0xff]
      %v385 = vld [vmem:[%s1 + $0x20] sm:$0xff]
      %v386 = vld [vmem:[%s1 + $0x28] sm:$0xff]
      %v387 = vld [vmem:[%s1 + $0x30] sm:$0xff]
      %v388 = vld [vmem:[%s1 + $0x38] sm:$0xff]
      %v389 = vld [vmem:[%s1 + $0x40] sm:$0xff]
      %v390 = vld [vmem:[%s1 + $0x48] sm:$0xff]
      %v391 = vld [vmem:[%s1 + $0x50] sm:$0xff]
      %v392 = vld [vmem:[%s1 + $0x58] sm:$0xff]
      %v393 = vld [vmem:[%s1 + $0x60] sm:$0xff]
      %v394 = vld [vmem:[%s1 + $0x68] sm:$0xff]
      %v395 = vld [vmem:[%s1 + $0x70] sm:$0xff]
      %v396 = vld [vmem:[%s1 + $0x78] sm:$0xff]
      %397 = vmatprep.subr.mxu0 0.0
      %398 = vmatpush1.msra.mxu0 %v381
      %399 = vmatprep.subr.mxu0 0.0
      %400 = vmatpush1.msra.mxu0 %v382
      %401 = vmatprep.subr.mxu0 0.0
      %402 = vmatpush1.msra.mxu0 %v383
      %403 = vmatprep.subr.mxu0 0.0
      %404 = vmatpush1.msra.mxu0 %v384
      %405 = vmatprep.subr.mxu0 0.0
      %406 = vmatpush1.msra.mxu0 %v385
      %407 = vmatprep.subr.mxu0 0.0
      %408 = vmatpush1.msra.mxu0 %v386
      %409 = vmatprep.subr.mxu0 0.0
      %410 = vmatpush1.msra.mxu0 %v387
      %411 = vmatprep.subr.mxu0 0.0
      %412 = vmatpush1.msra.mxu0 %v388
      %413 = vmatprep.subr.mxu0 0.0
      %414 = vmatpush1.msra.mxu0 %v389
      %415 = vmatprep.subr.mxu0 0.0
      %416 = vmatpush1.msra.mxu0 %v390
      %417 = vmatprep.subr.mxu0 0.0
      %418 = vmatpush1.msra.mxu0 %v391
      %419 = vmatprep.subr.mxu0 0.0
      %420 = vmatpush1.msra.mxu0 %v392
      %421 = vmatprep.subr.mxu0 0.0
      %422 = vmatpush1.msra.mxu0 %v393
      %423 = vmatprep.subr.mxu0 0.0
      %424 = vmatpush1.msra.mxu0 %v394
      %425 = vmatprep.subr.mxu0 0.0
      %426 = vmatpush1.msra.mxu0 %v395
      %427 = vmatprep.subr.mxu0 0.0
      %428 = vmatpush1.msra.mxu0 %v396
      %429 = vmatprep.subr.mxu0 0.0
      %430 = vmatpush1.msra.mxu0 0.0
      %431 = vmatprep.subr.mxu0 0.0
      %432 = vmatpush1.msra.mxu0 0.0
      %433 = vmatprep.subr.mxu0 0.0
      %434 = vmatpush1.msra.mxu0 0.0
      %435 = vmatprep.subr.mxu0 0.0
      %436 = vmatpush1.msra.mxu0 0.0
      %437 = vmatprep.subr.mxu0 0.0
      %438 = vmatpush1.msra.mxu0 0.0
      %439 = vmatprep.subr.mxu0 0.0
      %440 = vmatpush1.msra.mxu0 0.0
      %441 = vmatprep.subr.mxu0 0.0
      %442 = vmatpush1.msra.mxu0 0.0
      %443 = vmatprep.subr.mxu0 0.0
      %444 = vmatpush1.msra.mxu0 0.0
      %445 = vmatprep.subr.mxu0 0.0
      %446 = vmatpush1.msra.mxu0 0.0
      %447 = vmatprep.subr.mxu0 0.0
      %448 = vmatpush1.msra.mxu0 0.0
      %449 = vmatprep.subr.mxu0 0.0
      %450 = vmatpush1.msra.mxu0 0.0
      %451 = vmatprep.subr.mxu0 0.0
      %452 = vmatpush1.msra.mxu0 0.0
      %453 = vmatprep.subr.mxu0 0.0
      %454 = vmatpush1.msra.mxu0 0.0
      %455 = vmatprep.subr.mxu0 0.0
      %456 = vmatpush1.msra.mxu0 0.0
      %457 = vmatprep.subr.mxu0 0.0
      %458 = vmatpush1.msra.mxu0 0.0
      %459 = vmatprep.subr.mxu0 0.0
      %460 = vmatpush1.msra.mxu0 0.0
      %461 = vmatprep.mubr.f32.mxu0 0.0
      %462 = vmatmul.mubr.f32.gmra.mrb[0].mxu0 %v349
      %v463 = vpop.f32.mrb[0].mxu0
      %v464 = vadd.f32 0.0, %v463
      %v465 = vpop.f32.mrb[0].mxu0
      %466 = vmatprep.mubr.f32.mxu0 0.0
      %467 = vmatmul.mubr.f32.gmra.mrb[0].mxu0 %v350
      %v468 = vpop.f32.mrb[0].mxu0
      %v469 = vadd.f32 0.0, %v468
      %v470 = vpop.f32.mrb[0].mxu0
      %471 = vmatprep.mubr.f32.mxu0 0.0
      %472 = vmatmul.mubr.f32.gmra.mrb[0].mxu0 %v351
      %v473 = vpop.f32.mrb[0].mxu0
      %v474 = vadd.f32 0.0, %v473
      %v475 = vpop.f32.mrb[0].mxu0
      %476 = vmatprep.mubr.f32.mxu0 0.0
      %477 = vmatmul.mubr.f32.gmra.mrb[0].mxu0 %v352
      %v478 = vpop.f32.mrb[0].mxu0
      %v479 = vadd.f32 0.0, %v478
      %v480 = vpop.f32.mrb[0].mxu0
      %481 = vmatprep.mubr.f32.mxu0 0.0
      %482 = vmatmul.mubr.f32.gmra.mrb[0].mxu0 %v353
      %v483 = vpop.f32.mrb[0].mxu0
      %v484 = vadd.f32 0.0, %v483
      %v485 = vpop.f32.mrb[0].mxu0
      %486 = vmatprep.mubr.f32.mxu0 0.0
      %487 = vmatmul.mubr.f32.gmra.mrb[0].mxu0 %v354
      %v488 = vpop.f32.mrb[0].mxu0
      %v489 = vadd.f32 0.0, %v488
      %v490 = vpop.f32.mrb[0].mxu0
      %491 = vmatprep.mubr.f32.mxu0 0.0
      %492 = vmatmul.mubr.f32.gmra.mrb[0].mxu0 %v355
      %v493 = vpop.f32.mrb[0].mxu0
      %v494 = vadd.f32 0.0, %v493
      %v495 = vpop.f32.mrb[0].mxu0
      %496 = vmatprep.mubr.f32.mxu0 0.0
      %497 = vmatmul.mubr.f32.gmra.mrb[0].mxu0 %v356
      %v498 = vpop.f32.mrb[0].mxu0
      %v499 = vadd.f32 0.0, %v498
      %v500 = vpop.f32.mrb[0].mxu0
      %501 = vmatprep.mubr.f32.mxu0 0.0
      %502 = vmatmul.mubr.f32.gmra.mrb[0].mxu0 %v357
      %v503 = vpop.f32.mrb[0].mxu0
      %v504 = vadd.f32 0.0, %v503
      %v505 = vpop.f32.mrb[0].mxu0
      %506 = vmatprep.mubr.f32.mxu0 0.0
      %507 = vmatmul.mubr.f32.gmra.mrb[0].mxu0 %v358
      %v508 = vpop.f32.mrb[0].mxu0
      %v509 = vadd.f32 0.0, %v508
      %v510 = vpop.f32.mrb[0].mxu0
      %511 = vmatprep.mubr.f32.mxu0 0.0
      %512 = vmatmul.mubr.f32.gmra.mrb[0].mxu0 %v359
      %v513 = vpop.f32.mrb[0].mxu0
      %v514 = vadd.f32 0.0, %v513
      %v515 = vpop.f32.mrb[0].mxu0
      %516 = vmatprep.mubr.f32.mxu0 0.0
      %517 = vmatmul.mubr.f32.gmra.mrb[0].mxu0 %v360
      %v518 = vpop.f32.mrb[0].mxu0
      %v519 = vadd.f32 0.0, %v518
      %v520 = vpop.f32.mrb[0].mxu0
      %521 = vmatprep.mubr.f32.mxu0 0.0
      %522 = vmatmul.mubr.f32.gmra.mrb[0].mxu0 %v361
      %v523 = vpop.f32.mrb[0].mxu0
      %v524 = vadd.f32 0.0, %v523
      %v525 = vpop.f32.mrb[0].mxu0
      %526 = vmatprep.mubr.f32.mxu0 0.0
      %527 = vmatmul.mubr.f32.gmra.mrb[0].mxu0 %v362
      %v528 = vpop.f32.mrb[0].mxu0
      %v529 = vadd.f32 0.0, %v528
      %v530 = vpop.f32.mrb[0].mxu0
      %531 = vmatprep.mubr.f32.mxu0 0.0
      %532 = vmatmul.mubr.f32.gmra.mrb[0].mxu0 %v363
      %v533 = vpop.f32.mrb[0].mxu0
      %v534 = vadd.f32 0.0, %v533
      %v535 = vpop.f32.mrb[0].mxu0
      %536 = vmatprep.mubr.f32.mxu0 0.0
      %537 = vmatmul.mubr.f32.gmra.mrb[0].mxu0 %v364
      %v538 = vpop.f32.mrb[0].mxu0
      %v539 = vadd.f32 0.0, %v538
      %v540 = vpop.f32.mrb[0].mxu0
      %541 = vmatprep.mubr.f32.mxu0 0.0
      %542 = vmatmul.mubr.f32.gmra.mrb[0].mxu0 %v365
      %v543 = vpop.f32.mrb[0].mxu0
      %v544 = vadd.f32 0.0, %v543
      %v545 = vpop.f32.mrb[0].mxu0
      %546 = vmatprep.mubr.f32.mxu0 0.0
      %547 = vmatmul.mubr.f32.gmra.mrb[0].mxu0 %v366
      %v548 = vpop.f32.mrb[0].mxu0
      %v549 = vadd.f32 0.0, %v548
      %v550 = vpop.f32.mrb[0].mxu0
      %551 = vmatprep.mubr.f32.mxu0 0.0
      %552 = vmatmul.mubr.f32.gmra.mrb[0].mxu0 %v367
      %v553 = vpop.f32.mrb[0].mxu0
      %v554 = vadd.f32 0.0, %v553
      %v555 = vpop.f32.mrb[0].mxu0
      %556 = vmatprep.mubr.f32.mxu0 0.0
      %557 = vmatmul.mubr.f32.gmra.mrb[0].mxu0 %v368
      %v558 = vpop.f32.mrb[0].mxu0
      %v559 = vadd.f32 0.0, %v558
      %v560 = vpop.f32.mrb[0].mxu0
      %561 = vmatprep.mubr.f32.mxu0 0.0
      %562 = vmatmul.mubr.f32.gmra.mrb[0].mxu0 %v369
      %v563 = vpop.f32.mrb[0].mxu0
      %v564 = vadd.f32 0.0, %v563
      %v565 = vpop.f32.mrb[0].mxu0
      %566 = vmatprep.mubr.f32.mxu0 0.0
      %567 = vmatmul.mubr.f32.gmra.mrb[0].mxu0 %v370
      %v568 = vpop.f32.mrb[0].mxu0
      %v569 = vadd.f32 0.0, %v568
      %v570 = vpop.f32.mrb[0].mxu0
      %571 = vmatprep.mubr.f32.mxu0 0.0
      %572 = vmatmul.mubr.f32.gmra.mrb[0].mxu0 %v371
      %v573 = vpop.f32.mrb[0].mxu0
      %v574 = vadd.f32 0.0, %v573
      %v575 = vpop.f32.mrb[0].mxu0
      %576 = vmatprep.mubr.f32.mxu0 0.0
      %577 = vmatmul.mubr.f32.gmra.mrb[0].mxu0 %v372
      %v578 = vpop.f32.mrb[0].mxu0
      %v579 = vadd.f32 0.0, %v578
      %v580 = vpop.f32.mrb[0].mxu0
      %581 = vmatprep.mubr.f32.mxu0 0.0
      %582 = vmatmul.mubr.f32.gmra.mrb[0].mxu0 %v373
      %v583 = vpop.f32.mrb[0].mxu0
      %v584 = vadd.f32 0.0, %v583
      %v585 = vpop.f32.mrb[0].mxu0
      %586 = vmatprep.mubr.f32.mxu0 0.0
      %587 = vmatmul.mubr.f32.gmra.mrb[0].mxu0 %v374
      %v588 = vpop.f32.mrb[0].mxu0
      %v589 = vadd.f32 0.0, %v588
      %v590 = vpop.f32.mrb[0].mxu0
      %591 = vmatprep.mubr.f32.mxu0 0.0
      %592 = vmatmul.mubr.f32.gmra.mrb[0].mxu0 %v375
      %v593 = vpop.f32.mrb[0].mxu0
      %v594 = vadd.f32 0.0, %v593
      %v595 = vpop.f32.mrb[0].mxu0
      %596 = vmatprep.mubr.f32.mxu0 0.0
      %597 = vmatmul.mubr.f32.gmra.mrb[0].mxu0 %v376
      %v598 = vpop.f32.mrb[0].mxu0
      %v599 = vadd.f32 0.0, %v598
      %v600 = vpop.f32.mrb[0].mxu0
      %601 = vmatprep.mubr.f32.mxu0 0.0
      %602 = vmatmul.mubr.f32.gmra.mrb[0].mxu0 %v377
      %v603 = vpop.f32.mrb[0].mxu0
      %v604 = vadd.f32 0.0, %v603
      %v605 = vpop.f32.mrb[0].mxu0
      %606 = vmatprep.mubr.f32.mxu0 0.0
      %607 = vmatmul.mubr.f32.gmra.mrb[0].mxu0 %v378
      %v608 = vpop.f32.mrb[0].mxu0
      %v609 = vadd.f32 0.0, %v608
      %v610 = vpop.f32.mrb[0].mxu0
      %611 = vmatprep.mubr.f32.mxu0 0.0
      %612 = vmatmul.mubr.f32.gmra.mrb[0].mxu0 %v379
      %v613 = vpop.f32.mrb[0].mxu0
      %v614 = vadd.f32 0.0, %v613
      %v615 = vpop.f32.mrb[0].mxu0
      %616 = vmatprep.mubr.f32.mxu0 0.0
      %617 = vmatmul.mubr.f32.gmra.mrb[0].mxu0 %v380
      %v618 = vpop.f32.mrb[0].mxu0
      %v619 = vadd.f32 0.0, %v618
      %v620 = vpop.f32.mrb[0].mxu0
      %621 = vdwg.mxu0
      %622 = vst [vmem:[%s233] sm:$0xff] %v464
      %623 = vst [vmem:[%s233 + $0x8] sm:$0xff] %v469
      %624 = vst [vmem:[%s233 + $0x10] sm:$0xff] %v474
      %625 = vst [vmem:[%s233 + $0x18] sm:$0xff] %v479
      %626 = vst [vmem:[%s233 + $0x20] sm:$0xff] %v484
      %627 = vst [vmem:[%s233 + $0x28] sm:$0xff] %v489
      %628 = vst [vmem:[%s233 + $0x30] sm:$0xff] %v494
      %629 = vst [vmem:[%s233 + $0x38] sm:$0xff] %v499
      %630 = vst [vmem:[%s233 + $0x40] sm:$0xff] %v504
      %631 = vst [vmem:[%s233 + $0x48] sm:$0xff] %v509
      %632 = vst [vmem:[%s233 + $0x50] sm:$0xff] %v514
      %633 = vst [vmem:[%s233 + $0x58] sm:$0xff] %v519
      %634 = vst [vmem:[%s233 + $0x60] sm:$0xff] %v524
      %635 = vst [vmem:[%s233 + $0x68] sm:$0xff] %v529
      %636 = vst [vmem:[%s233 + $0x70] sm:$0xff] %v534
      %637 = vst [vmem:[%s233 + $0x78] sm:$0xff] %v539
      %638 = vst [vmem:[%s233 + $0x80] sm:$0xff] %v544
      %639 = vst [vmem:[%s233 + $0x88] sm:$0xff] %v549
      %640 = vst [vmem:[%s233 + $0x90] sm:$0xff] %v554
      %641 = vst [vmem:[%s233 + $0x98] sm:$0xff] %v559
      %642 = vst [vmem:[%s233 + $0xa0] sm:$0xff] %v564
      %643 = vst [vmem:[%s233 + $0xa8] sm:$0xff] %v569
      %644 = vst [vmem:[%s233 + $0xb0] sm:$0xff] %v574
      %645 = vst [vmem:[%s233 + $0xb8] sm:$0xff] %v579
      %646 = vst [vmem:[%s233 + $0xc0] sm:$0xff] %v584
      %647 = vst [vmem:[%s233 + $0xc8] sm:$0xff] %v589
      %648 = vst [vmem:[%s233 + $0xd0] sm:$0xff] %v594
      %649 = vst [vmem:[%s233 + $0xd8] sm:$0xff] %v599
      %650 = vst [vmem:[%s233 + $0xe0] sm:$0xff] %v604
      %651 = vst [vmem:[%s233 + $0xe8] sm:$0xff] %v609
      %652 = vst [vmem:[%s233 + $0xf0] sm:$0xff] %v614
      %653 = vst [vmem:[%s233 + $0xf8] sm:$0xff] %v619
      %v654 = vadd.f32 %v464, %v469
      %v655 = vadd.f32 %v654, %v474
      %v656 = vadd.f32 %v655, %v479
      %v657 = vadd.f32 %v656, %v484
      %v658 = vadd.f32 %v657, %v489
      %v659 = vadd.f32 %v658, %v494
      %v660 = vadd.f32 %v659, %v499
      %v661 = vadd.f32 %v660, %v504
      %v662 = vadd.f32 %v661, %v509
      %v663 = vadd.f32 %v662, %v514
      %v664 = vadd.f32 %v663, %v519
      %v665 = vadd.f32 %v664, %v524
      %v666 = vadd.f32 %v665, %v529
      %v667 = vadd.f32 %v666, %v534
      %v668 = vadd.f32 %v667, %v539
      %v669 = vadd.f32 %v668, %v544
      %v670 = vadd.f32 %v669, %v549
      %v671 = vadd.f32 %v670, %v554
      %v672 = vadd.f32 %v671, %v559
      %v673 = vadd.f32 %v672, %v564
      %v674 = vadd.f32 %v673, %v569
      %v675 = vadd.f32 %v674, %v574
      %v676 = vadd.f32 %v675, %v579
      %v677 = vadd.f32 %v676, %v584
      %v678 = vadd.f32 %v677, %v589
      %v679 = vadd.f32 %v678, %v594
      %v680 = vadd.f32 %v679, %v599
      %v681 = vadd.f32 %v680, %v604
      %v682 = vadd.f32 %v681, %v609
      %v683 = vadd.f32 %v682, %v614
      %v684 = vadd.f32 %v683, %v619
      %v685 = vrot.slane %v684, 4
      %v686 = vadd.f32 %v684, %v685
      %v687 = vrot.slane %v686, 2
      %v688 = vadd.f32 %v686, %v687
      %v689 = vrot.slane %v688, 1
      %v690 = vadd.f32 %v688, %v689
      %691 = vst [vmem:[%s238] sm:$0x1] %v690
      %v692 = vmul.f32 %v464, %v464
      %v693 = vmul.f32 %v469, %v469
      %v694 = vmul.f32 %v474, %v474
      %v695 = vmul.f32 %v479, %v479
      %v696 = vmul.f32 %v484, %v484
      %v697 = vmul.f32 %v489, %v489
      %v698 = vmul.f32 %v494, %v494
      %v699 = vmul.f32 %v499, %v499
      %v700 = vmul.f32 %v504, %v504
      %v701 = vmul.f32 %v509, %v509
      %v702 = vmul.f32 %v514, %v514
      %v703 = vmul.f32 %v519, %v519
      %v704 = vmul.f32 %v524, %v524
      %v705 = vmul.f32 %v529, %v529
      %v706 = vmul.f32 %v534, %v534
      %v707 = vmul.f32 %v539, %v539
      %v708 = vmul.f32 %v544, %v544
      %v709 = vmul.f32 %v549, %v549
      %v710 = vmul.f32 %v554, %v554
      %v711 = vmul.f32 %v559, %v559
      %v712 = vmul.f32 %v564, %v564
      %v713 = vmul.f32 %v569, %v569
      %v714 = vmul.f32 %v574, %v574
      %v715 = vmul.f32 %v579, %v579
      %v716 = vmul.f32 %v584, %v584
      %v717 = vmul.f32 %v589, %v589
      %v718 = vmul.f32 %v594, %v594
      %v719 = vmul.f32 %v599, %v599
      %v720 = vmul.f32 %v604, %v604
      %v721 = vmul.f32 %v609, %v609
      %v722 = vmul.f32 %v614, %v614
      %v723 = vmul.f32 %v619, %v619
      %v724 = vadd.f32 %v692, %v693
      %v725 = vadd.f32 %v724, %v694
      %v726 = vadd.f32 %v725, %v695
      %v727 = vadd.f32 %v726, %v696
      %v728 = vadd.f32 %v727, %v697
      %v729 = vadd.f32 %v728, %v698
      %v730 = vadd.f32 %v729, %v699
      %v731 = vadd.f32 %v730, %v700
      %v732 = vadd.f32 %v731, %v701
      %v733 = vadd.f32 %v732, %v702
      %v734 = vadd.f32 %v733, %v703
      %v735 = vadd.f32 %v734, %v704
      %v736 = vadd.f32 %v735, %v705
      %v737 = vadd.f32 %v736, %v706
      %v738 = vadd.f32 %v737, %v707
      %v739 = vadd.f32 %v738, %v708
      %v740 = vadd.f32 %v739, %v709
      %v741 = vadd.f32 %v740, %v710
      %v742 = vadd.f32 %v741, %v711
      %v743 = vadd.f32 %v742, %v712
      %v744 = vadd.f32 %v743, %v713
      %v745 = vadd.f32 %v744, %v714
      %v746 = vadd.f32 %v745, %v715
      %v747 = vadd.f32 %v746, %v716
      %v748 = vadd.f32 %v747, %v717
      %v749 = vadd.f32 %v748, %v718
      %v750 = vadd.f32 %v749, %v719
      %v751 = vadd.f32 %v750, %v720
      %v752 = vadd.f32 %v751, %v721
      %v753 = vadd.f32 %v752, %v722
      %v754 = vadd.f32 %v753, %v723
      %v755 = vrot.slane %v754, 4
      %v756 = vadd.f32 %v754, %v755
      %v757 = vrot.slane %v756, 2
      %v758 = vadd.f32 %v756, %v757
      %v759 = vrot.slane %v758, 1
      %v760 = vadd.f32 %v758, %v759
      %761 = vst [vmem:[%s238 + $0x1] sm:$0x1] %v760
      %s762 = smul.u32 32, %s17
      %p763 = scmp.lt.s32.totalorder %s762, 63
      %s764 = scalar_select %p763, %s762, 63
      %s765 = smul.addr %s764, 8
      %s766 = scalar_lea.vmem %s4, %s765
      %p767 = scmp.lt.s32.totalorder %s17, 1
      %s768 = scalar_select %p767, %s17, 1
      %s769 = smul.addr %s768, 8
      %s770 = scalar_lea.vmem %s5, %s769
      // Predicated region
      $region37: #{bottleneck_forward.6} parent=35 // pred_check
        %p771 = pneg %p124
      $region38: #{bottleneck_forward.6} parent=35 // pred_check_branch
        %773 = sbr.rel (%p771) target = $region40
      $region39: #{bottleneck_forward.6} parent=35 // pred_region
        %s774 = smul.u32 32, %s17
      $region40: #{bottleneck_forward.6} parent=35 // pred_fallthru
        _
      // Predicated region
      $region41: #{bottleneck_forward.6} parent=35 // pred_check
        %p775 = pneg %p150
      $region42: #{bottleneck_forward.6} parent=35 // pred_check_branch
        %777 = sbr.rel (%p775) target = $region44
      $region43: #{bottleneck_forward.6} parent=35 // pred_region
        _
      $region44: #{bottleneck_forward.6} parent=35 // pred_fallthru
        _
    $region36: #{bottleneck_forward.6} parent=5 // pred_fallthru
      _
    %p778 = scmp.le.s32.totalorder 2, %s12
    // Predicated region
    $region45: #{bottleneck_forward.6} parent=5 // pred_check
      %p779 = pneg %p778
    $region46: #{bottleneck_forward.6} parent=5 // pred_check_branch
      %781 = sbr.rel (%p779) target = $region48
    $region47: #{bottleneck_forward.6} parent=5 // pred_region
      %s782 = ssub.s32 %s12, 2
      // Predicated region
      $region49: #{bottleneck_forward.6} parent=47 // pred_check
        %p783 = pneg %p130
      $region50: #{bottleneck_forward.6} parent=47 // pred_check_branch
        %785 = sbr.rel (%p783) target = $region52
      $region51: #{bottleneck_forward.6} parent=47 // pred_region
        %s786 = smul.u32 32, %s18
        %p787 = scmp.lt.s32.totalorder %s786, 63
        %s788 = scalar_select %p787, %s786, 63
        %s789 = smul.addr %s788, 8
        %s790 = scalar_lea.vmem %s4, %s789
      $region52: #{bottleneck_forward.6} parent=47 // pred_fallthru
        _
      // Predicated region
      $region53: #{bottleneck_forward.6} parent=47 // pred_check
        %p791 = pneg %p156
      $region54: #{bottleneck_forward.6} parent=47 // pred_check_branch
        %793 = sbr.rel (%p791) target = $region56
      $region55: #{bottleneck_forward.6} parent=47 // pred_region
        %p794 = scmp.lt.s32.totalorder %s18, 1
        %s795 = scalar_select %p794, %s18, 1
        %s796 = smul.addr %s795, 8
        %s797 = scalar_lea.vmem %s5, %s796
      $region56: #{bottleneck_forward.6} parent=47 // pred_fallthru
        _
    $region48: #{bottleneck_forward.6} parent=5 // pred_fallthru
      _
  $region6: #{bottleneck_forward.6} parent=0 // loop_footer
    %s16 = sadd.s32 1, %s12
  $region7: #{bottleneck_forward.6} parent=0 // loop_footer_branch
    %11 = sbr.rel target = $region3
  $region8: #{bottleneck_forward.6} parent=0 // loop_exit
    _

// kernel: bottleneck_forward.4
$region0: #{bottleneck_forward.4}
  #allocation0 [shape = 'u32[]', space=smem, size = 0x4, offset = 0x4, fixed_abs, tag = 'smem constant byte address 0x4 - core index']
  #allocation1 [shape = 'u32[144,128]{1,0:T(1,128)}', space=vmem, size = 0x12000, scoped, tag = 'internal scratch']
  %s0 = inlined_call_operand.vmem [shape: f32[512,128], index: 0, kind: input, shape index: {}]
  %s1 = inlined_call_operand.vmem [shape: f32[128,128], index: 1, kind: input, shape index: {}]
  %s2 = inlined_call_operand.vmem [shape: f32[512,128], index: 2, kind: output, shape index: {0}]
  %s3 = inlined_call_operand.vmem [shape: f32[2,8,128], index: 3, kind: output, shape index: {1}]
  %4 = xla_tuple %s2, %s3
  %s5 = sld [smem:[#allocation0]]
  $region49: #{bottleneck_forward.4} parent=0
    _
  %s7 = ssub.s32 1, %s5
  %s8 = scalar_select 0, %s7, %s5
  loop: start=0, step=1, limit=4
  $region2: #{bottleneck_forward.4} parent=0 // loop_pre_header
    _
  $region3: #{bottleneck_forward.4} parent=0 // loop_header
    %s10 = sphi 0, %s14
    %p11 = scmp.ge.s32.totalorder %s10, 4
    %s20 = sphi 0, %s22
    %s23 = sphi 0, %s20
    %s24 = sphi 0, %s23
    %s40 = sphi 0, %s24
    %s44 = sphi 0, %s44
    %s46 = sphi 0, %s44
    %s47 = sphi 0, %s46
    %s61 = sphi 0, %s47
    %s67 = sphi 0, %s69
    %s70 = sphi 0, %s67
    %s71 = sphi 0, %s70
    %s87 = sphi 0, %s71
    %s93 = sphi 0, %s95
    %s96 = sphi 0, %s93
    %s97 = sphi 0, %s96
    %s113 = sphi 0, %s97
  $region4: #{bottleneck_forward.4} parent=0 // loop_header_branch
    %13 = sbr.rel (%p11) target = $region8
  $region5: #{bottleneck_forward.4} parent=0 // loop_body
    %s15 = ssub.s32 %s10, 1
    %s16 = ssub.s32 %s10, 2
    %s17 = sadd.s32 %s10, 1
    %s18 = ssub.s32 %s10, %s17
    %p19 = scmp.eq.s32.totalorder %s18, 0
    %s21 = sadd.s32 %s20, 1
    %s22 = scalar_select %p19, %s20, %s21
    %p25 = pneg %p19
    %p26 = scmp.eq.s32.totalorder %s10, 1
    %p27 = por %p25, %p26
    %p28 = scmp.ne.s32.totalorder %s20, %s23
    %p29 = scmp.eq.s32.totalorder %s10, 0
    %p30 = por %p28, %p29
    %p31 = scmp.ne.s32.totalorder %s20, %s23
    %p32 = scmp.eq.s32.totalorder %s15, 1
    %p33 = por %p31, %p32
    %p34 = scmp.ne.s32.totalorder %s23, %s24
    %p35 = scmp.eq.s32.totalorder %s15, 0
    %p36 = por %p34, %p35
    %p37 = scmp.ne.s32.totalorder %s23, %s24
    %p38 = scmp.eq.s32.totalorder %s16, 1
    %p39 = por %p37, %p38
    %p41 = scmp.ne.s32.totalorder %s24, %s40
    %p42 = scmp.eq.s32.totalorder %s16, 0
    %p43 = por %p41, %p42
    %s45 = sadd.s32 %s44, 1
    %p48 = scmp.eq.s32.totalorder %s10, 1
    %p49 = scmp.ne.s32.totalorder %s44, %s46
    %p50 = scmp.eq.s32.totalorder %s10, 0
    %p51 = por %p49, %p50
    %p52 = scmp.ne.s32.totalorder %s44, %s46
    %p53 = scmp.eq.s32.totalorder %s15, 1
    %p54 = por %p52, %p53
    %p55 = scmp.ne.s32.totalorder %s46, %s47
    %p56 = scmp.eq.s32.totalorder %s15, 0
    %p57 = por %p55, %p56
    %p58 = scmp.ne.s32.totalorder %s46, %s47
    %p59 = scmp.eq.s32.totalorder %s16, 1
    %p60 = por %p58, %p59
    %p62 = scmp.ne.s32.totalorder %s47, %s61
    %p63 = scmp.eq.s32.totalorder %s16, 0
    %p64 = por %p62, %p63
    %s65 = ssub.s32 %s10, %s17
    %p66 = scmp.eq.s32.totalorder %s65, 0
    %s68 = sadd.s32 %s67, 1
    %s69 = scalar_select %p66, %s67, %s68
    %p72 = pneg %p66
    %p73 = scmp.eq.s32.totalorder %s10, 1
    %p74 = por %p72, %p73
    %p75 = scmp.ne.s32.totalorder %s67, %s70
    %p76 = scmp.eq.s32.totalorder %s10, 0
    %p77 = por %p75, %p76
    %p78 = scmp.ne.s32.totalorder %s67, %s70
    %p79 = scmp.eq.s32.totalorder %s15, 1
    %p80 = por %p78, %p79
    %p81 = scmp.ne.s32.totalorder %s70, %s71
    %p82 = scmp.eq.s32.totalorder %s15, 0
    %p83 = por %p81, %p82
    %p84 = scmp.ne.s32.totalorder %s70, %s71
    %p85 = scmp.eq.s32.totalorder %s16, 1
    %p86 = por %p84, %p85
    %p88 = scmp.ne.s32.totalorder %s71, %s87
    %p89 = scmp.eq.s32.totalorder %s16, 0
    %p90 = por %p88, %p89
    %s91 = ssub.s32 %s10, %s17
    %p92 = scmp.eq.s32.totalorder %s91, 0
    %s94 = sadd.s32 %s93, 1
    %s95 = scalar_select %p92, %s93, %s94
    %p98 = pneg %p92
    %p99 = scmp.eq.s32.totalorder %s10, 1
    %p100 = por %p98, %p99
    %p101 = scmp.ne.s32.totalorder %s93, %s96
    %p102 = scmp.eq.s32.totalorder %s10, 0
    %p103 = por %p101, %p102
    %p104 = scmp.ne.s32.totalorder %s93, %s96
    %p105 = scmp.eq.s32.totalorder %s15, 1
    %p106 = por %p104, %p105
    %p107 = scmp.ne.s32.totalorder %s96, %s97
    %p108 = scmp.eq.s32.totalorder %s15, 0
    %p109 = por %p107, %p108
    %p110 = scmp.ne.s32.totalorder %s96, %s97
    %p111 = scmp.eq.s32.totalorder %s16, 1
    %p112 = por %p110, %p111
    %p114 = scmp.ne.s32.totalorder %s97, %s113
    %p115 = scmp.eq.s32.totalorder %s16, 0
    %p116 = por %p114, %p115
    %p117 = scmp.le.s32.totalorder 1, %s10
    %p118 = scmp.lt.s32.totalorder %s10, 3
    %p119 = pnand %p117, %p118
    %p120 = pneg %p119
    // Predicated region
    $region9: #{bottleneck_forward.4} parent=5 // pred_check
      _
    $region10: #{bottleneck_forward.4} parent=5 // pred_check_branch
      %122 = sbr.rel (%p119) target = $region12
    $region11: #{bottleneck_forward.4} parent=5 // pred_region
      %s123 = ssub.s32 %s10, 1
      // Predicated region
      $region13: #{bottleneck_forward.4} parent=11 // pred_check
        %p124 = pneg %p57
      $region14: #{bottleneck_forward.4} parent=11 // pred_check_branch
        %126 = sbr.rel (%p124) target = $region16
      $region15: #{bottleneck_forward.4} parent=11 // pred_region
        _
      $region16: #{bottleneck_forward.4} parent=11 // pred_fallthru
        _
    $region12: #{bottleneck_forward.4} parent=5 // pred_fallthru
      _
    %p127 = scmp.lt.s32.totalorder %s10, 2
    // Predicated region
    $region17: #{bottleneck_forward.4} parent=5 // pred_check
      %p128 = pneg %p127
    $region18: #{bottleneck_forward.4} parent=5 // pred_check_branch
      %130 = sbr.rel (%p128) target = $region20
    $region19: #{bottleneck_forward.4} parent=5 // pred_region
      // Predicated region
      $region21: #{bottleneck_forward.4} parent=19 // pred_check
        %p131 = pneg %p30
      $region22: #{bottleneck_forward.4} parent=19 // pred_check_branch
        %133 = sbr.rel (%p131) target = $region24
      $region23: #{bottleneck_forward.4} parent=19 // pred_region
        %s134 = smul.u32 32, %s10
        %p135 = scmp.lt.s32.totalorder %s134, 63
        %s136 = scalar_select %p135, %s134, 63
        %s137 = smul.addr %s136, 8
        %s138 = scalar_lea.vmem %s0, %s137
        %s139 = smul.u32 32, %s10
      $region24: #{bottleneck_forward.4} parent=19 // pred_fallthru
        _
    $region20: #{bottleneck_forward.4} parent=5 // pred_fallthru
      _
    %p140 = scmp.le.s32.totalorder 1, %s10
    %p141 = scmp.lt.s32.totalorder %s10, 3
    %p142 = pnand %p140, %p141
    %p143 = pneg %p142
    // Predicated region
    $region25: #{bottleneck_forward.4} parent=5 // pred_check
      _
    $region26: #{bottleneck_forward.4} parent=5 // pred_check_branch
      %145 = sbr.rel (%p142) target = $region28
    $region27: #{bottleneck_forward.4} parent=5 // pred_region
      %s146 = ssub.s32 %s10, 1
      %s147 = smul.u32 32, %s15
      %p148 = scmp.lt.s32.totalorder %s147, 63
      %s149 = scalar_select %p148, %s147, 63
      %s150 = smul.addr %s149, 8
      %s151 = scalar_lea.vmem %s0, %s150
      %p152 = pneg %p36
      %p153 = pneg %p33
      %p154 = pneg %p57
      %p155 = pneg %p54
      %p156 = pneg %p83
      %p157 = pneg %p80
      %s158 = smul.u32 32, %s15
      %p159 = scmp.lt.s32.totalorder %s158, 63
      %s160 = scalar_select %p159, %s158, 63
      %s161 = smul.addr %s160, 8
      %s162 = scalar_lea.vmem %s2, %s161
      %p163 = pneg %p109
      %p164 = pneg %p106
      %p165 = scmp.lt.s32.totalorder %s15, 1
      %s166 = scalar_select %p165, %s15, 1
      %s167 = smul.addr %s166, 8
      %s168 = scalar_lea.vmem %s3, %s167
      %s169 = smul.u32 32, %s15
      %p170 = scmp.lt.s32.totalorder %s169, 63
      %s171 = scalar_select %p170, %s169, 63
      %s172 = smul.addr %s171, 8
      %s173 = scalar_lea.vmem %s0, %s172
      %s174 = smul.u32 32, %s15
      %s175 = smul.u32 32, %s15
      %p176 = scmp.lt.s32.totalorder %s175, 63
      %s177 = scalar_select %p176, %s175, 63
      %s178 = smul.addr %s177, 8
      %s179 = scalar_lea.vmem %s2, %s178
      %s180 = smul.u32 32, %s15
      %p181 = scmp.lt.s32.totalorder %s15, 1
      %s182 = scalar_select %p181, %s15, 1
      %s183 = smul.addr %s182, 8
      %s184 = scalar_lea.vmem %s3, %s183
      %v185 = vld [vmem:[%s173] sm:$0xff]
      %v186 = vld [vmem:[%s173 + $0x8] sm:$0xff]
      %v187 = vld [vmem:[%s173 + $0x10] sm:$0xff]
      %v188 = vld [vmem:[%s173 + $0x18] sm:$0xff]
      %v189 = vld [vmem:[%s173 + $0x20] sm:$0xff]
      %v190 = vld [vmem:[%s173 + $0x28] sm:$0xff]
      %v191 = vld [vmem:[%s173 + $0x30] sm:$0xff]
      %v192 = vld [vmem:[%s173 + $0x38] sm:$0xff]
      %v193 = vld [vmem:[%s173 + $0x40] sm:$0xff]
      %v194 = vld [vmem:[%s173 + $0x48] sm:$0xff]
      %v195 = vld [vmem:[%s173 + $0x50] sm:$0xff]
      %v196 = vld [vmem:[%s173 + $0x58] sm:$0xff]
      %v197 = vld [vmem:[%s173 + $0x60] sm:$0xff]
      %v198 = vld [vmem:[%s173 + $0x68] sm:$0xff]
      %v199 = vld [vmem:[%s173 + $0x70] sm:$0xff]
      %v200 = vld [vmem:[%s173 + $0x78] sm:$0xff]
      %v201 = vld [vmem:[%s173 + $0x80] sm:$0xff]
      %v202 = vld [vmem:[%s173 + $0x88] sm:$0xff]
      %v203 = vld [vmem:[%s173 + $0x90] sm:$0xff]
      %v204 = vld [vmem:[%s173 + $0x98] sm:$0xff]
      %v205 = vld [vmem:[%s173 + $0xa0] sm:$0xff]
      %v206 = vld [vmem:[%s173 + $0xa8] sm:$0xff]
      %v207 = vld [vmem:[%s173 + $0xb0] sm:$0xff]
      %v208 = vld [vmem:[%s173 + $0xb8] sm:$0xff]
      %v209 = vld [vmem:[%s173 + $0xc0] sm:$0xff]
      %v210 = vld [vmem:[%s173 + $0xc8] sm:$0xff]
      %v211 = vld [vmem:[%s173 + $0xd0] sm:$0xff]
      %v212 = vld [vmem:[%s173 + $0xd8] sm:$0xff]
      %v213 = vld [vmem:[%s173 + $0xe0] sm:$0xff]
      %v214 = vld [vmem:[%s173 + $0xe8] sm:$0xff]
      %v215 = vld [vmem:[%s173 + $0xf0] sm:$0xff]
      %v216 = vld [vmem:[%s173 + $0xf8] sm:$0xff]
      %v217 = vld [vmem:[%s1] sm:$0xff]
      %v218 = vld [vmem:[%s1 + $0x8] sm:$0xff]
      %v219 = vld [vmem:[%s1 + $0x10] sm:$0xff]
      %v220 = vld [vmem:[%s1 + $0x18] sm:$0xff]
      %v221 = vld [vmem:[%s1 + $0x20] sm:$0xff]
      %v222 = vld [vmem:[%s1 + $0x28] sm:$0xff]
      %v223 = vld [vmem:[%s1 + $0x30] sm:$0xff]
      %v224 = vld [vmem:[%s1 + $0x38] sm:$0xff]
      %v225 = vld [vmem:[%s1 + $0x40] sm:$0xff]
      %v226 = vld [vmem:[%s1 + $0x48] sm:$0xff]
      %v227 = vld [vmem:[%s1 + $0x50] sm:$0xff]
      %v228 = vld [vmem:[%s1 + $0x58] sm:$0xff]
      %v229 = vld [vmem:[%s1 + $0x60] sm:$0xff]
      %v230 = vld [vmem:[%s1 + $0x68] sm:$0xff]
      %v231 = vld [vmem:[%s1 + $0x70] sm:$0xff]
      %v232 = vld [vmem:[%s1 + $0x78] sm:$0xff]
      %233 = vmatprep.subr.mxu0 0.0
      %234 = vmatpush1.msra.mxu0 %v217
      %235 = vmatprep.subr.mxu0 0.0
      %236 = vmatpush1.msra.mxu0 %v218
      %237 = vmatprep.subr.mxu0 0.0
      %238 = vmatpush1.msra.mxu0 %v219
      %239 = vmatprep.subr.mxu0 0.0
      %240 = vmatpush1.msra.mxu0 %v220
      %241 = vmatprep.subr.mxu0 0.0
      %242 = vmatpush1.msra.mxu0 %v221
      %243 = vmatprep.subr.mxu0 0.0
      %244 = vmatpush1.msra.mxu0 %v222
      %245 = vmatprep.subr.mxu0 0.0
      %246 = vmatpush1.msra.mxu0 %v223
      %247 = vmatprep.subr.mxu0 0.0
      %248 = vmatpush1.msra.mxu0 %v224
      %249 = vmatprep.subr.mxu0 0.0
      %250 = vmatpush1.msra.mxu0 %v225
      %251 = vmatprep.subr.mxu0 0.0
      %252 = vmatpush1.msra.mxu0 %v226
      %253 = vmatprep.subr.mxu0 0.0
      %254 = vmatpush1.msra.mxu0 %v227
      %255 = vmatprep.subr.mxu0 0.0
      %256 = vmatpush1.msra.mxu0 %v228
      %257 = vmatprep.subr.mxu0 0.0
      %258 = vmatpush1.msra.mxu0 %v229
      %259 = vmatprep.subr.mxu0 0.0
      %260 = vmatpush1.msra.mxu0 %v230
      %261 = vmatprep.subr.mxu0 0.0
      %262 = vmatpush1.msra.mxu0 %v231
      %263 = vmatprep.subr.mxu0 0.0
      %264 = vmatpush1.msra.mxu0 %v232
      %265 = vmatprep.subr.mxu0 0.0
      %266 = vmatpush1.msra.mxu0 0.0
      %267 = vmatprep.subr.mxu0 0.0
      %268 = vmatpush1.msra.mxu0 0.0
      %269 = vmatprep.subr.mxu0 0.0
      %270 = vmatpush1.msra.mxu0 0.0
      %271 = vmatprep.subr.mxu0 0.0
      %272 = vmatpush1.msra.mxu0 0.0
      %273 = vmatprep.subr.mxu0 0.0
      %274 = vmatpush1.msra.mxu0 0.0
      %275 = vmatprep.subr.mxu0 0.0
      %276 = vmatpush1.msra.mxu0 0.0
      %277 = vmatprep.subr.mxu0 0.0
      %278 = vmatpush1.msra.mxu0 0.0
      %279 = vmatprep.subr.mxu0 0.0
      %280 = vmatpush1.msra.mxu0 0.0
      %281 = vmatprep.subr.mxu0 0.0
      %282 = vmatpush1.msra.mxu0 0.0
      %283 = vmatprep.subr.mxu0 0.0
      %284 = vmatpush1.msra.mxu0 0.0
      %285 = vmatprep.subr.mxu0 0.0
      %286 = vmatpush1.msra.mxu0 0.0
      %287 = vmatprep.subr.mxu0 0.0
      %288 = vmatpush1.msra.mxu0 0.0
      %289 = vmatprep.subr.mxu0 0.0
      %290 = vmatpush1.msra.mxu0 0.0
      %291 = vmatprep.subr.mxu0 0.0
      %292 = vmatpush1.msra.mxu0 0.0
      %293 = vmatprep.subr.mxu0 0.0
      %294 = vmatpush1.msra.mxu0 0.0
      %295 = vmatprep.subr.mxu0 0.0
      %296 = vmatpush1.msra.mxu0 0.0
      %297 = vmatprep.mubr.f32.mxu0 0.0
      %298 = vmatmul.mubr.f32.gmra.mrb[0].mxu0 %v185
      %v299 = vpop.f32.mrb[0].mxu0
      %v300 = vadd.f32 0.0, %v299
      %v301 = vpop.f32.mrb[0].mxu0
      %302 = vmatprep.mubr.f32.mxu0 0.0
      %303 = vmatmul.mubr.f32.gmra.mrb[0].mxu0 %v186
      %v304 = vpop.f32.mrb[0].mxu0
      %v305 = vadd.f32 0.0, %v304
      %v306 = vpop.f32.mrb[0].mxu0
      %307 = vmatprep.mubr.f32.mxu0 0.0
      %308 = vmatmul.mubr.f32.gmra.mrb[0].mxu0 %v187
      %v309 = vpop.f32.mrb[0].mxu0
      %v310 = vadd.f32 0.0, %v309
      %v311 = vpop.f32.mrb[0].mxu0
      %312 = vmatprep.mubr.f32.mxu0 0.0
      %313 = vmatmul.mubr.f32.gmra.mrb[0].mxu0 %v188
      %v314 = vpop.f32.mrb[0].mxu0
      %v315 = vadd.f32 0.0, %v314
      %v316 = vpop.f32.mrb[0].mxu0
      %317 = vmatprep.mubr.f32.mxu0 0.0
      %318 = vmatmul.mubr.f32.gmra.mrb[0].mxu0 %v189
      %v319 = vpop.f32.mrb[0].mxu0
      %v320 = vadd.f32 0.0, %v319
      %v321 = vpop.f32.mrb[0].mxu0
      %322 = vmatprep.mubr.f32.mxu0 0.0
      %323 = vmatmul.mubr.f32.gmra.mrb[0].mxu0 %v190
      %v324 = vpop.f32.mrb[0].mxu0
      %v325 = vadd.f32 0.0, %v324
      %v326 = vpop.f32.mrb[0].mxu0
      %327 = vmatprep.mubr.f32.mxu0 0.0
      %328 = vmatmul.mubr.f32.gmra.mrb[0].mxu0 %v191
      %v329 = vpop.f32.mrb[0].mxu0
      %v330 = vadd.f32 0.0, %v329
      %v331 = vpop.f32.mrb[0].mxu0
      %332 = vmatprep.mubr.f32.mxu0 0.0
      %333 = vmatmul.mubr.f32.gmra.mrb[0].mxu0 %v192
      %v334 = vpop.f32.mrb[0].mxu0
      %v335 = vadd.f32 0.0, %v334
      %v336 = vpop.f32.mrb[0].mxu0
      %337 = vmatprep.mubr.f32.mxu0 0.0
      %338 = vmatmul.mubr.f32.gmra.mrb[0].mxu0 %v193
      %v339 = vpop.f32.mrb[0].mxu0
      %v340 = vadd.f32 0.0, %v339
      %v341 = vpop.f32.mrb[0].mxu0
      %342 = vmatprep.mubr.f32.mxu0 0.0
      %343 = vmatmul.mubr.f32.gmra.mrb[0].mxu0 %v194
      %v344 = vpop.f32.mrb[0].mxu0
      %v345 = vadd.f32 0.0, %v344
      %v346 = vpop.f32.mrb[0].mxu0
      %347 = vmatprep.mubr.f32.mxu0 0.0
      %348 = vmatmul.mubr.f32.gmra.mrb[0].mxu0 %v195
      %v349 = vpop.f32.mrb[0].mxu0
      %v350 = vadd.f32 0.0, %v349
      %v351 = vpop.f32.mrb[0].mxu0
      %352 = vmatprep.mubr.f32.mxu0 0.0
      %353 = vmatmul.mubr.f32.gmra.mrb[0].mxu0 %v196
      %v354 = vpop.f32.mrb[0].mxu0
      %v355 = vadd.f32 0.0, %v354
      %v356 = vpop.f32.mrb[0].mxu0
      %357 = vmatprep.mubr.f32.mxu0 0.0
      %358 = vmatmul.mubr.f32.gmra.mrb[0].mxu0 %v197
      %v359 = vpop.f32.mrb[0].mxu0
      %v360 = vadd.f32 0.0, %v359
      %v361 = vpop.f32.mrb[0].mxu0
      %362 = vmatprep.mubr.f32.mxu0 0.0
      %363 = vmatmul.mubr.f32.gmra.mrb[0].mxu0 %v198
      %v364 = vpop.f32.mrb[0].mxu0
      %v365 = vadd.f32 0.0, %v364
      %v366 = vpop.f32.mrb[0].mxu0
      %367 = vmatprep.mubr.f32.mxu0 0.0
      %368 = vmatmul.mubr.f32.gmra.mrb[0].mxu0 %v199
      %v369 = vpop.f32.mrb[0].mxu0
      %v370 = vadd.f32 0.0, %v369
      %v371 = vpop.f32.mrb[0].mxu0
      %372 = vmatprep.mubr.f32.mxu0 0.0
      %373 = vmatmul.mubr.f32.gmra.mrb[0].mxu0 %v200
      %v374 = vpop.f32.mrb[0].mxu0
      %v375 = vadd.f32 0.0, %v374
      %v376 = vpop.f32.mrb[0].mxu0
      %377 = vmatprep.mubr.f32.mxu0 0.0
      %378 = vmatmul.mubr.f32.gmra.mrb[0].mxu0 %v201
      %v379 = vpop.f32.mrb[0].mxu0
      %v380 = vadd.f32 0.0, %v379
      %v381 = vpop.f32.mrb[0].mxu0
      %382 = vmatprep.mubr.f32.mxu0 0.0
      %383 = vmatmul.mubr.f32.gmra.mrb[0].mxu0 %v202
      %v384 = vpop.f32.mrb[0].mxu0
      %v385 = vadd.f32 0.0, %v384
      %v386 = vpop.f32.mrb[0].mxu0
      %387 = vmatprep.mubr.f32.mxu0 0.0
      %388 = vmatmul.mubr.f32.gmra.mrb[0].mxu0 %v203
      %v389 = vpop.f32.mrb[0].mxu0
      %v390 = vadd.f32 0.0, %v389
      %v391 = vpop.f32.mrb[0].mxu0
      %392 = vmatprep.mubr.f32.mxu0 0.0
      %393 = vmatmul.mubr.f32.gmra.mrb[0].mxu0 %v204
      %v394 = vpop.f32.mrb[0].mxu0
      %v395 = vadd.f32 0.0, %v394
      %v396 = vpop.f32.mrb[0].mxu0
      %397 = vmatprep.mubr.f32.mxu0 0.0
      %398 = vmatmul.mubr.f32.gmra.mrb[0].mxu0 %v205
      %v399 = vpop.f32.mrb[0].mxu0
      %v400 = vadd.f32 0.0, %v399
      %v401 = vpop.f32.mrb[0].mxu0
      %402 = vmatprep.mubr.f32.mxu0 0.0
      %403 = vmatmul.mubr.f32.gmra.mrb[0].mxu0 %v206
      %v404 = vpop.f32.mrb[0].mxu0
      %v405 = vadd.f32 0.0, %v404
      %v406 = vpop.f32.mrb[0].mxu0
      %407 = vmatprep.mubr.f32.mxu0 0.0
      %408 = vmatmul.mubr.f32.gmra.mrb[0].mxu0 %v207
      %v409 = vpop.f32.mrb[0].mxu0
      %v410 = vadd.f32 0.0, %v409
      %v411 = vpop.f32.mrb[0].mxu0
      %412 = vmatprep.mubr.f32.mxu0 0.0
      %413 = vmatmul.mubr.f32.gmra.mrb[0].mxu0 %v208
      %v414 = vpop.f32.mrb[0].mxu0
      %v415 = vadd.f32 0.0, %v414
      %v416 = vpop.f32.mrb[0].mxu0
      %417 = vmatprep.mubr.f32.mxu0 0.0
      %418 = vmatmul.mubr.f32.gmra.mrb[0].mxu0 %v209
      %v419 = vpop.f32.mrb[0].mxu0
      %v420 = vadd.f32 0.0, %v419
      %v421 = vpop.f32.mrb[0].mxu0
      %422 = vmatprep.mubr.f32.mxu0 0.0
      %423 = vmatmul.mubr.f32.gmra.mrb[0].mxu0 %v210
      %v424 = vpop.f32.mrb[0].mxu0
      %v425 = vadd.f32 0.0, %v424
      %v426 = vpop.f32.mrb[0].mxu0
      %427 = vmatprep.mubr.f32.mxu0 0.0
      %428 = vmatmul.mubr.f32.gmra.mrb[0].mxu0 %v211
      %v429 = vpop.f32.mrb[0].mxu0
      %v430 = vadd.f32 0.0, %v429
      %v431 = vpop.f32.mrb[0].mxu0
      %432 = vmatprep.mubr.f32.mxu0 0.0
      %433 = vmatmul.mubr.f32.gmra.mrb[0].mxu0 %v212
      %v434 = vpop.f32.mrb[0].mxu0
      %v435 = vadd.f32 0.0, %v434
      %v436 = vpop.f32.mrb[0].mxu0
      %437 = vmatprep.mubr.f32.mxu0 0.0
      %438 = vmatmul.mubr.f32.gmra.mrb[0].mxu0 %v213
      %v439 = vpop.f32.mrb[0].mxu0
      %v440 = vadd.f32 0.0, %v439
      %v441 = vpop.f32.mrb[0].mxu0
      %442 = vmatprep.mubr.f32.mxu0 0.0
      %443 = vmatmul.mubr.f32.gmra.mrb[0].mxu0 %v214
      %v444 = vpop.f32.mrb[0].mxu0
      %v445 = vadd.f32 0.0, %v444
      %v446 = vpop.f32.mrb[0].mxu0
      %447 = vmatprep.mubr.f32.mxu0 0.0
      %448 = vmatmul.mubr.f32.gmra.mrb[0].mxu0 %v215
      %v449 = vpop.f32.mrb[0].mxu0
      %v450 = vadd.f32 0.0, %v449
      %v451 = vpop.f32.mrb[0].mxu0
      %452 = vmatprep.mubr.f32.mxu0 0.0
      %453 = vmatmul.mubr.f32.gmra.mrb[0].mxu0 %v216
      %v454 = vpop.f32.mrb[0].mxu0
      %v455 = vadd.f32 0.0, %v454
      %v456 = vpop.f32.mrb[0].mxu0
      %457 = vdwg.mxu0
      %458 = vst [vmem:[%s179] sm:$0xff] %v300
      %459 = vst [vmem:[%s179 + $0x8] sm:$0xff] %v305
      %460 = vst [vmem:[%s179 + $0x10] sm:$0xff] %v310
      %461 = vst [vmem:[%s179 + $0x18] sm:$0xff] %v315
      %462 = vst [vmem:[%s179 + $0x20] sm:$0xff] %v320
      %463 = vst [vmem:[%s179 + $0x28] sm:$0xff] %v325
      %464 = vst [vmem:[%s179 + $0x30] sm:$0xff] %v330
      %465 = vst [vmem:[%s179 + $0x38] sm:$0xff] %v335
      %466 = vst [vmem:[%s179 + $0x40] sm:$0xff] %v340
      %467 = vst [vmem:[%s179 + $0x48] sm:$0xff] %v345
      %468 = vst [vmem:[%s179 + $0x50] sm:$0xff] %v350
      %469 = vst [vmem:[%s179 + $0x58] sm:$0xff] %v355
      %470 = vst [vmem:[%s179 + $0x60] sm:$0xff] %v360
      %471 = vst [vmem:[%s179 + $0x68] sm:$0xff] %v365
      %472 = vst [vmem:[%s179 + $0x70] sm:$0xff] %v370
      %473 = vst [vmem:[%s179 + $0x78] sm:$0xff] %v375
      %474 = vst [vmem:[%s179 + $0x80] sm:$0xff] %v380
      %475 = vst [vmem:[%s179 + $0x88] sm:$0xff] %v385
      %476 = vst [vmem:[%s179 + $0x90] sm:$0xff] %v390
      %477 = vst [vmem:[%s179 + $0x98] sm:$0xff] %v395
      %478 = vst [vmem:[%s179 + $0xa0] sm:$0xff] %v400
      %479 = vst [vmem:[%s179 + $0xa8] sm:$0xff] %v405
      %480 = vst [vmem:[%s179 + $0xb0] sm:$0xff] %v410
      %481 = vst [vmem:[%s179 + $0xb8] sm:$0xff] %v415
      %482 = vst [vmem:[%s179 + $0xc0] sm:$0xff] %v420
      %483 = vst [vmem:[%s179 + $0xc8] sm:$0xff] %v425
      %484 = vst [vmem:[%s179 + $0xd0] sm:$0xff] %v430
      %485 = vst [vmem:[%s179 + $0xd8] sm:$0xff] %v435
      %486 = vst [vmem:[%s179 + $0xe0] sm:$0xff] %v440
      %487 = vst [vmem:[%s179 + $0xe8] sm:$0xff] %v445
      %488 = vst [vmem:[%s179 + $0xf0] sm:$0xff] %v450
      %489 = vst [vmem:[%s179 + $0xf8] sm:$0xff] %v455
      %v490 = vadd.f32 %v300, %v305
      %v491 = vadd.f32 %v490, %v310
      %v492 = vadd.f32 %v491, %v315
      %v493 = vadd.f32 %v492, %v320
      %v494 = vadd.f32 %v493, %v325
      %v495 = vadd.f32 %v494, %v330
      %v496 = vadd.f32 %v495, %v335
      %v497 = vadd.f32 %v496, %v340
      %v498 = vadd.f32 %v497, %v345
      %v499 = vadd.f32 %v498, %v350
      %v500 = vadd.f32 %v499, %v355
      %v501 = vadd.f32 %v500, %v360
      %v502 = vadd.f32 %v501, %v365
      %v503 = vadd.f32 %v502, %v370
      %v504 = vadd.f32 %v503, %v375
      %v505 = vadd.f32 %v504, %v380
      %v506 = vadd.f32 %v505, %v385
      %v507 = vadd.f32 %v506, %v390
      %v508 = vadd.f32 %v507, %v395
      %v509 = vadd.f32 %v508, %v400
      %v510 = vadd.f32 %v509, %v405
      %v511 = vadd.f32 %v510, %v410
      %v512 = vadd.f32 %v511, %v415
      %v513 = vadd.f32 %v512, %v420
      %v514 = vadd.f32 %v513, %v425
      %v515 = vadd.f32 %v514, %v430
      %v516 = vadd.f32 %v515, %v435
      %v517 = vadd.f32 %v516, %v440
      %v518 = vadd.f32 %v517, %v445
      %v519 = vadd.f32 %v518, %v450
      %v520 = vadd.f32 %v519, %v455
      %v521 = vrot.slane %v520, 4
      %v522 = vadd.f32 %v520, %v521
      %v523 = vrot.slane %v522, 2
      %v524 = vadd.f32 %v522, %v523
      %v525 = vrot.slane %v524, 1
      %v526 = vadd.f32 %v524, %v525
      %527 = vst [vmem:[%s184] sm:$0x1] %v526
      %v528 = vmul.f32 %v300, %v300
      %v529 = vmul.f32 %v305, %v305
      %v530 = vmul.f32 %v310, %v310
      %v531 = vmul.f32 %v315, %v315
      %v532 = vmul.f32 %v320, %v320
      %v533 = vmul.f32 %v325, %v325
      %v534 = vmul.f32 %v330, %v330
      %v535 = vmul.f32 %v335, %v335
      %v536 = vmul.f32 %v340, %v340
      %v537 = vmul.f32 %v345, %v345
      %v538 = vmul.f32 %v350, %v350
      %v539 = vmul.f32 %v355, %v355
      %v540 = vmul.f32 %v360, %v360
      %v541 = vmul.f32 %v365, %v365
      %v542 = vmul.f32 %v370, %v370
      %v543 = vmul.f32 %v375, %v375
      %v544 = vmul.f32 %v380, %v380
      %v545 = vmul.f32 %v385, %v385
      %v546 = vmul.f32 %v390, %v390
      %v547 = vmul.f32 %v395, %v395
      %v548 = vmul.f32 %v400, %v400
      %v549 = vmul.f32 %v405, %v405
      %v550 = vmul.f32 %v410, %v410
      %v551 = vmul.f32 %v415, %v415
      %v552 = vmul.f32 %v420, %v420
      %v553 = vmul.f32 %v425, %v425
      %v554 = vmul.f32 %v430, %v430
      %v555 = vmul.f32 %v435, %v435
      %v556 = vmul.f32 %v440, %v440
      %v557 = vmul.f32 %v445, %v445
      %v558 = vmul.f32 %v450, %v450
      %v559 = vmul.f32 %v455, %v455
      %v560 = vadd.f32 %v528, %v529
      %v561 = vadd.f32 %v560, %v530
      %v562 = vadd.f32 %v561, %v531
      %v563 = vadd.f32 %v562, %v532
      %v564 = vadd.f32 %v563, %v533
      %v565 = vadd.f32 %v564, %v534
      %v566 = vadd.f32 %v565, %v535
      %v567 = vadd.f32 %v566, %v536
      %v568 = vadd.f32 %v567, %v537
      %v569 = vadd.f32 %v568, %v538
      %v570 = vadd.f32 %v569, %v539
      %v571 = vadd.f32 %v570, %v540
      %v572 = vadd.f32 %v571, %v541
      %v573 = vadd.f32 %v572, %v542
      %v574 = vadd.f32 %v573, %v543
      %v575 = vadd.f32 %v574, %v544
      %v576 = vadd.f32 %v575, %v545
      %v577 = vadd.f32 %v576, %v546
      %v578 = vadd.f32 %v577, %v547
      %v579 = vadd.f32 %v578, %v548
      %v580 = vadd.f32 %v579, %v549
      %v581 = vadd.f32 %v580, %v550
      %v582 = vadd.f32 %v581, %v551
      %v583 = vadd.f32 %v582, %v552
      %v584 = vadd.f32 %v583, %v553
      %v585 = vadd.f32 %v584, %v554
      %v586 = vadd.f32 %v585, %v555
      %v587 = vadd.f32 %v586, %v556
      %v588 = vadd.f32 %v587, %v557
      %v589 = vadd.f32 %v588, %v558
      %v590 = vadd.f32 %v589, %v559
      %v591 = vrot.slane %v590, 4
      %v592 = vadd.f32 %v590, %v591
      %v593 = vrot.slane %v592, 2
      %v594 = vadd.f32 %v592, %v593
      %v595 = vrot.slane %v594, 1
      %v596 = vadd.f32 %v594, %v595
      %597 = vst [vmem:[%s184 + $0x1] sm:$0x1] %v596
      %s598 = smul.u32 32, %s15
      %p599 = scmp.lt.s32.totalorder %s598, 63
      %s600 = scalar_select %p599, %s598, 63
      %s601 = smul.addr %s600, 8
      %s602 = scalar_lea.vmem %s2, %s601
      %p603 = scmp.lt.s32.totalorder %s15, 1
      %s604 = scalar_select %p603, %s15, 1
      %s605 = smul.addr %s604, 8
      %s606 = scalar_lea.vmem %s3, %s605
      // Predicated region
      $region29: #{bottleneck_forward.4} parent=27 // pred_check
        %p607 = pneg %p80
      $region30: #{bottleneck_forward.4} parent=27 // pred_check_branch
        %609 = sbr.rel (%p607) target = $region32
      $region31: #{bottleneck_forward.4} parent=27 // pred_region
        %s610 = smul.u32 32, %s15
      $region32: #{bottleneck_forward.4} parent=27 // pred_fallthru
        _
      // Predicated region
      $region33: #{bottleneck_forward.4} parent=27 // pred_check
        %p611 = pneg %p106
      $region34: #{bottleneck_forward.4} parent=27 // pred_check_branch
        %613 = sbr.rel (%p611) target = $region36
      $region35: #{bottleneck_forward.4} parent=27 // pred_region
        _
      $region36: #{bottleneck_forward.4} parent=27 // pred_fallthru
        _
    $region28: #{bottleneck_forward.4} parent=5 // pred_fallthru
      _
    %p614 = scmp.le.s32.totalorder 2, %s10
    // Predicated region
    $region37: #{bottleneck_forward.4} parent=5 // pred_check
      %p615 = pneg %p614
    $region38: #{bottleneck_forward.4} parent=5 // pred_check_branch
      %617 = sbr.rel (%p615) target = $region40
    $region39: #{bottleneck_forward.4} parent=5 // pred_region
      %s618 = ssub.s32 %s10, 2
      // Predicated region
      $region41: #{bottleneck_forward.4} parent=39 // pred_check
        %p619 = pneg %p86
      $region42: #{bottleneck_forward.4} parent=39 // pred_check_branch
        %621 = sbr.rel (%p619) target = $region44
      $region43: #{bottleneck_forward.4} parent=39 // pred_region
        %s622 = smul.u32 32, %s16
        %p623 = scmp.lt.s32.totalorder %s622, 63
        %s624 = scalar_select %p623, %s622, 63
        %s625 = smul.addr %s624, 8
        %s626 = scalar_lea.vmem %s2, %s625
      $region44: #{bottleneck_forward.4} parent=39 // pred_fallthru
        _
      // Predicated region
      $region45: #{bottleneck_forward.4} parent=39 // pred_check
        %p627 = pneg %p112
      $region46: #{bottleneck_forward.4} parent=39 // pred_check_branch
        %629 = sbr.rel (%p627) target = $region48
      $region47: #{bottleneck_forward.4} parent=39 // pred_region
        %p630 = scmp.lt.s32.totalorder %s16, 1
        %s631 = scalar_select %p630, %s16, 1
        %s632 = smul.addr %s631, 8
        %s633 = scalar_lea.vmem %s3, %s632
      $region48: #{bottleneck_forward.4} parent=39 // pred_fallthru
        _
    $region40: #{bottleneck_forward.4} parent=5 // pred_fallthru
      _
  $region6: #{bottleneck_forward.4} parent=0 // loop_footer
    %s14 = sadd.s32 1, %s10
  $region7: #{bottleneck_forward.4} parent=0 // loop_footer_branch
    %9 = sbr.rel target = $region3
  $region8: #{bottleneck_forward.4} parent=0 // loop_exit
    _

// kernel: bottleneck_forward.5
$region0: #{bottleneck_forward.5}
  #allocation0 [shape = 'u32[]', space=smem, size = 0x4, offset = 0x4, fixed_abs, tag = 'smem constant byte address 0x4 - core index']
  #allocation1 [shape = 'u32[144,128]{1,0:T(1,128)}', space=vmem, size = 0x12000, scoped, tag = 'internal scratch']
  #allocation2 [shape = 'f32[18,24,128]{2,1,0:T(8,128)}', space=vmem, size = 0x36000, scoped, tag = 'scratch operand']
  #allocation3 [shape = 'f32[256,128]{1,0:T(8,128)}', space=vmem, size = 0x20000, scoped, tag = 'scratch operand']
  %s0 = inlined_call_operand.vmem [shape: f32[512,128], index: 0, kind: input, shape index: {}]
  %s1 = inlined_call_operand.vmem [shape: f32[9,128,128], index: 1, kind: input, shape index: {}]
  %s2 = inlined_call_operand.vmem [shape: f32[1,128], index: 2, kind: input, shape index: {}]
  %s3 = inlined_call_operand.vmem [shape: f32[1,128], index: 3, kind: input, shape index: {}]
  %s4 = inlined_call_operand.vmem [shape: f32[512,128], index: 4, kind: output, shape index: {0}]
  %s5 = inlined_call_operand.vmem [shape: f32[2,8,128], index: 5, kind: output, shape index: {1}]
  %6 = xla_tuple %s4, %s5
  %s7 = sld [smem:[#allocation0]]
  $region57: #{bottleneck_forward.5} parent=0
    _
  %s9 = ssub.s32 1, %s7
  %s10 = scalar_select 0, %s9, %s7
  loop: start=0, step=1, limit=4
  $region2: #{bottleneck_forward.5} parent=0 // loop_pre_header
    _
  $region3: #{bottleneck_forward.5} parent=0 // loop_header
    %s12 = sphi 0, %s16
    %p13 = scmp.ge.s32.totalorder %s12, 4
    %s22 = sphi 0, %s24
    %s25 = sphi 0, %s22
    %s26 = sphi 0, %s25
    %s42 = sphi 0, %s26
    %s46 = sphi 0, %s46
    %s48 = sphi 0, %s46
    %s49 = sphi 0, %s48
    %s63 = sphi 0, %s49
    %s67 = sphi 0, %s67
    %s69 = sphi 0, %s67
    %s70 = sphi 0, %s69
    %s84 = sphi 0, %s70
    %s88 = sphi 0, %s88
    %s90 = sphi 0, %s88
    %s91 = sphi 0, %s90
    %s105 = sphi 0, %s91
    %s111 = sphi 0, %s113
    %s114 = sphi 0, %s111
    %s115 = sphi 0, %s114
    %s131 = sphi 0, %s115
    %s137 = sphi 0, %s139
    %s140 = sphi 0, %s137
    %s141 = sphi 0, %s140
    %s157 = sphi 0, %s141
  $region4: #{bottleneck_forward.5} parent=0 // loop_header_branch
    %15 = sbr.rel (%p13) target = $region8
  $region5: #{bottleneck_forward.5} parent=0 // loop_body
    %s17 = ssub.s32 %s12, 1
    %s18 = ssub.s32 %s12, 2
    %s19 = sadd.s32 %s12, 1
    %s20 = ssub.s32 %s12, %s19
    %p21 = scmp.eq.s32.totalorder %s20, 0
    %s23 = sadd.s32 %s22, 1
    %s24 = scalar_select %p21, %s22, %s23
    %p27 = pneg %p21
    %p28 = scmp.eq.s32.totalorder %s12, 1
    %p29 = por %p27, %p28
    %p30 = scmp.ne.s32.totalorder %s22, %s25
    %p31 = scmp.eq.s32.totalorder %s12, 0
    %p32 = por %p30, %p31
    %p33 = scmp.ne.s32.totalorder %s22, %s25
    %p34 = scmp.eq.s32.totalorder %s17, 1
    %p35 = por %p33, %p34
    %p36 = scmp.ne.s32.totalorder %s25, %s26
    %p37 = scmp.eq.s32.totalorder %s17, 0
    %p38 = por %p36, %p37
    %p39 = scmp.ne.s32.totalorder %s25, %s26
    %p40 = scmp.eq.s32.totalorder %s18, 1
    %p41 = por %p39, %p40
    %p43 = scmp.ne.s32.totalorder %s26, %s42
    %p44 = scmp.eq.s32.totalorder %s18, 0
    %p45 = por %p43, %p44
    %s47 = sadd.s32 %s46, 1
    %p50 = scmp.eq.s32.totalorder %s12, 1
    %p51 = scmp.ne.s32.totalorder %s46, %s48
    %p52 = scmp.eq.s32.totalorder %s12, 0
    %p53 = por %p51, %p52
    %p54 = scmp.ne.s32.totalorder %s46, %s48
    %p55 = scmp.eq.s32.totalorder %s17, 1
    %p56 = por %p54, %p55
    %p57 = scmp.ne.s32.totalorder %s48, %s49
    %p58 = scmp.eq.s32.totalorder %s17, 0
    %p59 = por %p57, %p58
    %p60 = scmp.ne.s32.totalorder %s48, %s49
    %p61 = scmp.eq.s32.totalorder %s18, 1
    %p62 = por %p60, %p61
    %p64 = scmp.ne.s32.totalorder %s49, %s63
    %p65 = scmp.eq.s32.totalorder %s18, 0
    %p66 = por %p64, %p65
    %s68 = sadd.s32 %s67, 1
    %p71 = scmp.eq.s32.totalorder %s12, 1
    %p72 = scmp.ne.s32.totalorder %s67, %s69
    %p73 = scmp.eq.s32.totalorder %s12, 0
    %p74 = por %p72, %p73
    %p75 = scmp.ne.s32.totalorder %s67, %s69
    %p76 = scmp.eq.s32.totalorder %s17, 1
    %p77 = por %p75, %p76
    %p78 = scmp.ne.s32.totalorder %s69, %s70
    %p79 = scmp.eq.s32.totalorder %s17, 0
    %p80 = por %p78, %p79
    %p81 = scmp.ne.s32.totalorder %s69, %s70
    %p82 = scmp.eq.s32.totalorder %s18, 1
    %p83 = por %p81, %p82
    %p85 = scmp.ne.s32.totalorder %s70, %s84
    %p86 = scmp.eq.s32.totalorder %s18, 0
    %p87 = por %p85, %p86
    %s89 = sadd.s32 %s88, 1
    %p92 = scmp.eq.s32.totalorder %s12, 1
    %p93 = scmp.ne.s32.totalorder %s88, %s90
    %p94 = scmp.eq.s32.totalorder %s12, 0
    %p95 = por %p93, %p94
    %p96 = scmp.ne.s32.totalorder %s88, %s90
    %p97 = scmp.eq.s32.totalorder %s17, 1
    %p98 = por %p96, %p97
    %p99 = scmp.ne.s32.totalorder %s90, %s91
    %p100 = scmp.eq.s32.totalorder %s17, 0
    %p101 = por %p99, %p100
    %p102 = scmp.ne.s32.totalorder %s90, %s91
    %p103 = scmp.eq.s32.totalorder %s18, 1
    %p104 = por %p102, %p103
    %p106 = scmp.ne.s32.totalorder %s91, %s105
    %p107 = scmp.eq.s32.totalorder %s18, 0
    %p108 = por %p106, %p107
    %s109 = ssub.s32 %s12, %s19
    %p110 = scmp.eq.s32.totalorder %s109, 0
    %s112 = sadd.s32 %s111, 1
    %s113 = scalar_select %p110, %s111, %s112
    %p116 = pneg %p110
    %p117 = scmp.eq.s32.totalorder %s12, 1
    %p118 = por %p116, %p117
    %p119 = scmp.ne.s32.totalorder %s111, %s114
    %p120 = scmp.eq.s32.totalorder %s12, 0
    %p121 = por %p119, %p120
    %p122 = scmp.ne.s32.totalorder %s111, %s114
    %p123 = scmp.eq.s32.totalorder %s17, 1
    %p124 = por %p122, %p123
    %p125 = scmp.ne.s32.totalorder %s114, %s115
    %p126 = scmp.eq.s32.totalorder %s17, 0
    %p127 = por %p125, %p126
    %p128 = scmp.ne.s32.totalorder %s114, %s115
    %p129 = scmp.eq.s32.totalorder %s18, 1
    %p130 = por %p128, %p129
    %p132 = scmp.ne.s32.totalorder %s115, %s131
    %p133 = scmp.eq.s32.totalorder %s18, 0
    %p134 = por %p132, %p133
    %s135 = ssub.s32 %s12, %s19
    %p136 = scmp.eq.s32.totalorder %s135, 0
    %s138 = sadd.s32 %s137, 1
    %s139 = scalar_select %p136, %s137, %s138
    %p142 = pneg %p136
    %p143 = scmp.eq.s32.totalorder %s12, 1
    %p144 = por %p142, %p143
    %p145 = scmp.ne.s32.totalorder %s137, %s140
    %p146 = scmp.eq.s32.totalorder %s12, 0
    %p147 = por %p145, %p146
    %p148 = scmp.ne.s32.totalorder %s137, %s140
    %p149 = scmp.eq.s32.totalorder %s17, 1
    %p150 = por %p148, %p149
    %p151 = scmp.ne.s32.totalorder %s140, %s141
    %p152 = scmp.eq.s32.totalorder %s17, 0
    %p153 = por %p151, %p152
    %p154 = scmp.ne.s32.totalorder %s140, %s141
    %p155 = scmp.eq.s32.totalorder %s18, 1
    %p156 = por %p154, %p155
    %p158 = scmp.ne.s32.totalorder %s141, %s157
    %p159 = scmp.eq.s32.totalorder %s18, 0
    %p160 = por %p158, %p159
    %p161 = scmp.le.s32.totalorder 1, %s12
    %p162 = scmp.lt.s32.totalorder %s12, 3
    %p163 = pnand %p161, %p162
    %p164 = pneg %p163
    // Predicated region
    $region9: #{bottleneck_forward.5} parent=5 // pred_check
      _
    $region10: #{bottleneck_forward.5} parent=5 // pred_check_branch
      %166 = sbr.rel (%p163) target = $region12
    $region11: #{bottleneck_forward.5} parent=5 // pred_region
      %s167 = ssub.s32 %s12, 1
      // Predicated region
      $region13: #{bottleneck_forward.5} parent=11 // pred_check
        %p168 = pneg %p59
      $region14: #{bottleneck_forward.5} parent=11 // pred_check_branch
        %170 = sbr.rel (%p168) target = $region16
      $region15: #{bottleneck_forward.5} parent=11 // pred_region
        _
      $region16: #{bottleneck_forward.5} parent=11 // pred_fallthru
        _
      // Predicated region
      $region17: #{bottleneck_forward.5} parent=11 // pred_check
        %p171 = pneg %p80
      $region18: #{bottleneck_forward.5} parent=11 // pred_check_branch
        %173 = sbr.rel (%p171) target = $region20
      $region19: #{bottleneck_forward.5} parent=11 // pred_region
        _
      $region20: #{bottleneck_forward.5} parent=11 // pred_fallthru
        _
      // Predicated region
      $region21: #{bottleneck_forward.5} parent=11 // pred_check
        %p174 = pneg %p101
      $region22: #{bottleneck_forward.5} parent=11 // pred_check_branch
        %176 = sbr.rel (%p174) target = $region24
      $region23: #{bottleneck_forward.5} parent=11 // pred_region
        _
      $region24: #{bottleneck_forward.5} parent=11 // pred_fallthru
        _
    $region12: #{bottleneck_forward.5} parent=5 // pred_fallthru
      _
    %p177 = scmp.lt.s32.totalorder %s12, 2
    // Predicated region
    $region25: #{bottleneck_forward.5} parent=5 // pred_check
      %p178 = pneg %p177
    $region26: #{bottleneck_forward.5} parent=5 // pred_check_branch
      %180 = sbr.rel (%p178) target = $region28
    $region27: #{bottleneck_forward.5} parent=5 // pred_region
      // Predicated region
      $region29: #{bottleneck_forward.5} parent=27 // pred_check
        %p181 = pneg %p32
      $region30: #{bottleneck_forward.5} parent=27 // pred_check_branch
        %183 = sbr.rel (%p181) target = $region32
      $region31: #{bottleneck_forward.5} parent=27 // pred_region
        %s184 = smul.u32 32, %s12
        %p185 = scmp.lt.s32.totalorder %s184, 63
        %s186 = scalar_select %p185, %s184, 63
        %s187 = smul.addr %s186, 8
        %s188 = scalar_lea.vmem %s0, %s187
        %s189 = smul.u32 32, %s12
      $region32: #{bottleneck_forward.5} parent=27 // pred_fallthru
        _
    $region28: #{bottleneck_forward.5} parent=5 // pred_fallthru
      _
    %p190 = scmp.le.s32.totalorder 1, %s12
    %p191 = scmp.lt.s32.totalorder %s12, 3
    %p192 = pnand %p190, %p191
    %p193 = pneg %p192
    // Predicated region
    $region33: #{bottleneck_forward.5} parent=5 // pred_check
      _
    $region34: #{bottleneck_forward.5} parent=5 // pred_check_branch
      %195 = sbr.rel (%p192) target = $region36
    $region35: #{bottleneck_forward.5} parent=5 // pred_region
      %s196 = ssub.s32 %s12, 1
      %s197 = smul.u32 32, %s17
      %p198 = scmp.lt.s32.totalorder %s197, 63
      %s199 = scalar_select %p198, %s197, 63
      %s200 = smul.addr %s199, 8
      %s201 = scalar_lea.vmem %s0, %s200
      %p202 = pneg %p38
      %p203 = pneg %p35
      %p204 = pneg %p59
      %p205 = pneg %p56
      %p206 = pneg %p80
      %p207 = pneg %p77
      %p208 = pneg %p101
      %p209 = pneg %p98
      %p210 = pneg %p127
      %p211 = pneg %p124
      %s212 = smul.u32 32, %s17
      %p213 = scmp.lt.s32.totalorder %s212, 63
      %s214 = scalar_select %p213, %s212, 63
      %s215 = smul.addr %s214, 8
      %s216 = scalar_lea.vmem %s4, %s215
      %p217 = pneg %p153
      %p218 = pneg %p150
      %p219 = scmp.lt.s32.totalorder %s17, 1
      %s220 = scalar_select %p219, %s17, 1
      %s221 = smul.addr %s220, 8
      %s222 = scalar_lea.vmem %s5, %s221
      %s223 = smul.u32 32, %s17
      %p224 = scmp.lt.s32.totalorder %s223, 63
      %s225 = scalar_select %p224, %s223, 63
      %s226 = smul.addr %s225, 8
      %s227 = scalar_lea.vmem %s0, %s226
      %s228 = smul.u32 32, %s17
      %s229 = smul.u32 32, %s17
      %p230 = scmp.lt.s32.totalorder %s229, 63
      %s231 = scalar_select %p230, %s229, 63
      %s232 = smul.addr %s231, 8
      %s233 = scalar_lea.vmem %s4, %s232
      %s234 = smul.u32 32, %s17
      %p235 = scmp.lt.s32.totalorder %s17, 1
      %s236 = scalar_select %p235, %s17, 1
      %s237 = smul.addr %s236, 8
      %s238 = scalar_lea.vmem %s5, %s237
      %v239 = vld [vmem:[%s227] sm:$0xff]
      %v240 = vld [vmem:[%s227 + $0x8] sm:$0xff]
      %v241 = vld [vmem:[%s227 + $0x10] sm:$0xff]
      %v242 = vld [vmem:[%s227 + $0x18] sm:$0xff]
      %v243 = vld [vmem:[%s227 + $0x20] sm:$0xff]
      %v244 = vld [vmem:[%s227 + $0x28] sm:$0xff]
      %v245 = vld [vmem:[%s227 + $0x30] sm:$0xff]
      %v246 = vld [vmem:[%s227 + $0x38] sm:$0xff]
      %v247 = vld [vmem:[%s227 + $0x40] sm:$0xff]
      %v248 = vld [vmem:[%s227 + $0x48] sm:$0xff]
      %v249 = vld [vmem:[%s227 + $0x50] sm:$0xff]
      %v250 = vld [vmem:[%s227 + $0x58] sm:$0xff]
      %v251 = vld [vmem:[%s227 + $0x60] sm:$0xff]
      %v252 = vld [vmem:[%s227 + $0x68] sm:$0xff]
      %v253 = vld [vmem:[%s227 + $0x70] sm:$0xff]
      %v254 = vld [vmem:[%s227 + $0x78] sm:$0xff]
      %v255 = vld [vmem:[%s227 + $0x80] sm:$0xff]
      %v256 = vld [vmem:[%s227 + $0x88] sm:$0xff]
      %v257 = vld [vmem:[%s227 + $0x90] sm:$0xff]
      %v258 = vld [vmem:[%s227 + $0x98] sm:$0xff]
      %v259 = vld [vmem:[%s227 + $0xa0] sm:$0xff]
      %v260 = vld [vmem:[%s227 + $0xa8] sm:$0xff]
      %v261 = vld [vmem:[%s227 + $0xb0] sm:$0xff]
      %v262 = vld [vmem:[%s227 + $0xb8] sm:$0xff]
      %v263 = vld [vmem:[%s227 + $0xc0] sm:$0xff]
      %v264 = vld [vmem:[%s227 + $0xc8] sm:$0xff]
      %v265 = vld [vmem:[%s227 + $0xd0] sm:$0xff]
      %v266 = vld [vmem:[%s227 + $0xd8] sm:$0xff]
      %v267 = vld [vmem:[%s227 + $0xe0] sm:$0xff]
      %v268 = vld [vmem:[%s227 + $0xe8] sm:$0xff]
      %v269 = vld [vmem:[%s227 + $0xf0] sm:$0xff]
      %v270 = vld [vmem:[%s227 + $0xf8] sm:$0xff]
      %v271 = vld [vmem:[%s2] sm:$0x1]
      %v273 = vlaneseq
      %v274 = vshrl.u32 %v273, 7
      %v275 = vsub.s32 0, %v274
      %v276 = vrot.slane %v271, %v275
      %v278 = vmul.f32 %v239, %v276
      %v279 = vmul.f32 %v240, %v276
      %v280 = vmul.f32 %v241, %v276
      %v281 = vmul.f32 %v242, %v276
      %v282 = vmul.f32 %v243, %v276
      %v283 = vmul.f32 %v244, %v276
      %v284 = vmul.f32 %v245, %v276
      %v285 = vmul.f32 %v246, %v276
      %v286 = vmul.f32 %v247, %v276
      %v287 = vmul.f32 %v248, %v276
      %v288 = vmul.f32 %v249, %v276
      %v289 = vmul.f32 %v250, %v276
      %v290 = vmul.f32 %v251, %v276
      %v291 = vmul.f32 %v252, %v276
      %v292 = vmul.f32 %v253, %v276
      %v293 = vmul.f32 %v254, %v276
      %v294 = vmul.f32 %v255, %v276
      %v295 = vmul.f32 %v256, %v276
      %v296 = vmul.f32 %v257, %v276
      %v297 = vmul.f32 %v258, %v276
      %v298 = vmul.f32 %v259, %v276
      %v299 = vmul.f32 %v260, %v276
      %v300 = vmul.f32 %v261, %v276
      %v301 = vmul.f32 %v262, %v276
      %v302 = vmul.f32 %v263, %v276
      %v303 = vmul.f32 %v264, %v276
      %v304 = vmul.f32 %v265, %v276
      %v305 = vmul.f32 %v266, %v276
      %v306 = vmul.f32 %v267, %v276
      %v307 = vmul.f32 %v268, %v276
      %v308 = vmul.f32 %v269, %v276
      %v309 = vmul.f32 %v270, %v276
      %v310 = vld [vmem:[%s3] sm:$0x1]
      %v312 = vlaneseq
      %v313 = vshrl.u32 %v312, 7
      %v314 = vsub.s32 0, %v313
      %v315 = vrot.slane %v310, %v314
      %v317 = vadd.f32 %v278, %v315
      %v318 = vadd.f32 %v279, %v315
      %v319 = vadd.f32 %v280, %v315
      %v320 = vadd.f32 %v281, %v315
      %v321 = vadd.f32 %v282, %v315
      %v322 = vadd.f32 %v283, %v315
      %v323 = vadd.f32 %v284, %v315
      %v324 = vadd.f32 %v285, %v315
      %v325 = vadd.f32 %v286, %v315
      %v326 = vadd.f32 %v287, %v315
      %v327 = vadd.f32 %v288, %v315
      %v328 = vadd.f32 %v289, %v315
      %v329 = vadd.f32 %v290, %v315
      %v330 = vadd.f32 %v291, %v315
      %v331 = vadd.f32 %v292, %v315
      %v332 = vadd.f32 %v293, %v315
      %v333 = vadd.f32 %v294, %v315
      %v334 = vadd.f32 %v295, %v315
      %v335 = vadd.f32 %v296, %v315
      %v336 = vadd.f32 %v297, %v315
      %v337 = vadd.f32 %v298, %v315
      %v338 = vadd.f32 %v299, %v315
      %v339 = vadd.f32 %v300, %v315
      %v340 = vadd.f32 %v301, %v315
      %v341 = vadd.f32 %v302, %v315
      %v342 = vadd.f32 %v303, %v315
      %v343 = vadd.f32 %v304, %v315
      %v344 = vadd.f32 %v305, %v315
      %v345 = vadd.f32 %v306, %v315
      %v346 = vadd.f32 %v307, %v315
      %v347 = vadd.f32 %v308, %v315
      %v348 = vadd.f32 %v309, %v315
      %v349 = vmax.f32 %v317, 0.0
      %v350 = vmax.f32 %v318, 0.0
      %v351 = vmax.f32 %v319, 0.0
      %v352 = vmax.f32 %v320, 0.0
      %v353 = vmax.f32 %v321, 0.0
      %v354 = vmax.f32 %v322, 0.0
      %v355 = vmax.f32 %v323, 0.0
      %v356 = vmax.f32 %v324, 0.0
      %v357 = vmax.f32 %v325, 0.0
      %v358 = vmax.f32 %v326, 0.0
      %v359 = vmax.f32 %v327, 0.0
      %v360 = vmax.f32 %v328, 0.0
      %v361 = vmax.f32 %v329, 0.0
      %v362 = vmax.f32 %v330, 0.0
      %v363 = vmax.f32 %v331, 0.0
      %v364 = vmax.f32 %v332, 0.0
      %v365 = vmax.f32 %v333, 0.0
      %v366 = vmax.f32 %v334, 0.0
      %v367 = vmax.f32 %v335, 0.0
      %v368 = vmax.f32 %v336, 0.0
      %v369 = vmax.f32 %v337, 0.0
      %v370 = vmax.f32 %v338, 0.0
      %v371 = vmax.f32 %v339, 0.0
      %v372 = vmax.f32 %v340, 0.0
      %v373 = vmax.f32 %v341, 0.0
      %v374 = vmax.f32 %v342, 0.0
      %v375 = vmax.f32 %v343, 0.0
      %v376 = vmax.f32 %v344, 0.0
      %v377 = vmax.f32 %v345, 0.0
      %v378 = vmax.f32 %v346, 0.0
      %v379 = vmax.f32 %v347, 0.0
      %v380 = vmax.f32 %v348, 0.0
      %381 = vst [vmem:[#allocation2] sm:$0xff] 0.0
      %382 = vst [vmem:[#allocation2 + $0x8] sm:$0xff] 0.0
      %383 = vst [vmem:[#allocation2 + $0x10] sm:$0xff] 0.0
      %s384 = scalar_lea.vmem [#allocation2], 408
      %385 = vst [vmem:[%s384] sm:$0xff] 0.0
      %386 = vst [vmem:[%s384 + $0x8] sm:$0xff] 0.0
      %387 = vst [vmem:[%s384 + $0x10] sm:$0xff] 0.0
      %s388 = scalar_lea.vmem [#allocation2], 24
      %389 = vst [vmem:[%s388] sm:$0x1] 0.0
      %390 = vst [vmem:[%s388 + $0x18] sm:$0x1] 0.0
      %391 = vst [vmem:[%s388 + $0x30] sm:$0x1] 0.0
      %392 = vst [vmem:[%s388 + $0x48] sm:$0x1] 0.0
      %393 = vst [vmem:[%s388 + $0x60] sm:$0x1] 0.0
      %394 = vst [vmem:[%s388 + $0x78] sm:$0x1] 0.0
      %395 = vst [vmem:[%s388 + $0x90] sm:$0x1] 0.0
      %396 = vst [vmem:[%s388 + $0xa8] sm:$0x1] 0.0
      %397 = vst [vmem:[%s388 + $0xc0] sm:$0x1] 0.0
      %398 = vst [vmem:[%s388 + $0xd8] sm:$0x1] 0.0
      %399 = vst [vmem:[%s388 + $0xf0] sm:$0x1] 0.0
      %400 = vst [vmem:[%s388 + $0x108] sm:$0x1] 0.0
      %401 = vst [vmem:[%s388 + $0x120] sm:$0x1] 0.0
      %402 = vst [vmem:[%s388 + $0x138] sm:$0x1] 0.0
      %403 = vst [vmem:[%s388 + $0x150] sm:$0x1] 0.0
      %404 = vst [vmem:[%s388 + $0x168] sm:$0x1] 0.0
      %405 = vst [vmem:[%s388 + $0x11] sm:$0x1] 0.0
      %406 = vst [vmem:[%s388 + $0x29] sm:$0x1] 0.0
      %407 = vst [vmem:[%s388 + $0x41] sm:$0x1] 0.0
      %408 = vst [vmem:[%s388 + $0x59] sm:$0x1] 0.0
      %409 = vst [vmem:[%s388 + $0x71] sm:$0x1] 0.0
      %410 = vst [vmem:[%s388 + $0x89] sm:$0x1] 0.0
      %411 = vst [vmem:[%s388 + $0xa1] sm:$0x1] 0.0
      %412 = vst [vmem:[%s388 + $0xb9] sm:$0x1] 0.0
      %413 = vst [vmem:[%s388 + $0xd1] sm:$0x1] 0.0
      %414 = vst [vmem:[%s388 + $0xe9] sm:$0x1] 0.0
      %415 = vst [vmem:[%s388 + $0x101] sm:$0x1] 0.0
      %416 = vst [vmem:[%s388 + $0x119] sm:$0x1] 0.0
      %417 = vst [vmem:[%s388 + $0x131] sm:$0x1] 0.0
      %418 = vst [vmem:[%s388 + $0x149] sm:$0x1] 0.0
      %419 = vst [vmem:[%s388 + $0x161] sm:$0x1] 0.0
      %420 = vst [vmem:[%s388 + $0x179] sm:$0x1] 0.0
      %421 = vst [vmem:[%s388 + $0x1] sm:$0xff] %v349
      %422 = vst [vmem:[%s388 + $0x9] sm:$0xff] %v350
      %423 = vst [vmem:[%s388 + $0x19] sm:$0xff] %v351
      %424 = vst [vmem:[%s388 + $0x21] sm:$0xff] %v352
      %425 = vst [vmem:[%s388 + $0x31] sm:$0xff] %v353
      %426 = vst [vmem:[%s388 + $0x39] sm:$0xff] %v354
      %427 = vst [vmem:[%s388 + $0x49] sm:$0xff] %v355
      %428 = vst [vmem:[%s388 + $0x51] sm:$0xff] %v356
      %429 = vst [vmem:[%s388 + $0x61] sm:$0xff] %v357
      %430 = vst [vmem:[%s388 + $0x69] sm:$0xff] %v358
      %431 = vst [vmem:[%s388 + $0x79] sm:$0xff] %v359
      %432 = vst [vmem:[%s388 + $0x81] sm:$0xff] %v360
      %433 = vst [vmem:[%s388 + $0x91] sm:$0xff] %v361
      %434 = vst [vmem:[%s388 + $0x99] sm:$0xff] %v362
      %435 = vst [vmem:[%s388 + $0xa9] sm:$0xff] %v363
      %436 = vst [vmem:[%s388 + $0xb1] sm:$0xff] %v364
      %437 = vst [vmem:[%s388 + $0xc1] sm:$0xff] %v365
      %438 = vst [vmem:[%s388 + $0xc9] sm:$0xff] %v366
      %439 = vst [vmem:[%s388 + $0xd9] sm:$0xff] %v367
      %440 = vst [vmem:[%s388 + $0xe1] sm:$0xff] %v368
      %441 = vst [vmem:[%s388 + $0xf1] sm:$0xff] %v369
      %442 = vst [vmem:[%s388 + $0xf9] sm:$0xff] %v370
      %443 = vst [vmem:[%s388 + $0x109] sm:$0xff] %v371
      %444 = vst [vmem:[%s388 + $0x111] sm:$0xff] %v372
      %445 = vst [vmem:[%s388 + $0x121] sm:$0xff] %v373
      %446 = vst [vmem:[%s388 + $0x129] sm:$0xff] %v374
      %447 = vst [vmem:[%s388 + $0x139] sm:$0xff] %v375
      %448 = vst [vmem:[%s388 + $0x141] sm:$0xff] %v376
      %449 = vst [vmem:[%s388 + $0x151] sm:$0xff] %v377
      %450 = vst [vmem:[%s388 + $0x159] sm:$0xff] %v378
      %451 = vst [vmem:[%s388 + $0x169] sm:$0xff] %v379
      %452 = vst [vmem:[%s388 + $0x171] sm:$0xff] %v380
      %v453 = vld [vmem:[#allocation2] sm:$0xff]
      %v454 = vld [vmem:[#allocation2 + $0x8] sm:$0xff]
      %v455 = vld [vmem:[#allocation2 + $0x18] sm:$0xff]
      %v456 = vld [vmem:[#allocation2 + $0x20] sm:$0xff]
      %v457 = vld [vmem:[#allocation2 + $0x30] sm:$0xff]
      %v458 = vld [vmem:[#allocation2 + $0x38] sm:$0xff]
      %v459 = vld [vmem:[#allocation2 + $0x48] sm:$0xff]
      %v460 = vld [vmem:[#allocation2 + $0x50] sm:$0xff]
      %v461 = vld [vmem:[#allocation2 + $0x60] sm:$0xff]
      %v462 = vld [vmem:[#allocation2 + $0x68] sm:$0xff]
      %v463 = vld [vmem:[#allocation2 + $0x78] sm:$0xff]
      %v464 = vld [vmem:[#allocation2 + $0x80] sm:$0xff]
      %v465 = vld [vmem:[#allocation2 + $0x90] sm:$0xff]
      %v466 = vld [vmem:[#allocation2 + $0x98] sm:$0xff]
      %v467 = vld [vmem:[#allocation2 + $0xa8] sm:$0xff]
      %v468 = vld [vmem:[#allocation2 + $0xb0] sm:$0xff]
      %v469 = vld [vmem:[#allocation2 + $0xc0] sm:$0xff]
      %v470 = vld [vmem:[#allocation2 + $0xc8] sm:$0xff]
      %v471 = vld [vmem:[#allocation2 + $0xd8] sm:$0xff]
      %v472 = vld [vmem:[#allocation2 + $0xe0] sm:$0xff]
      %v473 = vld [vmem:[#allocation2 + $0xf0] sm:$0xff]
      %v474 = vld [vmem:[#allocation2 + $0xf8] sm:$0xff]
      %v475 = vld [vmem:[#allocation2 + $0x108] sm:$0xff]
      %v476 = vld [vmem:[#allocation2 + $0x110] sm:$0xff]
      %v477 = vld [vmem:[#allocation2 + $0x120] sm:$0xff]
      %v478 = vld [vmem:[#allocation2 + $0x128] sm:$0xff]
      %v479 = vld [vmem:[#allocation2 + $0x138] sm:$0xff]
      %v480 = vld [vmem:[#allocation2 + $0x140] sm:$0xff]
      %v481 = vld [vmem:[#allocation2 + $0x150] sm:$0xff]
      %v482 = vld [vmem:[#allocation2 + $0x158] sm:$0xff]
      %v483 = vld [vmem:[#allocation2 + $0x168] sm:$0xff]
      %v484 = vld [vmem:[#allocation2 + $0x170] sm:$0xff]
      %v485 = vld [vmem:[%s1] sm:$0xff]
      %v486 = vld [vmem:[%s1 + $0x8] sm:$0xff]
      %v487 = vld [vmem:[%s1 + $0x10] sm:$0xff]
      %v488 = vld [vmem:[%s1 + $0x18] sm:$0xff]
      %v489 = vld [vmem:[%s1 + $0x20] sm:$0xff]
      %v490 = vld [vmem:[%s1 + $0x28] sm:$0xff]
      %v491 = vld [vmem:[%s1 + $0x30] sm:$0xff]
      %v492 = vld [vmem:[%s1 + $0x38] sm:$0xff]
      %v493 = vld [vmem:[%s1 + $0x40] sm:$0xff]
      %v494 = vld [vmem:[%s1 + $0x48] sm:$0xff]
      %v495 = vld [vmem:[%s1 + $0x50] sm:$0xff]
      %v496 = vld [vmem:[%s1 + $0x58] sm:$0xff]
      %v497 = vld [vmem:[%s1 + $0x60] sm:$0xff]
      %v498 = vld [vmem:[%s1 + $0x68] sm:$0xff]
      %v499 = vld [vmem:[%s1 + $0x70] sm:$0xff]
      %v500 = vld [vmem:[%s1 + $0x78] sm:$0xff]
      %501 = vmatprep.subr.mxu0 0.0
      %502 = vmatpush1.msra.mxu0 %v485
      %503 = vmatprep.subr.mxu0 0.0
      %504 = vmatpush1.msra.mxu0 %v486
      %505 = vmatprep.subr.mxu0 0.0
      %506 = vmatpush1.msra.mxu0 %v487
      %507 = vmatprep.subr.mxu0 0.0
      %508 = vmatpush1.msra.mxu0 %v488
      %509 = vmatprep.subr.mxu0 0.0
      %510 = vmatpush1.msra.mxu0 %v489
      %511 = vmatprep.subr.mxu0 0.0
      %512 = vmatpush1.msra.mxu0 %v490
      %513 = vmatprep.subr.mxu0 0.0
      %514 = vmatpush1.msra.mxu0 %v491
      %515 = vmatprep.subr.mxu0 0.0
      %516 = vmatpush1.msra.mxu0 %v492
      %517 = vmatprep.subr.mxu0 0.0
      %518 = vmatpush1.msra.mxu0 %v493
      %519 = vmatprep.subr.mxu0 0.0
      %520 = vmatpush1.msra.mxu0 %v494
      %521 = vmatprep.subr.mxu0 0.0
      %522 = vmatpush1.msra.mxu0 %v495
      %523 = vmatprep.subr.mxu0 0.0
      %524 = vmatpush1.msra.mxu0 %v496
      %525 = vmatprep.subr.mxu0 0.0
      %526 = vmatpush1.msra.mxu0 %v497
      %527 = vmatprep.subr.mxu0 0.0
      %528 = vmatpush1.msra.mxu0 %v498
      %529 = vmatprep.subr.mxu0 0.0
      %530 = vmatpush1.msra.mxu0 %v499
      %531 = vmatprep.subr.mxu0 0.0
      %532 = vmatpush1.msra.mxu0 %v500
      %533 = vmatprep.subr.mxu0 0.0
      %534 = vmatpush1.msra.mxu0 0.0
      %535 = vmatprep.subr.mxu0 0.0
      %536 = vmatpush1.msra.mxu0 0.0
      %537 = vmatprep.subr.mxu0 0.0
      %538 = vmatpush1.msra.mxu0 0.0
      %539 = vmatprep.subr.mxu0 0.0
      %540 = vmatpush1.msra.mxu0 0.0
      %541 = vmatprep.subr.mxu0 0.0
      %542 = vmatpush1.msra.mxu0 0.0
      %543 = vmatprep.subr.mxu0 0.0
      %544 = vmatpush1.msra.mxu0 0.0
      %545 = vmatprep.subr.mxu0 0.0
      %546 = vmatpush1.msra.mxu0 0.0
      %547 = vmatprep.subr.mxu0 0.0
      %548 = vmatpush1.msra.mxu0 0.0
      %549 = vmatprep.subr.mxu0 0.0
      %550 = vmatpush1.msra.mxu0 0.0
      %551 = vmatprep.subr.mxu0 0.0
      %552 = vmatpush1.msra.mxu0 0.0
      %553 = vmatprep.subr.mxu0 0.0
      %554 = vmatpush1.msra.mxu0 0.0
      %555 = vmatprep.subr.mxu0 0.0
      %556 = vmatpush1.msra.mxu0 0.0
      %557 = vmatprep.subr.mxu0 0.0
      %558 = vmatpush1.msra.mxu0 0.0
      %559 = vmatprep.subr.mxu0 0.0
      %560 = vmatpush1.msra.mxu0 0.0
      %561 = vmatprep.subr.mxu0 0.0
      %562 = vmatpush1.msra.mxu0 0.0
      %563 = vmatprep.subr.mxu0 0.0
      %564 = vmatpush1.msra.mxu0 0.0
      %565 = vmatprep.mubr.f32.mxu0 0.0
      %566 = vmatmul.mubr.f32.gmra.mrb[0].mxu0 %v453
      %v567 = vpop.f32.mrb[0].mxu0
      %v568 = vadd.f32 0.0, %v567
      %v569 = vpop.f32.mrb[0].mxu0
      %570 = vmatprep.mubr.f32.mxu0 0.0
      %571 = vmatmul.mubr.f32.gmra.mrb[0].mxu0 %v454
      %v572 = vpop.f32.mrb[0].mxu0
      %v573 = vadd.f32 0.0, %v572
      %v574 = vpop.f32.mrb[0].mxu0
      %575 = vmatprep.mubr.f32.mxu0 0.0
      %576 = vmatmul.mubr.f32.gmra.mrb[0].mxu0 %v455
      %v577 = vpop.f32.mrb[0].mxu0
      %v578 = vadd.f32 0.0, %v577
      %v579 = vpop.f32.mrb[0].mxu0
      %580 = vmatprep.mubr.f32.mxu0 0.0
      %581 = vmatmul.mubr.f32.gmra.mrb[0].mxu0 %v456
      %v582 = vpop.f32.mrb[0].mxu0
      %v583 = vadd.f32 0.0, %v582
      %v584 = vpop.f32.mrb[0].mxu0
      %585 = vmatprep.mubr.f32.mxu0 0.0
      %586 = vmatmul.mubr.f32.gmra.mrb[0].mxu0 %v457
      %v587 = vpop.f32.mrb[0].mxu0
      %v588 = vadd.f32 0.0, %v587
      %v589 = vpop.f32.mrb[0].mxu0
      %590 = vmatprep.mubr.f32.mxu0 0.0
      %591 = vmatmul.mubr.f32.gmra.mrb[0].mxu0 %v458
      %v592 = vpop.f32.mrb[0].mxu0
      %v593 = vadd.f32 0.0, %v592
      %v594 = vpop.f32.mrb[0].mxu0
      %595 = vmatprep.mubr.f32.mxu0 0.0
      %596 = vmatmul.mubr.f32.gmra.mrb[0].mxu0 %v459
      %v597 = vpop.f32.mrb[0].mxu0
      %v598 = vadd.f32 0.0, %v597
      %v599 = vpop.f32.mrb[0].mxu0
      %600 = vmatprep.mubr.f32.mxu0 0.0
      %601 = vmatmul.mubr.f32.gmra.mrb[0].mxu0 %v460
      %v602 = vpop.f32.mrb[0].mxu0
      %v603 = vadd.f32 0.0, %v602
      %v604 = vpop.f32.mrb[0].mxu0
      %605 = vmatprep.mubr.f32.mxu0 0.0
      %606 = vmatmul.mubr.f32.gmra.mrb[0].mxu0 %v461
      %v607 = vpop.f32.mrb[0].mxu0
      %v608 = vadd.f32 0.0, %v607
      %v609 = vpop.f32.mrb[0].mxu0
      %610 = vmatprep.mubr.f32.mxu0 0.0
      %611 = vmatmul.mubr.f32.gmra.mrb[0].mxu0 %v462
      %v612 = vpop.f32.mrb[0].mxu0
      %v613 = vadd.f32 0.0, %v612
      %v614 = vpop.f32.mrb[0].mxu0
      %615 = vmatprep.mubr.f32.mxu0 0.0
      %616 = vmatmul.mubr.f32.gmra.mrb[0].mxu0 %v463
      %v617 = vpop.f32.mrb[0].mxu0
      %v618 = vadd.f32 0.0, %v617
      %v619 = vpop.f32.mrb[0].mxu0
      %620 = vmatprep.mubr.f32.mxu0 0.0
      %621 = vmatmul.mubr.f32.gmra.mrb[0].mxu0 %v464
      %v622 = vpop.f32.mrb[0].mxu0
      %v623 = vadd.f32 0.0, %v622
      %v624 = vpop.f32.mrb[0].mxu0
      %625 = vmatprep.mubr.f32.mxu0 0.0
      %626 = vmatmul.mubr.f32.gmra.mrb[0].mxu0 %v465
      %v627 = vpop.f32.mrb[0].mxu0
      %v628 = vadd.f32 0.0, %v627
      %v629 = vpop.f32.mrb[0].mxu0
      %630 = vmatprep.mubr.f32.mxu0 0.0
      %631 = vmatmul.mubr.f32.gmra.mrb[0].mxu0 %v466
      %v632 = vpop.f32.mrb[0].mxu0
      %v633 = vadd.f32 0.0, %v632
      %v634 = vpop.f32.mrb[0].mxu0
      %635 = vmatprep.mubr.f32.mxu0 0.0
      %636 = vmatmul.mubr.f32.gmra.mrb[0].mxu0 %v467
      %v637 = vpop.f32.mrb[0].mxu0
      %v638 = vadd.f32 0.0, %v637
      %v639 = vpop.f32.mrb[0].mxu0
      %640 = vmatprep.mubr.f32.mxu0 0.0
      %641 = vmatmul.mubr.f32.gmra.mrb[0].mxu0 %v468
      %v642 = vpop.f32.mrb[0].mxu0
      %v643 = vadd.f32 0.0, %v642
      %v644 = vpop.f32.mrb[0].mxu0
      %645 = vmatprep.mubr.f32.mxu0 0.0
      %646 = vmatmul.mubr.f32.gmra.mrb[0].mxu0 %v469
      %v647 = vpop.f32.mrb[0].mxu0
      %v648 = vadd.f32 0.0, %v647
      %v649 = vpop.f32.mrb[0].mxu0
      %650 = vmatprep.mubr.f32.mxu0 0.0
      %651 = vmatmul.mubr.f32.gmra.mrb[0].mxu0 %v470
      %v652 = vpop.f32.mrb[0].mxu0
      %v653 = vadd.f32 0.0, %v652
      %v654 = vpop.f32.mrb[0].mxu0
      %655 = vmatprep.mubr.f32.mxu0 0.0
      %656 = vmatmul.mubr.f32.gmra.mrb[0].mxu0 %v471
      %v657 = vpop.f32.mrb[0].mxu0
      %v658 = vadd.f32 0.0, %v657
      %v659 = vpop.f32.mrb[0].mxu0
      %660 = vmatprep.mubr.f32.mxu0 0.0
      %661 = vmatmul.mubr.f32.gmra.mrb[0].mxu0 %v472
      %v662 = vpop.f32.mrb[0].mxu0
      %v663 = vadd.f32 0.0, %v662
      %v664 = vpop.f32.mrb[0].mxu0
      %665 = vmatprep.mubr.f32.mxu0 0.0
      %666 = vmatmul.mubr.f32.gmra.mrb[0].mxu0 %v473
      %v667 = vpop.f32.mrb[0].mxu0
      %v668 = vadd.f32 0.0, %v667
      %v669 = vpop.f32.mrb[0].mxu0
      %670 = vmatprep.mubr.f32.mxu0 0.0
      %671 = vmatmul.mubr.f32.gmra.mrb[0].mxu0 %v474
      %v672 = vpop.f32.mrb[0].mxu0
      %v673 = vadd.f32 0.0, %v672
      %v674 = vpop.f32.mrb[0].mxu0
      %675 = vmatprep.mubr.f32.mxu0 0.0
      %676 = vmatmul.mubr.f32.gmra.mrb[0].mxu0 %v475
      %v677 = vpop.f32.mrb[0].mxu0
      %v678 = vadd.f32 0.0, %v677
      %v679 = vpop.f32.mrb[0].mxu0
      %680 = vmatprep.mubr.f32.mxu0 0.0
      %681 = vmatmul.mubr.f32.gmra.mrb[0].mxu0 %v476
      %v682 = vpop.f32.mrb[0].mxu0
      %v683 = vadd.f32 0.0, %v682
      %v684 = vpop.f32.mrb[0].mxu0
      %685 = vmatprep.mubr.f32.mxu0 0.0
      %686 = vmatmul.mubr.f32.gmra.mrb[0].mxu0 %v477
      %v687 = vpop.f32.mrb[0].mxu0
      %v688 = vadd.f32 0.0, %v687
      %v689 = vpop.f32.mrb[0].mxu0
      %690 = vmatprep.mubr.f32.mxu0 0.0
      %691 = vmatmul.mubr.f32.gmra.mrb[0].mxu0 %v478
      %v692 = vpop.f32.mrb[0].mxu0
      %v693 = vadd.f32 0.0, %v692
      %v694 = vpop.f32.mrb[0].mxu0
      %695 = vmatprep.mubr.f32.mxu0 0.0
      %696 = vmatmul.mubr.f32.gmra.mrb[0].mxu0 %v479
      %v697 = vpop.f32.mrb[0].mxu0
      %v698 = vadd.f32 0.0, %v697
      %v699 = vpop.f32.mrb[0].mxu0
      %700 = vmatprep.mubr.f32.mxu0 0.0
      %701 = vmatmul.mubr.f32.gmra.mrb[0].mxu0 %v480
      %v702 = vpop.f32.mrb[0].mxu0
      %v703 = vadd.f32 0.0, %v702
      %v704 = vpop.f32.mrb[0].mxu0
      %705 = vmatprep.mubr.f32.mxu0 0.0
      %706 = vmatmul.mubr.f32.gmra.mrb[0].mxu0 %v481
      %v707 = vpop.f32.mrb[0].mxu0
      %v708 = vadd.f32 0.0, %v707
      %v709 = vpop.f32.mrb[0].mxu0
      %710 = vmatprep.mubr.f32.mxu0 0.0
      %711 = vmatmul.mubr.f32.gmra.mrb[0].mxu0 %v482
      %v712 = vpop.f32.mrb[0].mxu0
      %v713 = vadd.f32 0.0, %v712
      %v714 = vpop.f32.mrb[0].mxu0
      %715 = vmatprep.mubr.f32.mxu0 0.0
      %716 = vmatmul.mubr.f32.gmra.mrb[0].mxu0 %v483
      %v717 = vpop.f32.mrb[0].mxu0
      %v718 = vadd.f32 0.0, %v717
      %v719 = vpop.f32.mrb[0].mxu0
      %720 = vmatprep.mubr.f32.mxu0 0.0
      %721 = vmatmul.mubr.f32.gmra.mrb[0].mxu0 %v484
      %v722 = vpop.f32.mrb[0].mxu0
      %v723 = vadd.f32 0.0, %v722
      %v724 = vpop.f32.mrb[0].mxu0
      %725 = vdwg.mxu0
      %726 = vst [vmem:[#allocation3] sm:$0xff] %v568
      %727 = vst [vmem:[#allocation3 + $0x8] sm:$0xff] %v573
      %728 = vst [vmem:[#allocation3 + $0x10] sm:$0xff] %v578
      %729 = vst [vmem:[#allocation3 + $0x18] sm:$0xff] %v583
      %730 = vst [vmem:[#allocation3 + $0x20] sm:$0xff] %v588
      %731 = vst [vmem:[#allocation3 + $0x28] sm:$0xff] %v593
      %732 = vst [vmem:[#allocation3 + $0x30] sm:$0xff] %v598
      %733 = vst [vmem:[#allocation3 + $0x38] sm:$0xff] %v603
      %734 = vst [vmem:[#allocation3 + $0x40] sm:$0xff] %v608
      %735 = vst [vmem:[#allocation3 + $0x48] sm:$0xff] %v613
      %736 = vst [vmem:[#allocation3 + $0x50] sm:$0xff] %v618
      %737 = vst [vmem:[#allocation3 + $0x58] sm:$0xff] %v623
      %738 = vst [vmem:[#allocation3 + $0x60] sm:$0xff] %v628
      %739 = vst [vmem:[#allocation3 + $0x68] sm:$0xff] %v633
      %740 = vst [vmem:[#allocation3 + $0x70] sm:$0xff] %v638
      %741 = vst [vmem:[#allocation3 + $0x78] sm:$0xff] %v643
      %742 = vst [vmem:[#allocation3 + $0x80] sm:$0xff] %v648
      %743 = vst [vmem:[#allocation3 + $0x88] sm:$0xff] %v653
      %744 = vst [vmem:[#allocation3 + $0x90] sm:$0xff] %v658
      %745 = vst [vmem:[#allocation3 + $0x98] sm:$0xff] %v663
      %746 = vst [vmem:[#allocation3 + $0xa0] sm:$0xff] %v668
      %747 = vst [vmem:[#allocation3 + $0xa8] sm:$0xff] %v673
      %748 = vst [vmem:[#allocation3 + $0xb0] sm:$0xff] %v678
      %749 = vst [vmem:[#allocation3 + $0xb8] sm:$0xff] %v683
      %750 = vst [vmem:[#allocation3 + $0xc0] sm:$0xff] %v688
      %751 = vst [vmem:[#allocation3 + $0xc8] sm:$0xff] %v693
      %752 = vst [vmem:[#allocation3 + $0xd0] sm:$0xff] %v698
      %753 = vst [vmem:[#allocation3 + $0xd8] sm:$0xff] %v703
      %754 = vst [vmem:[#allocation3 + $0xe0] sm:$0xff] %v708
      %755 = vst [vmem:[#allocation3 + $0xe8] sm:$0xff] %v713
      %756 = vst [vmem:[#allocation3 + $0xf0] sm:$0xff] %v718
      %757 = vst [vmem:[#allocation3 + $0xf8] sm:$0xff] %v723
      %v758 = vld [vmem:[#allocation2 + $0x1] sm:$0xff]
      %v759 = vld [vmem:[#allocation2 + $0x9] sm:$0xff]
      %v760 = vld [vmem:[#allocation2 + $0x19] sm:$0xff]
      %v761 = vld [vmem:[#allocation2 + $0x21] sm:$0xff]
      %v762 = vld [vmem:[#allocation2 + $0x31] sm:$0xff]
      %v763 = vld [vmem:[#allocation2 + $0x39] sm:$0xff]
      %v764 = vld [vmem:[#allocation2 + $0x49] sm:$0xff]
      %v765 = vld [vmem:[#allocation2 + $0x51] sm:$0xff]
      %v766 = vld [vmem:[#allocation2 + $0x61] sm:$0xff]
      %v767 = vld [vmem:[#allocation2 + $0x69] sm:$0xff]
      %v768 = vld [vmem:[#allocation2 + $0x79] sm:$0xff]
      %v769 = vld [vmem:[#allocation2 + $0x81] sm:$0xff]
      %v770 = vld [vmem:[#allocation2 + $0x91] sm:$0xff]
      %v771 = vld [vmem:[#allocation2 + $0x99] sm:$0xff]
      %v772 = vld [vmem:[#allocation2 + $0xa9] sm:$0xff]
      %v773 = vld [vmem:[#allocation2 + $0xb1] sm:$0xff]
      %v774 = vld [vmem:[#allocation2 + $0xc1] sm:$0xff]
      %v775 = vld [vmem:[#allocation2 + $0xc9] sm:$0xff]
      %v776 = vld [vmem:[#allocation2 + $0xd9] sm:$0xff]
      %v777 = vld [vmem:[#allocation2 + $0xe1] sm:$0xff]
      %v778 = vld [vmem:[#allocation2 + $0xf1] sm:$0xff]
      %v779 = vld [vmem:[#allocation2 + $0xf9] sm:$0xff]
      %v780 = vld [vmem:[#allocation2 + $0x109] sm:$0xff]
      %v781 = vld [vmem:[#allocation2 + $0x111] sm:$0xff]
      %v782 = vld [vmem:[#allocation2 + $0x121] sm:$0xff]
      %v783 = vld [vmem:[#allocation2 + $0x129] sm:$0xff]
      %v784 = vld [vmem:[#allocation2 + $0x139] sm:$0xff]
      %v785 = vld [vmem:[#allocation2 + $0x141] sm:$0xff]
      %v786 = vld [vmem:[#allocation2 + $0x151] sm:$0xff]
      %v787 = vld [vmem:[#allocation2 + $0x159] sm:$0xff]
      %v788 = vld [vmem:[#allocation2 + $0x169] sm:$0xff]
      %v789 = vld [vmem:[#allocation2 + $0x171] sm:$0xff]
      %s790 = scalar_lea.vmem %s1, 128
      %v791 = vld [vmem:[%s790] sm:$0xff]
      %v792 = vld [vmem:[%s790 + $0x8] sm:$0xff]
      %v793 = vld [vmem:[%s790 + $0x10] sm:$0xff]
      %v794 = vld [vmem:[%s790 + $0x18] sm:$0xff]
      %v795 = vld [vmem:[%s790 + $0x20] sm:$0xff]
      %v796 = vld [vmem:[%s790 + $0x28] sm:$0xff]
      %v797 = vld [vmem:[%s790 + $0x30] sm:$0xff]
      %v798 = vld [vmem:[%s790 + $0x38] sm:$0xff]
      %v799 = vld [vmem:[%s790 + $0x40] sm:$0xff]
      %v800 = vld [vmem:[%s790 + $0x48] sm:$0xff]
      %v801 = vld [vmem:[%s790 + $0x50] sm:$0xff]
      %v802 = vld [vmem:[%s790 + $0x58] sm:$0xff]
      %v803 = vld [vmem:[%s790 + $0x60] sm:$0xff]
      %v804 = vld [vmem:[%s790 + $0x68] sm:$0xff]
      %v805 = vld [vmem:[%s790 + $0x70] sm:$0xff]
      %v806 = vld [vmem:[%s790 + $0x78] sm:$0xff]
      %807 = vmatprep.subr.mxu0 0.0
      %808 = vmatpush1.msra.mxu0 %v791
      %809 = vmatprep.subr.mxu0 0.0
      %810 = vmatpush1.msra.mxu0 %v792
      %811 = vmatprep.subr.mxu0 0.0
      %812 = vmatpush1.msra.mxu0 %v793
      %813 = vmatprep.subr.mxu0 0.0
      %814 = vmatpush1.msra.mxu0 %v794
      %815 = vmatprep.subr.mxu0 0.0
      %816 = vmatpush1.msra.mxu0 %v795
      %817 = vmatprep.subr.mxu0 0.0
      %818 = vmatpush1.msra.mxu0 %v796
      %819 = vmatprep.subr.mxu0 0.0
      %820 = vmatpush1.msra.mxu0 %v797
      %821 = vmatprep.subr.mxu0 0.0
      %822 = vmatpush1.msra.mxu0 %v798
      %823 = vmatprep.subr.mxu0 0.0
      %824 = vmatpush1.msra.mxu0 %v799
      %825 = vmatprep.subr.mxu0 0.0
      %826 = vmatpush1.msra.mxu0 %v800
      %827 = vmatprep.subr.mxu0 0.0
      %828 = vmatpush1.msra.mxu0 %v801
      %829 = vmatprep.subr.mxu0 0.0
      %830 = vmatpush1.msra.mxu0 %v802
      %831 = vmatprep.subr.mxu0 0.0
      %832 = vmatpush1.msra.mxu0 %v803
      %833 = vmatprep.subr.mxu0 0.0
      %834 = vmatpush1.msra.mxu0 %v804
      %835 = vmatprep.subr.mxu0 0.0
      %836 = vmatpush1.msra.mxu0 %v805
      %837 = vmatprep.subr.mxu0 0.0
      %838 = vmatpush1.msra.mxu0 %v806
      %839 = vmatprep.subr.mxu0 0.0
      %840 = vmatpush1.msra.mxu0 0.0
      %841 = vmatprep.subr.mxu0 0.0
      %842 = vmatpush1.msra.mxu0 0.0
      %843 = vmatprep.subr.mxu0 0.0
      %844 = vmatpush1.msra.mxu0 0.0
      %845 = vmatprep.subr.mxu0 0.0
      %846 = vmatpush1.msra.mxu0 0.0
      %847 = vmatprep.subr.mxu0 0.0
      %848 = vmatpush1.msra.mxu0 0.0
      %849 = vmatprep.subr.mxu0 0.0
      %850 = vmatpush1.msra.mxu0 0.0
      %851 = vmatprep.subr.mxu0 0.0
      %852 = vmatpush1.msra.mxu0 0.0
      %853 = vmatprep.subr.mxu0 0.0
      %854 = vmatpush1.msra.mxu0 0.0
      %855 = vmatprep.subr.mxu0 0.0
      %856 = vmatpush1.msra.mxu0 0.0
      %857 = vmatprep.subr.mxu0 0.0
      %858 = vmatpush1.msra.mxu0 0.0
      %859 = vmatprep.subr.mxu0 0.0
      %860 = vmatpush1.msra.mxu0 0.0
      %861 = vmatprep.subr.mxu0 0.0
      %862 = vmatpush1.msra.mxu0 0.0
      %863 = vmatprep.subr.mxu0 0.0
      %864 = vmatpush1.msra.mxu0 0.0
      %865 = vmatprep.subr.mxu0 0.0
      %866 = vmatpush1.msra.mxu0 0.0
      %867 = vmatprep.subr.mxu0 0.0
      %868 = vmatpush1.msra.mxu0 0.0
      %869 = vmatprep.subr.mxu0 0.0
      %870 = vmatpush1.msra.mxu0 0.0
      %871 = vmatprep.mubr.f32.mxu0 0.0
      %872 = vmatmul.mubr.f32.gmra.mrb[0].mxu0 %v758
      %v873 = vpop.f32.mrb[0].mxu0
      %v874 = vadd.f32 0.0, %v873
      %v875 = vpop.f32.mrb[0].mxu0
      %876 = vmatprep.mubr.f32.mxu0 0.0
      %877 = vmatmul.mubr.f32.gmra.mrb[0].mxu0 %v759
      %v878 = vpop.f32.mrb[0].mxu0
      %v879 = vadd.f32 0.0, %v878
      %v880 = vpop.f32.mrb[0].mxu0
      %881 = vmatprep.mubr.f32.mxu0 0.0
      %882 = vmatmul.mubr.f32.gmra.mrb[0].mxu0 %v760
      %v883 = vpop.f32.mrb[0].mxu0
      %v884 = vadd.f32 0.0, %v883
      %v885 = vpop.f32.mrb[0].mxu0
      %886 = vmatprep.mubr.f32.mxu0 0.0
      %887 = vmatmul.mubr.f32.gmra.mrb[0].mxu0 %v761
      %v888 = vpop.f32.mrb[0].mxu0
      %v889 = vadd.f32 0.0, %v888
      %v890 = vpop.f32.mrb[0].mxu0
      %891 = vmatprep.mubr.f32.mxu0 0.0
      %892 = vmatmul.mubr.f32.gmra.mrb[0].mxu0 %v762
      %v893 = vpop.f32.mrb[0].mxu0
      %v894 = vadd.f32 0.0, %v893
      %v895 = vpop.f32.mrb[0].mxu0
      %896 = vmatprep.mubr.f32.mxu0 0.0
      %897 = vmatmul.mubr.f32.gmra.mrb[0].mxu0 %v763
      %v898 = vpop.f32.mrb[0].mxu0
      %v899 = vadd.f32 0.0, %v898
      %v900 = vpop.f32.mrb[0].mxu0
      %901 = vmatprep.mubr.f32.mxu0 0.0
      %902 = vmatmul.mubr.f32.gmra.mrb[0].mxu0 %v764
      %v903 = vpop.f32.mrb[0].mxu0
      %v904 = vadd.f32 0.0, %v903
      %v905 = vpop.f32.mrb[0].mxu0
      %906 = vmatprep.mubr.f32.mxu0 0.0
      %907 = vmatmul.mubr.f32.gmra.mrb[0].mxu0 %v765
      %v908 = vpop.f32.mrb[0].mxu0
      %v909 = vadd.f32 0.0, %v908
      %v910 = vpop.f32.mrb[0].mxu0
      %911 = vmatprep.mubr.f32.mxu0 0.0
      %912 = vmatmul.mubr.f32.gmra.mrb[0].mxu0 %v766
      %v913 = vpop.f32.mrb[0].mxu0
      %v914 = vadd.f32 0.0, %v913
      %v915 = vpop.f32.mrb[0].mxu0
      %916 = vmatprep.mubr.f32.mxu0 0.0
      %917 = vmatmul.mubr.f32.gmra.mrb[0].mxu0 %v767
      %v918 = vpop.f32.mrb[0].mxu0
      %v919 = vadd.f32 0.0, %v918
      %v920 = vpop.f32.mrb[0].mxu0
      %921 = vmatprep.mubr.f32.mxu0 0.0
      %922 = vmatmul.mubr.f32.gmra.mrb[0].mxu0 %v768
      %v923 = vpop.f32.mrb[0].mxu0
      %v924 = vadd.f32 0.0, %v923
      %v925 = vpop.f32.mrb[0].mxu0
      %926 = vmatprep.mubr.f32.mxu0 0.0
      %927 = vmatmul.mubr.f32.gmra.mrb[0].mxu0 %v769
      %v928 = vpop.f32.mrb[0].mxu0
      %v929 = vadd.f32 0.0, %v928
      %v930 = vpop.f32.mrb[0].mxu0
      %931 = vmatprep.mubr.f32.mxu0 0.0
      %932 = vmatmul.mubr.f32.gmra.mrb[0].mxu0 %v770
      %v933 = vpop.f32.mrb[0].mxu0
      %v934 = vadd.f32 0.0, %v933
      %v935 = vpop.f32.mrb[0].mxu0
      %936 = vmatprep.mubr.f32.mxu0 0.0
      %937 = vmatmul.mubr.f32.gmra.mrb[0].mxu0 %v771
      %v938 = vpop.f32.mrb[0].mxu0
      %v939 = vadd.f32 0.0, %v938
      %v940 = vpop.f32.mrb[0].mxu0
      %941 = vmatprep.mubr.f32.mxu0 0.0
      %942 = vmatmul.mubr.f32.gmra.mrb[0].mxu0 %v772
      %v943 = vpop.f32.mrb[0].mxu0
      %v944 = vadd.f32 0.0, %v943
      %v945 = vpop.f32.mrb[0].mxu0
      %946 = vmatprep.mubr.f32.mxu0 0.0
      %947 = vmatmul.mubr.f32.gmra.mrb[0].mxu0 %v773
      %v948 = vpop.f32.mrb[0].mxu0
      %v949 = vadd.f32 0.0, %v948
      %v950 = vpop.f32.mrb[0].mxu0
      %951 = vmatprep.mubr.f32.mxu0 0.0
      %952 = vmatmul.mubr.f32.gmra.mrb[0].mxu0 %v774
      %v953 = vpop.f32.mrb[0].mxu0
      %v954 = vadd.f32 0.0, %v953
      %v955 = vpop.f32.mrb[0].mxu0
      %956 = vmatprep.mubr.f32.mxu0 0.0
      %957 = vmatmul.mubr.f32.gmra.mrb[0].mxu0 %v775
      %v958 = vpop.f32.mrb[0].mxu0
      %v959 = vadd.f32 0.0, %v958
      %v960 = vpop.f32.mrb[0].mxu0
      %961 = vmatprep.mubr.f32.mxu0 0.0
      %962 = vmatmul.mubr.f32.gmra.mrb[0].mxu0 %v776
      %v963 = vpop.f32.mrb[0].mxu0
      %v964 = vadd.f32 0.0, %v963
      %v965 = vpop.f32.mrb[0].mxu0
      %966 = vmatprep.mubr.f32.mxu0 0.0
      %967 = vmatmul.mubr.f32.gmra.mrb[0].mxu0 %v777
      %v968 = vpop.f32.mrb[0].mxu0
      %v969 = vadd.f32 0.0, %v968
      %v970 = vpop.f32.mrb[0].mxu0
      %971 = vmatprep.mubr.f32.mxu0 0.0
      %972 = vmatmul.mubr.f32.gmra.mrb[0].mxu0 %v778
      %v973 = vpop.f32.mrb[0].mxu0
      %v974 = vadd.f32 0.0, %v973
      %v975 = vpop.f32.mrb[0].mxu0
      %976 = vmatprep.mubr.f32.mxu0 0.0
      %977 = vmatmul.mubr.f32.gmra.mrb[0].mxu0 %v779
      %v978 = vpop.f32.mrb[0].mxu0
      %v979 = vadd.f32 0.0, %v978
      %v980 = vpop.f32.mrb[0].mxu0
      %981 = vmatprep.mubr.f32.mxu0 0.0
      %982 = vmatmul.mubr.f32.gmra.mrb[0].mxu0 %v780
      %v983 = vpop.f32.mrb[0].mxu0
      %v984 = vadd.f32 0.0, %v983
      %v985 = vpop.f32.mrb[0].mxu0
      %986 = vmatprep.mubr.f32.mxu0 0.0
      %987 = vmatmul.mubr.f32.gmra.mrb[0].mxu0 %v781
      %v988 = vpop.f32.mrb[0].mxu0
      %v989 = vadd.f32 0.0, %v988
      %v990 = vpop.f32.mrb[0].mxu0
      %991 = vmatprep.mubr.f32.mxu0 0.0
      %992 = vmatmul.mubr.f32.gmra.mrb[0].mxu0 %v782
      %v993 = vpop.f32.mrb[0].mxu0
      %v994 = vadd.f32 0.0, %v993
      %v995 = vpop.f32.mrb[0].mxu0
      %996 = vmatprep.mubr.f32.mxu0 0.0
      %997 = vmatmul.mubr.f32.gmra.mrb[0].mxu0 %v783
      %v998 = vpop.f32.mrb[0].mxu0
      %v999 = vadd.f32 0.0, %v998
      %v1000 = vpop.f32.mrb[0].mxu0
      %1001 = vmatprep.mubr.f32.mxu0 0.0
      %1002 = vmatmul.mubr.f32.gmra.mrb[0].mxu0 %v784
      %v1003 = vpop.f32.mrb[0].mxu0
      %v1004 = vadd.f32 0.0, %v1003
      %v1005 = vpop.f32.mrb[0].mxu0
      %1006 = vmatprep.mubr.f32.mxu0 0.0
      %1007 = vmatmul.mubr.f32.gmra.mrb[0].mxu0 %v785
      %v1008 = vpop.f32.mrb[0].mxu0
      %v1009 = vadd.f32 0.0, %v1008
      %v1010 = vpop.f32.mrb[0].mxu0
      %1011 = vmatprep.mubr.f32.mxu0 0.0
      %1012 = vmatmul.mubr.f32.gmra.mrb[0].mxu0 %v786
      %v1013 = vpop.f32.mrb[0].mxu0
      %v1014 = vadd.f32 0.0, %v1013
      %v1015 = vpop.f32.mrb[0].mxu0
      %1016 = vmatprep.mubr.f32.mxu0 0.0
      %1017 = vmatmul.mubr.f32.gmra.mrb[0].mxu0 %v787
      %v1018 = vpop.f32.mrb[0].mxu0
      %v1019 = vadd.f32 0.0, %v1018
      %v1020 = vpop.f32.mrb[0].mxu0
      %1021 = vmatprep.mubr.f32.mxu0 0.0
      %1022 = vmatmul.mubr.f32.gmra.mrb[0].mxu0 %v788
      %v1023 = vpop.f32.mrb[0].mxu0
      %v1024 = vadd.f32 0.0, %v1023
      %v1025 = vpop.f32.mrb[0].mxu0
      %1026 = vmatprep.mubr.f32.mxu0 0.0
      %1027 = vmatmul.mubr.f32.gmra.mrb[0].mxu0 %v789
      %v1028 = vpop.f32.mrb[0].mxu0
      %v1029 = vadd.f32 0.0, %v1028
      %v1030 = vpop.f32.mrb[0].mxu0
      %1031 = vdwg.mxu0
      %v1032 = vld [vmem:[#allocation3] sm:$0xff]
      %v1033 = vld [vmem:[#allocation3 + $0x8] sm:$0xff]
      %v1034 = vld [vmem:[#allocation3 + $0x10] sm:$0xff]
      %v1035 = vld [vmem:[#allocation3 + $0x18] sm:$0xff]
      %v1036 = vld [vmem:[#allocation3 + $0x20] sm:$0xff]
      %v1037 = vld [vmem:[#allocation3 + $0x28] sm:$0xff]
      %v1038 = vld [vmem:[#allocation3 + $0x30] sm:$0xff]
      %v1039 = vld [vmem:[#allocation3 + $0x38] sm:$0xff]
      %v1040 = vld [vmem:[#allocation3 + $0x40] sm:$0xff]
      %v1041 = vld [vmem:[#allocation3 + $0x48] sm:$0xff]
      %v1042 = vld [vmem:[#allocation3 + $0x50] sm:$0xff]
      %v1043 = vld [vmem:[#allocation3 + $0x58] sm:$0xff]
      %v1044 = vld [vmem:[#allocation3 + $0x60] sm:$0xff]
      %v1045 = vld [vmem:[#allocation3 + $0x68] sm:$0xff]
      %v1046 = vld [vmem:[#allocation3 + $0x70] sm:$0xff]
      %v1047 = vld [vmem:[#allocation3 + $0x78] sm:$0xff]
      %v1048 = vld [vmem:[#allocation3 + $0x80] sm:$0xff]
      %v1049 = vld [vmem:[#allocation3 + $0x88] sm:$0xff]
      %v1050 = vld [vmem:[#allocation3 + $0x90] sm:$0xff]
      %v1051 = vld [vmem:[#allocation3 + $0x98] sm:$0xff]
      %v1052 = vld [vmem:[#allocation3 + $0xa0] sm:$0xff]
      %v1053 = vld [vmem:[#allocation3 + $0xa8] sm:$0xff]
      %v1054 = vld [vmem:[#allocation3 + $0xb0] sm:$0xff]
      %v1055 = vld [vmem:[#allocation3 + $0xb8] sm:$0xff]
      %v1056 = vld [vmem:[#allocation3 + $0xc0] sm:$0xff]
      %v1057 = vld [vmem:[#allocation3 + $0xc8] sm:$0xff]
      %v1058 = vld [vmem:[#allocation3 + $0xd0] sm:$0xff]
      %v1059 = vld [vmem:[#allocation3 + $0xd8] sm:$0xff]
      %v1060 = vld [vmem:[#allocation3 + $0xe0] sm:$0xff]
      %v1061 = vld [vmem:[#allocation3 + $0xe8] sm:$0xff]
      %v1062 = vld [vmem:[#allocation3 + $0xf0] sm:$0xff]
      %v1063 = vld [vmem:[#allocation3 + $0xf8] sm:$0xff]
      %v1064 = vadd.f32 %v1032, %v874
      %v1065 = vadd.f32 %v1033, %v879
      %v1066 = vadd.f32 %v1034, %v884
      %v1067 = vadd.f32 %v1035, %v889
      %v1068 = vadd.f32 %v1036, %v894
      %v1069 = vadd.f32 %v1037, %v899
      %v1070 = vadd.f32 %v1038, %v904
      %v1071 = vadd.f32 %v1039, %v909
      %v1072 = vadd.f32 %v1040, %v914
      %v1073 = vadd.f32 %v1041, %v919
      %v1074 = vadd.f32 %v1042, %v924
      %v1075 = vadd.f32 %v1043, %v929
      %v1076 = vadd.f32 %v1044, %v934
      %v1077 = vadd.f32 %v1045, %v939
      %v1078 = vadd.f32 %v1046, %v944
      %v1079 = vadd.f32 %v1047, %v949
      %v1080 = vadd.f32 %v1048, %v954
      %v1081 = vadd.f32 %v1049, %v959
      %v1082 = vadd.f32 %v1050, %v964
      %v1083 = vadd.f32 %v1051, %v969
      %v1084 = vadd.f32 %v1052, %v974
      %v1085 = vadd.f32 %v1053, %v979
      %v1086 = vadd.f32 %v1054, %v984
      %v1087 = vadd.f32 %v1055, %v989
      %v1088 = vadd.f32 %v1056, %v994
      %v1089 = vadd.f32 %v1057, %v999
      %v1090 = vadd.f32 %v1058, %v1004
      %v1091 = vadd.f32 %v1059, %v1009
      %v1092 = vadd.f32 %v1060, %v1014
      %v1093 = vadd.f32 %v1061, %v1019
      %v1094 = vadd.f32 %v1062, %v1024
      %v1095 = vadd.f32 %v1063, %v1029
      %1096 = vst [vmem:[#allocation3] sm:$0xff] %v1064
      %1097 = vst [vmem:[#allocation3 + $0x8] sm:$0xff] %v1065
      %1098 = vst [vmem:[#allocation3 + $0x10] sm:$0xff] %v1066
      %1099 = vst [vmem:[#allocation3 + $0x18] sm:$0xff] %v1067
      %1100 = vst [vmem:[#allocation3 + $0x20] sm:$0xff] %v1068
      %1101 = vst [vmem:[#allocation3 + $0x28] sm:$0xff] %v1069
      %1102 = vst [vmem:[#allocation3 + $0x30] sm:$0xff] %v1070
      %1103 = vst [vmem:[#allocation3 + $0x38] sm:$0xff] %v1071
      %1104 = vst [vmem:[#allocation3 + $0x40] sm:$0xff] %v1072
      %1105 = vst [vmem:[#allocation3 + $0x48] sm:$0xff] %v1073
      %1106 = vst [vmem:[#allocation3 + $0x50] sm:$0xff] %v1074
      %1107 = vst [vmem:[#allocation3 + $0x58] sm:$0xff] %v1075
      %1108 = vst [vmem:[#allocation3 + $0x60] sm:$0xff] %v1076
      %1109 = vst [vmem:[#allocation3 + $0x68] sm:$0xff] %v1077
      %1110 = vst [vmem:[#allocation3 + $0x70] sm:$0xff] %v1078
      %1111 = vst [vmem:[#allocation3 + $0x78] sm:$0xff] %v1079
      %1112 = vst [vmem:[#allocation3 + $0x80] sm:$0xff] %v1080
      %1113 = vst [vmem:[#allocation3 + $0x88] sm:$0xff] %v1081
      %1114 = vst [vmem:[#allocation3 + $0x90] sm:$0xff] %v1082
      %1115 = vst [vmem:[#allocation3 + $0x98] sm:$0xff] %v1083
      %1116 = vst [vmem:[#allocation3 + $0xa0] sm:$0xff] %v1084
      %1117 = vst [vmem:[#allocation3 + $0xa8] sm:$0xff] %v1085
      %1118 = vst [vmem:[#allocation3 + $0xb0] sm:$0xff] %v1086
      %1119 = vst [vmem:[#allocation3 + $0xb8] sm:$0xff] %v1087
      %1120 = vst [vmem:[#allocation3 + $0xc0] sm:$0xff] %v1088
      %1121 = vst [vmem:[#allocation3 + $0xc8] sm:$0xff] %v1089
      %1122 = vst [vmem:[#allocation3 + $0xd0] sm:$0xff] %v1090
      %1123 = vst [vmem:[#allocation3 + $0xd8] sm:$0xff] %v1091
      %1124 = vst [vmem:[#allocation3 + $0xe0] sm:$0xff] %v1092
      %1125 = vst [vmem:[#allocation3 + $0xe8] sm:$0xff] %v1093
      %1126 = vst [vmem:[#allocation3 + $0xf0] sm:$0xff] %v1094
      %1127 = vst [vmem:[#allocation3 + $0xf8] sm:$0xff] %v1095
      %v1128 = vld [vmem:[#allocation2 + $0x2] sm:$0xff]
      %v1129 = vld [vmem:[#allocation2 + $0xa] sm:$0xff]
      %v1130 = vld [vmem:[#allocation2 + $0x1a] sm:$0xff]
      %v1131 = vld [vmem:[#allocation2 + $0x22] sm:$0xff]
      %v1132 = vld [vmem:[#allocation2 + $0x32] sm:$0xff]
      %v1133 = vld [vmem:[#allocation2 + $0x3a] sm:$0xff]
      %v1134 = vld [vmem:[#allocation2 + $0x4a] sm:$0xff]
      %v1135 = vld [vmem:[#allocation2 + $0x52] sm:$0xff]
      %v1136 = vld [vmem:[#allocation2 + $0x62] sm:$0xff]
      %v1137 = vld [vmem:[#allocation2 + $0x6a] sm:$0xff]
      %v1138 = vld [vmem:[#allocation2 + $0x7a] sm:$0xff]
      %v1139 = vld [vmem:[#allocation2 + $0x82] sm:$0xff]
      %v1140 = vld [vmem:[#allocation2 + $0x92] sm:$0xff]
      %v1141 = vld [vmem:[#allocation2 + $0x9a] sm:$0xff]
      %v1142 = vld [vmem:[#allocation2 + $0xaa] sm:$0xff]
      %v1143 = vld [vmem:[#allocation2 + $0xb2] sm:$0xff]
      %v1144 = vld [vmem:[#allocation2 + $0xc2] sm:$0xff]
      %v1145 = vld [vmem:[#allocation2 + $0xca] sm:$0xff]
      %v1146 = vld [vmem:[#allocation2 + $0xda] sm:$0xff]
      %v1147 = vld [vmem:[#allocation2 + $0xe2] sm:$0xff]
      %v1148 = vld [vmem:[#allocation2 + $0xf2] sm:$0xff]
      %v1149 = vld [vmem:[#allocation2 + $0xfa] sm:$0xff]
      %v1150 = vld [vmem:[#allocation2 + $0x10a] sm:$0xff]
      %v1151 = vld [vmem:[#allocation2 + $0x112] sm:$0xff]
      %v1152 = vld [vmem:[#allocation2 + $0x122] sm:$0xff]
      %v1153 = vld [vmem:[#allocation2 + $0x12a] sm:$0xff]
      %v1154 = vld [vmem:[#allocation2 + $0x13a] sm:$0xff]
      %v1155 = vld [vmem:[#allocation2 + $0x142] sm:$0xff]
      %v1156 = vld [vmem:[#allocation2 + $0x152] sm:$0xff]
      %v1157 = vld [vmem:[#allocation2 + $0x15a] sm:$0xff]
      %v1158 = vld [vmem:[#allocation2 + $0x16a] sm:$0xff]
      %v1159 = vld [vmem:[#allocation2 + $0x172] sm:$0xff]
      %s1160 = scalar_lea.vmem %s1, 256
      %v1161 = vld [vmem:[%s1160] sm:$0xff]
      %v1162 = vld [vmem:[%s1160 + $0x8] sm:$0xff]
      %v1163 = vld [vmem:[%s1160 + $0x10] sm:$0xff]
      %v1164 = vld [vmem:[%s1160 + $0x18] sm:$0xff]
      %v1165 = vld [vmem:[%s1160 + $0x20] sm:$0xff]
      %v1166 = vld [vmem:[%s1160 + $0x28] sm:$0xff]
      %v1167 = vld [vmem:[%s1160 + $0x30] sm:$0xff]
      %v1168 = vld [vmem:[%s1160 + $0x38] sm:$0xff]
      %v1169 = vld [vmem:[%s1160 + $0x40] sm:$0xff]
      %v1170 = vld [vmem:[%s1160 + $0x48] sm:$0xff]
      %v1171 = vld [vmem:[%s1160 + $0x50] sm:$0xff]
      %v1172 = vld [vmem:[%s1160 + $0x58] sm:$0xff]
      %v1173 = vld [vmem:[%s1160 + $0x60] sm:$0xff]
      %v1174 = vld [vmem:[%s1160 + $0x68] sm:$0xff]
      %v1175 = vld [vmem:[%s1160 + $0x70] sm:$0xff]
      %v1176 = vld [vmem:[%s1160 + $0x78] sm:$0xff]
      %1177 = vmatprep.subr.mxu0 0.0
      %1178 = vmatpush1.msra.mxu0 %v1161
      %1179 = vmatprep.subr.mxu0 0.0
      %1180 = vmatpush1.msra.mxu0 %v1162
      %1181 = vmatprep.subr.mxu0 0.0
      %1182 = vmatpush1.msra.mxu0 %v1163
      %1183 = vmatprep.subr.mxu0 0.0
      %1184 = vmatpush1.msra.mxu0 %v1164
      %1185 = vmatprep.subr.mxu0 0.0
      %1186 = vmatpush1.msra.mxu0 %v1165
      %1187 = vmatprep.subr.mxu0 0.0
      %1188 = vmatpush1.msra.mxu0 %v1166
      %1189 = vmatprep.subr.mxu0 0.0
      %1190 = vmatpush1.msra.mxu0 %v1167
      %1191 = vmatprep.subr.mxu0 0.0
      %1192 = vmatpush1.msra.mxu0 %v1168
      %1193 = vmatprep.subr.mxu0 0.0
      %1194 = vmatpush1.msra.mxu0 %v1169
      %1195 = vmatprep.subr.mxu0 0.0
      %1196 = vmatpush1.msra.mxu0 %v1170
      %1197 = vmatprep.subr.mxu0 0.0
      %1198 = vmatpush1.msra.mxu0 %v1171
      %1199 = vmatprep.subr.mxu0 0.0
      %1200 = vmatpush1.msra.mxu0 %v1172
      %1201 = vmatprep.subr.mxu0 0.0
      %1202 = vmatpush1.msra.mxu0 %v1173
      %1203 = vmatprep.subr.mxu0 0.0
      %1204 = vmatpush1.msra.mxu0 %v1174
      %1205 = vmatprep.subr.mxu0 0.0
      %1206 = vmatpush1.msra.mxu0 %v1175
      %1207 = vmatprep.subr.mxu0 0.0
      %1208 = vmatpush1.msra.mxu0 %v1176
      %1209 = vmatprep.subr.mxu0 0.0
      %1210 = vmatpush1.msra.mxu0 0.0
      %1211 = vmatprep.subr.mxu0 0.0
      %1212 = vmatpush1.msra.mxu0 0.0
      %1213 = vmatprep.subr.mxu0 0.0
      %1214 = vmatpush1.msra.mxu0 0.0
      %1215 = vmatprep.subr.mxu0 0.0
      %1216 = vmatpush1.msra.mxu0 0.0
      %1217 = vmatprep.subr.mxu0 0.0
      %1218 = vmatpush1.msra.mxu0 0.0
      %1219 = vmatprep.subr.mxu0 0.0
      %1220 = vmatpush1.msra.mxu0 0.0
      %1221 = vmatprep.subr.mxu0 0.0
      %1222 = vmatpush1.msra.mxu0 0.0
      %1223 = vmatprep.subr.mxu0 0.0
      %1224 = vmatpush1.msra.mxu0 0.0
      %1225 = vmatprep.subr.mxu0 0.0
      %1226 = vmatpush1.msra.mxu0 0.0
      %1227 = vmatprep.subr.mxu0 0.0
      %1228 = vmatpush1.msra.mxu0 0.0
      %1229 = vmatprep.subr.mxu0 0.0
      %1230 = vmatpush1.msra.mxu0 0.0
      %1231 = vmatprep.subr.mxu0 0.0
      %1232 = vmatpush1.msra.mxu0 0.0
      %1233 = vmatprep.subr.mxu0 0.0
      %1234 = vmatpush1.msra.mxu0 0.0
      %1235 = vmatprep.subr.mxu0 0.0
      %1236 = vmatpush1.msra.mxu0 0.0
      %1237 = vmatprep.subr.mxu0 0.0
      %1238 = vmatpush1.msra.mxu0 0.0
      %1239 = vmatprep.subr.mxu0 0.0
      %1240 = vmatpush1.msra.mxu0 0.0
      %1241 = vmatprep.mubr.f32.mxu0 0.0
      %1242 = vmatmul.mubr.f32.gmra.mrb[0].mxu0 %v1128
      %v1243 = vpop.f32.mrb[0].mxu0
      %v1244 = vadd.f32 0.0, %v1243
      %v1245 = vpop.f32.mrb[0].mxu0
      %1246 = vmatprep.mubr.f32.mxu0 0.0
      %1247 = vmatmul.mubr.f32.gmra.mrb[0].mxu0 %v1129
      %v1248 = vpop.f32.mrb[0].mxu0
      %v1249 = vadd.f32 0.0, %v1248
      %v1250 = vpop.f32.mrb[0].mxu0
      %1251 = vmatprep.mubr.f32.mxu0 0.0
      %1252 = vmatmul.mubr.f32.gmra.mrb[0].mxu0 %v1130
      %v1253 = vpop.f32.mrb[0].mxu0
      %v1254 = vadd.f32 0.0, %v1253
      %v1255 = vpop.f32.mrb[0].mxu0
      %1256 = vmatprep.mubr.f32.mxu0 0.0
      %1257 = vmatmul.mubr.f32.gmra.mrb[0].mxu0 %v1131
      %v1258 = vpop.f32.mrb[0].mxu0
      %v1259 = vadd.f32 0.0, %v1258
      %v1260 = vpop.f32.mrb[0].mxu0
      %1261 = vmatprep.mubr.f32.mxu0 0.0
      %1262 = vmatmul.mubr.f32.gmra.mrb[0].mxu0 %v1132
      %v1263 = vpop.f32.mrb[0].mxu0
      %v1264 = vadd.f32 0.0, %v1263
      %v1265 = vpop.f32.mrb[0].mxu0
      %1266 = vmatprep.mubr.f32.mxu0 0.0
      %1267 = vmatmul.mubr.f32.gmra.mrb[0].mxu0 %v1133
      %v1268 = vpop.f32.mrb[0].mxu0
      %v1269 = vadd.f32 0.0, %v1268
      %v1270 = vpop.f32.mrb[0].mxu0
      %1271 = vmatprep.mubr.f32.mxu0 0.0
      %1272 = vmatmul.mubr.f32.gmra.mrb[0].mxu0 %v1134
      %v1273 = vpop.f32.mrb[0].mxu0
      %v1274 = vadd.f32 0.0, %v1273
      %v1275 = vpop.f32.mrb[0].mxu0
      %1276 = vmatprep.mubr.f32.mxu0 0.0
      %1277 = vmatmul.mubr.f32.gmra.mrb[0].mxu0 %v1135
      %v1278 = vpop.f32.mrb[0].mxu0
      %v1279 = vadd.f32 0.0, %v1278
      %v1280 = vpop.f32.mrb[0].mxu0
      %1281 = vmatprep.mubr.f32.mxu0 0.0
      %1282 = vmatmul.mubr.f32.gmra.mrb[0].mxu0 %v1136
      %v1283 = vpop.f32.mrb[0].mxu0
      %v1284 = vadd.f32 0.0, %v1283
      %v1285 = vpop.f32.mrb[0].mxu0
      %1286 = vmatprep.mubr.f32.mxu0 0.0
      %1287 = vmatmul.mubr.f32.gmra.mrb[0].mxu0 %v1137
      %v1288 = vpop.f32.mrb[0].mxu0
      %v1289 = vadd.f32 0.0, %v1288
      %v1290 = vpop.f32.mrb[0].mxu0
      %1291 = vmatprep.mubr.f32.mxu0 0.0
      %1292 = vmatmul.mubr.f32.gmra.mrb[0].mxu0 %v1138
      %v1293 = vpop.f32.mrb[0].mxu0
      %v1294 = vadd.f32 0.0, %v1293
      %v1295 = vpop.f32.mrb[0].mxu0
      %1296 = vmatprep.mubr.f32.mxu0 0.0
      %1297 = vmatmul.mubr.f32.gmra.mrb[0].mxu0 %v1139
      %v1298 = vpop.f32.mrb[0].mxu0
      %v1299 = vadd.f32 0.0, %v1298
      %v1300 = vpop.f32.mrb[0].mxu0
      %1301 = vmatprep.mubr.f32.mxu0 0.0
      %1302 = vmatmul.mubr.f32.gmra.mrb[0].mxu0 %v1140
      %v1303 = vpop.f32.mrb[0].mxu0
      %v1304 = vadd.f32 0.0, %v1303
      %v1305 = vpop.f32.mrb[0].mxu0
      %1306 = vmatprep.mubr.f32.mxu0 0.0
      %1307 = vmatmul.mubr.f32.gmra.mrb[0].mxu0 %v1141
      %v1308 = vpop.f32.mrb[0].mxu0
      %v1309 = vadd.f32 0.0, %v1308
      %v1310 = vpop.f32.mrb[0].mxu0
      %1311 = vmatprep.mubr.f32.mxu0 0.0
      %1312 = vmatmul.mubr.f32.gmra.mrb[0].mxu0 %v1142
      %v1313 = vpop.f32.mrb[0].mxu0
      %v1314 = vadd.f32 0.0, %v1313
      %v1315 = vpop.f32.mrb[0].mxu0
      %1316 = vmatprep.mubr.f32.mxu0 0.0
      %1317 = vmatmul.mubr.f32.gmra.mrb[0].mxu0 %v1143
      %v1318 = vpop.f32.mrb[0].mxu0
      %v1319 = vadd.f32 0.0, %v1318
      %v1320 = vpop.f32.mrb[0].mxu0
      %1321 = vmatprep.mubr.f32.mxu0 0.0
      %1322 = vmatmul.mubr.f32.gmra.mrb[0].mxu0 %v1144
      %v1323 = vpop.f32.mrb[0].mxu0
      %v1324 = vadd.f32 0.0, %v1323
      %v1325 = vpop.f32.mrb[0].mxu0
      %1326 = vmatprep.mubr.f32.mxu0 0.0
      %1327 = vmatmul.mubr.f32.gmra.mrb[0].mxu0 %v1145
      %v1328 = vpop.f32.mrb[0].mxu0
      %v1329 = vadd.f32 0.0, %v1328
      %v1330 = vpop.f32.mrb[0].mxu0
      %1331 = vmatprep.mubr.f32.mxu0 0.0
      %1332 = vmatmul.mubr.f32.gmra.mrb[0].mxu0 %v1146
      %v1333 = vpop.f32.mrb[0].mxu0
      %v1334 = vadd.f32 0.0, %v1333
      %v1335 = vpop.f32.mrb[0].mxu0
      %1336 = vmatprep.mubr.f32.mxu0 0.0
      %1337 = vmatmul.mubr.f32.gmra.mrb[0].mxu0 %v1147
      %v1338 = vpop.f32.mrb[0].mxu0
      %v1339 = vadd.f32 0.0, %v1338
      %v1340 = vpop.f32.mrb[0].mxu0
      %1341 = vmatprep.mubr.f32.mxu0 0.0
      %1342 = vmatmul.mubr.f32.gmra.mrb[0].mxu0 %v1148
      %v1343 = vpop.f32.mrb[0].mxu0
      %v1344 = vadd.f32 0.0, %v1343
      %v1345 = vpop.f32.mrb[0].mxu0
      %1346 = vmatprep.mubr.f32.mxu0 0.0
      %1347 = vmatmul.mubr.f32.gmra.mrb[0].mxu0 %v1149
      %v1348 = vpop.f32.mrb[0].mxu0
      %v1349 = vadd.f32 0.0, %v1348
      %v1350 = vpop.f32.mrb[0].mxu0
      %1351 = vmatprep.mubr.f32.mxu0 0.0
      %1352 = vmatmul.mubr.f32.gmra.mrb[0].mxu0 %v1150
      %v1353 = vpop.f32.mrb[0].mxu0
      %v1354 = vadd.f32 0.0, %v1353
      %v1355 = vpop.f32.mrb[0].mxu0
      %1356 = vmatprep.mubr.f32.mxu0 0.0
      %1357 = vmatmul.mubr.f32.gmra.mrb[0].mxu0 %v1151
      %v1358 = vpop.f32.mrb[0].mxu0
      %v1359 = vadd.f32 0.0, %v1358
      %v1360 = vpop.f32.mrb[0].mxu0
      %1361 = vmatprep.mubr.f32.mxu0 0.0
      %1362 = vmatmul.mubr.f32.gmra.mrb[0].mxu0 %v1152
      %v1363 = vpop.f32.mrb[0].mxu0
      %v1364 = vadd.f32 0.0, %v1363
      %v1365 = vpop.f32.mrb[0].mxu0
      %1366 = vmatprep.mubr.f32.mxu0 0.0
      %1367 = vmatmul.mubr.f32.gmra.mrb[0].mxu0 %v1153
      %v1368 = vpop.f32.mrb[0].mxu0
      %v1369 = vadd.f32 0.0, %v1368
      %v1370 = vpop.f32.mrb[0].mxu0
      %1371 = vmatprep.mubr.f32.mxu0 0.0
      %1372 = vmatmul.mubr.f32.gmra.mrb[0].mxu0 %v1154
      %v1373 = vpop.f32.mrb[0].mxu0
      %v1374 = vadd.f32 0.0, %v1373
      %v1375 = vpop.f32.mrb[0].mxu0
      %1376 = vmatprep.mubr.f32.mxu0 0.0
      %1377 = vmatmul.mubr.f32.gmra.mrb[0].mxu0 %v1155
      %v1378 = vpop.f32.mrb[0].mxu0
      %v1379 = vadd.f32 0.0, %v1378
      %v1380 = vpop.f32.mrb[0].mxu0
      %1381 = vmatprep.mubr.f32.mxu0 0.0
      %1382 = vmatmul.mubr.f32.gmra.mrb[0].mxu0 %v1156
      %v1383 = vpop.f32.mrb[0].mxu0
      %v1384 = vadd.f32 0.0, %v1383
      %v1385 = vpop.f32.mrb[0].mxu0
      %1386 = vmatprep.mubr.f32.mxu0 0.0
      %1387 = vmatmul.mubr.f32.gmra.mrb[0].mxu0 %v1157
      %v1388 = vpop.f32.mrb[0].mxu0
      %v1389 = vadd.f32 0.0, %v1388
      %v1390 = vpop.f32.mrb[0].mxu0
      %1391 = vmatprep.mubr.f32.mxu0 0.0
      %1392 = vmatmul.mubr.f32.gmra.mrb[0].mxu0 %v1158
      %v1393 = vpop.f32.mrb[0].mxu0
      %v1394 = vadd.f32 0.0, %v1393
      %v1395 = vpop.f32.mrb[0].mxu0
      %1396 = vmatprep.mubr.f32.mxu0 0.0
      %1397 = vmatmul.mubr.f32.gmra.mrb[0].mxu0 %v1159
      %v1398 = vpop.f32.mrb[0].mxu0
      %v1399 = vadd.f32 0.0, %v1398
      %v1400 = vpop.f32.mrb[0].mxu0
      %1401 = vdwg.mxu0
      %v1402 = vld [vmem:[#allocation3] sm:$0xff]
      %v1403 = vld [vmem:[#allocation3 + $0x8] sm:$0xff]
      %v1404 = vld [vmem:[#allocation3 + $0x10] sm:$0xff]
      %v1405 = vld [vmem:[#allocation3 + $0x18] sm:$0xff]
      %v1406 = vld [vmem:[#allocation3 + $0x20] sm:$0xff]
      %v1407 = vld [vmem:[#allocation3 + $0x28] sm:$0xff]
      %v1408 = vld [vmem:[#allocation3 + $0x30] sm:$0xff]
      %v1409 = vld [vmem:[#allocation3 + $0x38] sm:$0xff]
      %v1410 = vld [vmem:[#allocation3 + $0x40] sm:$0xff]
      %v1411 = vld [vmem:[#allocation3 + $0x48] sm:$0xff]
      %v1412 = vld [vmem:[#allocation3 + $0x50] sm:$0xff]
      %v1413 = vld [vmem:[#allocation3 + $0x58] sm:$0xff]
      %v1414 = vld [vmem:[#allocation3 + $0x60] sm:$0xff]
      %v1415 = vld [vmem:[#allocation3 + $0x68] sm:$0xff]
      %v1416 = vld [vmem:[#allocation3 + $0x70] sm:$0xff]
      %v1417 = vld [vmem:[#allocation3 + $0x78] sm:$0xff]
      %v1418 = vld [vmem:[#allocation3 + $0x80] sm:$0xff]
      %v1419 = vld [vmem:[#allocation3 + $0x88] sm:$0xff]
      %v1420 = vld [vmem:[#allocation3 + $0x90] sm:$0xff]
      %v1421 = vld [vmem:[#allocation3 + $0x98] sm:$0xff]
      %v1422 = vld [vmem:[#allocation3 + $0xa0] sm:$0xff]
      %v1423 = vld [vmem:[#allocation3 + $0xa8] sm:$0xff]
      %v1424 = vld [vmem:[#allocation3 + $0xb0] sm:$0xff]
      %v1425 = vld [vmem:[#allocation3 + $0xb8] sm:$0xff]
      %v1426 = vld [vmem:[#allocation3 + $0xc0] sm:$0xff]
      %v1427 = vld [vmem:[#allocation3 + $0xc8] sm:$0xff]
      %v1428 = vld [vmem:[#allocation3 + $0xd0] sm:$0xff]
      %v1429 = vld [vmem:[#allocation3 + $0xd8] sm:$0xff]
      %v1430 = vld [vmem:[#allocation3 + $0xe0] sm:$0xff]
      %v1431 = vld [vmem:[#allocation3 + $0xe8] sm:$0xff]
      %v1432 = vld [vmem:[#allocation3 + $0xf0] sm:$0xff]
      %v1433 = vld [vmem:[#allocation3 + $0xf8] sm:$0xff]
      %v1434 = vadd.f32 %v1402, %v1244
      %v1435 = vadd.f32 %v1403, %v1249
      %v1436 = vadd.f32 %v1404, %v1254
      %v1437 = vadd.f32 %v1405, %v1259
      %v1438 = vadd.f32 %v1406, %v1264
      %v1439 = vadd.f32 %v1407, %v1269
      %v1440 = vadd.f32 %v1408, %v1274
      %v1441 = vadd.f32 %v1409, %v1279
      %v1442 = vadd.f32 %v1410, %v1284
      %v1443 = vadd.f32 %v1411, %v1289
      %v1444 = vadd.f32 %v1412, %v1294
      %v1445 = vadd.f32 %v1413, %v1299
      %v1446 = vadd.f32 %v1414, %v1304
      %v1447 = vadd.f32 %v1415, %v1309
      %v1448 = vadd.f32 %v1416, %v1314
      %v1449 = vadd.f32 %v1417, %v1319
      %v1450 = vadd.f32 %v1418, %v1324
      %v1451 = vadd.f32 %v1419, %v1329
      %v1452 = vadd.f32 %v1420, %v1334
      %v1453 = vadd.f32 %v1421, %v1339
      %v1454 = vadd.f32 %v1422, %v1344
      %v1455 = vadd.f32 %v1423, %v1349
      %v1456 = vadd.f32 %v1424, %v1354
      %v1457 = vadd.f32 %v1425, %v1359
      %v1458 = vadd.f32 %v1426, %v1364
      %v1459 = vadd.f32 %v1427, %v1369
      %v1460 = vadd.f32 %v1428, %v1374
      %v1461 = vadd.f32 %v1429, %v1379
      %v1462 = vadd.f32 %v1430, %v1384
      %v1463 = vadd.f32 %v1431, %v1389
      %v1464 = vadd.f32 %v1432, %v1394
      %v1465 = vadd.f32 %v1433, %v1399
      %1466 = vst [vmem:[#allocation3] sm:$0xff] %v1434
      %1467 = vst [vmem:[#allocation3 + $0x8] sm:$0xff] %v1435
      %1468 = vst [vmem:[#allocation3 + $0x10] sm:$0xff] %v1436
      %1469 = vst [vmem:[#allocation3 + $0x18] sm:$0xff] %v1437
      %1470 = vst [vmem:[#allocation3 + $0x20] sm:$0xff] %v1438
      %1471 = vst [vmem:[#allocation3 + $0x28] sm:$0xff] %v1439
      %1472 = vst [vmem:[#allocation3 + $0x30] sm:$0xff] %v1440
      %1473 = vst [vmem:[#allocation3 + $0x38] sm:$0xff] %v1441
      %1474 = vst [vmem:[#allocation3 + $0x40] sm:$0xff] %v1442
      %1475 = vst [vmem:[#allocation3 + $0x48] sm:$0xff] %v1443
      %1476 = vst [vmem:[#allocation3 + $0x50] sm:$0xff] %v1444
      %1477 = vst [vmem:[#allocation3 + $0x58] sm:$0xff] %v1445
      %1478 = vst [vmem:[#allocation3 + $0x60] sm:$0xff] %v1446
      %1479 = vst [vmem:[#allocation3 + $0x68] sm:$0xff] %v1447
      %1480 = vst [vmem:[#allocation3 + $0x70] sm:$0xff] %v1448
      %1481 = vst [vmem:[#allocation3 + $0x78] sm:$0xff] %v1449
      %1482 = vst [vmem:[#allocation3 + $0x80] sm:$0xff] %v1450
      %1483 = vst [vmem:[#allocation3 + $0x88] sm:$0xff] %v1451
      %1484 = vst [vmem:[#allocation3 + $0x90] sm:$0xff] %v1452
      %1485 = vst [vmem:[#allocation3 + $0x98] sm:$0xff] %v1453
      %1486 = vst [vmem:[#allocation3 + $0xa0] sm:$0xff] %v1454
      %1487 = vst [vmem:[#allocation3 + $0xa8] sm:$0xff] %v1455
      %1488 = vst [vmem:[#allocation3 + $0xb0] sm:$0xff] %v1456
      %1489 = vst [vmem:[#allocation3 + $0xb8] sm:$0xff] %v1457
      %1490 = vst [vmem:[#allocation3 + $0xc0] sm:$0xff] %v1458
      %1491 = vst [vmem:[#allocation3 + $0xc8] sm:$0xff] %v1459
      %1492 = vst [vmem:[#allocation3 + $0xd0] sm:$0xff] %v1460
      %1493 = vst [vmem:[#allocation3 + $0xd8] sm:$0xff] %v1461
      %1494 = vst [vmem:[#allocation3 + $0xe0] sm:$0xff] %v1462
      %1495 = vst [vmem:[#allocation3 + $0xe8] sm:$0xff] %v1463
      %1496 = vst [vmem:[#allocation3 + $0xf0] sm:$0xff] %v1464
      %1497 = vst [vmem:[#allocation3 + $0xf8] sm:$0xff] %v1465
      %v1498 = vld [vmem:[%s388] sm:$0xff]
      %v1499 = vld [vmem:[%s388 + $0x8] sm:$0xff]
      %v1500 = vld [vmem:[%s388 + $0x18] sm:$0xff]
      %v1501 = vld [vmem:[%s388 + $0x20] sm:$0xff]
      %v1502 = vld [vmem:[%s388 + $0x30] sm:$0xff]
      %v1503 = vld [vmem:[%s388 + $0x38] sm:$0xff]
      %v1504 = vld [vmem:[%s388 + $0x48] sm:$0xff]
      %v1505 = vld [vmem:[%s388 + $0x50] sm:$0xff]
      %v1506 = vld [vmem:[%s388 + $0x60] sm:$0xff]
      %v1507 = vld [vmem:[%s388 + $0x68] sm:$0xff]
      %v1508 = vld [vmem:[%s388 + $0x78] sm:$0xff]
      %v1509 = vld [vmem:[%s388 + $0x80] sm:$0xff]
      %v1510 = vld [vmem:[%s388 + $0x90] sm:$0xff]
      %v1511 = vld [vmem:[%s388 + $0x98] sm:$0xff]
      %v1512 = vld [vmem:[%s388 + $0xa8] sm:$0xff]
      %v1513 = vld [vmem:[%s388 + $0xb0] sm:$0xff]
      %v1514 = vld [vmem:[%s388 + $0xc0] sm:$0xff]
      %v1515 = vld [vmem:[%s388 + $0xc8] sm:$0xff]
      %v1516 = vld [vmem:[%s388 + $0xd8] sm:$0xff]
      %v1517 = vld [vmem:[%s388 + $0xe0] sm:$0xff]
      %v1518 = vld [vmem:[%s388 + $0xf0] sm:$0xff]
      %v1519 = vld [vmem:[%s388 + $0xf8] sm:$0xff]
      %v1520 = vld [vmem:[%s388 + $0x108] sm:$0xff]
      %v1521 = vld [vmem:[%s388 + $0x110] sm:$0xff]
      %v1522 = vld [vmem:[%s388 + $0x120] sm:$0xff]
      %v1523 = vld [vmem:[%s388 + $0x128] sm:$0xff]
      %v1524 = vld [vmem:[%s388 + $0x138] sm:$0xff]
      %v1525 = vld [vmem:[%s388 + $0x140] sm:$0xff]
      %v1526 = vld [vmem:[%s388 + $0x150] sm:$0xff]
      %v1527 = vld [vmem:[%s388 + $0x158] sm:$0xff]
      %v1528 = vld [vmem:[%s388 + $0x168] sm:$0xff]
      %v1529 = vld [vmem:[%s388 + $0x170] sm:$0xff]
      %s1530 = scalar_lea.vmem %s1, 384
      %v1531 = vld [vmem:[%s1530] sm:$0xff]
      %v1532 = vld [vmem:[%s1530 + $0x8] sm:$0xff]
      %v1533 = vld [vmem:[%s1530 + $0x10] sm:$0xff]
      %v1534 = vld [vmem:[%s1530 + $0x18] sm:$0xff]
      %v1535 = vld [vmem:[%s1530 + $0x20] sm:$0xff]
      %v1536 = vld [vmem:[%s1530 + $0x28] sm:$0xff]
      %v1537 = vld [vmem:[%s1530 + $0x30] sm:$0xff]
      %v1538 = vld [vmem:[%s1530 + $0x38] sm:$0xff]
      %v1539 = vld [vmem:[%s1530 + $0x40] sm:$0xff]
      %v1540 = vld [vmem:[%s1530 + $0x48] sm:$0xff]
      %v1541 = vld [vmem:[%s1530 + $0x50] sm:$0xff]
      %v1542 = vld [vmem:[%s1530 + $0x58] sm:$0xff]
      %v1543 = vld [vmem:[%s1530 + $0x60] sm:$0xff]
      %v1544 = vld [vmem:[%s1530 + $0x68] sm:$0xff]
      %v1545 = vld [vmem:[%s1530 + $0x70] sm:$0xff]
      %v1546 = vld [vmem:[%s1530 + $0x78] sm:$0xff]
      %1547 = vmatprep.subr.mxu0 0.0
      %1548 = vmatpush1.msra.mxu0 %v1531
      %1549 = vmatprep.subr.mxu0 0.0
      %1550 = vmatpush1.msra.mxu0 %v1532
      %1551 = vmatprep.subr.mxu0 0.0
      %1552 = vmatpush1.msra.mxu0 %v1533
      %1553 = vmatprep.subr.mxu0 0.0
      %1554 = vmatpush1.msra.mxu0 %v1534
      %1555 = vmatprep.subr.mxu0 0.0
      %1556 = vmatpush1.msra.mxu0 %v1535
      %1557 = vmatprep.subr.mxu0 0.0
      %1558 = vmatpush1.msra.mxu0 %v1536
      %1559 = vmatprep.subr.mxu0 0.0
      %1560 = vmatpush1.msra.mxu0 %v1537
      %1561 = vmatprep.subr.mxu0 0.0
      %1562 = vmatpush1.msra.mxu0 %v1538
      %1563 = vmatprep.subr.mxu0 0.0
      %1564 = vmatpush1.msra.mxu0 %v1539
      %1565 = vmatprep.subr.mxu0 0.0
      %1566 = vmatpush1.msra.mxu0 %v1540
      %1567 = vmatprep.subr.mxu0 0.0
      %1568 = vmatpush1.msra.mxu0 %v1541
      %1569 = vmatprep.subr.mxu0 0.0
      %1570 = vmatpush1.msra.mxu0 %v1542
      %1571 = vmatprep.subr.mxu0 0.0
      %1572 = vmatpush1.msra.mxu0 %v1543
      %1573 = vmatprep.subr.mxu0 0.0
      %1574 = vmatpush1.msra.mxu0 %v1544
      %1575 = vmatprep.subr.mxu0 0.0
      %1576 = vmatpush1.msra.mxu0 %v1545
      %1577 = vmatprep.subr.mxu0 0.0
      %1578 = vmatpush1.msra.mxu0 %v1546
      %1579 = vmatprep.subr.mxu0 0.0
      %1580 = vmatpush1.msra.mxu0 0.0
      %1581 = vmatprep.subr.mxu0 0.0
      %1582 = vmatpush1.msra.mxu0 0.0
      %1583 = vmatprep.subr.mxu0 0.0
      %1584 = vmatpush1.msra.mxu0 0.0
      %1585 = vmatprep.subr.mxu0 0.0
      %1586 = vmatpush1.msra.mxu0 0.0
      %1587 = vmatprep.subr.mxu0 0.0
      %1588 = vmatpush1.msra.mxu0 0.0
      %1589 = vmatprep.subr.mxu0 0.0
      %1590 = vmatpush1.msra.mxu0 0.0
      %1591 = vmatprep.subr.mxu0 0.0
      %1592 = vmatpush1.msra.mxu0 0.0
      %1593 = vmatprep.subr.mxu0 0.0
      %1594 = vmatpush1.msra.mxu0 0.0
      %1595 = vmatprep.subr.mxu0 0.0
      %1596 = vmatpush1.msra.mxu0 0.0
      %1597 = vmatprep.subr.mxu0 0.0
      %1598 = vmatpush1.msra.mxu0 0.0
      %1599 = vmatprep.subr.mxu0 0.0
      %1600 = vmatpush1.msra.mxu0 0.0
      %1601 = vmatprep.subr.mxu0 0.0
      %1602 = vmatpush1.msra.mxu0 0.0
      %1603 = vmatprep.subr.mxu0 0.0
      %1604 = vmatpush1.msra.mxu0 0.0
      %1605 = vmatprep.subr.mxu0 0.0
      %1606 = vmatpush1.msra.mxu0 0.0
      %1607 = vmatprep.subr.mxu0 0.0
      %1608 = vmatpush1.msra.mxu0 0.0
      %1609 = vmatprep.subr.mxu0 0.0
      %1610 = vmatpush1.msra.mxu0 0.0
      %1611 = vmatprep.mubr.f32.mxu0 0.0
      %1612 = vmatmul.mubr.f32.gmra.mrb[0].mxu0 %v1498
      %v1613 = vpop.f32.mrb[0].mxu0
      %v1614 = vadd.f32 0.0, %v1613
      %v1615 = vpop.f32.mrb[0].mxu0
      %1616 = vmatprep.mubr.f32.mxu0 0.0
      %1617 = vmatmul.mubr.f32.gmra.mrb[0].mxu0 %v1499
      %v1618 = vpop.f32.mrb[0].mxu0
      %v1619 = vadd.f32 0.0, %v1618
      %v1620 = vpop.f32.mrb[0].mxu0
      %1621 = vmatprep.mubr.f32.mxu0 0.0
      %1622 = vmatmul.mubr.f32.gmra.mrb[0].mxu0 %v1500
      %v1623 = vpop.f32.mrb[0].mxu0
      %v1624 = vadd.f32 0.0, %v1623
      %v1625 = vpop.f32.mrb[0].mxu0
      %1626 = vmatprep.mubr.f32.mxu0 0.0
      %1627 = vmatmul.mubr.f32.gmra.mrb[0].mxu0 %v1501
      %v1628 = vpop.f32.mrb[0].mxu0
      %v1629 = vadd.f32 0.0, %v1628
      %v1630 = vpop.f32.mrb[0].mxu0
      %1631 = vmatprep.mubr.f32.mxu0 0.0
      %1632 = vmatmul.mubr.f32.gmra.mrb[0].mxu0 %v1502
      %v1633 = vpop.f32.mrb[0].mxu0
      %v1634 = vadd.f32 0.0, %v1633
      %v1635 = vpop.f32.mrb[0].mxu0
      %1636 = vmatprep.mubr.f32.mxu0 0.0
      %1637 = vmatmul.mubr.f32.gmra.mrb[0].mxu0 %v1503
      %v1638 = vpop.f32.mrb[0].mxu0
      %v1639 = vadd.f32 0.0, %v1638
      %v1640 = vpop.f32.mrb[0].mxu0
      %1641 = vmatprep.mubr.f32.mxu0 0.0
      %1642 = vmatmul.mubr.f32.gmra.mrb[0].mxu0 %v1504
      %v1643 = vpop.f32.mrb[0].mxu0
      %v1644 = vadd.f32 0.0, %v1643
      %v1645 = vpop.f32.mrb[0].mxu0
      %1646 = vmatprep.mubr.f32.mxu0 0.0
      %1647 = vmatmul.mubr.f32.gmra.mrb[0].mxu0 %v1505
      %v1648 = vpop.f32.mrb[0].mxu0
      %v1649 = vadd.f32 0.0, %v1648
      %v1650 = vpop.f32.mrb[0].mxu0
      %1651 = vmatprep.mubr.f32.mxu0 0.0
      %1652 = vmatmul.mubr.f32.gmra.mrb[0].mxu0 %v1506
      %v1653 = vpop.f32.mrb[0].mxu0
      %v1654 = vadd.f32 0.0, %v1653
      %v1655 = vpop.f32.mrb[0].mxu0
      %1656 = vmatprep.mubr.f32.mxu0 0.0
      %1657 = vmatmul.mubr.f32.gmra.mrb[0].mxu0 %v1507
      %v1658 = vpop.f32.mrb[0].mxu0
      %v1659 = vadd.f32 0.0, %v1658
      %v1660 = vpop.f32.mrb[0].mxu0
      %1661 = vmatprep.mubr.f32.mxu0 0.0
      %1662 = vmatmul.mubr.f32.gmra.mrb[0].mxu0 %v1508
      %v1663 = vpop.f32.mrb[0].mxu0
      %v1664 = vadd.f32 0.0, %v1663
      %v1665 = vpop.f32.mrb[0].mxu0
      %1666 = vmatprep.mubr.f32.mxu0 0.0
      %1667 = vmatmul.mubr.f32.gmra.mrb[0].mxu0 %v1509
      %v1668 = vpop.f32.mrb[0].mxu0
      %v1669 = vadd.f32 0.0, %v1668
      %v1670 = vpop.f32.mrb[0].mxu0
      %1671 = vmatprep.mubr.f32.mxu0 0.0
      %1672 = vmatmul.mubr.f32.gmra.mrb[0].mxu0 %v1510
      %v1673 = vpop.f32.mrb[0].mxu0
      %v1674 = vadd.f32 0.0, %v1673
      %v1675 = vpop.f32.mrb[0].mxu0
      %1676 = vmatprep.mubr.f32.mxu0 0.0
      %1677 = vmatmul.mubr.f32.gmra.mrb[0].mxu0 %v1511
      %v1678 = vpop.f32.mrb[0].mxu0
      %v1679 = vadd.f32 0.0, %v1678
      %v1680 = vpop.f32.mrb[0].mxu0
      %1681 = vmatprep.mubr.f32.mxu0 0.0
      %1682 = vmatmul.mubr.f32.gmra.mrb[0].mxu0 %v1512
      %v1683 = vpop.f32.mrb[0].mxu0
      %v1684 = vadd.f32 0.0, %v1683
      %v1685 = vpop.f32.mrb[0].mxu0
      %1686 = vmatprep.mubr.f32.mxu0 0.0
      %1687 = vmatmul.mubr.f32.gmra.mrb[0].mxu0 %v1513
      %v1688 = vpop.f32.mrb[0].mxu0
      %v1689 = vadd.f32 0.0, %v1688
      %v1690 = vpop.f32.mrb[0].mxu0
      %1691 = vmatprep.mubr.f32.mxu0 0.0
      %1692 = vmatmul.mubr.f32.gmra.mrb[0].mxu0 %v1514
      %v1693 = vpop.f32.mrb[0].mxu0
      %v1694 = vadd.f32 0.0, %v1693
      %v1695 = vpop.f32.mrb[0].mxu0
      %1696 = vmatprep.mubr.f32.mxu0 0.0
      %1697 = vmatmul.mubr.f32.gmra.mrb[0].mxu0 %v1515
      %v1698 = vpop.f32.mrb[0].mxu0
      %v1699 = vadd.f32 0.0, %v1698
      %v1700 = vpop.f32.mrb[0].mxu0
      %1701 = vmatprep.mubr.f32.mxu0 0.0
      %1702 = vmatmul.mubr.f32.gmra.mrb[0].mxu0 %v1516
      %v1703 = vpop.f32.mrb[0].mxu0
      %v1704 = vadd.f32 0.0, %v1703
      %v1705 = vpop.f32.mrb[0].mxu0
      %1706 = vmatprep.mubr.f32.mxu0 0.0
      %1707 = vmatmul.mubr.f32.gmra.mrb[0].mxu0 %v1517
      %v1708 = vpop.f32.mrb[0].mxu0
      %v1709 = vadd.f32 0.0, %v1708
      %v1710 = vpop.f32.mrb[0].mxu0
      %1711 = vmatprep.mubr.f32.mxu0 0.0
      %1712 = vmatmul.mubr.f32.gmra.mrb[0].mxu0 %v1518
      %v1713 = vpop.f32.mrb[0].mxu0
      %v1714 = vadd.f32 0.0, %v1713
      %v1715 = vpop.f32.mrb[0].mxu0
      %1716 = vmatprep.mubr.f32.mxu0 0.0
      %1717 = vmatmul.mubr.f32.gmra.mrb[0].mxu0 %v1519
      %v1718 = vpop.f32.mrb[0].mxu0
      %v1719 = vadd.f32 0.0, %v1718
      %v1720 = vpop.f32.mrb[0].mxu0
      %1721 = vmatprep.mubr.f32.mxu0 0.0
      %1722 = vmatmul.mubr.f32.gmra.mrb[0].mxu0 %v1520
      %v1723 = vpop.f32.mrb[0].mxu0
      %v1724 = vadd.f32 0.0, %v1723
      %v1725 = vpop.f32.mrb[0].mxu0
      %1726 = vmatprep.mubr.f32.mxu0 0.0
      %1727 = vmatmul.mubr.f32.gmra.mrb[0].mxu0 %v1521
      %v1728 = vpop.f32.mrb[0].mxu0
      %v1729 = vadd.f32 0.0, %v1728
      %v1730 = vpop.f32.mrb[0].mxu0
      %1731 = vmatprep.mubr.f32.mxu0 0.0
      %1732 = vmatmul.mubr.f32.gmra.mrb[0].mxu0 %v1522
      %v1733 = vpop.f32.mrb[0].mxu0
      %v1734 = vadd.f32 0.0, %v1733
      %v1735 = vpop.f32.mrb[0].mxu0
      %1736 = vmatprep.mubr.f32.mxu0 0.0
      %1737 = vmatmul.mubr.f32.gmra.mrb[0].mxu0 %v1523
      %v1738 = vpop.f32.mrb[0].mxu0
      %v1739 = vadd.f32 0.0, %v1738
      %v1740 = vpop.f32.mrb[0].mxu0
      %1741 = vmatprep.mubr.f32.mxu0 0.0
      %1742 = vmatmul.mubr.f32.gmra.mrb[0].mxu0 %v1524
      %v1743 = vpop.f32.mrb[0].mxu0
      %v1744 = vadd.f32 0.0, %v1743
      %v1745 = vpop.f32.mrb[0].mxu0
      %1746 = vmatprep.mubr.f32.mxu0 0.0
      %1747 = vmatmul.mubr.f32.gmra.mrb[0].mxu0 %v1525
      %v1748 = vpop.f32.mrb[0].mxu0
      %v1749 = vadd.f32 0.0, %v1748
      %v1750 = vpop.f32.mrb[0].mxu0
      %1751 = vmatprep.mubr.f32.mxu0 0.0
      %1752 = vmatmul.mubr.f32.gmra.mrb[0].mxu0 %v1526
      %v1753 = vpop.f32.mrb[0].mxu0
      %v1754 = vadd.f32 0.0, %v1753
      %v1755 = vpop.f32.mrb[0].mxu0
      %1756 = vmatprep.mubr.f32.mxu0 0.0
      %1757 = vmatmul.mubr.f32.gmra.mrb[0].mxu0 %v1527
      %v1758 = vpop.f32.mrb[0].mxu0
      %v1759 = vadd.f32 0.0, %v1758
      %v1760 = vpop.f32.mrb[0].mxu0
      %1761 = vmatprep.mubr.f32.mxu0 0.0
      %1762 = vmatmul.mubr.f32.gmra.mrb[0].mxu0 %v1528
      %v1763 = vpop.f32.mrb[0].mxu0
      %v1764 = vadd.f32 0.0, %v1763
      %v1765 = vpop.f32.mrb[0].mxu0
      %1766 = vmatprep.mubr.f32.mxu0 0.0
      %1767 = vmatmul.mubr.f32.gmra.mrb[0].mxu0 %v1529
      %v1768 = vpop.f32.mrb[0].mxu0
      %v1769 = vadd.f32 0.0, %v1768
      %v1770 = vpop.f32.mrb[0].mxu0
      %1771 = vdwg.mxu0
      %v1772 = vld [vmem:[#allocation3] sm:$0xff]
      %v1773 = vld [vmem:[#allocation3 + $0x8] sm:$0xff]
      %v1774 = vld [vmem:[#allocation3 + $0x10] sm:$0xff]
      %v1775 = vld [vmem:[#allocation3 + $0x18] sm:$0xff]
      %v1776 = vld [vmem:[#allocation3 + $0x20] sm:$0xff]
      %v1777 = vld [vmem:[#allocation3 + $0x28] sm:$0xff]
      %v1778 = vld [vmem:[#allocation3 + $0x30] sm:$0xff]
      %v1779 = vld [vmem:[#allocation3 + $0x38] sm:$0xff]
      %v1780 = vld [vmem:[#allocation3 + $0x40] sm:$0xff]
      %v1781 = vld [vmem:[#allocation3 + $0x48] sm:$0xff]
      %v1782 = vld [vmem:[#allocation3 + $0x50] sm:$0xff]
      %v1783 = vld [vmem:[#allocation3 + $0x58] sm:$0xff]
      %v1784 = vld [vmem:[#allocation3 + $0x60] sm:$0xff]
      %v1785 = vld [vmem:[#allocation3 + $0x68] sm:$0xff]
      %v1786 = vld [vmem:[#allocation3 + $0x70] sm:$0xff]
      %v1787 = vld [vmem:[#allocation3 + $0x78] sm:$0xff]
      %v1788 = vld [vmem:[#allocation3 + $0x80] sm:$0xff]
      %v1789 = vld [vmem:[#allocation3 + $0x88] sm:$0xff]
      %v1790 = vld [vmem:[#allocation3 + $0x90] sm:$0xff]
      %v1791 = vld [vmem:[#allocation3 + $0x98] sm:$0xff]
      %v1792 = vld [vmem:[#allocation3 + $0xa0] sm:$0xff]
      %v1793 = vld [vmem:[#allocation3 + $0xa8] sm:$0xff]
      %v1794 = vld [vmem:[#allocation3 + $0xb0] sm:$0xff]
      %v1795 = vld [vmem:[#allocation3 + $0xb8] sm:$0xff]
      %v1796 = vld [vmem:[#allocation3 + $0xc0] sm:$0xff]
      %v1797 = vld [vmem:[#allocation3 + $0xc8] sm:$0xff]
      %v1798 = vld [vmem:[#allocation3 + $0xd0] sm:$0xff]
      %v1799 = vld [vmem:[#allocation3 + $0xd8] sm:$0xff]
      %v1800 = vld [vmem:[#allocation3 + $0xe0] sm:$0xff]
      %v1801 = vld [vmem:[#allocation3 + $0xe8] sm:$0xff]
      %v1802 = vld [vmem:[#allocation3 + $0xf0] sm:$0xff]
      %v1803 = vld [vmem:[#allocation3 + $0xf8] sm:$0xff]
      %v1804 = vadd.f32 %v1772, %v1614
      %v1805 = vadd.f32 %v1773, %v1619
      %v1806 = vadd.f32 %v1774, %v1624
      %v1807 = vadd.f32 %v1775, %v1629
      %v1808 = vadd.f32 %v1776, %v1634
      %v1809 = vadd.f32 %v1777, %v1639
      %v1810 = vadd.f32 %v1778, %v1644
      %v1811 = vadd.f32 %v1779, %v1649
      %v1812 = vadd.f32 %v1780, %v1654
      %v1813 = vadd.f32 %v1781, %v1659
      %v1814 = vadd.f32 %v1782, %v1664
      %v1815 = vadd.f32 %v1783, %v1669
      %v1816 = vadd.f32 %v1784, %v1674
      %v1817 = vadd.f32 %v1785, %v1679
      %v1818 = vadd.f32 %v1786, %v1684
      %v1819 = vadd.f32 %v1787, %v1689
      %v1820 = vadd.f32 %v1788, %v1694
      %v1821 = vadd.f32 %v1789, %v1699
      %v1822 = vadd.f32 %v1790, %v1704
      %v1823 = vadd.f32 %v1791, %v1709
      %v1824 = vadd.f32 %v1792, %v1714
      %v1825 = vadd.f32 %v1793, %v1719
      %v1826 = vadd.f32 %v1794, %v1724
      %v1827 = vadd.f32 %v1795, %v1729
      %v1828 = vadd.f32 %v1796, %v1734
      %v1829 = vadd.f32 %v1797, %v1739
      %v1830 = vadd.f32 %v1798, %v1744
      %v1831 = vadd.f32 %v1799, %v1749
      %v1832 = vadd.f32 %v1800, %v1754
      %v1833 = vadd.f32 %v1801, %v1759
      %v1834 = vadd.f32 %v1802, %v1764
      %v1835 = vadd.f32 %v1803, %v1769
      %1836 = vst [vmem:[#allocation3] sm:$0xff] %v1804
      %1837 = vst [vmem:[#allocation3 + $0x8] sm:$0xff] %v1805
      %1838 = vst [vmem:[#allocation3 + $0x10] sm:$0xff] %v1806
      %1839 = vst [vmem:[#allocation3 + $0x18] sm:$0xff] %v1807
      %1840 = vst [vmem:[#allocation3 + $0x20] sm:$0xff] %v1808
      %1841 = vst [vmem:[#allocation3 + $0x28] sm:$0xff] %v1809
      %1842 = vst [vmem:[#allocation3 + $0x30] sm:$0xff] %v1810
      %1843 = vst [vmem:[#allocation3 + $0x38] sm:$0xff] %v1811
      %1844 = vst [vmem:[#allocation3 + $0x40] sm:$0xff] %v1812
      %1845 = vst [vmem:[#allocation3 + $0x48] sm:$0xff] %v1813
      %1846 = vst [vmem:[#allocation3 + $0x50] sm:$0xff] %v1814
      %1847 = vst [vmem:[#allocation3 + $0x58] sm:$0xff] %v1815
      %1848 = vst [vmem:[#allocation3 + $0x60] sm:$0xff] %v1816
      %1849 = vst [vmem:[#allocation3 + $0x68] sm:$0xff] %v1817
      %1850 = vst [vmem:[#allocation3 + $0x70] sm:$0xff] %v1818
      %1851 = vst [vmem:[#allocation3 + $0x78] sm:$0xff] %v1819
      %1852 = vst [vmem:[#allocation3 + $0x80] sm:$0xff] %v1820
      %1853 = vst [vmem:[#allocation3 + $0x88] sm:$0xff] %v1821
      %1854 = vst [vmem:[#allocation3 + $0x90] sm:$0xff] %v1822
      %1855 = vst [vmem:[#allocation3 + $0x98] sm:$0xff] %v1823
      %1856 = vst [vmem:[#allocation3 + $0xa0] sm:$0xff] %v1824
      %1857 = vst [vmem:[#allocation3 + $0xa8] sm:$0xff] %v1825
      %1858 = vst [vmem:[#allocation3 + $0xb0] sm:$0xff] %v1826
      %1859 = vst [vmem:[#allocation3 + $0xb8] sm:$0xff] %v1827
      %1860 = vst [vmem:[#allocation3 + $0xc0] sm:$0xff] %v1828
      %1861 = vst [vmem:[#allocation3 + $0xc8] sm:$0xff] %v1829
      %1862 = vst [vmem:[#allocation3 + $0xd0] sm:$0xff] %v1830
      %1863 = vst [vmem:[#allocation3 + $0xd8] sm:$0xff] %v1831
      %1864 = vst [vmem:[#allocation3 + $0xe0] sm:$0xff] %v1832
      %1865 = vst [vmem:[#allocation3 + $0xe8] sm:$0xff] %v1833
      %1866 = vst [vmem:[#allocation3 + $0xf0] sm:$0xff] %v1834
      %1867 = vst [vmem:[#allocation3 + $0xf8] sm:$0xff] %v1835
      %v1868 = vld [vmem:[%s388 + $0x1] sm:$0xff]
      %v1869 = vld [vmem:[%s388 + $0x9] sm:$0xff]
      %v1870 = vld [vmem:[%s388 + $0x19] sm:$0xff]
      %v1871 = vld [vmem:[%s388 + $0x21] sm:$0xff]
      %v1872 = vld [vmem:[%s388 + $0x31] sm:$0xff]
      %v1873 = vld [vmem:[%s388 + $0x39] sm:$0xff]
      %v1874 = vld [vmem:[%s388 + $0x49] sm:$0xff]
      %v1875 = vld [vmem:[%s388 + $0x51] sm:$0xff]
      %v1876 = vld [vmem:[%s388 + $0x61] sm:$0xff]
      %v1877 = vld [vmem:[%s388 + $0x69] sm:$0xff]
      %v1878 = vld [vmem:[%s388 + $0x79] sm:$0xff]
      %v1879 = vld [vmem:[%s388 + $0x81] sm:$0xff]
      %v1880 = vld [vmem:[%s388 + $0x91] sm:$0xff]
      %v1881 = vld [vmem:[%s388 + $0x99] sm:$0xff]
      %v1882 = vld [vmem:[%s388 + $0xa9] sm:$0xff]
      %v1883 = vld [vmem:[%s388 + $0xb1] sm:$0xff]
      %v1884 = vld [vmem:[%s388 + $0xc1] sm:$0xff]
      %v1885 = vld [vmem:[%s388 + $0xc9] sm:$0xff]
      %v1886 = vld [vmem:[%s388 + $0xd9] sm:$0xff]
      %v1887 = vld [vmem:[%s388 + $0xe1] sm:$0xff]
      %v1888 = vld [vmem:[%s388 + $0xf1] sm:$0xff]
      %v1889 = vld [vmem:[%s388 + $0xf9] sm:$0xff]
      %v1890 = vld [vmem:[%s388 + $0x109] sm:$0xff]
      %v1891 = vld [vmem:[%s388 + $0x111] sm:$0xff]
      %v1892 = vld [vmem:[%s388 + $0x121] sm:$0xff]
      %v1893 = vld [vmem:[%s388 + $0x129] sm:$0xff]
      %v1894 = vld [vmem:[%s388 + $0x139] sm:$0xff]
      %v1895 = vld [vmem:[%s388 + $0x141] sm:$0xff]
      %v1896 = vld [vmem:[%s388 + $0x151] sm:$0xff]
      %v1897 = vld [vmem:[%s388 + $0x159] sm:$0xff]
      %v1898 = vld [vmem:[%s388 + $0x169] sm:$0xff]
      %v1899 = vld [vmem:[%s388 + $0x171] sm:$0xff]
      %s1900 = scalar_lea.vmem %s1, 512
      %v1901 = vld [vmem:[%s1900] sm:$0xff]
      %v1902 = vld [vmem:[%s1900 + $0x8] sm:$0xff]
      %v1903 = vld [vmem:[%s1900 + $0x10] sm:$0xff]
      %v1904 = vld [vmem:[%s1900 + $0x18] sm:$0xff]
      %v1905 = vld [vmem:[%s1900 + $0x20] sm:$0xff]
      %v1906 = vld [vmem:[%s1900 + $0x28] sm:$0xff]
      %v1907 = vld [vmem:[%s1900 + $0x30] sm:$0xff]
      %v1908 = vld [vmem:[%s1900 + $0x38] sm:$0xff]
      %v1909 = vld [vmem:[%s1900 + $0x40] sm:$0xff]
      %v1910 = vld [vmem:[%s1900 + $0x48] sm:$0xff]
      %v1911 = vld [vmem:[%s1900 + $0x50] sm:$0xff]
      %v1912 = vld [vmem:[%s1900 + $0x58] sm:$0xff]
      %v1913 = vld [vmem:[%s1900 + $0x60] sm:$0xff]
      %v1914 = vld [vmem:[%s1900 + $0x68] sm:$0xff]
      %v1915 = vld [vmem:[%s1900 + $0x70] sm:$0xff]
      %v1916 = vld [vmem:[%s1900 + $0x78] sm:$0xff]
      %1917 = vmatprep.subr.mxu0 0.0
      %1918 = vmatpush1.msra.mxu0 %v1901
      %1919 = vmatprep.subr.mxu0 0.0
      %1920 = vmatpush1.msra.mxu0 %v1902
      %1921 = vmatprep.subr.mxu0 0.0
      %1922 = vmatpush1.msra.mxu0 %v1903
      %1923 = vmatprep.subr.mxu0 0.0
      %1924 = vmatpush1.msra.mxu0 %v1904
      %1925 = vmatprep.subr.mxu0 0.0
      %1926 = vmatpush1.msra.mxu0 %v1905
      %1927 = vmatprep.subr.mxu0 0.0
      %1928 = vmatpush1.msra.mxu0 %v1906
      %1929 = vmatprep.subr.mxu0 0.0
      %1930 = vmatpush1.msra.mxu0 %v1907
      %1931 = vmatprep.subr.mxu0 0.0
      %1932 = vmatpush1.msra.mxu0 %v1908
      %1933 = vmatprep.subr.mxu0 0.0
      %1934 = vmatpush1.msra.mxu0 %v1909
      %1935 = vmatprep.subr.mxu0 0.0
      %1936 = vmatpush1.msra.mxu0 %v1910
      %1937 = vmatprep.subr.mxu0 0.0
      %1938 = vmatpush1.msra.mxu0 %v1911
      %1939 = vmatprep.subr.mxu0 0.0
      %1940 = vmatpush1.msra.mxu0 %v1912
      %1941 = vmatprep.subr.mxu0 0.0
      %1942 = vmatpush1.msra.mxu0 %v1913
      %1943 = vmatprep.subr.mxu0 0.0
      %1944 = vmatpush1.msra.mxu0 %v1914
      %1945 = vmatprep.subr.mxu0 0.0
      %1946 = vmatpush1.msra.mxu0 %v1915
      %1947 = vmatprep.subr.mxu0 0.0
      %1948 = vmatpush1.msra.mxu0 %v1916
      %1949 = vmatprep.subr.mxu0 0.0
      %1950 = vmatpush1.msra.mxu0 0.0
      %1951 = vmatprep.subr.mxu0 0.0
      %1952 = vmatpush1.msra.mxu0 0.0
      %1953 = vmatprep.subr.mxu0 0.0
      %1954 = vmatpush1.msra.mxu0 0.0
      %1955 = vmatprep.subr.mxu0 0.0
      %1956 = vmatpush1.msra.mxu0 0.0
      %1957 = vmatprep.subr.mxu0 0.0
      %1958 = vmatpush1.msra.mxu0 0.0
      %1959 = vmatprep.subr.mxu0 0.0
      %1960 = vmatpush1.msra.mxu0 0.0
      %1961 = vmatprep.subr.mxu0 0.0
      %1962 = vmatpush1.msra.mxu0 0.0
      %1963 = vmatprep.subr.mxu0 0.0
      %1964 = vmatpush1.msra.mxu0 0.0
      %1965 = vmatprep.subr.mxu0 0.0
      %1966 = vmatpush1.msra.mxu0 0.0
      %1967 = vmatprep.subr.mxu0 0.0
      %1968 = vmatpush1.msra.mxu0 0.0
      %1969 = vmatprep.subr.mxu0 0.0
      %1970 = vmatpush1.msra.mxu0 0.0
      %1971 = vmatprep.subr.mxu0 0.0
      %1972 = vmatpush1.msra.mxu0 0.0
      %1973 = vmatprep.subr.mxu0 0.0
      %1974 = vmatpush1.msra.mxu0 0.0
      %1975 = vmatprep.subr.mxu0 0.0
      %1976 = vmatpush1.msra.mxu0 0.0
      %1977 = vmatprep.subr.mxu0 0.0
      %1978 = vmatpush1.msra.mxu0 0.0
      %1979 = vmatprep.subr.mxu0 0.0
      %1980 = vmatpush1.msra.mxu0 0.0
      %1981 = vmatprep.mubr.f32.mxu0 0.0
      %1982 = vmatmul.mubr.f32.gmra.mrb[0].mxu0 %v1868
      %v1983 = vpop.f32.mrb[0].mxu0
      %v1984 = vadd.f32 0.0, %v1983
      %v1985 = vpop.f32.mrb[0].mxu0
      %1986 = vmatprep.mubr.f32.mxu0 0.0
      %1987 = vmatmul.mubr.f32.gmra.mrb[0].mxu0 %v1869
      %v1988 = vpop.f32.mrb[0].mxu0
      %v1989 = vadd.f32 0.0, %v1988
      %v1990 = vpop.f32.mrb[0].mxu0
      %1991 = vmatprep.mubr.f32.mxu0 0.0
      %1992 = vmatmul.mubr.f32.gmra.mrb[0].mxu0 %v1870
      %v1993 = vpop.f32.mrb[0].mxu0
      %v1994 = vadd.f32 0.0, %v1993
      %v1995 = vpop.f32.mrb[0].mxu0
      %1996 = vmatprep.mubr.f32.mxu0 0.0
      %1997 = vmatmul.mubr.f32.gmra.mrb[0].mxu0 %v1871
      %v1998 = vpop.f32.mrb[0].mxu0
      %v1999 = vadd.f32 0.0, %v1998
      %v2000 = vpop.f32.mrb[0].mxu0
      %2001 = vmatprep.mubr.f32.mxu0 0.0
      %2002 = vmatmul.mubr.f32.gmra.mrb[0].mxu0 %v1872
      %v2003 = vpop.f32.mrb[0].mxu0
      %v2004 = vadd.f32 0.0, %v2003
      %v2005 = vpop.f32.mrb[0].mxu0
      %2006 = vmatprep.mubr.f32.mxu0 0.0
      %2007 = vmatmul.mubr.f32.gmra.mrb[0].mxu0 %v1873
      %v2008 = vpop.f32.mrb[0].mxu0
      %v2009 = vadd.f32 0.0, %v2008
      %v2010 = vpop.f32.mrb[0].mxu0
      %2011 = vmatprep.mubr.f32.mxu0 0.0
      %2012 = vmatmul.mubr.f32.gmra.mrb[0].mxu0 %v1874
      %v2013 = vpop.f32.mrb[0].mxu0
      %v2014 = vadd.f32 0.0, %v2013
      %v2015 = vpop.f32.mrb[0].mxu0
      %2016 = vmatprep.mubr.f32.mxu0 0.0
      %2017 = vmatmul.mubr.f32.gmra.mrb[0].mxu0 %v1875
      %v2018 = vpop.f32.mrb[0].mxu0
      %v2019 = vadd.f32 0.0, %v2018
      %v2020 = vpop.f32.mrb[0].mxu0
      %2021 = vmatprep.mubr.f32.mxu0 0.0
      %2022 = vmatmul.mubr.f32.gmra.mrb[0].mxu0 %v1876
      %v2023 = vpop.f32.mrb[0].mxu0
      %v2024 = vadd.f32 0.0, %v2023
      %v2025 = vpop.f32.mrb[0].mxu0
      %2026 = vmatprep.mubr.f32.mxu0 0.0
      %2027 = vmatmul.mubr.f32.gmra.mrb[0].mxu0 %v1877
      %v2028 = vpop.f32.mrb[0].mxu0
      %v2029 = vadd.f32 0.0, %v2028
      %v2030 = vpop.f32.mrb[0].mxu0
      %2031 = vmatprep.mubr.f32.mxu0 0.0
      %2032 = vmatmul.mubr.f32.gmra.mrb[0].mxu0 %v1878
      %v2033 = vpop.f32.mrb[0].mxu0
      %v2034 = vadd.f32 0.0, %v2033
      %v2035 = vpop.f32.mrb[0].mxu0
      %2036 = vmatprep.mubr.f32.mxu0 0.0
      %2037 = vmatmul.mubr.f32.gmra.mrb[0].mxu0 %v1879
      %v2038 = vpop.f32.mrb[0].mxu0
      %v2039 = vadd.f32 0.0, %v2038
      %v2040 = vpop.f32.mrb[0].mxu0
      %2041 = vmatprep.mubr.f32.mxu0 0.0
      %2042 = vmatmul.mubr.f32.gmra.mrb[0].mxu0 %v1880
      %v2043 = vpop.f32.mrb[0].mxu0
      %v2044 = vadd.f32 0.0, %v2043
      %v2045 = vpop.f32.mrb[0].mxu0
      %2046 = vmatprep.mubr.f32.mxu0 0.0
      %2047 = vmatmul.mubr.f32.gmra.mrb[0].mxu0 %v1881
      %v2048 = vpop.f32.mrb[0].mxu0
      %v2049 = vadd.f32 0.0, %v2048
      %v2050 = vpop.f32.mrb[0].mxu0
      %2051 = vmatprep.mubr.f32.mxu0 0.0
      %2052 = vmatmul.mubr.f32.gmra.mrb[0].mxu0 %v1882
      %v2053 = vpop.f32.mrb[0].mxu0
      %v2054 = vadd.f32 0.0, %v2053
      %v2055 = vpop.f32.mrb[0].mxu0
      %2056 = vmatprep.mubr.f32.mxu0 0.0
      %2057 = vmatmul.mubr.f32.gmra.mrb[0].mxu0 %v1883
      %v2058 = vpop.f32.mrb[0].mxu0
      %v2059 = vadd.f32 0.0, %v2058
      %v2060 = vpop.f32.mrb[0].mxu0
      %2061 = vmatprep.mubr.f32.mxu0 0.0
      %2062 = vmatmul.mubr.f32.gmra.mrb[0].mxu0 %v1884
      %v2063 = vpop.f32.mrb[0].mxu0
      %v2064 = vadd.f32 0.0, %v2063
      %v2065 = vpop.f32.mrb[0].mxu0
      %2066 = vmatprep.mubr.f32.mxu0 0.0
      %2067 = vmatmul.mubr.f32.gmra.mrb[0].mxu0 %v1885
      %v2068 = vpop.f32.mrb[0].mxu0
      %v2069 = vadd.f32 0.0, %v2068
      %v2070 = vpop.f32.mrb[0].mxu0
      %2071 = vmatprep.mubr.f32.mxu0 0.0
      %2072 = vmatmul.mubr.f32.gmra.mrb[0].mxu0 %v1886
      %v2073 = vpop.f32.mrb[0].mxu0
      %v2074 = vadd.f32 0.0, %v2073
      %v2075 = vpop.f32.mrb[0].mxu0
      %2076 = vmatprep.mubr.f32.mxu0 0.0
      %2077 = vmatmul.mubr.f32.gmra.mrb[0].mxu0 %v1887
      %v2078 = vpop.f32.mrb[0].mxu0
      %v2079 = vadd.f32 0.0, %v2078
      %v2080 = vpop.f32.mrb[0].mxu0
      %2081 = vmatprep.mubr.f32.mxu0 0.0
      %2082 = vmatmul.mubr.f32.gmra.mrb[0].mxu0 %v1888
      %v2083 = vpop.f32.mrb[0].mxu0
      %v2084 = vadd.f32 0.0, %v2083
      %v2085 = vpop.f32.mrb[0].mxu0
      %2086 = vmatprep.mubr.f32.mxu0 0.0
      %2087 = vmatmul.mubr.f32.gmra.mrb[0].mxu0 %v1889
      %v2088 = vpop.f32.mrb[0].mxu0
      %v2089 = vadd.f32 0.0, %v2088
      %v2090 = vpop.f32.mrb[0].mxu0
      %2091 = vmatprep.mubr.f32.mxu0 0.0
      %2092 = vmatmul.mubr.f32.gmra.mrb[0].mxu0 %v1890
      %v2093 = vpop.f32.mrb[0].mxu0
      %v2094 = vadd.f32 0.0, %v2093
      %v2095 = vpop.f32.mrb[0].mxu0
      %2096 = vmatprep.mubr.f32.mxu0 0.0
      %2097 = vmatmul.mubr.f32.gmra.mrb[0].mxu0 %v1891
      %v2098 = vpop.f32.mrb[0].mxu0
      %v2099 = vadd.f32 0.0, %v2098
      %v2100 = vpop.f32.mrb[0].mxu0
      %2101 = vmatprep.mubr.f32.mxu0 0.0
      %2102 = vmatmul.mubr.f32.gmra.mrb[0].mxu0 %v1892
      %v2103 = vpop.f32.mrb[0].mxu0
      %v2104 = vadd.f32 0.0, %v2103
      %v2105 = vpop.f32.mrb[0].mxu0
      %2106 = vmatprep.mubr.f32.mxu0 0.0
      %2107 = vmatmul.mubr.f32.gmra.mrb[0].mxu0 %v1893
      %v2108 = vpop.f32.mrb[0].mxu0
      %v2109 = vadd.f32 0.0, %v2108
      %v2110 = vpop.f32.mrb[0].mxu0
      %2111 = vmatprep.mubr.f32.mxu0 0.0
      %2112 = vmatmul.mubr.f32.gmra.mrb[0].mxu0 %v1894
      %v2113 = vpop.f32.mrb[0].mxu0
      %v2114 = vadd.f32 0.0, %v2113
      %v2115 = vpop.f32.mrb[0].mxu0
      %2116 = vmatprep.mubr.f32.mxu0 0.0
      %2117 = vmatmul.mubr.f32.gmra.mrb[0].mxu0 %v1895
      %v2118 = vpop.f32.mrb[0].mxu0
      %v2119 = vadd.f32 0.0, %v2118
      %v2120 = vpop.f32.mrb[0].mxu0
      %2121 = vmatprep.mubr.f32.mxu0 0.0
      %2122 = vmatmul.mubr.f32.gmra.mrb[0].mxu0 %v1896
      %v2123 = vpop.f32.mrb[0].mxu0
      %v2124 = vadd.f32 0.0, %v2123
      %v2125 = vpop.f32.mrb[0].mxu0
      %2126 = vmatprep.mubr.f32.mxu0 0.0
      %2127 = vmatmul.mubr.f32.gmra.mrb[0].mxu0 %v1897
      %v2128 = vpop.f32.mrb[0].mxu0
      %v2129 = vadd.f32 0.0, %v2128
      %v2130 = vpop.f32.mrb[0].mxu0
      %2131 = vmatprep.mubr.f32.mxu0 0.0
      %2132 = vmatmul.mubr.f32.gmra.mrb[0].mxu0 %v1898
      %v2133 = vpop.f32.mrb[0].mxu0
      %v2134 = vadd.f32 0.0, %v2133
      %v2135 = vpop.f32.mrb[0].mxu0
      %2136 = vmatprep.mubr.f32.mxu0 0.0
      %2137 = vmatmul.mubr.f32.gmra.mrb[0].mxu0 %v1899
      %v2138 = vpop.f32.mrb[0].mxu0
      %v2139 = vadd.f32 0.0, %v2138
      %v2140 = vpop.f32.mrb[0].mxu0
      %2141 = vdwg.mxu0
      %v2142 = vld [vmem:[#allocation3] sm:$0xff]
      %v2143 = vld [vmem:[#allocation3 + $0x8] sm:$0xff]
      %v2144 = vld [vmem:[#allocation3 + $0x10] sm:$0xff]
      %v2145 = vld [vmem:[#allocation3 + $0x18] sm:$0xff]
      %v2146 = vld [vmem:[#allocation3 + $0x20] sm:$0xff]
      %v2147 = vld [vmem:[#allocation3 + $0x28] sm:$0xff]
      %v2148 = vld [vmem:[#allocation3 + $0x30] sm:$0xff]
      %v2149 = vld [vmem:[#allocation3 + $0x38] sm:$0xff]
      %v2150 = vld [vmem:[#allocation3 + $0x40] sm:$0xff]
      %v2151 = vld [vmem:[#allocation3 + $0x48] sm:$0xff]
      %v2152 = vld [vmem:[#allocation3 + $0x50] sm:$0xff]
      %v2153 = vld [vmem:[#allocation3 + $0x58] sm:$0xff]
      %v2154 = vld [vmem:[#allocation3 + $0x60] sm:$0xff]
      %v2155 = vld [vmem:[#allocation3 + $0x68] sm:$0xff]
      %v2156 = vld [vmem:[#allocation3 + $0x70] sm:$0xff]
      %v2157 = vld [vmem:[#allocation3 + $0x78] sm:$0xff]
      %v2158 = vld [vmem:[#allocation3 + $0x80] sm:$0xff]
      %v2159 = vld [vmem:[#allocation3 + $0x88] sm:$0xff]
      %v2160 = vld [vmem:[#allocation3 + $0x90] sm:$0xff]
      %v2161 = vld [vmem:[#allocation3 + $0x98] sm:$0xff]
      %v2162 = vld [vmem:[#allocation3 + $0xa0] sm:$0xff]
      %v2163 = vld [vmem:[#allocation3 + $0xa8] sm:$0xff]
      %v2164 = vld [vmem:[#allocation3 + $0xb0] sm:$0xff]
      %v2165 = vld [vmem:[#allocation3 + $0xb8] sm:$0xff]
      %v2166 = vld [vmem:[#allocation3 + $0xc0] sm:$0xff]
      %v2167 = vld [vmem:[#allocation3 + $0xc8] sm:$0xff]
      %v2168 = vld [vmem:[#allocation3 + $0xd0] sm:$0xff]
      %v2169 = vld [vmem:[#allocation3 + $0xd8] sm:$0xff]
      %v2170 = vld [vmem:[#allocation3 + $0xe0] sm:$0xff]
      %v2171 = vld [vmem:[#allocation3 + $0xe8] sm:$0xff]
      %v2172 = vld [vmem:[#allocation3 + $0xf0] sm:$0xff]
      %v2173 = vld [vmem:[#allocation3 + $0xf8] sm:$0xff]
      %v2174 = vadd.f32 %v2142, %v1984
      %v2175 = vadd.f32 %v2143, %v1989
      %v2176 = vadd.f32 %v2144, %v1994
      %v2177 = vadd.f32 %v2145, %v1999
      %v2178 = vadd.f32 %v2146, %v2004
      %v2179 = vadd.f32 %v2147, %v2009
      %v2180 = vadd.f32 %v2148, %v2014
      %v2181 = vadd.f32 %v2149, %v2019
      %v2182 = vadd.f32 %v2150, %v2024
      %v2183 = vadd.f32 %v2151, %v2029
      %v2184 = vadd.f32 %v2152, %v2034
      %v2185 = vadd.f32 %v2153, %v2039
      %v2186 = vadd.f32 %v2154, %v2044
      %v2187 = vadd.f32 %v2155, %v2049
      %v2188 = vadd.f32 %v2156, %v2054
      %v2189 = vadd.f32 %v2157, %v2059
      %v2190 = vadd.f32 %v2158, %v2064
      %v2191 = vadd.f32 %v2159, %v2069
      %v2192 = vadd.f32 %v2160, %v2074
      %v2193 = vadd.f32 %v2161, %v2079
      %v2194 = vadd.f32 %v2162, %v2084
      %v2195 = vadd.f32 %v2163, %v2089
      %v2196 = vadd.f32 %v2164, %v2094
      %v2197 = vadd.f32 %v2165, %v2099
      %v2198 = vadd.f32 %v2166, %v2104
      %v2199 = vadd.f32 %v2167, %v2109
      %v2200 = vadd.f32 %v2168, %v2114
      %v2201 = vadd.f32 %v2169, %v2119
      %v2202 = vadd.f32 %v2170, %v2124
      %v2203 = vadd.f32 %v2171, %v2129
      %v2204 = vadd.f32 %v2172, %v2134
      %v2205 = vadd.f32 %v2173, %v2139
      %2206 = vst [vmem:[#allocation3] sm:$0xff] %v2174
      %2207 = vst [vmem:[#allocation3 + $0x8] sm:$0xff] %v2175
      %2208 = vst [vmem:[#allocation3 + $0x10] sm:$0xff] %v2176
      %2209 = vst [vmem:[#allocation3 + $0x18] sm:$0xff] %v2177
      %2210 = vst [vmem:[#allocation3 + $0x20] sm:$0xff] %v2178
      %2211 = vst [vmem:[#allocation3 + $0x28] sm:$0xff] %v2179
      %2212 = vst [vmem:[#allocation3 + $0x30] sm:$0xff] %v2180
      %2213 = vst [vmem:[#allocation3 + $0x38] sm:$0xff] %v2181
      %2214 = vst [vmem:[#allocation3 + $0x40] sm:$0xff] %v2182
      %2215 = vst [vmem:[#allocation3 + $0x48] sm:$0xff] %v2183
      %2216 = vst [vmem:[#allocation3 + $0x50] sm:$0xff] %v2184
      %2217 = vst [vmem:[#allocation3 + $0x58] sm:$0xff] %v2185
      %2218 = vst [vmem:[#allocation3 + $0x60] sm:$0xff] %v2186
      %2219 = vst [vmem:[#allocation3 + $0x68] sm:$0xff] %v2187
      %2220 = vst [vmem:[#allocation3 + $0x70] sm:$0xff] %v2188
      %2221 = vst [vmem:[#allocation3 + $0x78] sm:$0xff] %v2189
      %2222 = vst [vmem:[#allocation3 + $0x80] sm:$0xff] %v2190
      %2223 = vst [vmem:[#allocation3 + $0x88] sm:$0xff] %v2191
      %2224 = vst [vmem:[#allocation3 + $0x90] sm:$0xff] %v2192
      %2225 = vst [vmem:[#allocation3 + $0x98] sm:$0xff] %v2193
      %2226 = vst [vmem:[#allocation3 + $0xa0] sm:$0xff] %v2194
      %2227 = vst [vmem:[#allocation3 + $0xa8] sm:$0xff] %v2195
      %2228 = vst [vmem:[#allocation3 + $0xb0] sm:$0xff] %v2196
      %2229 = vst [vmem:[#allocation3 + $0xb8] sm:$0xff] %v2197
      %2230 = vst [vmem:[#allocation3 + $0xc0] sm:$0xff] %v2198
      %2231 = vst [vmem:[#allocation3 + $0xc8] sm:$0xff] %v2199
      %2232 = vst [vmem:[#allocation3 + $0xd0] sm:$0xff] %v2200
      %2233 = vst [vmem:[#allocation3 + $0xd8] sm:$0xff] %v2201
      %2234 = vst [vmem:[#allocation3 + $0xe0] sm:$0xff] %v2202
      %2235 = vst [vmem:[#allocation3 + $0xe8] sm:$0xff] %v2203
      %2236 = vst [vmem:[#allocation3 + $0xf0] sm:$0xff] %v2204
      %2237 = vst [vmem:[#allocation3 + $0xf8] sm:$0xff] %v2205
      %v2238 = vld [vmem:[%s388 + $0x2] sm:$0xff]
      %v2239 = vld [vmem:[%s388 + $0xa] sm:$0xff]
      %v2240 = vld [vmem:[%s388 + $0x1a] sm:$0xff]
      %v2241 = vld [vmem:[%s388 + $0x22] sm:$0xff]
      %v2242 = vld [vmem:[%s388 + $0x32] sm:$0xff]
      %v2243 = vld [vmem:[%s388 + $0x3a] sm:$0xff]
      %v2244 = vld [vmem:[%s388 + $0x4a] sm:$0xff]
      %v2245 = vld [vmem:[%s388 + $0x52] sm:$0xff]
      %v2246 = vld [vmem:[%s388 + $0x62] sm:$0xff]
      %v2247 = vld [vmem:[%s388 + $0x6a] sm:$0xff]
      %v2248 = vld [vmem:[%s388 + $0x7a] sm:$0xff]
      %v2249 = vld [vmem:[%s388 + $0x82] sm:$0xff]
      %v2250 = vld [vmem:[%s388 + $0x92] sm:$0xff]
      %v2251 = vld [vmem:[%s388 + $0x9a] sm:$0xff]
      %v2252 = vld [vmem:[%s388 + $0xaa] sm:$0xff]
      %v2253 = vld [vmem:[%s388 + $0xb2] sm:$0xff]
      %v2254 = vld [vmem:[%s388 + $0xc2] sm:$0xff]
      %v2255 = vld [vmem:[%s388 + $0xca] sm:$0xff]
      %v2256 = vld [vmem:[%s388 + $0xda] sm:$0xff]
      %v2257 = vld [vmem:[%s388 + $0xe2] sm:$0xff]
      %v2258 = vld [vmem:[%s388 + $0xf2] sm:$0xff]
      %v2259 = vld [vmem:[%s388 + $0xfa] sm:$0xff]
      %v2260 = vld [vmem:[%s388 + $0x10a] sm:$0xff]
      %v2261 = vld [vmem:[%s388 + $0x112] sm:$0xff]
      %v2262 = vld [vmem:[%s388 + $0x122] sm:$0xff]
      %v2263 = vld [vmem:[%s388 + $0x12a] sm:$0xff]
      %v2264 = vld [vmem:[%s388 + $0x13a] sm:$0xff]
      %v2265 = vld [vmem:[%s388 + $0x142] sm:$0xff]
      %v2266 = vld [vmem:[%s388 + $0x152] sm:$0xff]
      %v2267 = vld [vmem:[%s388 + $0x15a] sm:$0xff]
      %v2268 = vld [vmem:[%s388 + $0x16a] sm:$0xff]
      %v2269 = vld [vmem:[%s388 + $0x172] sm:$0xff]
      %s2270 = scalar_lea.vmem %s1, 640
      %v2271 = vld [vmem:[%s2270] sm:$0xff]
      %v2272 = vld [vmem:[%s2270 + $0x8] sm:$0xff]
      %v2273 = vld [vmem:[%s2270 + $0x10] sm:$0xff]
      %v2274 = vld [vmem:[%s2270 + $0x18] sm:$0xff]
      %v2275 = vld [vmem:[%s2270 + $0x20] sm:$0xff]
      %v2276 = vld [vmem:[%s2270 + $0x28] sm:$0xff]
      %v2277 = vld [vmem:[%s2270 + $0x30] sm:$0xff]
      %v2278 = vld [vmem:[%s2270 + $0x38] sm:$0xff]
      %v2279 = vld [vmem:[%s2270 + $0x40] sm:$0xff]
      %v2280 = vld [vmem:[%s2270 + $0x48] sm:$0xff]
      %v2281 = vld [vmem:[%s2270 + $0x50] sm:$0xff]
      %v2282 = vld [vmem:[%s2270 + $0x58] sm:$0xff]
      %v2283 = vld [vmem:[%s2270 + $0x60] sm:$0xff]
      %v2284 = vld [vmem:[%s2270 + $0x68] sm:$0xff]
      %v2285 = vld [vmem:[%s2270 + $0x70] sm:$0xff]
      %v2286 = vld [vmem:[%s2270 + $0x78] sm:$0xff]
      %2287 = vmatprep.subr.mxu0 0.0
      %2288 = vmatpush1.msra.mxu0 %v2271
      %2289 = vmatprep.subr.mxu0 0.0
      %2290 = vmatpush1.msra.mxu0 %v2272
      %2291 = vmatprep.subr.mxu0 0.0
      %2292 = vmatpush1.msra.mxu0 %v2273
      %2293 = vmatprep.subr.mxu0 0.0
      %2294 = vmatpush1.msra.mxu0 %v2274
      %2295 = vmatprep.subr.mxu0 0.0
      %2296 = vmatpush1.msra.mxu0 %v2275
      %2297 = vmatprep.subr.mxu0 0.0
      %2298 = vmatpush1.msra.mxu0 %v2276
      %2299 = vmatprep.subr.mxu0 0.0
      %2300 = vmatpush1.msra.mxu0 %v2277
      %2301 = vmatprep.subr.mxu0 0.0
      %2302 = vmatpush1.msra.mxu0 %v2278
      %2303 = vmatprep.subr.mxu0 0.0
      %2304 = vmatpush1.msra.mxu0 %v2279
      %2305 = vmatprep.subr.mxu0 0.0
      %2306 = vmatpush1.msra.mxu0 %v2280
      %2307 = vmatprep.subr.mxu0 0.0
      %2308 = vmatpush1.msra.mxu0 %v2281
      %2309 = vmatprep.subr.mxu0 0.0
      %2310 = vmatpush1.msra.mxu0 %v2282
      %2311 = vmatprep.subr.mxu0 0.0
      %2312 = vmatpush1.msra.mxu0 %v2283
      %2313 = vmatprep.subr.mxu0 0.0
      %2314 = vmatpush1.msra.mxu0 %v2284
      %2315 = vmatprep.subr.mxu0 0.0
      %2316 = vmatpush1.msra.mxu0 %v2285
      %2317 = vmatprep.subr.mxu0 0.0
      %2318 = vmatpush1.msra.mxu0 %v2286
      %2319 = vmatprep.subr.mxu0 0.0
      %2320 = vmatpush1.msra.mxu0 0.0
      %2321 = vmatprep.subr.mxu0 0.0
      %2322 = vmatpush1.msra.mxu0 0.0
      %2323 = vmatprep.subr.mxu0 0.0
      %2324 = vmatpush1.msra.mxu0 0.0
      %2325 = vmatprep.subr.mxu0 0.0
      %2326 = vmatpush1.msra.mxu0 0.0
      %2327 = vmatprep.subr.mxu0 0.0
      %2328 = vmatpush1.msra.mxu0 0.0
      %2329 = vmatprep.subr.mxu0 0.0
      %2330 = vmatpush1.msra.mxu0 0.0
      %2331 = vmatprep.subr.mxu0 0.0
      %2332 = vmatpush1.msra.mxu0 0.0
      %2333 = vmatprep.subr.mxu0 0.0
      %2334 = vmatpush1.msra.mxu0 0.0
      %2335 = vmatprep.subr.mxu0 0.0
      %2336 = vmatpush1.msra.mxu0 0.0
      %2337 = vmatprep.subr.mxu0 0.0
      %2338 = vmatpush1.msra.mxu0 0.0
      %2339 = vmatprep.subr.mxu0 0.0
      %2340 = vmatpush1.msra.mxu0 0.0
      %2341 = vmatprep.subr.mxu0 0.0
      %2342 = vmatpush1.msra.mxu0 0.0
      %2343 = vmatprep.subr.mxu0 0.0
      %2344 = vmatpush1.msra.mxu0 0.0
      %2345 = vmatprep.subr.mxu0 0.0
      %2346 = vmatpush1.msra.mxu0 0.0
      %2347 = vmatprep.subr.mxu0 0.0
      %2348 = vmatpush1.msra.mxu0 0.0
      %2349 = vmatprep.subr.mxu0 0.0
      %2350 = vmatpush1.msra.mxu0 0.0
      %2351 = vmatprep.mubr.f32.mxu0 0.0
      %2352 = vmatmul.mubr.f32.gmra.mrb[0].mxu0 %v2238
      %v2353 = vpop.f32.mrb[0].mxu0
      %v2354 = vadd.f32 0.0, %v2353
      %v2355 = vpop.f32.mrb[0].mxu0
      %2356 = vmatprep.mubr.f32.mxu0 0.0
      %2357 = vmatmul.mubr.f32.gmra.mrb[0].mxu0 %v2239
      %v2358 = vpop.f32.mrb[0].mxu0
      %v2359 = vadd.f32 0.0, %v2358
      %v2360 = vpop.f32.mrb[0].mxu0
      %2361 = vmatprep.mubr.f32.mxu0 0.0
      %2362 = vmatmul.mubr.f32.gmra.mrb[0].mxu0 %v2240
      %v2363 = vpop.f32.mrb[0].mxu0
      %v2364 = vadd.f32 0.0, %v2363
      %v2365 = vpop.f32.mrb[0].mxu0
      %2366 = vmatprep.mubr.f32.mxu0 0.0
      %2367 = vmatmul.mubr.f32.gmra.mrb[0].mxu0 %v2241
      %v2368 = vpop.f32.mrb[0].mxu0
      %v2369 = vadd.f32 0.0, %v2368
      %v2370 = vpop.f32.mrb[0].mxu0
      %2371 = vmatprep.mubr.f32.mxu0 0.0
      %2372 = vmatmul.mubr.f32.gmra.mrb[0].mxu0 %v2242
      %v2373 = vpop.f32.mrb[0].mxu0
      %v2374 = vadd.f32 0.0, %v2373
      %v2375 = vpop.f32.mrb[0].mxu0
      %2376 = vmatprep.mubr.f32.mxu0 0.0
      %2377 = vmatmul.mubr.f32.gmra.mrb[0].mxu0 %v2243
      %v2378 = vpop.f32.mrb[0].mxu0
      %v2379 = vadd.f32 0.0, %v2378
      %v2380 = vpop.f32.mrb[0].mxu0
      %2381 = vmatprep.mubr.f32.mxu0 0.0
      %2382 = vmatmul.mubr.f32.gmra.mrb[0].mxu0 %v2244
      %v2383 = vpop.f32.mrb[0].mxu0
      %v2384 = vadd.f32 0.0, %v2383
      %v2385 = vpop.f32.mrb[0].mxu0
      %2386 = vmatprep.mubr.f32.mxu0 0.0
      %2387 = vmatmul.mubr.f32.gmra.mrb[0].mxu0 %v2245
      %v2388 = vpop.f32.mrb[0].mxu0
      %v2389 = vadd.f32 0.0, %v2388
      %v2390 = vpop.f32.mrb[0].mxu0
      %2391 = vmatprep.mubr.f32.mxu0 0.0
      %2392 = vmatmul.mubr.f32.gmra.mrb[0].mxu0 %v2246
      %v2393 = vpop.f32.mrb[0].mxu0
      %v2394 = vadd.f32 0.0, %v2393
      %v2395 = vpop.f32.mrb[0].mxu0
      %2396 = vmatprep.mubr.f32.mxu0 0.0
      %2397 = vmatmul.mubr.f32.gmra.mrb[0].mxu0 %v2247
      %v2398 = vpop.f32.mrb[0].mxu0
      %v2399 = vadd.f32 0.0, %v2398
      %v2400 = vpop.f32.mrb[0].mxu0
      %2401 = vmatprep.mubr.f32.mxu0 0.0
      %2402 = vmatmul.mubr.f32.gmra.mrb[0].mxu0 %v2248
      %v2403 = vpop.f32.mrb[0].mxu0
      %v2404 = vadd.f32 0.0, %v2403
      %v2405 = vpop.f32.mrb[0].mxu0
      %2406 = vmatprep.mubr.f32.mxu0 0.0
      %2407 = vmatmul.mubr.f32.gmra.mrb[0].mxu0 %v2249
      %v2408 = vpop.f32.mrb[0].mxu0
      %v2409 = vadd.f32 0.0, %v2408
      %v2410 = vpop.f32.mrb[0].mxu0
      %2411 = vmatprep.mubr.f32.mxu0 0.0
      %2412 = vmatmul.mubr.f32.gmra.mrb[0].mxu0 %v2250
      %v2413 = vpop.f32.mrb[0].mxu0
      %v2414 = vadd.f32 0.0, %v2413
      %v2415 = vpop.f32.mrb[0].mxu0
      %2416 = vmatprep.mubr.f32.mxu0 0.0
      %2417 = vmatmul.mubr.f32.gmra.mrb[0].mxu0 %v2251
      %v2418 = vpop.f32.mrb[0].mxu0
      %v2419 = vadd.f32 0.0, %v2418
      %v2420 = vpop.f32.mrb[0].mxu0
      %2421 = vmatprep.mubr.f32.mxu0 0.0
      %2422 = vmatmul.mubr.f32.gmra.mrb[0].mxu0 %v2252
      %v2423 = vpop.f32.mrb[0].mxu0
      %v2424 = vadd.f32 0.0, %v2423
      %v2425 = vpop.f32.mrb[0].mxu0
      %2426 = vmatprep.mubr.f32.mxu0 0.0
      %2427 = vmatmul.mubr.f32.gmra.mrb[0].mxu0 %v2253
      %v2428 = vpop.f32.mrb[0].mxu0
      %v2429 = vadd.f32 0.0, %v2428
      %v2430 = vpop.f32.mrb[0].mxu0
      %2431 = vmatprep.mubr.f32.mxu0 0.0
      %2432 = vmatmul.mubr.f32.gmra.mrb[0].mxu0 %v2254
      %v2433 = vpop.f32.mrb[0].mxu0
      %v2434 = vadd.f32 0.0, %v2433
      %v2435 = vpop.f32.mrb[0].mxu0
      %2436 = vmatprep.mubr.f32.mxu0 0.0
      %2437 = vmatmul.mubr.f32.gmra.mrb[0].mxu0 %v2255
      %v2438 = vpop.f32.mrb[0].mxu0
      %v2439 = vadd.f32 0.0, %v2438
      %v2440 = vpop.f32.mrb[0].mxu0
      %2441 = vmatprep.mubr.f32.mxu0 0.0
      %2442 = vmatmul.mubr.f32.gmra.mrb[0].mxu0 %v2256
      %v2443 = vpop.f32.mrb[0].mxu0
      %v2444 = vadd.f32 0.0, %v2443
      %v2445 = vpop.f32.mrb[0].mxu0
      %2446 = vmatprep.mubr.f32.mxu0 0.0
      %2447 = vmatmul.mubr.f32.gmra.mrb[0].mxu0 %v2257
      %v2448 = vpop.f32.mrb[0].mxu0
      %v2449 = vadd.f32 0.0, %v2448
      %v2450 = vpop.f32.mrb[0].mxu0
      %2451 = vmatprep.mubr.f32.mxu0 0.0
      %2452 = vmatmul.mubr.f32.gmra.mrb[0].mxu0 %v2258
      %v2453 = vpop.f32.mrb[0].mxu0
      %v2454 = vadd.f32 0.0, %v2453
      %v2455 = vpop.f32.mrb[0].mxu0
      %2456 = vmatprep.mubr.f32.mxu0 0.0
      %2457 = vmatmul.mubr.f32.gmra.mrb[0].mxu0 %v2259
      %v2458 = vpop.f32.mrb[0].mxu0
      %v2459 = vadd.f32 0.0, %v2458
      %v2460 = vpop.f32.mrb[0].mxu0
      %2461 = vmatprep.mubr.f32.mxu0 0.0
      %2462 = vmatmul.mubr.f32.gmra.mrb[0].mxu0 %v2260
      %v2463 = vpop.f32.mrb[0].mxu0
      %v2464 = vadd.f32 0.0, %v2463
      %v2465 = vpop.f32.mrb[0].mxu0
      %2466 = vmatprep.mubr.f32.mxu0 0.0
      %2467 = vmatmul.mubr.f32.gmra.mrb[0].mxu0 %v2261
      %v2468 = vpop.f32.mrb[0].mxu0
      %v2469 = vadd.f32 0.0, %v2468
      %v2470 = vpop.f32.mrb[0].mxu0
      %2471 = vmatprep.mubr.f32.mxu0 0.0
      %2472 = vmatmul.mubr.f32.gmra.mrb[0].mxu0 %v2262
      %v2473 = vpop.f32.mrb[0].mxu0
      %v2474 = vadd.f32 0.0, %v2473
      %v2475 = vpop.f32.mrb[0].mxu0
      %2476 = vmatprep.mubr.f32.mxu0 0.0
      %2477 = vmatmul.mubr.f32.gmra.mrb[0].mxu0 %v2263
      %v2478 = vpop.f32.mrb[0].mxu0
      %v2479 = vadd.f32 0.0, %v2478
      %v2480 = vpop.f32.mrb[0].mxu0
      %2481 = vmatprep.mubr.f32.mxu0 0.0
      %2482 = vmatmul.mubr.f32.gmra.mrb[0].mxu0 %v2264
      %v2483 = vpop.f32.mrb[0].mxu0
      %v2484 = vadd.f32 0.0, %v2483
      %v2485 = vpop.f32.mrb[0].mxu0
      %2486 = vmatprep.mubr.f32.mxu0 0.0
      %2487 = vmatmul.mubr.f32.gmra.mrb[0].mxu0 %v2265
      %v2488 = vpop.f32.mrb[0].mxu0
      %v2489 = vadd.f32 0.0, %v2488
      %v2490 = vpop.f32.mrb[0].mxu0
      %2491 = vmatprep.mubr.f32.mxu0 0.0
      %2492 = vmatmul.mubr.f32.gmra.mrb[0].mxu0 %v2266
      %v2493 = vpop.f32.mrb[0].mxu0
      %v2494 = vadd.f32 0.0, %v2493
      %v2495 = vpop.f32.mrb[0].mxu0
      %2496 = vmatprep.mubr.f32.mxu0 0.0
      %2497 = vmatmul.mubr.f32.gmra.mrb[0].mxu0 %v2267
      %v2498 = vpop.f32.mrb[0].mxu0
      %v2499 = vadd.f32 0.0, %v2498
      %v2500 = vpop.f32.mrb[0].mxu0
      %2501 = vmatprep.mubr.f32.mxu0 0.0
      %2502 = vmatmul.mubr.f32.gmra.mrb[0].mxu0 %v2268
      %v2503 = vpop.f32.mrb[0].mxu0
      %v2504 = vadd.f32 0.0, %v2503
      %v2505 = vpop.f32.mrb[0].mxu0
      %2506 = vmatprep.mubr.f32.mxu0 0.0
      %2507 = vmatmul.mubr.f32.gmra.mrb[0].mxu0 %v2269
      %v2508 = vpop.f32.mrb[0].mxu0
      %v2509 = vadd.f32 0.0, %v2508
      %v2510 = vpop.f32.mrb[0].mxu0
      %2511 = vdwg.mxu0
      %v2512 = vld [vmem:[#allocation3] sm:$0xff]
      %v2513 = vld [vmem:[#allocation3 + $0x8] sm:$0xff]
      %v2514 = vld [vmem:[#allocation3 + $0x10] sm:$0xff]
      %v2515 = vld [vmem:[#allocation3 + $0x18] sm:$0xff]
      %v2516 = vld [vmem:[#allocation3 + $0x20] sm:$0xff]
      %v2517 = vld [vmem:[#allocation3 + $0x28] sm:$0xff]
      %v2518 = vld [vmem:[#allocation3 + $0x30] sm:$0xff]
      %v2519 = vld [vmem:[#allocation3 + $0x38] sm:$0xff]
      %v2520 = vld [vmem:[#allocation3 + $0x40] sm:$0xff]
      %v2521 = vld [vmem:[#allocation3 + $0x48] sm:$0xff]
      %v2522 = vld [vmem:[#allocation3 + $0x50] sm:$0xff]
      %v2523 = vld [vmem:[#allocation3 + $0x58] sm:$0xff]
      %v2524 = vld [vmem:[#allocation3 + $0x60] sm:$0xff]
      %v2525 = vld [vmem:[#allocation3 + $0x68] sm:$0xff]
      %v2526 = vld [vmem:[#allocation3 + $0x70] sm:$0xff]
      %v2527 = vld [vmem:[#allocation3 + $0x78] sm:$0xff]
      %v2528 = vld [vmem:[#allocation3 + $0x80] sm:$0xff]
      %v2529 = vld [vmem:[#allocation3 + $0x88] sm:$0xff]
      %v2530 = vld [vmem:[#allocation3 + $0x90] sm:$0xff]
      %v2531 = vld [vmem:[#allocation3 + $0x98] sm:$0xff]
      %v2532 = vld [vmem:[#allocation3 + $0xa0] sm:$0xff]
      %v2533 = vld [vmem:[#allocation3 + $0xa8] sm:$0xff]
      %v2534 = vld [vmem:[#allocation3 + $0xb0] sm:$0xff]
      %v2535 = vld [vmem:[#allocation3 + $0xb8] sm:$0xff]
      %v2536 = vld [vmem:[#allocation3 + $0xc0] sm:$0xff]
      %v2537 = vld [vmem:[#allocation3 + $0xc8] sm:$0xff]
      %v2538 = vld [vmem:[#allocation3 + $0xd0] sm:$0xff]
      %v2539 = vld [vmem:[#allocation3 + $0xd8] sm:$0xff]
      %v2540 = vld [vmem:[#allocation3 + $0xe0] sm:$0xff]
      %v2541 = vld [vmem:[#allocation3 + $0xe8] sm:$0xff]
      %v2542 = vld [vmem:[#allocation3 + $0xf0] sm:$0xff]
      %v2543 = vld [vmem:[#allocation3 + $0xf8] sm:$0xff]
      %v2544 = vadd.f32 %v2512, %v2354
      %v2545 = vadd.f32 %v2513, %v2359
      %v2546 = vadd.f32 %v2514, %v2364
      %v2547 = vadd.f32 %v2515, %v2369
      %v2548 = vadd.f32 %v2516, %v2374
      %v2549 = vadd.f32 %v2517, %v2379
      %v2550 = vadd.f32 %v2518, %v2384
      %v2551 = vadd.f32 %v2519, %v2389
      %v2552 = vadd.f32 %v2520, %v2394
      %v2553 = vadd.f32 %v2521, %v2399
      %v2554 = vadd.f32 %v2522, %v2404
      %v2555 = vadd.f32 %v2523, %v2409
      %v2556 = vadd.f32 %v2524, %v2414
      %v2557 = vadd.f32 %v2525, %v2419
      %v2558 = vadd.f32 %v2526, %v2424
      %v2559 = vadd.f32 %v2527, %v2429
      %v2560 = vadd.f32 %v2528, %v2434
      %v2561 = vadd.f32 %v2529, %v2439
      %v2562 = vadd.f32 %v2530, %v2444
      %v2563 = vadd.f32 %v2531, %v2449
      %v2564 = vadd.f32 %v2532, %v2454
      %v2565 = vadd.f32 %v2533, %v2459
      %v2566 = vadd.f32 %v2534, %v2464
      %v2567 = vadd.f32 %v2535, %v2469
      %v2568 = vadd.f32 %v2536, %v2474
      %v2569 = vadd.f32 %v2537, %v2479
      %v2570 = vadd.f32 %v2538, %v2484
      %v2571 = vadd.f32 %v2539, %v2489
      %v2572 = vadd.f32 %v2540, %v2494
      %v2573 = vadd.f32 %v2541, %v2499
      %v2574 = vadd.f32 %v2542, %v2504
      %v2575 = vadd.f32 %v2543, %v2509
      %2576 = vst [vmem:[#allocation3] sm:$0xff] %v2544
      %2577 = vst [vmem:[#allocation3 + $0x8] sm:$0xff] %v2545
      %2578 = vst [vmem:[#allocation3 + $0x10] sm:$0xff] %v2546
      %2579 = vst [vmem:[#allocation3 + $0x18] sm:$0xff] %v2547
      %2580 = vst [vmem:[#allocation3 + $0x20] sm:$0xff] %v2548
      %2581 = vst [vmem:[#allocation3 + $0x28] sm:$0xff] %v2549
      %2582 = vst [vmem:[#allocation3 + $0x30] sm:$0xff] %v2550
      %2583 = vst [vmem:[#allocation3 + $0x38] sm:$0xff] %v2551
      %2584 = vst [vmem:[#allocation3 + $0x40] sm:$0xff] %v2552
      %2585 = vst [vmem:[#allocation3 + $0x48] sm:$0xff] %v2553
      %2586 = vst [vmem:[#allocation3 + $0x50] sm:$0xff] %v2554
      %2587 = vst [vmem:[#allocation3 + $0x58] sm:$0xff] %v2555
      %2588 = vst [vmem:[#allocation3 + $0x60] sm:$0xff] %v2556
      %2589 = vst [vmem:[#allocation3 + $0x68] sm:$0xff] %v2557
      %2590 = vst [vmem:[#allocation3 + $0x70] sm:$0xff] %v2558
      %2591 = vst [vmem:[#allocation3 + $0x78] sm:$0xff] %v2559
      %2592 = vst [vmem:[#allocation3 + $0x80] sm:$0xff] %v2560
      %2593 = vst [vmem:[#allocation3 + $0x88] sm:$0xff] %v2561
      %2594 = vst [vmem:[#allocation3 + $0x90] sm:$0xff] %v2562
      %2595 = vst [vmem:[#allocation3 + $0x98] sm:$0xff] %v2563
      %2596 = vst [vmem:[#allocation3 + $0xa0] sm:$0xff] %v2564
      %2597 = vst [vmem:[#allocation3 + $0xa8] sm:$0xff] %v2565
      %2598 = vst [vmem:[#allocation3 + $0xb0] sm:$0xff] %v2566
      %2599 = vst [vmem:[#allocation3 + $0xb8] sm:$0xff] %v2567
      %2600 = vst [vmem:[#allocation3 + $0xc0] sm:$0xff] %v2568
      %2601 = vst [vmem:[#allocation3 + $0xc8] sm:$0xff] %v2569
      %2602 = vst [vmem:[#allocation3 + $0xd0] sm:$0xff] %v2570
      %2603 = vst [vmem:[#allocation3 + $0xd8] sm:$0xff] %v2571
      %2604 = vst [vmem:[#allocation3 + $0xe0] sm:$0xff] %v2572
      %2605 = vst [vmem:[#allocation3 + $0xe8] sm:$0xff] %v2573
      %2606 = vst [vmem:[#allocation3 + $0xf0] sm:$0xff] %v2574
      %2607 = vst [vmem:[#allocation3 + $0xf8] sm:$0xff] %v2575
      %s2608 = scalar_lea.vmem [#allocation2], 48
      %v2609 = vld [vmem:[%s2608] sm:$0xff]
      %v2610 = vld [vmem:[%s2608 + $0x8] sm:$0xff]
      %v2611 = vld [vmem:[%s2608 + $0x18] sm:$0xff]
      %v2612 = vld [vmem:[%s2608 + $0x20] sm:$0xff]
      %v2613 = vld [vmem:[%s2608 + $0x30] sm:$0xff]
      %v2614 = vld [vmem:[%s2608 + $0x38] sm:$0xff]
      %v2615 = vld [vmem:[%s2608 + $0x48] sm:$0xff]
      %v2616 = vld [vmem:[%s2608 + $0x50] sm:$0xff]
      %v2617 = vld [vmem:[%s2608 + $0x60] sm:$0xff]
      %v2618 = vld [vmem:[%s2608 + $0x68] sm:$0xff]
      %v2619 = vld [vmem:[%s2608 + $0x78] sm:$0xff]
      %v2620 = vld [vmem:[%s2608 + $0x80] sm:$0xff]
      %v2621 = vld [vmem:[%s2608 + $0x90] sm:$0xff]
      %v2622 = vld [vmem:[%s2608 + $0x98] sm:$0xff]
      %v2623 = vld [vmem:[%s2608 + $0xa8] sm:$0xff]
      %v2624 = vld [vmem:[%s2608 + $0xb0] sm:$0xff]
      %v2625 = vld [vmem:[%s2608 + $0xc0] sm:$0xff]
      %v2626 = vld [vmem:[%s2608 + $0xc8] sm:$0xff]
      %v2627 = vld [vmem:[%s2608 + $0xd8] sm:$0xff]
      %v2628 = vld [vmem:[%s2608 + $0xe0] sm:$0xff]
      %v2629 = vld [vmem:[%s2608 + $0xf0] sm:$0xff]
      %v2630 = vld [vmem:[%s2608 + $0xf8] sm:$0xff]
      %v2631 = vld [vmem:[%s2608 + $0x108] sm:$0xff]
      %v2632 = vld [vmem:[%s2608 + $0x110] sm:$0xff]
      %v2633 = vld [vmem:[%s2608 + $0x120] sm:$0xff]
      %v2634 = vld [vmem:[%s2608 + $0x128] sm:$0xff]
      %v2635 = vld [vmem:[%s2608 + $0x138] sm:$0xff]
      %v2636 = vld [vmem:[%s2608 + $0x140] sm:$0xff]
      %v2637 = vld [vmem:[%s2608 + $0x150] sm:$0xff]
      %v2638 = vld [vmem:[%s2608 + $0x158] sm:$0xff]
      %v2639 = vld [vmem:[%s2608 + $0x168] sm:$0xff]
      %v2640 = vld [vmem:[%s2608 + $0x170] sm:$0xff]
      %s2641 = scalar_lea.vmem %s1, 768
      %v2642 = vld [vmem:[%s2641] sm:$0xff]
      %v2643 = vld [vmem:[%s2641 + $0x8] sm:$0xff]
      %v2644 = vld [vmem:[%s2641 + $0x10] sm:$0xff]
      %v2645 = vld [vmem:[%s2641 + $0x18] sm:$0xff]
      %v2646 = vld [vmem:[%s2641 + $0x20] sm:$0xff]
      %v2647 = vld [vmem:[%s2641 + $0x28] sm:$0xff]
      %v2648 = vld [vmem:[%s2641 + $0x30] sm:$0xff]
      %v2649 = vld [vmem:[%s2641 + $0x38] sm:$0xff]
      %v2650 = vld [vmem:[%s2641 + $0x40] sm:$0xff]
      %v2651 = vld [vmem:[%s2641 + $0x48] sm:$0xff]
      %v2652 = vld [vmem:[%s2641 + $0x50] sm:$0xff]
      %v2653 = vld [vmem:[%s2641 + $0x58] sm:$0xff]
      %v2654 = vld [vmem:[%s2641 + $0x60] sm:$0xff]
      %v2655 = vld [vmem:[%s2641 + $0x68] sm:$0xff]
      %v2656 = vld [vmem:[%s2641 + $0x70] sm:$0xff]
      %v2657 = vld [vmem:[%s2641 + $0x78] sm:$0xff]
      %2658 = vmatprep.subr.mxu0 0.0
      %2659 = vmatpush1.msra.mxu0 %v2642
      %2660 = vmatprep.subr.mxu0 0.0
      %2661 = vmatpush1.msra.mxu0 %v2643
      %2662 = vmatprep.subr.mxu0 0.0
      %2663 = vmatpush1.msra.mxu0 %v2644
      %2664 = vmatprep.subr.mxu0 0.0
      %2665 = vmatpush1.msra.mxu0 %v2645
      %2666 = vmatprep.subr.mxu0 0.0
      %2667 = vmatpush1.msra.mxu0 %v2646
      %2668 = vmatprep.subr.mxu0 0.0
      %2669 = vmatpush1.msra.mxu0 %v2647
      %2670 = vmatprep.subr.mxu0 0.0
      %2671 = vmatpush1.msra.mxu0 %v2648
      %2672 = vmatprep.subr.mxu0 0.0
      %2673 = vmatpush1.msra.mxu0 %v2649
      %2674 = vmatprep.subr.mxu0 0.0
      %2675 = vmatpush1.msra.mxu0 %v2650
      %2676 = vmatprep.subr.mxu0 0.0
      %2677 = vmatpush1.msra.mxu0 %v2651
      %2678 = vmatprep.subr.mxu0 0.0
      %2679 = vmatpush1.msra.mxu0 %v2652
      %2680 = vmatprep.subr.mxu0 0.0
      %2681 = vmatpush1.msra.mxu0 %v2653
      %2682 = vmatprep.subr.mxu0 0.0
      %2683 = vmatpush1.msra.mxu0 %v2654
      %2684 = vmatprep.subr.mxu0 0.0
      %2685 = vmatpush1.msra.mxu0 %v2655
      %2686 = vmatprep.subr.mxu0 0.0
      %2687 = vmatpush1.msra.mxu0 %v2656
      %2688 = vmatprep.subr.mxu0 0.0
      %2689 = vmatpush1.msra.mxu0 %v2657
      %2690 = vmatprep.subr.mxu0 0.0
      %2691 = vmatpush1.msra.mxu0 0.0
      %2692 = vmatprep.subr.mxu0 0.0
      %2693 = vmatpush1.msra.mxu0 0.0
      %2694 = vmatprep.subr.mxu0 0.0
      %2695 = vmatpush1.msra.mxu0 0.0
      %2696 = vmatprep.subr.mxu0 0.0
      %2697 = vmatpush1.msra.mxu0 0.0
      %2698 = vmatprep.subr.mxu0 0.0
      %2699 = vmatpush1.msra.mxu0 0.0
      %2700 = vmatprep.subr.mxu0 0.0
      %2701 = vmatpush1.msra.mxu0 0.0
      %2702 = vmatprep.subr.mxu0 0.0
      %2703 = vmatpush1.msra.mxu0 0.0
      %2704 = vmatprep.subr.mxu0 0.0
      %2705 = vmatpush1.msra.mxu0 0.0
      %2706 = vmatprep.subr.mxu0 0.0
      %2707 = vmatpush1.msra.mxu0 0.0
      %2708 = vmatprep.subr.mxu0 0.0
      %2709 = vmatpush1.msra.mxu0 0.0
      %2710 = vmatprep.subr.mxu0 0.0
      %2711 = vmatpush1.msra.mxu0 0.0
      %2712 = vmatprep.subr.mxu0 0.0
      %2713 = vmatpush1.msra.mxu0 0.0
      %2714 = vmatprep.subr.mxu0 0.0
      %2715 = vmatpush1.msra.mxu0 0.0
      %2716 = vmatprep.subr.mxu0 0.0
      %2717 = vmatpush1.msra.mxu0 0.0
      %2718 = vmatprep.subr.mxu0 0.0
      %2719 = vmatpush1.msra.mxu0 0.0
      %2720 = vmatprep.subr.mxu0 0.0
      %2721 = vmatpush1.msra.mxu0 0.0
      %2722 = vmatprep.mubr.f32.mxu0 0.0
      %2723 = vmatmul.mubr.f32.gmra.mrb[0].mxu0 %v2609
      %v2724 = vpop.f32.mrb[0].mxu0
      %v2725 = vadd.f32 0.0, %v2724
      %v2726 = vpop.f32.mrb[0].mxu0
      %2727 = vmatprep.mubr.f32.mxu0 0.0
      %2728 = vmatmul.mubr.f32.gmra.mrb[0].mxu0 %v2610
      %v2729 = vpop.f32.mrb[0].mxu0
      %v2730 = vadd.f32 0.0, %v2729
      %v2731 = vpop.f32.mrb[0].mxu0
      %2732 = vmatprep.mubr.f32.mxu0 0.0
      %2733 = vmatmul.mubr.f32.gmra.mrb[0].mxu0 %v2611
      %v2734 = vpop.f32.mrb[0].mxu0
      %v2735 = vadd.f32 0.0, %v2734
      %v2736 = vpop.f32.mrb[0].mxu0
      %2737 = vmatprep.mubr.f32.mxu0 0.0
      %2738 = vmatmul.mubr.f32.gmra.mrb[0].mxu0 %v2612
      %v2739 = vpop.f32.mrb[0].mxu0
      %v2740 = vadd.f32 0.0, %v2739
      %v2741 = vpop.f32.mrb[0].mxu0
      %2742 = vmatprep.mubr.f32.mxu0 0.0
      %2743 = vmatmul.mubr.f32.gmra.mrb[0].mxu0 %v2613
      %v2744 = vpop.f32.mrb[0].mxu0
      %v2745 = vadd.f32 0.0, %v2744
      %v2746 = vpop.f32.mrb[0].mxu0
      %2747 = vmatprep.mubr.f32.mxu0 0.0
      %2748 = vmatmul.mubr.f32.gmra.mrb[0].mxu0 %v2614
      %v2749 = vpop.f32.mrb[0].mxu0
      %v2750 = vadd.f32 0.0, %v2749
      %v2751 = vpop.f32.mrb[0].mxu0
      %2752 = vmatprep.mubr.f32.mxu0 0.0
      %2753 = vmatmul.mubr.f32.gmra.mrb[0].mxu0 %v2615
      %v2754 = vpop.f32.mrb[0].mxu0
      %v2755 = vadd.f32 0.0, %v2754
      %v2756 = vpop.f32.mrb[0].mxu0
      %2757 = vmatprep.mubr.f32.mxu0 0.0
      %2758 = vmatmul.mubr.f32.gmra.mrb[0].mxu0 %v2616
      %v2759 = vpop.f32.mrb[0].mxu0
      %v2760 = vadd.f32 0.0, %v2759
      %v2761 = vpop.f32.mrb[0].mxu0
      %2762 = vmatprep.mubr.f32.mxu0 0.0
      %2763 = vmatmul.mubr.f32.gmra.mrb[0].mxu0 %v2617
      %v2764 = vpop.f32.mrb[0].mxu0
      %v2765 = vadd.f32 0.0, %v2764
      %v2766 = vpop.f32.mrb[0].mxu0
      %2767 = vmatprep.mubr.f32.mxu0 0.0
      %2768 = vmatmul.mubr.f32.gmra.mrb[0].mxu0 %v2618
      %v2769 = vpop.f32.mrb[0].mxu0
      %v2770 = vadd.f32 0.0, %v2769
      %v2771 = vpop.f32.mrb[0].mxu0
      %2772 = vmatprep.mubr.f32.mxu0 0.0
      %2773 = vmatmul.mubr.f32.gmra.mrb[0].mxu0 %v2619
      %v2774 = vpop.f32.mrb[0].mxu0
      %v2775 = vadd.f32 0.0, %v2774
      %v2776 = vpop.f32.mrb[0].mxu0
      %2777 = vmatprep.mubr.f32.mxu0 0.0
      %2778 = vmatmul.mubr.f32.gmra.mrb[0].mxu0 %v2620
      %v2779 = vpop.f32.mrb[0].mxu0
      %v2780 = vadd.f32 0.0, %v2779
      %v2781 = vpop.f32.mrb[0].mxu0
      %2782 = vmatprep.mubr.f32.mxu0 0.0
      %2783 = vmatmul.mubr.f32.gmra.mrb[0].mxu0 %v2621
      %v2784 = vpop.f32.mrb[0].mxu0
      %v2785 = vadd.f32 0.0, %v2784
      %v2786 = vpop.f32.mrb[0].mxu0
      %2787 = vmatprep.mubr.f32.mxu0 0.0
      %2788 = vmatmul.mubr.f32.gmra.mrb[0].mxu0 %v2622
      %v2789 = vpop.f32.mrb[0].mxu0
      %v2790 = vadd.f32 0.0, %v2789
      %v2791 = vpop.f32.mrb[0].mxu0
      %2792 = vmatprep.mubr.f32.mxu0 0.0
      %2793 = vmatmul.mubr.f32.gmra.mrb[0].mxu0 %v2623
      %v2794 = vpop.f32.mrb[0].mxu0
      %v2795 = vadd.f32 0.0, %v2794
      %v2796 = vpop.f32.mrb[0].mxu0
      %2797 = vmatprep.mubr.f32.mxu0 0.0
      %2798 = vmatmul.mubr.f32.gmra.mrb[0].mxu0 %v2624
      %v2799 = vpop.f32.mrb[0].mxu0
      %v2800 = vadd.f32 0.0, %v2799
      %v2801 = vpop.f32.mrb[0].mxu0
      %2802 = vmatprep.mubr.f32.mxu0 0.0
      %2803 = vmatmul.mubr.f32.gmra.mrb[0].mxu0 %v2625
      %v2804 = vpop.f32.mrb[0].mxu0
      %v2805 = vadd.f32 0.0, %v2804
      %v2806 = vpop.f32.mrb[0].mxu0
      %2807 = vmatprep.mubr.f32.mxu0 0.0
      %2808 = vmatmul.mubr.f32.gmra.mrb[0].mxu0 %v2626
      %v2809 = vpop.f32.mrb[0].mxu0
      %v2810 = vadd.f32 0.0, %v2809
      %v2811 = vpop.f32.mrb[0].mxu0
      %2812 = vmatprep.mubr.f32.mxu0 0.0
      %2813 = vmatmul.mubr.f32.gmra.mrb[0].mxu0 %v2627
      %v2814 = vpop.f32.mrb[0].mxu0
      %v2815 = vadd.f32 0.0, %v2814
      %v2816 = vpop.f32.mrb[0].mxu0
      %2817 = vmatprep.mubr.f32.mxu0 0.0
      %2818 = vmatmul.mubr.f32.gmra.mrb[0].mxu0 %v2628
      %v2819 = vpop.f32.mrb[0].mxu0
      %v2820 = vadd.f32 0.0, %v2819
      %v2821 = vpop.f32.mrb[0].mxu0
      %2822 = vmatprep.mubr.f32.mxu0 0.0
      %2823 = vmatmul.mubr.f32.gmra.mrb[0].mxu0 %v2629
      %v2824 = vpop.f32.mrb[0].mxu0
      %v2825 = vadd.f32 0.0, %v2824
      %v2826 = vpop.f32.mrb[0].mxu0
      %2827 = vmatprep.mubr.f32.mxu0 0.0
      %2828 = vmatmul.mubr.f32.gmra.mrb[0].mxu0 %v2630
      %v2829 = vpop.f32.mrb[0].mxu0
      %v2830 = vadd.f32 0.0, %v2829
      %v2831 = vpop.f32.mrb[0].mxu0
      %2832 = vmatprep.mubr.f32.mxu0 0.0
      %2833 = vmatmul.mubr.f32.gmra.mrb[0].mxu0 %v2631
      %v2834 = vpop.f32.mrb[0].mxu0
      %v2835 = vadd.f32 0.0, %v2834
      %v2836 = vpop.f32.mrb[0].mxu0
      %2837 = vmatprep.mubr.f32.mxu0 0.0
      %2838 = vmatmul.mubr.f32.gmra.mrb[0].mxu0 %v2632
      %v2839 = vpop.f32.mrb[0].mxu0
      %v2840 = vadd.f32 0.0, %v2839
      %v2841 = vpop.f32.mrb[0].mxu0
      %2842 = vmatprep.mubr.f32.mxu0 0.0
      %2843 = vmatmul.mubr.f32.gmra.mrb[0].mxu0 %v2633
      %v2844 = vpop.f32.mrb[0].mxu0
      %v2845 = vadd.f32 0.0, %v2844
      %v2846 = vpop.f32.mrb[0].mxu0
      %2847 = vmatprep.mubr.f32.mxu0 0.0
      %2848 = vmatmul.mubr.f32.gmra.mrb[0].mxu0 %v2634
      %v2849 = vpop.f32.mrb[0].mxu0
      %v2850 = vadd.f32 0.0, %v2849
      %v2851 = vpop.f32.mrb[0].mxu0
      %2852 = vmatprep.mubr.f32.mxu0 0.0
      %2853 = vmatmul.mubr.f32.gmra.mrb[0].mxu0 %v2635
      %v2854 = vpop.f32.mrb[0].mxu0
      %v2855 = vadd.f32 0.0, %v2854
      %v2856 = vpop.f32.mrb[0].mxu0
      %2857 = vmatprep.mubr.f32.mxu0 0.0
      %2858 = vmatmul.mubr.f32.gmra.mrb[0].mxu0 %v2636
      %v2859 = vpop.f32.mrb[0].mxu0
      %v2860 = vadd.f32 0.0, %v2859
      %v2861 = vpop.f32.mrb[0].mxu0
      %2862 = vmatprep.mubr.f32.mxu0 0.0
      %2863 = vmatmul.mubr.f32.gmra.mrb[0].mxu0 %v2637
      %v2864 = vpop.f32.mrb[0].mxu0
      %v2865 = vadd.f32 0.0, %v2864
      %v2866 = vpop.f32.mrb[0].mxu0
      %2867 = vmatprep.mubr.f32.mxu0 0.0
      %2868 = vmatmul.mubr.f32.gmra.mrb[0].mxu0 %v2638
      %v2869 = vpop.f32.mrb[0].mxu0
      %v2870 = vadd.f32 0.0, %v2869
      %v2871 = vpop.f32.mrb[0].mxu0
      %2872 = vmatprep.mubr.f32.mxu0 0.0
      %2873 = vmatmul.mubr.f32.gmra.mrb[0].mxu0 %v2639
      %v2874 = vpop.f32.mrb[0].mxu0
      %v2875 = vadd.f32 0.0, %v2874
      %v2876 = vpop.f32.mrb[0].mxu0
      %2877 = vmatprep.mubr.f32.mxu0 0.0
      %2878 = vmatmul.mubr.f32.gmra.mrb[0].mxu0 %v2640
      %v2879 = vpop.f32.mrb[0].mxu0
      %v2880 = vadd.f32 0.0, %v2879
      %v2881 = vpop.f32.mrb[0].mxu0
      %2882 = vdwg.mxu0
      %v2883 = vld [vmem:[#allocation3] sm:$0xff]
      %v2884 = vld [vmem:[#allocation3 + $0x8] sm:$0xff]
      %v2885 = vld [vmem:[#allocation3 + $0x10] sm:$0xff]
      %v2886 = vld [vmem:[#allocation3 + $0x18] sm:$0xff]
      %v2887 = vld [vmem:[#allocation3 + $0x20] sm:$0xff]
      %v2888 = vld [vmem:[#allocation3 + $0x28] sm:$0xff]
      %v2889 = vld [vmem:[#allocation3 + $0x30] sm:$0xff]
      %v2890 = vld [vmem:[#allocation3 + $0x38] sm:$0xff]
      %v2891 = vld [vmem:[#allocation3 + $0x40] sm:$0xff]
      %v2892 = vld [vmem:[#allocation3 + $0x48] sm:$0xff]
      %v2893 = vld [vmem:[#allocation3 + $0x50] sm:$0xff]
      %v2894 = vld [vmem:[#allocation3 + $0x58] sm:$0xff]
      %v2895 = vld [vmem:[#allocation3 + $0x60] sm:$0xff]
      %v2896 = vld [vmem:[#allocation3 + $0x68] sm:$0xff]
      %v2897 = vld [vmem:[#allocation3 + $0x70] sm:$0xff]
      %v2898 = vld [vmem:[#allocation3 + $0x78] sm:$0xff]
      %v2899 = vld [vmem:[#allocation3 + $0x80] sm:$0xff]
      %v2900 = vld [vmem:[#allocation3 + $0x88] sm:$0xff]
      %v2901 = vld [vmem:[#allocation3 + $0x90] sm:$0xff]
      %v2902 = vld [vmem:[#allocation3 + $0x98] sm:$0xff]
      %v2903 = vld [vmem:[#allocation3 + $0xa0] sm:$0xff]
      %v2904 = vld [vmem:[#allocation3 + $0xa8] sm:$0xff]
      %v2905 = vld [vmem:[#allocation3 + $0xb0] sm:$0xff]
      %v2906 = vld [vmem:[#allocation3 + $0xb8] sm:$0xff]
      %v2907 = vld [vmem:[#allocation3 + $0xc0] sm:$0xff]
      %v2908 = vld [vmem:[#allocation3 + $0xc8] sm:$0xff]
      %v2909 = vld [vmem:[#allocation3 + $0xd0] sm:$0xff]
      %v2910 = vld [vmem:[#allocation3 + $0xd8] sm:$0xff]
      %v2911 = vld [vmem:[#allocation3 + $0xe0] sm:$0xff]
      %v2912 = vld [vmem:[#allocation3 + $0xe8] sm:$0xff]
      %v2913 = vld [vmem:[#allocation3 + $0xf0] sm:$0xff]
      %v2914 = vld [vmem:[#allocation3 + $0xf8] sm:$0xff]
      %v2915 = vadd.f32 %v2883, %v2725
      %v2916 = vadd.f32 %v2884, %v2730
      %v2917 = vadd.f32 %v2885, %v2735
      %v2918 = vadd.f32 %v2886, %v2740
      %v2919 = vadd.f32 %v2887, %v2745
      %v2920 = vadd.f32 %v2888, %v2750
      %v2921 = vadd.f32 %v2889, %v2755
      %v2922 = vadd.f32 %v2890, %v2760
      %v2923 = vadd.f32 %v2891, %v2765
      %v2924 = vadd.f32 %v2892, %v2770
      %v2925 = vadd.f32 %v2893, %v2775
      %v2926 = vadd.f32 %v2894, %v2780
      %v2927 = vadd.f32 %v2895, %v2785
      %v2928 = vadd.f32 %v2896, %v2790
      %v2929 = vadd.f32 %v2897, %v2795
      %v2930 = vadd.f32 %v2898, %v2800
      %v2931 = vadd.f32 %v2899, %v2805
      %v2932 = vadd.f32 %v2900, %v2810
      %v2933 = vadd.f32 %v2901, %v2815
      %v2934 = vadd.f32 %v2902, %v2820
      %v2935 = vadd.f32 %v2903, %v2825
      %v2936 = vadd.f32 %v2904, %v2830
      %v2937 = vadd.f32 %v2905, %v2835
      %v2938 = vadd.f32 %v2906, %v2840
      %v2939 = vadd.f32 %v2907, %v2845
      %v2940 = vadd.f32 %v2908, %v2850
      %v2941 = vadd.f32 %v2909, %v2855
      %v2942 = vadd.f32 %v2910, %v2860
      %v2943 = vadd.f32 %v2911, %v2865
      %v2944 = vadd.f32 %v2912, %v2870
      %v2945 = vadd.f32 %v2913, %v2875
      %v2946 = vadd.f32 %v2914, %v2880
      %2947 = vst [vmem:[#allocation3] sm:$0xff] %v2915
      %2948 = vst [vmem:[#allocation3 + $0x8] sm:$0xff] %v2916
      %2949 = vst [vmem:[#allocation3 + $0x10] sm:$0xff] %v2917
      %2950 = vst [vmem:[#allocation3 + $0x18] sm:$0xff] %v2918
      %2951 = vst [vmem:[#allocation3 + $0x20] sm:$0xff] %v2919
      %2952 = vst [vmem:[#allocation3 + $0x28] sm:$0xff] %v2920
      %2953 = vst [vmem:[#allocation3 + $0x30] sm:$0xff] %v2921
      %2954 = vst [vmem:[#allocation3 + $0x38] sm:$0xff] %v2922
      %2955 = vst [vmem:[#allocation3 + $0x40] sm:$0xff] %v2923
      %2956 = vst [vmem:[#allocation3 + $0x48] sm:$0xff] %v2924
      %2957 = vst [vmem:[#allocation3 + $0x50] sm:$0xff] %v2925
      %2958 = vst [vmem:[#allocation3 + $0x58] sm:$0xff] %v2926
      %2959 = vst [vmem:[#allocation3 + $0x60] sm:$0xff] %v2927
      %2960 = vst [vmem:[#allocation3 + $0x68] sm:$0xff] %v2928
      %2961 = vst [vmem:[#allocation3 + $0x70] sm:$0xff] %v2929
      %2962 = vst [vmem:[#allocation3 + $0x78] sm:$0xff] %v2930
      %2963 = vst [vmem:[#allocation3 + $0x80] sm:$0xff] %v2931
      %2964 = vst [vmem:[#allocation3 + $0x88] sm:$0xff] %v2932
      %2965 = vst [vmem:[#allocation3 + $0x90] sm:$0xff] %v2933
      %2966 = vst [vmem:[#allocation3 + $0x98] sm:$0xff] %v2934
      %2967 = vst [vmem:[#allocation3 + $0xa0] sm:$0xff] %v2935
      %2968 = vst [vmem:[#allocation3 + $0xa8] sm:$0xff] %v2936
      %2969 = vst [vmem:[#allocation3 + $0xb0] sm:$0xff] %v2937
      %2970 = vst [vmem:[#allocation3 + $0xb8] sm:$0xff] %v2938
      %2971 = vst [vmem:[#allocation3 + $0xc0] sm:$0xff] %v2939
      %2972 = vst [vmem:[#allocation3 + $0xc8] sm:$0xff] %v2940
      %2973 = vst [vmem:[#allocation3 + $0xd0] sm:$0xff] %v2941
      %2974 = vst [vmem:[#allocation3 + $0xd8] sm:$0xff] %v2942
      %2975 = vst [vmem:[#allocation3 + $0xe0] sm:$0xff] %v2943
      %2976 = vst [vmem:[#allocation3 + $0xe8] sm:$0xff] %v2944
      %2977 = vst [vmem:[#allocation3 + $0xf0] sm:$0xff] %v2945
      %2978 = vst [vmem:[#allocation3 + $0xf8] sm:$0xff] %v2946
      %v2979 = vld [vmem:[%s2608 + $0x1] sm:$0xff]
      %v2980 = vld [vmem:[%s2608 + $0x9] sm:$0xff]
      %v2981 = vld [vmem:[%s2608 + $0x19] sm:$0xff]
      %v2982 = vld [vmem:[%s2608 + $0x21] sm:$0xff]
      %v2983 = vld [vmem:[%s2608 + $0x31] sm:$0xff]
      %v2984 = vld [vmem:[%s2608 + $0x39] sm:$0xff]
      %v2985 = vld [vmem:[%s2608 + $0x49] sm:$0xff]
      %v2986 = vld [vmem:[%s2608 + $0x51] sm:$0xff]
      %v2987 = vld [vmem:[%s2608 + $0x61] sm:$0xff]
      %v2988 = vld [vmem:[%s2608 + $0x69] sm:$0xff]
      %v2989 = vld [vmem:[%s2608 + $0x79] sm:$0xff]
      %v2990 = vld [vmem:[%s2608 + $0x81] sm:$0xff]
      %v2991 = vld [vmem:[%s2608 + $0x91] sm:$0xff]
      %v2992 = vld [vmem:[%s2608 + $0x99] sm:$0xff]
      %v2993 = vld [vmem:[%s2608 + $0xa9] sm:$0xff]
      %v2994 = vld [vmem:[%s2608 + $0xb1] sm:$0xff]
      %v2995 = vld [vmem:[%s2608 + $0xc1] sm:$0xff]
      %v2996 = vld [vmem:[%s2608 + $0xc9] sm:$0xff]
      %v2997 = vld [vmem:[%s2608 + $0xd9] sm:$0xff]
      %v2998 = vld [vmem:[%s2608 + $0xe1] sm:$0xff]
      %v2999 = vld [vmem:[%s2608 + $0xf1] sm:$0xff]
      %v3000 = vld [vmem:[%s2608 + $0xf9] sm:$0xff]
      %v3001 = vld [vmem:[%s2608 + $0x109] sm:$0xff]
      %v3002 = vld [vmem:[%s2608 + $0x111] sm:$0xff]
      %v3003 = vld [vmem:[%s2608 + $0x121] sm:$0xff]
      %v3004 = vld [vmem:[%s2608 + $0x129] sm:$0xff]
      %v3005 = vld [vmem:[%s2608 + $0x139] sm:$0xff]
      %v3006 = vld [vmem:[%s2608 + $0x141] sm:$0xff]
      %v3007 = vld [vmem:[%s2608 + $0x151] sm:$0xff]
      %v3008 = vld [vmem:[%s2608 + $0x159] sm:$0xff]
      %v3009 = vld [vmem:[%s2608 + $0x169] sm:$0xff]
      %v3010 = vld [vmem:[%s2608 + $0x171] sm:$0xff]
      %s3011 = scalar_lea.vmem %s1, 896
      %v3012 = vld [vmem:[%s3011] sm:$0xff]
      %v3013 = vld [vmem:[%s3011 + $0x8] sm:$0xff]
      %v3014 = vld [vmem:[%s3011 + $0x10] sm:$0xff]
      %v3015 = vld [vmem:[%s3011 + $0x18] sm:$0xff]
      %v3016 = vld [vmem:[%s3011 + $0x20] sm:$0xff]
      %v3017 = vld [vmem:[%s3011 + $0x28] sm:$0xff]
      %v3018 = vld [vmem:[%s3011 + $0x30] sm:$0xff]
      %v3019 = vld [vmem:[%s3011 + $0x38] sm:$0xff]
      %v3020 = vld [vmem:[%s3011 + $0x40] sm:$0xff]
      %v3021 = vld [vmem:[%s3011 + $0x48] sm:$0xff]
      %v3022 = vld [vmem:[%s3011 + $0x50] sm:$0xff]
      %v3023 = vld [vmem:[%s3011 + $0x58] sm:$0xff]
      %v3024 = vld [vmem:[%s3011 + $0x60] sm:$0xff]
      %v3025 = vld [vmem:[%s3011 + $0x68] sm:$0xff]
      %v3026 = vld [vmem:[%s3011 + $0x70] sm:$0xff]
      %v3027 = vld [vmem:[%s3011 + $0x78] sm:$0xff]
      %3028 = vmatprep.subr.mxu0 0.0
      %3029 = vmatpush1.msra.mxu0 %v3012
      %3030 = vmatprep.subr.mxu0 0.0
      %3031 = vmatpush1.msra.mxu0 %v3013
      %3032 = vmatprep.subr.mxu0 0.0
      %3033 = vmatpush1.msra.mxu0 %v3014
      %3034 = vmatprep.subr.mxu0 0.0
      %3035 = vmatpush1.msra.mxu0 %v3015
      %3036 = vmatprep.subr.mxu0 0.0
      %3037 = vmatpush1.msra.mxu0 %v3016
      %3038 = vmatprep.subr.mxu0 0.0
      %3039 = vmatpush1.msra.mxu0 %v3017
      %3040 = vmatprep.subr.mxu0 0.0
      %3041 = vmatpush1.msra.mxu0 %v3018
      %3042 = vmatprep.subr.mxu0 0.0
      %3043 = vmatpush1.msra.mxu0 %v3019
      %3044 = vmatprep.subr.mxu0 0.0
      %3045 = vmatpush1.msra.mxu0 %v3020
      %3046 = vmatprep.subr.mxu0 0.0
      %3047 = vmatpush1.msra.mxu0 %v3021
      %3048 = vmatprep.subr.mxu0 0.0
      %3049 = vmatpush1.msra.mxu0 %v3022
      %3050 = vmatprep.subr.mxu0 0.0
      %3051 = vmatpush1.msra.mxu0 %v3023
      %3052 = vmatprep.subr.mxu0 0.0
      %3053 = vmatpush1.msra.mxu0 %v3024
      %3054 = vmatprep.subr.mxu0 0.0
      %3055 = vmatpush1.msra.mxu0 %v3025
      %3056 = vmatprep.subr.mxu0 0.0
      %3057 = vmatpush1.msra.mxu0 %v3026
      %3058 = vmatprep.subr.mxu0 0.0
      %3059 = vmatpush1.msra.mxu0 %v3027
      %3060 = vmatprep.subr.mxu0 0.0
      %3061 = vmatpush1.msra.mxu0 0.0
      %3062 = vmatprep.subr.mxu0 0.0
      %3063 = vmatpush1.msra.mxu0 0.0
      %3064 = vmatprep.subr.mxu0 0.0
      %3065 = vmatpush1.msra.mxu0 0.0
      %3066 = vmatprep.subr.mxu0 0.0
      %3067 = vmatpush1.msra.mxu0 0.0
      %3068 = vmatprep.subr.mxu0 0.0
      %3069 = vmatpush1.msra.mxu0 0.0
      %3070 = vmatprep.subr.mxu0 0.0
      %3071 = vmatpush1.msra.mxu0 0.0
      %3072 = vmatprep.subr.mxu0 0.0
      %3073 = vmatpush1.msra.mxu0 0.0
      %3074 = vmatprep.subr.mxu0 0.0
      %3075 = vmatpush1.msra.mxu0 0.0
      %3076 = vmatprep.subr.mxu0 0.0
      %3077 = vmatpush1.msra.mxu0 0.0
      %3078 = vmatprep.subr.mxu0 0.0
      %3079 = vmatpush1.msra.mxu0 0.0
      %3080 = vmatprep.subr.mxu0 0.0
      %3081 = vmatpush1.msra.mxu0 0.0
      %3082 = vmatprep.subr.mxu0 0.0
      %3083 = vmatpush1.msra.mxu0 0.0
      %3084 = vmatprep.subr.mxu0 0.0
      %3085 = vmatpush1.msra.mxu0 0.0
      %3086 = vmatprep.subr.mxu0 0.0
      %3087 = vmatpush1.msra.mxu0 0.0
      %3088 = vmatprep.subr.mxu0 0.0
      %3089 = vmatpush1.msra.mxu0 0.0
      %3090 = vmatprep.subr.mxu0 0.0
      %3091 = vmatpush1.msra.mxu0 0.0
      %3092 = vmatprep.mubr.f32.mxu0 0.0
      %3093 = vmatmul.mubr.f32.gmra.mrb[0].mxu0 %v2979
      %v3094 = vpop.f32.mrb[0].mxu0
      %v3095 = vadd.f32 0.0, %v3094
      %v3096 = vpop.f32.mrb[0].mxu0
      %3097 = vmatprep.mubr.f32.mxu0 0.0
      %3098 = vmatmul.mubr.f32.gmra.mrb[0].mxu0 %v2980
      %v3099 = vpop.f32.mrb[0].mxu0
      %v3100 = vadd.f32 0.0, %v3099
      %v3101 = vpop.f32.mrb[0].mxu0
      %3102 = vmatprep.mubr.f32.mxu0 0.0
      %3103 = vmatmul.mubr.f32.gmra.mrb[0].mxu0 %v2981
      %v3104 = vpop.f32.mrb[0].mxu0
      %v3105 = vadd.f32 0.0, %v3104
      %v3106 = vpop.f32.mrb[0].mxu0
      %3107 = vmatprep.mubr.f32.mxu0 0.0
      %3108 = vmatmul.mubr.f32.gmra.mrb[0].mxu0 %v2982
      %v3109 = vpop.f32.mrb[0].mxu0
      %v3110 = vadd.f32 0.0, %v3109
      %v3111 = vpop.f32.mrb[0].mxu0
      %3112 = vmatprep.mubr.f32.mxu0 0.0
      %3113 = vmatmul.mubr.f32.gmra.mrb[0].mxu0 %v2983
      %v3114 = vpop.f32.mrb[0].mxu0
      %v3115 = vadd.f32 0.0, %v3114
      %v3116 = vpop.f32.mrb[0].mxu0
      %3117 = vmatprep.mubr.f32.mxu0 0.0
      %3118 = vmatmul.mubr.f32.gmra.mrb[0].mxu0 %v2984
      %v3119 = vpop.f32.mrb[0].mxu0
      %v3120 = vadd.f32 0.0, %v3119
      %v3121 = vpop.f32.mrb[0].mxu0
      %3122 = vmatprep.mubr.f32.mxu0 0.0
      %3123 = vmatmul.mubr.f32.gmra.mrb[0].mxu0 %v2985
      %v3124 = vpop.f32.mrb[0].mxu0
      %v3125 = vadd.f32 0.0, %v3124
      %v3126 = vpop.f32.mrb[0].mxu0
      %3127 = vmatprep.mubr.f32.mxu0 0.0
      %3128 = vmatmul.mubr.f32.gmra.mrb[0].mxu0 %v2986
      %v3129 = vpop.f32.mrb[0].mxu0
      %v3130 = vadd.f32 0.0, %v3129
      %v3131 = vpop.f32.mrb[0].mxu0
      %3132 = vmatprep.mubr.f32.mxu0 0.0
      %3133 = vmatmul.mubr.f32.gmra.mrb[0].mxu0 %v2987
      %v3134 = vpop.f32.mrb[0].mxu0
      %v3135 = vadd.f32 0.0, %v3134
      %v3136 = vpop.f32.mrb[0].mxu0
      %3137 = vmatprep.mubr.f32.mxu0 0.0
      %3138 = vmatmul.mubr.f32.gmra.mrb[0].mxu0 %v2988
      %v3139 = vpop.f32.mrb[0].mxu0
      %v3140 = vadd.f32 0.0, %v3139
      %v3141 = vpop.f32.mrb[0].mxu0
      %3142 = vmatprep.mubr.f32.mxu0 0.0
      %3143 = vmatmul.mubr.f32.gmra.mrb[0].mxu0 %v2989
      %v3144 = vpop.f32.mrb[0].mxu0
      %v3145 = vadd.f32 0.0, %v3144
      %v3146 = vpop.f32.mrb[0].mxu0
      %3147 = vmatprep.mubr.f32.mxu0 0.0
      %3148 = vmatmul.mubr.f32.gmra.mrb[0].mxu0 %v2990
      %v3149 = vpop.f32.mrb[0].mxu0
      %v3150 = vadd.f32 0.0, %v3149
      %v3151 = vpop.f32.mrb[0].mxu0
      %3152 = vmatprep.mubr.f32.mxu0 0.0
      %3153 = vmatmul.mubr.f32.gmra.mrb[0].mxu0 %v2991
      %v3154 = vpop.f32.mrb[0].mxu0
      %v3155 = vadd.f32 0.0, %v3154
      %v3156 = vpop.f32.mrb[0].mxu0
      %3157 = vmatprep.mubr.f32.mxu0 0.0
      %3158 = vmatmul.mubr.f32.gmra.mrb[0].mxu0 %v2992
      %v3159 = vpop.f32.mrb[0].mxu0
      %v3160 = vadd.f32 0.0, %v3159
      %v3161 = vpop.f32.mrb[0].mxu0
      %3162 = vmatprep.mubr.f32.mxu0 0.0
      %3163 = vmatmul.mubr.f32.gmra.mrb[0].mxu0 %v2993
      %v3164 = vpop.f32.mrb[0].mxu0
      %v3165 = vadd.f32 0.0, %v3164
      %v3166 = vpop.f32.mrb[0].mxu0
      %3167 = vmatprep.mubr.f32.mxu0 0.0
      %3168 = vmatmul.mubr.f32.gmra.mrb[0].mxu0 %v2994
      %v3169 = vpop.f32.mrb[0].mxu0
      %v3170 = vadd.f32 0.0, %v3169
      %v3171 = vpop.f32.mrb[0].mxu0
      %3172 = vmatprep.mubr.f32.mxu0 0.0
      %3173 = vmatmul.mubr.f32.gmra.mrb[0].mxu0 %v2995
      %v3174 = vpop.f32.mrb[0].mxu0
      %v3175 = vadd.f32 0.0, %v3174
      %v3176 = vpop.f32.mrb[0].mxu0
      %3177 = vmatprep.mubr.f32.mxu0 0.0
      %3178 = vmatmul.mubr.f32.gmra.mrb[0].mxu0 %v2996
      %v3179 = vpop.f32.mrb[0].mxu0
      %v3180 = vadd.f32 0.0, %v3179
      %v3181 = vpop.f32.mrb[0].mxu0
      %3182 = vmatprep.mubr.f32.mxu0 0.0
      %3183 = vmatmul.mubr.f32.gmra.mrb[0].mxu0 %v2997
      %v3184 = vpop.f32.mrb[0].mxu0
      %v3185 = vadd.f32 0.0, %v3184
      %v3186 = vpop.f32.mrb[0].mxu0
      %3187 = vmatprep.mubr.f32.mxu0 0.0
      %3188 = vmatmul.mubr.f32.gmra.mrb[0].mxu0 %v2998
      %v3189 = vpop.f32.mrb[0].mxu0
      %v3190 = vadd.f32 0.0, %v3189
      %v3191 = vpop.f32.mrb[0].mxu0
      %3192 = vmatprep.mubr.f32.mxu0 0.0
      %3193 = vmatmul.mubr.f32.gmra.mrb[0].mxu0 %v2999
      %v3194 = vpop.f32.mrb[0].mxu0
      %v3195 = vadd.f32 0.0, %v3194
      %v3196 = vpop.f32.mrb[0].mxu0
      %3197 = vmatprep.mubr.f32.mxu0 0.0
      %3198 = vmatmul.mubr.f32.gmra.mrb[0].mxu0 %v3000
      %v3199 = vpop.f32.mrb[0].mxu0
      %v3200 = vadd.f32 0.0, %v3199
      %v3201 = vpop.f32.mrb[0].mxu0
      %3202 = vmatprep.mubr.f32.mxu0 0.0
      %3203 = vmatmul.mubr.f32.gmra.mrb[0].mxu0 %v3001
      %v3204 = vpop.f32.mrb[0].mxu0
      %v3205 = vadd.f32 0.0, %v3204
      %v3206 = vpop.f32.mrb[0].mxu0
      %3207 = vmatprep.mubr.f32.mxu0 0.0
      %3208 = vmatmul.mubr.f32.gmra.mrb[0].mxu0 %v3002
      %v3209 = vpop.f32.mrb[0].mxu0
      %v3210 = vadd.f32 0.0, %v3209
      %v3211 = vpop.f32.mrb[0].mxu0
      %3212 = vmatprep.mubr.f32.mxu0 0.0
      %3213 = vmatmul.mubr.f32.gmra.mrb[0].mxu0 %v3003
      %v3214 = vpop.f32.mrb[0].mxu0
      %v3215 = vadd.f32 0.0, %v3214
      %v3216 = vpop.f32.mrb[0].mxu0
      %3217 = vmatprep.mubr.f32.mxu0 0.0
      %3218 = vmatmul.mubr.f32.gmra.mrb[0].mxu0 %v3004
      %v3219 = vpop.f32.mrb[0].mxu0
      %v3220 = vadd.f32 0.0, %v3219
      %v3221 = vpop.f32.mrb[0].mxu0
      %3222 = vmatprep.mubr.f32.mxu0 0.0
      %3223 = vmatmul.mubr.f32.gmra.mrb[0].mxu0 %v3005
      %v3224 = vpop.f32.mrb[0].mxu0
      %v3225 = vadd.f32 0.0, %v3224
      %v3226 = vpop.f32.mrb[0].mxu0
      %3227 = vmatprep.mubr.f32.mxu0 0.0
      %3228 = vmatmul.mubr.f32.gmra.mrb[0].mxu0 %v3006
      %v3229 = vpop.f32.mrb[0].mxu0
      %v3230 = vadd.f32 0.0, %v3229
      %v3231 = vpop.f32.mrb[0].mxu0
      %3232 = vmatprep.mubr.f32.mxu0 0.0
      %3233 = vmatmul.mubr.f32.gmra.mrb[0].mxu0 %v3007
      %v3234 = vpop.f32.mrb[0].mxu0
      %v3235 = vadd.f32 0.0, %v3234
      %v3236 = vpop.f32.mrb[0].mxu0
      %3237 = vmatprep.mubr.f32.mxu0 0.0
      %3238 = vmatmul.mubr.f32.gmra.mrb[0].mxu0 %v3008
      %v3239 = vpop.f32.mrb[0].mxu0
      %v3240 = vadd.f32 0.0, %v3239
      %v3241 = vpop.f32.mrb[0].mxu0
      %3242 = vmatprep.mubr.f32.mxu0 0.0
      %3243 = vmatmul.mubr.f32.gmra.mrb[0].mxu0 %v3009
      %v3244 = vpop.f32.mrb[0].mxu0
      %v3245 = vadd.f32 0.0, %v3244
      %v3246 = vpop.f32.mrb[0].mxu0
      %3247 = vmatprep.mubr.f32.mxu0 0.0
      %3248 = vmatmul.mubr.f32.gmra.mrb[0].mxu0 %v3010
      %v3249 = vpop.f32.mrb[0].mxu0
      %v3250 = vadd.f32 0.0, %v3249
      %v3251 = vpop.f32.mrb[0].mxu0
      %3252 = vdwg.mxu0
      %v3253 = vld [vmem:[#allocation3] sm:$0xff]
      %v3254 = vld [vmem:[#allocation3 + $0x8] sm:$0xff]
      %v3255 = vld [vmem:[#allocation3 + $0x10] sm:$0xff]
      %v3256 = vld [vmem:[#allocation3 + $0x18] sm:$0xff]
      %v3257 = vld [vmem:[#allocation3 + $0x20] sm:$0xff]
      %v3258 = vld [vmem:[#allocation3 + $0x28] sm:$0xff]
      %v3259 = vld [vmem:[#allocation3 + $0x30] sm:$0xff]
      %v3260 = vld [vmem:[#allocation3 + $0x38] sm:$0xff]
      %v3261 = vld [vmem:[#allocation3 + $0x40] sm:$0xff]
      %v3262 = vld [vmem:[#allocation3 + $0x48] sm:$0xff]
      %v3263 = vld [vmem:[#allocation3 + $0x50] sm:$0xff]
      %v3264 = vld [vmem:[#allocation3 + $0x58] sm:$0xff]
      %v3265 = vld [vmem:[#allocation3 + $0x60] sm:$0xff]
      %v3266 = vld [vmem:[#allocation3 + $0x68] sm:$0xff]
      %v3267 = vld [vmem:[#allocation3 + $0x70] sm:$0xff]
      %v3268 = vld [vmem:[#allocation3 + $0x78] sm:$0xff]
      %v3269 = vld [vmem:[#allocation3 + $0x80] sm:$0xff]
      %v3270 = vld [vmem:[#allocation3 + $0x88] sm:$0xff]
      %v3271 = vld [vmem:[#allocation3 + $0x90] sm:$0xff]
      %v3272 = vld [vmem:[#allocation3 + $0x98] sm:$0xff]
      %v3273 = vld [vmem:[#allocation3 + $0xa0] sm:$0xff]
      %v3274 = vld [vmem:[#allocation3 + $0xa8] sm:$0xff]
      %v3275 = vld [vmem:[#allocation3 + $0xb0] sm:$0xff]
      %v3276 = vld [vmem:[#allocation3 + $0xb8] sm:$0xff]
      %v3277 = vld [vmem:[#allocation3 + $0xc0] sm:$0xff]
      %v3278 = vld [vmem:[#allocation3 + $0xc8] sm:$0xff]
      %v3279 = vld [vmem:[#allocation3 + $0xd0] sm:$0xff]
      %v3280 = vld [vmem:[#allocation3 + $0xd8] sm:$0xff]
      %v3281 = vld [vmem:[#allocation3 + $0xe0] sm:$0xff]
      %v3282 = vld [vmem:[#allocation3 + $0xe8] sm:$0xff]
      %v3283 = vld [vmem:[#allocation3 + $0xf0] sm:$0xff]
      %v3284 = vld [vmem:[#allocation3 + $0xf8] sm:$0xff]
      %v3285 = vadd.f32 %v3253, %v3095
      %v3286 = vadd.f32 %v3254, %v3100
      %v3287 = vadd.f32 %v3255, %v3105
      %v3288 = vadd.f32 %v3256, %v3110
      %v3289 = vadd.f32 %v3257, %v3115
      %v3290 = vadd.f32 %v3258, %v3120
      %v3291 = vadd.f32 %v3259, %v3125
      %v3292 = vadd.f32 %v3260, %v3130
      %v3293 = vadd.f32 %v3261, %v3135
      %v3294 = vadd.f32 %v3262, %v3140
      %v3295 = vadd.f32 %v3263, %v3145
      %v3296 = vadd.f32 %v3264, %v3150
      %v3297 = vadd.f32 %v3265, %v3155
      %v3298 = vadd.f32 %v3266, %v3160
      %v3299 = vadd.f32 %v3267, %v3165
      %v3300 = vadd.f32 %v3268, %v3170
      %v3301 = vadd.f32 %v3269, %v3175
      %v3302 = vadd.f32 %v3270, %v3180
      %v3303 = vadd.f32 %v3271, %v3185
      %v3304 = vadd.f32 %v3272, %v3190
      %v3305 = vadd.f32 %v3273, %v3195
      %v3306 = vadd.f32 %v3274, %v3200
      %v3307 = vadd.f32 %v3275, %v3205
      %v3308 = vadd.f32 %v3276, %v3210
      %v3309 = vadd.f32 %v3277, %v3215
      %v3310 = vadd.f32 %v3278, %v3220
      %v3311 = vadd.f32 %v3279, %v3225
      %v3312 = vadd.f32 %v3280, %v3230
      %v3313 = vadd.f32 %v3281, %v3235
      %v3314 = vadd.f32 %v3282, %v3240
      %v3315 = vadd.f32 %v3283, %v3245
      %v3316 = vadd.f32 %v3284, %v3250
      %3317 = vst [vmem:[#allocation3] sm:$0xff] %v3285
      %3318 = vst [vmem:[#allocation3 + $0x8] sm:$0xff] %v3286
      %3319 = vst [vmem:[#allocation3 + $0x10] sm:$0xff] %v3287
      %3320 = vst [vmem:[#allocation3 + $0x18] sm:$0xff] %v3288
      %3321 = vst [vmem:[#allocation3 + $0x20] sm:$0xff] %v3289
      %3322 = vst [vmem:[#allocation3 + $0x28] sm:$0xff] %v3290
      %3323 = vst [vmem:[#allocation3 + $0x30] sm:$0xff] %v3291
      %3324 = vst [vmem:[#allocation3 + $0x38] sm:$0xff] %v3292
      %3325 = vst [vmem:[#allocation3 + $0x40] sm:$0xff] %v3293
      %3326 = vst [vmem:[#allocation3 + $0x48] sm:$0xff] %v3294
      %3327 = vst [vmem:[#allocation3 + $0x50] sm:$0xff] %v3295
      %3328 = vst [vmem:[#allocation3 + $0x58] sm:$0xff] %v3296
      %3329 = vst [vmem:[#allocation3 + $0x60] sm:$0xff] %v3297
      %3330 = vst [vmem:[#allocation3 + $0x68] sm:$0xff] %v3298
      %3331 = vst [vmem:[#allocation3 + $0x70] sm:$0xff] %v3299
      %3332 = vst [vmem:[#allocation3 + $0x78] sm:$0xff] %v3300
      %3333 = vst [vmem:[#allocation3 + $0x80] sm:$0xff] %v3301
      %3334 = vst [vmem:[#allocation3 + $0x88] sm:$0xff] %v3302
      %3335 = vst [vmem:[#allocation3 + $0x90] sm:$0xff] %v3303
      %3336 = vst [vmem:[#allocation3 + $0x98] sm:$0xff] %v3304
      %3337 = vst [vmem:[#allocation3 + $0xa0] sm:$0xff] %v3305
      %3338 = vst [vmem:[#allocation3 + $0xa8] sm:$0xff] %v3306
      %3339 = vst [vmem:[#allocation3 + $0xb0] sm:$0xff] %v3307
      %3340 = vst [vmem:[#allocation3 + $0xb8] sm:$0xff] %v3308
      %3341 = vst [vmem:[#allocation3 + $0xc0] sm:$0xff] %v3309
      %3342 = vst [vmem:[#allocation3 + $0xc8] sm:$0xff] %v3310
      %3343 = vst [vmem:[#allocation3 + $0xd0] sm:$0xff] %v3311
      %3344 = vst [vmem:[#allocation3 + $0xd8] sm:$0xff] %v3312
      %3345 = vst [vmem:[#allocation3 + $0xe0] sm:$0xff] %v3313
      %3346 = vst [vmem:[#allocation3 + $0xe8] sm:$0xff] %v3314
      %3347 = vst [vmem:[#allocation3 + $0xf0] sm:$0xff] %v3315
      %3348 = vst [vmem:[#allocation3 + $0xf8] sm:$0xff] %v3316
      %v3349 = vld [vmem:[%s2608 + $0x2] sm:$0xff]
      %v3350 = vld [vmem:[%s2608 + $0xa] sm:$0xff]
      %v3351 = vld [vmem:[%s2608 + $0x1a] sm:$0xff]
      %v3352 = vld [vmem:[%s2608 + $0x22] sm:$0xff]
      %v3353 = vld [vmem:[%s2608 + $0x32] sm:$0xff]
      %v3354 = vld [vmem:[%s2608 + $0x3a] sm:$0xff]
      %v3355 = vld [vmem:[%s2608 + $0x4a] sm:$0xff]
      %v3356 = vld [vmem:[%s2608 + $0x52] sm:$0xff]
      %v3357 = vld [vmem:[%s2608 + $0x62] sm:$0xff]
      %v3358 = vld [vmem:[%s2608 + $0x6a] sm:$0xff]
      %v3359 = vld [vmem:[%s2608 + $0x7a] sm:$0xff]
      %v3360 = vld [vmem:[%s2608 + $0x82] sm:$0xff]
      %v3361 = vld [vmem:[%s2608 + $0x92] sm:$0xff]
      %v3362 = vld [vmem:[%s2608 + $0x9a] sm:$0xff]
      %v3363 = vld [vmem:[%s2608 + $0xaa] sm:$0xff]
      %v3364 = vld [vmem:[%s2608 + $0xb2] sm:$0xff]
      %v3365 = vld [vmem:[%s2608 + $0xc2] sm:$0xff]
      %v3366 = vld [vmem:[%s2608 + $0xca] sm:$0xff]
      %v3367 = vld [vmem:[%s2608 + $0xda] sm:$0xff]
      %v3368 = vld [vmem:[%s2608 + $0xe2] sm:$0xff]
      %v3369 = vld [vmem:[%s2608 + $0xf2] sm:$0xff]
      %v3370 = vld [vmem:[%s2608 + $0xfa] sm:$0xff]
      %v3371 = vld [vmem:[%s2608 + $0x10a] sm:$0xff]
      %v3372 = vld [vmem:[%s2608 + $0x112] sm:$0xff]
      %v3373 = vld [vmem:[%s2608 + $0x122] sm:$0xff]
      %v3374 = vld [vmem:[%s2608 + $0x12a] sm:$0xff]
      %v3375 = vld [vmem:[%s2608 + $0x13a] sm:$0xff]
      %v3376 = vld [vmem:[%s2608 + $0x142] sm:$0xff]
      %v3377 = vld [vmem:[%s2608 + $0x152] sm:$0xff]
      %v3378 = vld [vmem:[%s2608 + $0x15a] sm:$0xff]
      %v3379 = vld [vmem:[%s2608 + $0x16a] sm:$0xff]
      %v3380 = vld [vmem:[%s2608 + $0x172] sm:$0xff]
      %s3381 = scalar_lea.vmem %s1, 1024
      %v3382 = vld [vmem:[%s3381] sm:$0xff]
      %v3383 = vld [vmem:[%s3381 + $0x8] sm:$0xff]
      %v3384 = vld [vmem:[%s3381 + $0x10] sm:$0xff]
      %v3385 = vld [vmem:[%s3381 + $0x18] sm:$0xff]
      %v3386 = vld [vmem:[%s3381 + $0x20] sm:$0xff]
      %v3387 = vld [vmem:[%s3381 + $0x28] sm:$0xff]
      %v3388 = vld [vmem:[%s3381 + $0x30] sm:$0xff]
      %v3389 = vld [vmem:[%s3381 + $0x38] sm:$0xff]
      %v3390 = vld [vmem:[%s3381 + $0x40] sm:$0xff]
      %v3391 = vld [vmem:[%s3381 + $0x48] sm:$0xff]
      %v3392 = vld [vmem:[%s3381 + $0x50] sm:$0xff]
      %v3393 = vld [vmem:[%s3381 + $0x58] sm:$0xff]
      %v3394 = vld [vmem:[%s3381 + $0x60] sm:$0xff]
      %v3395 = vld [vmem:[%s3381 + $0x68] sm:$0xff]
      %v3396 = vld [vmem:[%s3381 + $0x70] sm:$0xff]
      %v3397 = vld [vmem:[%s3381 + $0x78] sm:$0xff]
      %3398 = vmatprep.subr.mxu0 0.0
      %3399 = vmatpush1.msra.mxu0 %v3382
      %3400 = vmatprep.subr.mxu0 0.0
      %3401 = vmatpush1.msra.mxu0 %v3383
      %3402 = vmatprep.subr.mxu0 0.0
      %3403 = vmatpush1.msra.mxu0 %v3384
      %3404 = vmatprep.subr.mxu0 0.0
      %3405 = vmatpush1.msra.mxu0 %v3385
      %3406 = vmatprep.subr.mxu0 0.0
      %3407 = vmatpush1.msra.mxu0 %v3386
      %3408 = vmatprep.subr.mxu0 0.0
      %3409 = vmatpush1.msra.mxu0 %v3387
      %3410 = vmatprep.subr.mxu0 0.0
      %3411 = vmatpush1.msra.mxu0 %v3388
      %3412 = vmatprep.subr.mxu0 0.0
      %3413 = vmatpush1.msra.mxu0 %v3389
      %3414 = vmatprep.subr.mxu0 0.0
      %3415 = vmatpush1.msra.mxu0 %v3390
      %3416 = vmatprep.subr.mxu0 0.0
      %3417 = vmatpush1.msra.mxu0 %v3391
      %3418 = vmatprep.subr.mxu0 0.0
      %3419 = vmatpush1.msra.mxu0 %v3392
      %3420 = vmatprep.subr.mxu0 0.0
      %3421 = vmatpush1.msra.mxu0 %v3393
      %3422 = vmatprep.subr.mxu0 0.0
      %3423 = vmatpush1.msra.mxu0 %v3394
      %3424 = vmatprep.subr.mxu0 0.0
      %3425 = vmatpush1.msra.mxu0 %v3395
      %3426 = vmatprep.subr.mxu0 0.0
      %3427 = vmatpush1.msra.mxu0 %v3396
      %3428 = vmatprep.subr.mxu0 0.0
      %3429 = vmatpush1.msra.mxu0 %v3397
      %3430 = vmatprep.subr.mxu0 0.0
      %3431 = vmatpush1.msra.mxu0 0.0
      %3432 = vmatprep.subr.mxu0 0.0
      %3433 = vmatpush1.msra.mxu0 0.0
      %3434 = vmatprep.subr.mxu0 0.0
      %3435 = vmatpush1.msra.mxu0 0.0
      %3436 = vmatprep.subr.mxu0 0.0
      %3437 = vmatpush1.msra.mxu0 0.0
      %3438 = vmatprep.subr.mxu0 0.0
      %3439 = vmatpush1.msra.mxu0 0.0
      %3440 = vmatprep.subr.mxu0 0.0
      %3441 = vmatpush1.msra.mxu0 0.0
      %3442 = vmatprep.subr.mxu0 0.0
      %3443 = vmatpush1.msra.mxu0 0.0
      %3444 = vmatprep.subr.mxu0 0.0
      %3445 = vmatpush1.msra.mxu0 0.0
      %3446 = vmatprep.subr.mxu0 0.0
      %3447 = vmatpush1.msra.mxu0 0.0
      %3448 = vmatprep.subr.mxu0 0.0
      %3449 = vmatpush1.msra.mxu0 0.0
      %3450 = vmatprep.subr.mxu0 0.0
      %3451 = vmatpush1.msra.mxu0 0.0
      %3452 = vmatprep.subr.mxu0 0.0
      %3453 = vmatpush1.msra.mxu0 0.0
      %3454 = vmatprep.subr.mxu0 0.0
      %3455 = vmatpush1.msra.mxu0 0.0
      %3456 = vmatprep.subr.mxu0 0.0
      %3457 = vmatpush1.msra.mxu0 0.0
      %3458 = vmatprep.subr.mxu0 0.0
      %3459 = vmatpush1.msra.mxu0 0.0
      %3460 = vmatprep.subr.mxu0 0.0
      %3461 = vmatpush1.msra.mxu0 0.0
      %3462 = vmatprep.mubr.f32.mxu0 0.0
      %3463 = vmatmul.mubr.f32.gmra.mrb[0].mxu0 %v3349
      %v3464 = vpop.f32.mrb[0].mxu0
      %v3465 = vadd.f32 0.0, %v3464
      %v3466 = vpop.f32.mrb[0].mxu0
      %3467 = vmatprep.mubr.f32.mxu0 0.0
      %3468 = vmatmul.mubr.f32.gmra.mrb[0].mxu0 %v3350
      %v3469 = vpop.f32.mrb[0].mxu0
      %v3470 = vadd.f32 0.0, %v3469
      %v3471 = vpop.f32.mrb[0].mxu0
      %3472 = vmatprep.mubr.f32.mxu0 0.0
      %3473 = vmatmul.mubr.f32.gmra.mrb[0].mxu0 %v3351
      %v3474 = vpop.f32.mrb[0].mxu0
      %v3475 = vadd.f32 0.0, %v3474
      %v3476 = vpop.f32.mrb[0].mxu0
      %3477 = vmatprep.mubr.f32.mxu0 0.0
      %3478 = vmatmul.mubr.f32.gmra.mrb[0].mxu0 %v3352
      %v3479 = vpop.f32.mrb[0].mxu0
      %v3480 = vadd.f32 0.0, %v3479
      %v3481 = vpop.f32.mrb[0].mxu0
      %3482 = vmatprep.mubr.f32.mxu0 0.0
      %3483 = vmatmul.mubr.f32.gmra.mrb[0].mxu0 %v3353
      %v3484 = vpop.f32.mrb[0].mxu0
      %v3485 = vadd.f32 0.0, %v3484
      %v3486 = vpop.f32.mrb[0].mxu0
      %3487 = vmatprep.mubr.f32.mxu0 0.0
      %3488 = vmatmul.mubr.f32.gmra.mrb[0].mxu0 %v3354
      %v3489 = vpop.f32.mrb[0].mxu0
      %v3490 = vadd.f32 0.0, %v3489
      %v3491 = vpop.f32.mrb[0].mxu0
      %3492 = vmatprep.mubr.f32.mxu0 0.0
      %3493 = vmatmul.mubr.f32.gmra.mrb[0].mxu0 %v3355
      %v3494 = vpop.f32.mrb[0].mxu0
      %v3495 = vadd.f32 0.0, %v3494
      %v3496 = vpop.f32.mrb[0].mxu0
      %3497 = vmatprep.mubr.f32.mxu0 0.0
      %3498 = vmatmul.mubr.f32.gmra.mrb[0].mxu0 %v3356
      %v3499 = vpop.f32.mrb[0].mxu0
      %v3500 = vadd.f32 0.0, %v3499
      %v3501 = vpop.f32.mrb[0].mxu0
      %3502 = vmatprep.mubr.f32.mxu0 0.0
      %3503 = vmatmul.mubr.f32.gmra.mrb[0].mxu0 %v3357
      %v3504 = vpop.f32.mrb[0].mxu0
      %v3505 = vadd.f32 0.0, %v3504
      %v3506 = vpop.f32.mrb[0].mxu0
      %3507 = vmatprep.mubr.f32.mxu0 0.0
      %3508 = vmatmul.mubr.f32.gmra.mrb[0].mxu0 %v3358
      %v3509 = vpop.f32.mrb[0].mxu0
      %v3510 = vadd.f32 0.0, %v3509
      %v3511 = vpop.f32.mrb[0].mxu0
      %3512 = vmatprep.mubr.f32.mxu0 0.0
      %3513 = vmatmul.mubr.f32.gmra.mrb[0].mxu0 %v3359
      %v3514 = vpop.f32.mrb[0].mxu0
      %v3515 = vadd.f32 0.0, %v3514
      %v3516 = vpop.f32.mrb[0].mxu0
      %3517 = vmatprep.mubr.f32.mxu0 0.0
      %3518 = vmatmul.mubr.f32.gmra.mrb[0].mxu0 %v3360
      %v3519 = vpop.f32.mrb[0].mxu0
      %v3520 = vadd.f32 0.0, %v3519
      %v3521 = vpop.f32.mrb[0].mxu0
      %3522 = vmatprep.mubr.f32.mxu0 0.0
      %3523 = vmatmul.mubr.f32.gmra.mrb[0].mxu0 %v3361
      %v3524 = vpop.f32.mrb[0].mxu0
      %v3525 = vadd.f32 0.0, %v3524
      %v3526 = vpop.f32.mrb[0].mxu0
      %3527 = vmatprep.mubr.f32.mxu0 0.0
      %3528 = vmatmul.mubr.f32.gmra.mrb[0].mxu0 %v3362
      %v3529 = vpop.f32.mrb[0].mxu0
      %v3530 = vadd.f32 0.0, %v3529
      %v3531 = vpop.f32.mrb[0].mxu0
      %3532 = vmatprep.mubr.f32.mxu0 0.0
      %3533 = vmatmul.mubr.f32.gmra.mrb[0].mxu0 %v3363
      %v3534 = vpop.f32.mrb[0].mxu0
      %v3535 = vadd.f32 0.0, %v3534
      %v3536 = vpop.f32.mrb[0].mxu0
      %3537 = vmatprep.mubr.f32.mxu0 0.0
      %3538 = vmatmul.mubr.f32.gmra.mrb[0].mxu0 %v3364
      %v3539 = vpop.f32.mrb[0].mxu0
      %v3540 = vadd.f32 0.0, %v3539
      %v3541 = vpop.f32.mrb[0].mxu0
      %3542 = vmatprep.mubr.f32.mxu0 0.0
      %3543 = vmatmul.mubr.f32.gmra.mrb[0].mxu0 %v3365
      %v3544 = vpop.f32.mrb[0].mxu0
      %v3545 = vadd.f32 0.0, %v3544
      %v3546 = vpop.f32.mrb[0].mxu0
      %3547 = vmatprep.mubr.f32.mxu0 0.0
      %3548 = vmatmul.mubr.f32.gmra.mrb[0].mxu0 %v3366
      %v3549 = vpop.f32.mrb[0].mxu0
      %v3550 = vadd.f32 0.0, %v3549
      %v3551 = vpop.f32.mrb[0].mxu0
      %3552 = vmatprep.mubr.f32.mxu0 0.0
      %3553 = vmatmul.mubr.f32.gmra.mrb[0].mxu0 %v3367
      %v3554 = vpop.f32.mrb[0].mxu0
      %v3555 = vadd.f32 0.0, %v3554
      %v3556 = vpop.f32.mrb[0].mxu0
      %3557 = vmatprep.mubr.f32.mxu0 0.0
      %3558 = vmatmul.mubr.f32.gmra.mrb[0].mxu0 %v3368
      %v3559 = vpop.f32.mrb[0].mxu0
      %v3560 = vadd.f32 0.0, %v3559
      %v3561 = vpop.f32.mrb[0].mxu0
      %3562 = vmatprep.mubr.f32.mxu0 0.0
      %3563 = vmatmul.mubr.f32.gmra.mrb[0].mxu0 %v3369
      %v3564 = vpop.f32.mrb[0].mxu0
      %v3565 = vadd.f32 0.0, %v3564
      %v3566 = vpop.f32.mrb[0].mxu0
      %3567 = vmatprep.mubr.f32.mxu0 0.0
      %3568 = vmatmul.mubr.f32.gmra.mrb[0].mxu0 %v3370
      %v3569 = vpop.f32.mrb[0].mxu0
      %v3570 = vadd.f32 0.0, %v3569
      %v3571 = vpop.f32.mrb[0].mxu0
      %3572 = vmatprep.mubr.f32.mxu0 0.0
      %3573 = vmatmul.mubr.f32.gmra.mrb[0].mxu0 %v3371
      %v3574 = vpop.f32.mrb[0].mxu0
      %v3575 = vadd.f32 0.0, %v3574
      %v3576 = vpop.f32.mrb[0].mxu0
      %3577 = vmatprep.mubr.f32.mxu0 0.0
      %3578 = vmatmul.mubr.f32.gmra.mrb[0].mxu0 %v3372
      %v3579 = vpop.f32.mrb[0].mxu0
      %v3580 = vadd.f32 0.0, %v3579
      %v3581 = vpop.f32.mrb[0].mxu0
      %3582 = vmatprep.mubr.f32.mxu0 0.0
      %3583 = vmatmul.mubr.f32.gmra.mrb[0].mxu0 %v3373
      %v3584 = vpop.f32.mrb[0].mxu0
      %v3585 = vadd.f32 0.0, %v3584
      %v3586 = vpop.f32.mrb[0].mxu0
      %3587 = vmatprep.mubr.f32.mxu0 0.0
      %3588 = vmatmul.mubr.f32.gmra.mrb[0].mxu0 %v3374
      %v3589 = vpop.f32.mrb[0].mxu0
      %v3590 = vadd.f32 0.0, %v3589
      %v3591 = vpop.f32.mrb[0].mxu0
      %3592 = vmatprep.mubr.f32.mxu0 0.0
      %3593 = vmatmul.mubr.f32.gmra.mrb[0].mxu0 %v3375
      %v3594 = vpop.f32.mrb[0].mxu0
      %v3595 = vadd.f32 0.0, %v3594
      %v3596 = vpop.f32.mrb[0].mxu0
      %3597 = vmatprep.mubr.f32.mxu0 0.0
      %3598 = vmatmul.mubr.f32.gmra.mrb[0].mxu0 %v3376
      %v3599 = vpop.f32.mrb[0].mxu0
      %v3600 = vadd.f32 0.0, %v3599
      %v3601 = vpop.f32.mrb[0].mxu0
      %3602 = vmatprep.mubr.f32.mxu0 0.0
      %3603 = vmatmul.mubr.f32.gmra.mrb[0].mxu0 %v3377
      %v3604 = vpop.f32.mrb[0].mxu0
      %v3605 = vadd.f32 0.0, %v3604
      %v3606 = vpop.f32.mrb[0].mxu0
      %3607 = vmatprep.mubr.f32.mxu0 0.0
      %3608 = vmatmul.mubr.f32.gmra.mrb[0].mxu0 %v3378
      %v3609 = vpop.f32.mrb[0].mxu0
      %v3610 = vadd.f32 0.0, %v3609
      %v3611 = vpop.f32.mrb[0].mxu0
      %3612 = vmatprep.mubr.f32.mxu0 0.0
      %3613 = vmatmul.mubr.f32.gmra.mrb[0].mxu0 %v3379
      %v3614 = vpop.f32.mrb[0].mxu0
      %v3615 = vadd.f32 0.0, %v3614
      %v3616 = vpop.f32.mrb[0].mxu0
      %3617 = vmatprep.mubr.f32.mxu0 0.0
      %3618 = vmatmul.mubr.f32.gmra.mrb[0].mxu0 %v3380
      %v3619 = vpop.f32.mrb[0].mxu0
      %v3620 = vadd.f32 0.0, %v3619
      %v3621 = vpop.f32.mrb[0].mxu0
      %3622 = vdwg.mxu0
      %v3623 = vld [vmem:[#allocation3] sm:$0xff]
      %v3624 = vld [vmem:[#allocation3 + $0x8] sm:$0xff]
      %v3625 = vld [vmem:[#allocation3 + $0x10] sm:$0xff]
      %v3626 = vld [vmem:[#allocation3 + $0x18] sm:$0xff]
      %v3627 = vld [vmem:[#allocation3 + $0x20] sm:$0xff]
      %v3628 = vld [vmem:[#allocation3 + $0x28] sm:$0xff]
      %v3629 = vld [vmem:[#allocation3 + $0x30] sm:$0xff]
      %v3630 = vld [vmem:[#allocation3 + $0x38] sm:$0xff]
      %v3631 = vld [vmem:[#allocation3 + $0x40] sm:$0xff]
      %v3632 = vld [vmem:[#allocation3 + $0x48] sm:$0xff]
      %v3633 = vld [vmem:[#allocation3 + $0x50] sm:$0xff]
      %v3634 = vld [vmem:[#allocation3 + $0x58] sm:$0xff]
      %v3635 = vld [vmem:[#allocation3 + $0x60] sm:$0xff]
      %v3636 = vld [vmem:[#allocation3 + $0x68] sm:$0xff]
      %v3637 = vld [vmem:[#allocation3 + $0x70] sm:$0xff]
      %v3638 = vld [vmem:[#allocation3 + $0x78] sm:$0xff]
      %v3639 = vld [vmem:[#allocation3 + $0x80] sm:$0xff]
      %v3640 = vld [vmem:[#allocation3 + $0x88] sm:$0xff]
      %v3641 = vld [vmem:[#allocation3 + $0x90] sm:$0xff]
      %v3642 = vld [vmem:[#allocation3 + $0x98] sm:$0xff]
      %v3643 = vld [vmem:[#allocation3 + $0xa0] sm:$0xff]
      %v3644 = vld [vmem:[#allocation3 + $0xa8] sm:$0xff]
      %v3645 = vld [vmem:[#allocation3 + $0xb0] sm:$0xff]
      %v3646 = vld [vmem:[#allocation3 + $0xb8] sm:$0xff]
      %v3647 = vld [vmem:[#allocation3 + $0xc0] sm:$0xff]
      %v3648 = vld [vmem:[#allocation3 + $0xc8] sm:$0xff]
      %v3649 = vld [vmem:[#allocation3 + $0xd0] sm:$0xff]
      %v3650 = vld [vmem:[#allocation3 + $0xd8] sm:$0xff]
      %v3651 = vld [vmem:[#allocation3 + $0xe0] sm:$0xff]
      %v3652 = vld [vmem:[#allocation3 + $0xe8] sm:$0xff]
      %v3653 = vld [vmem:[#allocation3 + $0xf0] sm:$0xff]
      %v3654 = vld [vmem:[#allocation3 + $0xf8] sm:$0xff]
      %v3655 = vadd.f32 %v3623, %v3465
      %v3656 = vadd.f32 %v3624, %v3470
      %v3657 = vadd.f32 %v3625, %v3475
      %v3658 = vadd.f32 %v3626, %v3480
      %v3659 = vadd.f32 %v3627, %v3485
      %v3660 = vadd.f32 %v3628, %v3490
      %v3661 = vadd.f32 %v3629, %v3495
      %v3662 = vadd.f32 %v3630, %v3500
      %v3663 = vadd.f32 %v3631, %v3505
      %v3664 = vadd.f32 %v3632, %v3510
      %v3665 = vadd.f32 %v3633, %v3515
      %v3666 = vadd.f32 %v3634, %v3520
      %v3667 = vadd.f32 %v3635, %v3525
      %v3668 = vadd.f32 %v3636, %v3530
      %v3669 = vadd.f32 %v3637, %v3535
      %v3670 = vadd.f32 %v3638, %v3540
      %v3671 = vadd.f32 %v3639, %v3545
      %v3672 = vadd.f32 %v3640, %v3550
      %v3673 = vadd.f32 %v3641, %v3555
      %v3674 = vadd.f32 %v3642, %v3560
      %v3675 = vadd.f32 %v3643, %v3565
      %v3676 = vadd.f32 %v3644, %v3570
      %v3677 = vadd.f32 %v3645, %v3575
      %v3678 = vadd.f32 %v3646, %v3580
      %v3679 = vadd.f32 %v3647, %v3585
      %v3680 = vadd.f32 %v3648, %v3590
      %v3681 = vadd.f32 %v3649, %v3595
      %v3682 = vadd.f32 %v3650, %v3600
      %v3683 = vadd.f32 %v3651, %v3605
      %v3684 = vadd.f32 %v3652, %v3610
      %v3685 = vadd.f32 %v3653, %v3615
      %v3686 = vadd.f32 %v3654, %v3620
      %3687 = vst [vmem:[#allocation3] sm:$0xff] %v3655
      %3688 = vst [vmem:[#allocation3 + $0x8] sm:$0xff] %v3656
      %3689 = vst [vmem:[#allocation3 + $0x10] sm:$0xff] %v3657
      %3690 = vst [vmem:[#allocation3 + $0x18] sm:$0xff] %v3658
      %3691 = vst [vmem:[#allocation3 + $0x20] sm:$0xff] %v3659
      %3692 = vst [vmem:[#allocation3 + $0x28] sm:$0xff] %v3660
      %3693 = vst [vmem:[#allocation3 + $0x30] sm:$0xff] %v3661
      %3694 = vst [vmem:[#allocation3 + $0x38] sm:$0xff] %v3662
      %3695 = vst [vmem:[#allocation3 + $0x40] sm:$0xff] %v3663
      %3696 = vst [vmem:[#allocation3 + $0x48] sm:$0xff] %v3664
      %3697 = vst [vmem:[#allocation3 + $0x50] sm:$0xff] %v3665
      %3698 = vst [vmem:[#allocation3 + $0x58] sm:$0xff] %v3666
      %3699 = vst [vmem:[#allocation3 + $0x60] sm:$0xff] %v3667
      %3700 = vst [vmem:[#allocation3 + $0x68] sm:$0xff] %v3668
      %3701 = vst [vmem:[#allocation3 + $0x70] sm:$0xff] %v3669
      %3702 = vst [vmem:[#allocation3 + $0x78] sm:$0xff] %v3670
      %3703 = vst [vmem:[#allocation3 + $0x80] sm:$0xff] %v3671
      %3704 = vst [vmem:[#allocation3 + $0x88] sm:$0xff] %v3672
      %3705 = vst [vmem:[#allocation3 + $0x90] sm:$0xff] %v3673
      %3706 = vst [vmem:[#allocation3 + $0x98] sm:$0xff] %v3674
      %3707 = vst [vmem:[#allocation3 + $0xa0] sm:$0xff] %v3675
      %3708 = vst [vmem:[#allocation3 + $0xa8] sm:$0xff] %v3676
      %3709 = vst [vmem:[#allocation3 + $0xb0] sm:$0xff] %v3677
      %3710 = vst [vmem:[#allocation3 + $0xb8] sm:$0xff] %v3678
      %3711 = vst [vmem:[#allocation3 + $0xc0] sm:$0xff] %v3679
      %3712 = vst [vmem:[#allocation3 + $0xc8] sm:$0xff] %v3680
      %3713 = vst [vmem:[#allocation3 + $0xd0] sm:$0xff] %v3681
      %3714 = vst [vmem:[#allocation3 + $0xd8] sm:$0xff] %v3682
      %3715 = vst [vmem:[#allocation3 + $0xe0] sm:$0xff] %v3683
      %3716 = vst [vmem:[#allocation3 + $0xe8] sm:$0xff] %v3684
      %3717 = vst [vmem:[#allocation3 + $0xf0] sm:$0xff] %v3685
      %3718 = vst [vmem:[#allocation3 + $0xf8] sm:$0xff] %v3686
      %v3719 = vld [vmem:[#allocation3] sm:$0xff]
      %v3720 = vld [vmem:[#allocation3 + $0x8] sm:$0xff]
      %v3721 = vld [vmem:[#allocation3 + $0x10] sm:$0xff]
      %v3722 = vld [vmem:[#allocation3 + $0x18] sm:$0xff]
      %v3723 = vld [vmem:[#allocation3 + $0x20] sm:$0xff]
      %v3724 = vld [vmem:[#allocation3 + $0x28] sm:$0xff]
      %v3725 = vld [vmem:[#allocation3 + $0x30] sm:$0xff]
      %v3726 = vld [vmem:[#allocation3 + $0x38] sm:$0xff]
      %v3727 = vld [vmem:[#allocation3 + $0x40] sm:$0xff]
      %v3728 = vld [vmem:[#allocation3 + $0x48] sm:$0xff]
      %v3729 = vld [vmem:[#allocation3 + $0x50] sm:$0xff]
      %v3730 = vld [vmem:[#allocation3 + $0x58] sm:$0xff]
      %v3731 = vld [vmem:[#allocation3 + $0x60] sm:$0xff]
      %v3732 = vld [vmem:[#allocation3 + $0x68] sm:$0xff]
      %v3733 = vld [vmem:[#allocation3 + $0x70] sm:$0xff]
      %v3734 = vld [vmem:[#allocation3 + $0x78] sm:$0xff]
      %v3735 = vld [vmem:[#allocation3 + $0x80] sm:$0xff]
      %v3736 = vld [vmem:[#allocation3 + $0x88] sm:$0xff]
      %v3737 = vld [vmem:[#allocation3 + $0x90] sm:$0xff]
      %v3738 = vld [vmem:[#allocation3 + $0x98] sm:$0xff]
      %v3739 = vld [vmem:[#allocation3 + $0xa0] sm:$0xff]
      %v3740 = vld [vmem:[#allocation3 + $0xa8] sm:$0xff]
      %v3741 = vld [vmem:[#allocation3 + $0xb0] sm:$0xff]
      %v3742 = vld [vmem:[#allocation3 + $0xb8] sm:$0xff]
      %v3743 = vld [vmem:[#allocation3 + $0xc0] sm:$0xff]
      %v3744 = vld [vmem:[#allocation3 + $0xc8] sm:$0xff]
      %v3745 = vld [vmem:[#allocation3 + $0xd0] sm:$0xff]
      %v3746 = vld [vmem:[#allocation3 + $0xd8] sm:$0xff]
      %v3747 = vld [vmem:[#allocation3 + $0xe0] sm:$0xff]
      %v3748 = vld [vmem:[#allocation3 + $0xe8] sm:$0xff]
      %v3749 = vld [vmem:[#allocation3 + $0xf0] sm:$0xff]
      %v3750 = vld [vmem:[#allocation3 + $0xf8] sm:$0xff]
      %3751 = vst [vmem:[%s233] sm:$0xff] %v3719
      %3752 = vst [vmem:[%s233 + $0x8] sm:$0xff] %v3720
      %3753 = vst [vmem:[%s233 + $0x10] sm:$0xff] %v3721
      %3754 = vst [vmem:[%s233 + $0x18] sm:$0xff] %v3722
      %3755 = vst [vmem:[%s233 + $0x20] sm:$0xff] %v3723
      %3756 = vst [vmem:[%s233 + $0x28] sm:$0xff] %v3724
      %3757 = vst [vmem:[%s233 + $0x30] sm:$0xff] %v3725
      %3758 = vst [vmem:[%s233 + $0x38] sm:$0xff] %v3726
      %3759 = vst [vmem:[%s233 + $0x40] sm:$0xff] %v3727
      %3760 = vst [vmem:[%s233 + $0x48] sm:$0xff] %v3728
      %3761 = vst [vmem:[%s233 + $0x50] sm:$0xff] %v3729
      %3762 = vst [vmem:[%s233 + $0x58] sm:$0xff] %v3730
      %3763 = vst [vmem:[%s233 + $0x60] sm:$0xff] %v3731
      %3764 = vst [vmem:[%s233 + $0x68] sm:$0xff] %v3732
      %3765 = vst [vmem:[%s233 + $0x70] sm:$0xff] %v3733
      %3766 = vst [vmem:[%s233 + $0x78] sm:$0xff] %v3734
      %3767 = vst [vmem:[%s233 + $0x80] sm:$0xff] %v3735
      %3768 = vst [vmem:[%s233 + $0x88] sm:$0xff] %v3736
      %3769 = vst [vmem:[%s233 + $0x90] sm:$0xff] %v3737
      %3770 = vst [vmem:[%s233 + $0x98] sm:$0xff] %v3738
      %3771 = vst [vmem:[%s233 + $0xa0] sm:$0xff] %v3739
      %3772 = vst [vmem:[%s233 + $0xa8] sm:$0xff] %v3740
      %3773 = vst [vmem:[%s233 + $0xb0] sm:$0xff] %v3741
      %3774 = vst [vmem:[%s233 + $0xb8] sm:$0xff] %v3742
      %3775 = vst [vmem:[%s233 + $0xc0] sm:$0xff] %v3743
      %3776 = vst [vmem:[%s233 + $0xc8] sm:$0xff] %v3744
      %3777 = vst [vmem:[%s233 + $0xd0] sm:$0xff] %v3745
      %3778 = vst [vmem:[%s233 + $0xd8] sm:$0xff] %v3746
      %3779 = vst [vmem:[%s233 + $0xe0] sm:$0xff] %v3747
      %3780 = vst [vmem:[%s233 + $0xe8] sm:$0xff] %v3748
      %3781 = vst [vmem:[%s233 + $0xf0] sm:$0xff] %v3749
      %3782 = vst [vmem:[%s233 + $0xf8] sm:$0xff] %v3750
      %v3783 = vadd.f32 %v3719, %v3720
      %v3784 = vadd.f32 %v3783, %v3721
      %v3785 = vadd.f32 %v3784, %v3722
      %v3786 = vadd.f32 %v3785, %v3723
      %v3787 = vadd.f32 %v3786, %v3724
      %v3788 = vadd.f32 %v3787, %v3725
      %v3789 = vadd.f32 %v3788, %v3726
      %v3790 = vadd.f32 %v3789, %v3727
      %v3791 = vadd.f32 %v3790, %v3728
      %v3792 = vadd.f32 %v3791, %v3729
      %v3793 = vadd.f32 %v3792, %v3730
      %v3794 = vadd.f32 %v3793, %v3731
      %v3795 = vadd.f32 %v3794, %v3732
      %v3796 = vadd.f32 %v3795, %v3733
      %v3797 = vadd.f32 %v3796, %v3734
      %v3798 = vadd.f32 %v3797, %v3735
      %v3799 = vadd.f32 %v3798, %v3736
      %v3800 = vadd.f32 %v3799, %v3737
      %v3801 = vadd.f32 %v3800, %v3738
      %v3802 = vadd.f32 %v3801, %v3739
      %v3803 = vadd.f32 %v3802, %v3740
      %v3804 = vadd.f32 %v3803, %v3741
      %v3805 = vadd.f32 %v3804, %v3742
      %v3806 = vadd.f32 %v3805, %v3743
      %v3807 = vadd.f32 %v3806, %v3744
      %v3808 = vadd.f32 %v3807, %v3745
      %v3809 = vadd.f32 %v3808, %v3746
      %v3810 = vadd.f32 %v3809, %v3747
      %v3811 = vadd.f32 %v3810, %v3748
      %v3812 = vadd.f32 %v3811, %v3749
      %v3813 = vadd.f32 %v3812, %v3750
      %v3814 = vrot.slane %v3813, 4
      %v3815 = vadd.f32 %v3813, %v3814
      %v3816 = vrot.slane %v3815, 2
      %v3817 = vadd.f32 %v3815, %v3816
      %v3818 = vrot.slane %v3817, 1
      %v3819 = vadd.f32 %v3817, %v3818
      %3820 = vst [vmem:[%s238] sm:$0x1] %v3819
      %v3821 = vmul.f32 %v3719, %v3719
      %v3822 = vmul.f32 %v3720, %v3720
      %v3823 = vmul.f32 %v3721, %v3721
      %v3824 = vmul.f32 %v3722, %v3722
      %v3825 = vmul.f32 %v3723, %v3723
      %v3826 = vmul.f32 %v3724, %v3724
      %v3827 = vmul.f32 %v3725, %v3725
      %v3828 = vmul.f32 %v3726, %v3726
      %v3829 = vmul.f32 %v3727, %v3727
      %v3830 = vmul.f32 %v3728, %v3728
      %v3831 = vmul.f32 %v3729, %v3729
      %v3832 = vmul.f32 %v3730, %v3730
      %v3833 = vmul.f32 %v3731, %v3731
      %v3834 = vmul.f32 %v3732, %v3732
      %v3835 = vmul.f32 %v3733, %v3733
      %v3836 = vmul.f32 %v3734, %v3734
      %v3837 = vmul.f32 %v3735, %v3735
      %v3838 = vmul.f32 %v3736, %v3736
      %v3839 = vmul.f32 %v3737, %v3737
      %v3840 = vmul.f32 %v3738, %v3738
      %v3841 = vmul.f32 %v3739, %v3739
      %v3842 = vmul.f32 %v3740, %v3740
      %v3843 = vmul.f32 %v3741, %v3741
      %v3844 = vmul.f32 %v3742, %v3742
      %v3845 = vmul.f32 %v3743, %v3743
      %v3846 = vmul.f32 %v3744, %v3744
      %v3847 = vmul.f32 %v3745, %v3745
      %v3848 = vmul.f32 %v3746, %v3746
      %v3849 = vmul.f32 %v3747, %v3747
      %v3850 = vmul.f32 %v3748, %v3748
      %v3851 = vmul.f32 %v3749, %v3749
      %v3852 = vmul.f32 %v3750, %v3750
      %v3853 = vadd.f32 %v3821, %v3822
      %v3854 = vadd.f32 %v3853, %v3823
      %v3855 = vadd.f32 %v3854, %v3824
      %v3856 = vadd.f32 %v3855, %v3825
      %v3857 = vadd.f32 %v3856, %v3826
      %v3858 = vadd.f32 %v3857, %v3827
      %v3859 = vadd.f32 %v3858, %v3828
      %v3860 = vadd.f32 %v3859, %v3829
      %v3861 = vadd.f32 %v3860, %v3830
      %v3862 = vadd.f32 %v3861, %v3831
      %v3863 = vadd.f32 %v3862, %v3832
      %v3864 = vadd.f32 %v3863, %v3833
      %v3865 = vadd.f32 %v3864, %v3834
      %v3866 = vadd.f32 %v3865, %v3835
      %v3867 = vadd.f32 %v3866, %v3836
      %v3868 = vadd.f32 %v3867, %v3837
      %v3869 = vadd.f32 %v3868, %v3838
      %v3870 = vadd.f32 %v3869, %v3839
      %v3871 = vadd.f32 %v3870, %v3840
      %v3872 = vadd.f32 %v3871, %v3841
      %v3873 = vadd.f32 %v3872, %v3842
      %v3874 = vadd.f32 %v3873, %v3843
      %v3875 = vadd.f32 %v3874, %v3844
      %v3876 = vadd.f32 %v3875, %v3845
      %v3877 = vadd.f32 %v3876, %v3846
      %v3878 = vadd.f32 %v3877, %v3847
      %v3879 = vadd.f32 %v3878, %v3848
      %v3880 = vadd.f32 %v3879, %v3849
      %v3881 = vadd.f32 %v3880, %v3850
      %v3882 = vadd.f32 %v3881, %v3851
      %v3883 = vadd.f32 %v3882, %v3852
      %v3884 = vrot.slane %v3883, 4
      %v3885 = vadd.f32 %v3883, %v3884
      %v3886 = vrot.slane %v3885, 2
      %v3887 = vadd.f32 %v3885, %v3886
      %v3888 = vrot.slane %v3887, 1
      %v3889 = vadd.f32 %v3887, %v3888
      %3890 = vst [vmem:[%s238 + $0x1] sm:$0x1] %v3889
      %s3891 = smul.u32 32, %s17
      %p3892 = scmp.lt.s32.totalorder %s3891, 63
      %s3893 = scalar_select %p3892, %s3891, 63
      %s3894 = smul.addr %s3893, 8
      %s3895 = scalar_lea.vmem %s4, %s3894
      %p3896 = scmp.lt.s32.totalorder %s17, 1
      %s3897 = scalar_select %p3896, %s17, 1
      %s3898 = smul.addr %s3897, 8
      %s3899 = scalar_lea.vmem %s5, %s3898
      // Predicated region
      $region37: #{bottleneck_forward.5} parent=35 // pred_check
        %p3900 = pneg %p124
      $region38: #{bottleneck_forward.5} parent=35 // pred_check_branch
        %3902 = sbr.rel (%p3900) target = $region40
      $region39: #{bottleneck_forward.5} parent=35 // pred_region
        %s3903 = smul.u32 32, %s17
      $region40: #{bottleneck_forward.5} parent=35 // pred_fallthru
        _
      // Predicated region
      $region41: #{bottleneck_forward.5} parent=35 // pred_check
        %p3904 = pneg %p150
      $region42: #{bottleneck_forward.5} parent=35 // pred_check_branch
        %3906 = sbr.rel (%p3904) target = $region44
      $region43: #{bottleneck_forward.5} parent=35 // pred_region
        _
      $region44: #{bottleneck_forward.5} parent=35 // pred_fallthru
        _
    $region36: #{bottleneck_forward.5} parent=5 // pred_fallthru
      _
    %p3907 = scmp.le.s32.totalorder 2, %s12
    // Predicated region
    $region45: #{bottleneck_forward.5} parent=5 // pred_check
      %p3908 = pneg %p3907
    $region46: #{bottleneck_forward.5} parent=5 // pred_check_branch
      %3910 = sbr.rel (%p3908) target = $region48
    $region47: #{bottleneck_forward.5} parent=5 // pred_region
      %s3911 = ssub.s32 %s12, 2
      // Predicated region
      $region49: #{bottleneck_forward.5} parent=47 // pred_check
        %p3912 = pneg %p130
      $region50: #{bottleneck_forward.5} parent=47 // pred_check_branch
        %3914 = sbr.rel (%p3912) target = $region52
      $region51: #{bottleneck_forward.5} parent=47 // pred_region
        %s3915 = smul.u32 32, %s18
        %p3916 = scmp.lt.s32.totalorder %s3915, 63
        %s3917 = scalar_select %p3916, %s3915, 63
        %s3918 = smul.addr %s3917, 8
        %s3919 = scalar_lea.vmem %s4, %s3918
      $region52: #{bottleneck_forward.5} parent=47 // pred_fallthru
        _
      // Predicated region
      $region53: #{bottleneck_forward.5} parent=47 // pred_check
        %p3920 = pneg %p156
      $region54: #{bottleneck_forward.5} parent=47 // pred_check_branch
        %3922 = sbr.rel (%p3920) target = $region56
      $region55: #{bottleneck_forward.5} parent=47 // pred_region
        %p3923 = scmp.lt.s32.totalorder %s18, 1
        %s3924 = scalar_select %p3923, %s18, 1
        %s3925 = smul.addr %s3924, 8
        %s3926 = scalar_lea.vmem %s5, %s3925
      $region56: #{bottleneck_forward.5} parent=47 // pred_fallthru
        _
    $region48: #{bottleneck_forward.5} parent=5 // pred_fallthru
      _
  $region6: #{bottleneck_forward.5} parent=0 // loop_footer
    %s16 = sadd.s32 1, %s12
  $region7: #{bottleneck_forward.5} parent=0 // loop_footer_branch
    %11 = sbr.rel target = $region3
  $region8: #{bottleneck_forward.5} parent=0 // loop_exit
    _

</llo_original>
